<compile_context>
chip_gen: v6e
topology: v6e:2x2x1
jax: 0.10.0
libtpu: 0.0.40
codegen_flags: <defaults>
</compile_context>

<pallas_src>
import jax
import jax.numpy as jnp
from jax import lax
from jax.experimental import pallas as pl
from jax.experimental.pallas import tpu as pltpu


# ---------------------------------------------------------------------------
# Fused conv3x3(valid) [+ folded BN affine] + ReLU + maxpool2x2, ref -> ref.
# ---------------------------------------------------------------------------
def _conv3x3_relu_pool(src, dst, w_ref, scale, shift):
    # src:   Ref (H, W, Cin)      NHWC image (one batch element)
    # dst:   Ref (Hp, Wp, Cout)   pooled output, Hp=(H-2)//2, Wp=(W-2)//2
    # w_ref: Ref (3, 3*Cin, Cout) per-kh weights, rows ordered (kw, cin)
    # scale, shift: None or (1, Cout) f32 values (folded BatchNorm affine)
    h_in, w_in, cin = src.shape
    hp, wp, cout = dst.shape
    wo = 2 * wp                                   # conv output width (even)
    assert w_in == wo + 2 and h_in == 2 * hp + 2

    # One-hot selection matrices for the stride-2 column pick of the 2x2 pool
    # (avoids strided slices / reshapes; the tiny extra matmuls ride a mostly
    # idle MXU).
    jj = lax.broadcasted_iota(jnp.int32, (wp, wo), 0)
    ww = lax.broadcasted_iota(jnp.int32, (wp, wo), 1)
    s_even = (ww == 2 * jj).astype(jnp.float32)           # (Wp, Wo)
    s_odd = (ww == 2 * jj + 1).astype(jnp.float32)        # (Wp, Wo)

    w_k = [w_ref[k] for k in range(3)]                    # each (3*Cin, Cout)

    def conv_row(r):
        # Conv output row r: (Wo, Cout); K collapsed to 3*Cin per kh.
        acc = jnp.zeros((wo, cout), jnp.float32)
        for kh in range(3):
            row = src[r + kh]                             # (W, Cin)
            patch = jnp.concatenate(
                [row[0:wo], row[1:wo + 1], row[2:wo + 2]], axis=-1)  # (Wo, 3*Cin)
            acc = acc + jnp.dot(patch, w_k[kh],
                                preferred_element_type=jnp.float32)
        if scale is not None:
            acc = acc * scale + shift
        return jnp.maximum(acc, 0.0)

    def body(i, carry):
        m = jnp.maximum(conv_row(2 * i), conv_row(2 * i + 1))      # H-pool
        pooled = jnp.maximum(
            jnp.dot(s_even, m, preferred_element_type=jnp.float32),
            jnp.dot(s_odd, m, preferred_element_type=jnp.float32))  # W-pool
        dst[i] = pooled
        return carry

    lax.fori_loop(0, hp, body, 0)


def _conv_stack_kernel(x_ref, w1_ref, w2_ref, w3_ref, sc_ref, sh_ref,
                       o_ref, a1_ref, a2_ref):
    # Stages 1-2: conv+relu+pool. Stage 3: conv + folded BN affine + relu + pool.
    _conv3x3_relu_pool(x_ref, a1_ref, w1_ref, None, None)
    _conv3x3_relu_pool(a1_ref, a2_ref, w2_ref, None, None)
    _conv3x3_relu_pool(a2_ref, o_ref, w3_ref, sc_ref[...], sh_ref[...])


def conv_stack(x_nhwc, w1p, w2p, w3p, bn_scale, bn_shift):
    n, h, w, cin = x_nhwc.shape
    h1, wd1 = (h - 2) // 2, (w - 2) // 2
    h2, wd2 = (h1 - 2) // 2, (wd1 - 2) // 2
    h3, wd3 = (h2 - 2) // 2, (wd2 - 2) // 2
    c1, c2, c3 = w1p.shape[-1], w2p.shape[-1], w3p.shape[-1]
    return pl.pallas_call(
        _conv_stack_kernel,
        out_shape=jax.ShapeDtypeStruct((n, h3, wd3, c3), jnp.float32),
        grid=(n,),
        in_specs=[
            pl.BlockSpec((None, h, w, cin), lambda i: (i, 0, 0, 0)),
            pl.BlockSpec(w1p.shape, lambda i: (0, 0, 0)),
            pl.BlockSpec(w2p.shape, lambda i: (0, 0, 0)),
            pl.BlockSpec(w3p.shape, lambda i: (0, 0, 0)),
            pl.BlockSpec(bn_scale.shape, lambda i: (0, 0)),
            pl.BlockSpec(bn_shift.shape, lambda i: (0, 0)),
        ],
        out_specs=pl.BlockSpec((None, h3, wd3, c3), lambda i: (i, 0, 0, 0)),
        scratch_shapes=[pltpu.VMEM((h1, wd1, c1), jnp.float32),
                        pltpu.VMEM((h2, wd2, c2), jnp.float32)],
        compiler_params=pltpu.CompilerParams(
            dimension_semantics=("parallel",)),
    )(x_nhwc, w1p, w2p, w3p, bn_scale, bn_shift)


# ---------------------------------------------------------------------------
# Fused MLP head: relu(x @ W1 + b1) -> sigmoid(h @ W2 + b2), single call,
# everything resident in VMEM (fc1 weights pre-cast to bf16, f32 accumulation,
# f32 VPU epilogue).
# ---------------------------------------------------------------------------
def _mlp_head_kernel(x_ref, w1_ref, b1_ref, w2_ref, b2_ref, o_ref):
    x = x_ref[...].astype(jnp.bfloat16)
    hid = jnp.dot(x, w1_ref[...], preferred_element_type=jnp.float32)
    hid = jnp.maximum(hid + b1_ref[...], 0.0)
    z = jnp.dot(hid, w2_ref[...], preferred_element_type=jnp.float32) + b2_ref[...]
    o_ref[...] = jax.nn.sigmoid(z).astype(o_ref.dtype)


def mlp_head(x_flat, w1, b1, w2, b2):
    n = x_flat.shape[0]
    out_c = w2.shape[1]
    return pl.pallas_call(
        _mlp_head_kernel,
        out_shape=jax.ShapeDtypeStruct((n, out_c), jnp.float32),
    )(x_flat, w1, b1, w2, b2)


# ---------------------------------------------------------------------------
# Parameters (PyTorch shape conventions), one-time layout prep, forward pass.
# ---------------------------------------------------------------------------
def init_params(key, in_c, out_c):
    ks = jax.random.split(key, 11)
    p = {}
    p["conv1_w"] = 0.10 * jax.random.normal(ks[0], (16, in_c, 3, 3), jnp.float32)
    p["conv2_w"] = 0.05 * jax.random.normal(ks[1], (32, 16, 3, 3), jnp.float32)
    p["conv3_w"] = 0.05 * jax.random.normal(ks[2], (64, 32, 3, 3), jnp.float32)
    p["bn_gamma"] = 1.0 + 0.1 * jax.random.normal(ks[3], (64,), jnp.float32)
    p["bn_beta"] = 0.1 * jax.random.normal(ks[4], (64,), jnp.float32)
    p["bn_mean"] = 0.1 * jax.random.normal(ks[5], (64,), jnp.float32)
    p["bn_var"] = 0.9 + 0.1 * jnp.abs(jax.random.normal(ks[6], (64,), jnp.float32))
    p["fc1_w"] = 0.01 * jax.random.normal(ks[7], (200, 8 * 8 * 64), jnp.float32)
    p["fc1_b"] = 0.01 * jax.random.normal(ks[8], (200,), jnp.float32)
    p["fc2_w"] = 0.05 * jax.random.normal(ks[9], (out_c, 200), jnp.float32)
    p["fc2_b"] = 0.01 * jax.random.normal(ks[10], (out_c,), jnp.float32)
    return p


def prepare_params(p, eps=1e-5):
    """One-time weight layout prep (run OUTSIDE jit): no transposes in forward."""
    def conv_prep(w_oihw):
        cout, cin = w_oihw.shape[0], w_oihw.shape[1]
        w_hwio = jnp.transpose(w_oihw, (2, 3, 1, 0))       # (3, 3, Cin, Cout)
        return w_hwio.reshape(3, 3 * cin, cout).astype(jnp.float32)

    # TODO(synk): BatchNorm reproduced in inference mode (running stats folded
    # into a per-channel affine); training-mode batch statistics are not modeled.
    bn_scale = p["bn_gamma"] / jnp.sqrt(p["bn_var"] + eps)
    bn_shift = p["bn_beta"] - p["bn_mean"] * bn_scale

    # Permute fc1 input columns from NCHW-flatten order (c,h,w) to NHWC order
    # (h,w,c) so the kernel's NHWC flatten feeds fc1 directly.
    fc1 = p["fc1_w"].reshape(200, 64, 8, 8).transpose(0, 2, 3, 1).reshape(200, -1)

    return {
        "w1p": conv_prep(p["conv1_w"]),
        "w2p": conv_prep(p["conv2_w"]),
        "w3p": conv_prep(p["conv3_w"]),
        "bn_scale": bn_scale.reshape(1, -1).astype(jnp.float32),
        "bn_shift": bn_shift.reshape(1, -1).astype(jnp.float32),
        "fc1_w": fc1.T.astype(jnp.bfloat16),                # (4096, 200) bf16
        "fc1_b": p["fc1_b"].reshape(1, -1).astype(jnp.float32),
        "fc2_w": p["fc2_w"].T.astype(jnp.float32),          # (200, out_c)
        "fc2_b": p["fc2_b"].reshape(1, -1).astype(jnp.float32),
    }


def cnn_forward(x_nchw, pp):
    n = x_nchw.shape[0]
    x = jnp.transpose(x_nchw, (0, 2, 3, 1))                 # NCHW -> NHWC, once
    y = conv_stack(x, pp["w1p"], pp["w2p"], pp["w3p"],
                   pp["bn_scale"], pp["bn_shift"])          # (N, 8, 8, 64)
    y_flat = y.reshape(n, -1)                               # NHWC flatten
    return mlp_head(y_flat, pp["fc1_w"], pp["fc1_b"], pp["fc2_w"], pp["fc2_b"])


# Pure-JAX reference (PyTorch semantics) used as an in-script correctness check.
def cnn_reference(x_nchw, p, eps=1e-5):
    dn = ("NCHW", "OIHW", "NCHW")
    conv = lambda x, w: lax.conv_general_dilated(
        x, w, (1, 1), "VALID", dimension_numbers=dn)
    pool = lambda x: lax.reduce_window(
        x, -jnp.inf, lax.max, (1, 1, 2, 2), (1, 1, 2, 2), "VALID")
    y = pool(jax.nn.relu(conv(x_nchw, p["conv1_w"])))
    y = pool(jax.nn.relu(conv(y, p["conv2_w"])))
    scale = p["bn_gamma"] / jnp.sqrt(p["bn_var"] + eps)
    shift = p["bn_beta"] - p["bn_mean"] * scale
    y = conv(y, p["conv3_w"]) * scale[None, :, None, None] + shift[None, :, None, None]
    y = pool(jax.nn.relu(y))
    y = y.reshape(y.shape[0], -1)                           # NCHW flatten (torch .view)
    h = jax.nn.relu(y @ p["fc1_w"].T + p["fc1_b"])
    return jax.nn.sigmoid(h @ p["fc2_w"].T + p["fc2_b"])


if __name__ == "__main__":
    N, IN_C, OUT_C = 2, 3, 10
    H = W = 78  # smallest spatial size consistent with the 8*8*64 flatten

    key = jax.random.PRNGKey(0)
    kx, kp = jax.random.split(key)
    x = jax.random.normal(kx, (N, IN_C, H, W), jnp.float32)
    params = init_params(kp, IN_C, OUT_C)
    prepped = prepare_params(params)          # layout prep once, outside jit

    out = jax.jit(cnn_forward)(x, prepped)
    out = jax.block_until_ready(out)

    assert out.shape == (N, OUT_C), out.shape
    assert bool(jnp.all(jnp.isfinite(out)))
    assert bool(jnp.all((out >= 0.0) & (out <= 1.0)))       # sigmoid range

    ref = cnn_reference(x, params)
    max_err = float(jnp.max(jnp.abs(out - ref)))
    assert max_err < 1.5e-2, max_err                        # bf16 fc1 tolerance
    print("KERNEL_OK")
</pallas_src>

<mosaic_0001>
module attributes {stable_mosaic.version = 11 : i64} {
  func.func @_conv_stack_kernel(%arg0: i32, %arg1: memref<1x78x78x3xf32, #tpu.memory_space<vmem>>, %arg2: memref<3x9x16xf32, #tpu.memory_space<vmem>>, %arg3: memref<3x48x32xf32, #tpu.memory_space<vmem>>, %arg4: memref<3x96x64xf32, #tpu.memory_space<vmem>>, %arg5: memref<1x64xf32, #tpu.memory_space<vmem>>, %arg6: memref<1x64xf32, #tpu.memory_space<vmem>>, %arg7: memref<1x8x8x64xf32, #tpu.memory_space<vmem>>, %arg8: memref<38x38x16xf32, #tpu.memory_space<vmem>>, %arg9: memref<18x18x32xf32, #tpu.memory_space<vmem>>) attributes {dimension_semantics = [#tpu.dimension_semantics<parallel>], iteration_bounds = array<i64: 2>, scalar_prefetch = 0 : i64, scratch_operands = 2 : i64, tpu.core_type = #tpu.core_type<tc>, window_params = [{transform_indices = @transform_0, window_bounds = array<i64: 1, 78, 78, 3>}, {pipeline_mode = #tpu.pipeline_mode<synchronous>, transform_indices = @transform_1, window_bounds = array<i64: 3, 9, 16>}, {pipeline_mode = #tpu.pipeline_mode<synchronous>, transform_indices = @transform_2, window_bounds = array<i64: 3, 48, 32>}, {pipeline_mode = #tpu.pipeline_mode<synchronous>, transform_indices = @transform_3, window_bounds = array<i64: 3, 96, 64>}, {pipeline_mode = #tpu.pipeline_mode<synchronous>, transform_indices = @transform_4, window_bounds = array<i64: 1, 64>}, {pipeline_mode = #tpu.pipeline_mode<synchronous>, transform_indices = @transform_5, window_bounds = array<i64: 1, 64>}, {transform_indices = @transform_6, window_bounds = array<i64: 1, 8, 8, 64>}]} {
    %0 = tpu.iota {dimensions = array<i32: 0>} : vector<38x76xi32>
    %1 = tpu.iota {dimensions = array<i32: 1>} : vector<38x76xi32>
    %c2_i32 = arith.constant 2 : i32
    %2 = vector.broadcast %c2_i32 : i32 to vector<38x76xi32>
    %3 = arith.muli %2, %0 : vector<38x76xi32>
    %4 = arith.cmpi eq, %1, %3 : vector<38x76xi32>
    %5 = arith.extui %4 : vector<38x76xi1> to vector<38x76xi32>
    %6 = arith.sitofp %5 : vector<38x76xi32> to vector<38x76xf32>
    %c2_i32_0 = arith.constant 2 : i32
    %7 = vector.broadcast %c2_i32_0 : i32 to vector<38x76xi32>
    %8 = arith.muli %7, %0 : vector<38x76xi32>
    %c1_i32 = arith.constant 1 : i32
    %9 = vector.broadcast %c1_i32 : i32 to vector<38x76xi32>
    %10 = arith.addi %8, %9 : vector<38x76xi32>
    %11 = arith.cmpi eq, %1, %10 : vector<38x76xi32>
    %12 = arith.extui %11 : vector<38x76xi1> to vector<38x76xi32>
    %13 = arith.sitofp %12 : vector<38x76xi32> to vector<38x76xf32>
    %c0 = arith.constant 0 : index
    %c0_1 = arith.constant 0 : index
    %c0_2 = arith.constant 0 : index
    %14 = vector.load %arg2[%c0, %c0_1, %c0_2] : memref<3x9x16xf32, #tpu.memory_space<vmem>>, vector<1x9x16xf32>
    %15 = vector.shape_cast %14 : vector<1x9x16xf32> to vector<9x16xf32>
    %c1 = arith.constant 1 : index
    %c0_3 = arith.constant 0 : index
    %c0_4 = arith.constant 0 : index
    %16 = vector.load %arg2[%c1, %c0_3, %c0_4] : memref<3x9x16xf32, #tpu.memory_space<vmem>>, vector<1x9x16xf32>
    %17 = vector.shape_cast %16 : vector<1x9x16xf32> to vector<9x16xf32>
    %c2 = arith.constant 2 : index
    %c0_5 = arith.constant 0 : index
    %c0_6 = arith.constant 0 : index
    %18 = vector.load %arg2[%c2, %c0_5, %c0_6] : memref<3x9x16xf32, #tpu.memory_space<vmem>>, vector<1x9x16xf32>
    %19 = vector.shape_cast %18 : vector<1x9x16xf32> to vector<9x16xf32>
    %c0_i32 = arith.constant 0 : i32
    %c38_i32 = arith.constant 38 : i32
    %20 = arith.addi %c0_i32, %c38_i32 : i32
    %c1_i32_7 = arith.constant 1 : i32
    scf.for %arg10 = %c0_i32 to %20 step %c1_i32_7  : i32 {
      %c2_i32_43 = arith.constant 2 : i32
      %65 = arith.muli %c2_i32_43, %arg10 : i32
      %cst = arith.constant 0.000000e+00 : f32
      %66 = vector.broadcast %cst : f32 to vector<76x16xf32>
      %c0_i32_44 = arith.constant 0 : i32
      %67 = arith.addi %65, %c0_i32_44 : i32
      %c0_45 = arith.constant 0 : index
      %68 = arith.index_cast %67 : i32 to index
      %c0_46 = arith.constant 0 : index
      %c0_47 = arith.constant 0 : index
      %69 = vector.load %arg1[%c0_45, %68, %c0_46, %c0_47] : memref<1x78x78x3xf32, #tpu.memory_space<vmem>>, vector<1x1x78x3xf32>
      %70 = vector.shape_cast %69 : vector<1x1x78x3xf32> to vector<78x3xf32>
      %71 = vector.extract_strided_slice %70 {offsets = [0, 0], sizes = [76, 3], strides = [1, 1]} : vector<78x3xf32> to vector<76x3xf32>
      %72 = vector.extract_strided_slice %70 {offsets = [1, 0], sizes = [76, 3], strides = [1, 1]} : vector<78x3xf32> to vector<76x3xf32>
      %73 = vector.extract_strided_slice %70 {offsets = [2, 0], sizes = [76, 3], strides = [1, 1]} : vector<78x3xf32> to vector<76x3xf32>
      %74 = tpu.concatenate %71, %72, %73 in 1 : vector<76x3xf32>, vector<76x3xf32>, vector<76x3xf32> -> vector<76x9xf32>
      %cst_48 = arith.constant dense<0.000000e+00> : vector<76x16xf32>
      %75 = tpu.matmul %74, %15, %cst_48 {dimension_numbers = #tpu.dot_dimension_numbers<[1], [0], [0], [1], [0, 0, 1, 1], [], []>} : vector<76x9xf32>, vector<9x16xf32>, vector<76x16xf32> -> vector<76x16xf32>
      %76 = arith.addf %66, %75 : vector<76x16xf32>
      %c1_i32_49 = arith.constant 1 : i32
      %77 = arith.addi %65, %c1_i32_49 : i32
      %c0_50 = arith.constant 0 : index
      %78 = arith.index_cast %77 : i32 to index
      %c0_51 = arith.constant 0 : index
      %c0_52 = arith.constant 0 : index
      %79 = vector.load %arg1[%c0_50, %78, %c0_51, %c0_52] : memref<1x78x78x3xf32, #tpu.memory_space<vmem>>, vector<1x1x78x3xf32>
      %80 = vector.shape_cast %79 : vector<1x1x78x3xf32> to vector<78x3xf32>
      %81 = vector.extract_strided_slice %80 {offsets = [0, 0], sizes = [76, 3], strides = [1, 1]} : vector<78x3xf32> to vector<76x3xf32>
      %82 = vector.extract_strided_slice %80 {offsets = [1, 0], sizes = [76, 3], strides = [1, 1]} : vector<78x3xf32> to vector<76x3xf32>
      %83 = vector.extract_strided_slice %80 {offsets = [2, 0], sizes = [76, 3], strides = [1, 1]} : vector<78x3xf32> to vector<76x3xf32>
      %84 = tpu.concatenate %81, %82, %83 in 1 : vector<76x3xf32>, vector<76x3xf32>, vector<76x3xf32> -> vector<76x9xf32>
      %cst_53 = arith.constant dense<0.000000e+00> : vector<76x16xf32>
      %85 = tpu.matmul %84, %17, %cst_53 {dimension_numbers = #tpu.dot_dimension_numbers<[1], [0], [0], [1], [0, 0, 1, 1], [], []>} : vector<76x9xf32>, vector<9x16xf32>, vector<76x16xf32> -> vector<76x16xf32>
      %86 = arith.addf %76, %85 : vector<76x16xf32>
      %c2_i32_54 = arith.constant 2 : i32
      %87 = arith.addi %65, %c2_i32_54 : i32
      %c0_55 = arith.constant 0 : index
      %88 = arith.index_cast %87 : i32 to index
      %c0_56 = arith.constant 0 : index
      %c0_57 = arith.constant 0 : index
      %89 = vector.load %arg1[%c0_55, %88, %c0_56, %c0_57] : memref<1x78x78x3xf32, #tpu.memory_space<vmem>>, vector<1x1x78x3xf32>
      %90 = vector.shape_cast %89 : vector<1x1x78x3xf32> to vector<78x3xf32>
      %91 = vector.extract_strided_slice %90 {offsets = [0, 0], sizes = [76, 3], strides = [1, 1]} : vector<78x3xf32> to vector<76x3xf32>
      %92 = vector.extract_strided_slice %90 {offsets = [1, 0], sizes = [76, 3], strides = [1, 1]} : vector<78x3xf32> to vector<76x3xf32>
      %93 = vector.extract_strided_slice %90 {offsets = [2, 0], sizes = [76, 3], strides = [1, 1]} : vector<78x3xf32> to vector<76x3xf32>
      %94 = tpu.concatenate %91, %92, %93 in 1 : vector<76x3xf32>, vector<76x3xf32>, vector<76x3xf32> -> vector<76x9xf32>
      %cst_58 = arith.constant dense<0.000000e+00> : vector<76x16xf32>
      %95 = tpu.matmul %94, %19, %cst_58 {dimension_numbers = #tpu.dot_dimension_numbers<[1], [0], [0], [1], [0, 0, 1, 1], [], []>} : vector<76x9xf32>, vector<9x16xf32>, vector<76x16xf32> -> vector<76x16xf32>
      %96 = arith.addf %86, %95 : vector<76x16xf32>
      %cst_59 = arith.constant 0.000000e+00 : f32
      %97 = vector.broadcast %cst_59 : f32 to vector<76x16xf32>
      %98 = arith.maximumf %96, %97 : vector<76x16xf32>
      %c2_i32_60 = arith.constant 2 : i32
      %99 = arith.muli %c2_i32_60, %arg10 : i32
      %c1_i32_61 = arith.constant 1 : i32
      %100 = arith.addi %99, %c1_i32_61 : i32
      %cst_62 = arith.constant 0.000000e+00 : f32
      %101 = vector.broadcast %cst_62 : f32 to vector<76x16xf32>
      %c0_i32_63 = arith.constant 0 : i32
      %102 = arith.addi %100, %c0_i32_63 : i32
      %c0_64 = arith.constant 0 : index
      %103 = arith.index_cast %102 : i32 to index
      %c0_65 = arith.constant 0 : index
      %c0_66 = arith.constant 0 : index
      %104 = vector.load %arg1[%c0_64, %103, %c0_65, %c0_66] : memref<1x78x78x3xf32, #tpu.memory_space<vmem>>, vector<1x1x78x3xf32>
      %105 = vector.shape_cast %104 : vector<1x1x78x3xf32> to vector<78x3xf32>
      %106 = vector.extract_strided_slice %105 {offsets = [0, 0], sizes = [76, 3], strides = [1, 1]} : vector<78x3xf32> to vector<76x3xf32>
      %107 = vector.extract_strided_slice %105 {offsets = [1, 0], sizes = [76, 3], strides = [1, 1]} : vector<78x3xf32> to vector<76x3xf32>
      %108 = vector.extract_strided_slice %105 {offsets = [2, 0], sizes = [76, 3], strides = [1, 1]} : vector<78x3xf32> to vector<76x3xf32>
      %109 = tpu.concatenate %106, %107, %108 in 1 : vector<76x3xf32>, vector<76x3xf32>, vector<76x3xf32> -> vector<76x9xf32>
      %cst_67 = arith.constant dense<0.000000e+00> : vector<76x16xf32>
      %110 = tpu.matmul %109, %15, %cst_67 {dimension_numbers = #tpu.dot_dimension_numbers<[1], [0], [0], [1], [0, 0, 1, 1], [], []>} : vector<76x9xf32>, vector<9x16xf32>, vector<76x16xf32> -> vector<76x16xf32>
      %111 = arith.addf %101, %110 : vector<76x16xf32>
      %c1_i32_68 = arith.constant 1 : i32
      %112 = arith.addi %100, %c1_i32_68 : i32
      %c0_69 = arith.constant 0 : index
      %113 = arith.index_cast %112 : i32 to index
      %c0_70 = arith.constant 0 : index
      %c0_71 = arith.constant 0 : index
      %114 = vector.load %arg1[%c0_69, %113, %c0_70, %c0_71] : memref<1x78x78x3xf32, #tpu.memory_space<vmem>>, vector<1x1x78x3xf32>
      %115 = vector.shape_cast %114 : vector<1x1x78x3xf32> to vector<78x3xf32>
      %116 = vector.extract_strided_slice %115 {offsets = [0, 0], sizes = [76, 3], strides = [1, 1]} : vector<78x3xf32> to vector<76x3xf32>
      %117 = vector.extract_strided_slice %115 {offsets = [1, 0], sizes = [76, 3], strides = [1, 1]} : vector<78x3xf32> to vector<76x3xf32>
      %118 = vector.extract_strided_slice %115 {offsets = [2, 0], sizes = [76, 3], strides = [1, 1]} : vector<78x3xf32> to vector<76x3xf32>
      %119 = tpu.concatenate %116, %117, %118 in 1 : vector<76x3xf32>, vector<76x3xf32>, vector<76x3xf32> -> vector<76x9xf32>
      %cst_72 = arith.constant dense<0.000000e+00> : vector<76x16xf32>
      %120 = tpu.matmul %119, %17, %cst_72 {dimension_numbers = #tpu.dot_dimension_numbers<[1], [0], [0], [1], [0, 0, 1, 1], [], []>} : vector<76x9xf32>, vector<9x16xf32>, vector<76x16xf32> -> vector<76x16xf32>
      %121 = arith.addf %111, %120 : vector<76x16xf32>
      %c2_i32_73 = arith.constant 2 : i32
      %122 = arith.addi %100, %c2_i32_73 : i32
      %c0_74 = arith.constant 0 : index
      %123 = arith.index_cast %122 : i32 to index
      %c0_75 = arith.constant 0 : index
      %c0_76 = arith.constant 0 : index
      %124 = vector.load %arg1[%c0_74, %123, %c0_75, %c0_76] : memref<1x78x78x3xf32, #tpu.memory_space<vmem>>, vector<1x1x78x3xf32>
      %125 = vector.shape_cast %124 : vector<1x1x78x3xf32> to vector<78x3xf32>
      %126 = vector.extract_strided_slice %125 {offsets = [0, 0], sizes = [76, 3], strides = [1, 1]} : vector<78x3xf32> to vector<76x3xf32>
      %127 = vector.extract_strided_slice %125 {offsets = [1, 0], sizes = [76, 3], strides = [1, 1]} : vector<78x3xf32> to vector<76x3xf32>
      %128 = vector.extract_strided_slice %125 {offsets = [2, 0], sizes = [76, 3], strides = [1, 1]} : vector<78x3xf32> to vector<76x3xf32>
      %129 = tpu.concatenate %126, %127, %128 in 1 : vector<76x3xf32>, vector<76x3xf32>, vector<76x3xf32> -> vector<76x9xf32>
      %cst_77 = arith.constant dense<0.000000e+00> : vector<76x16xf32>
      %130 = tpu.matmul %129, %19, %cst_77 {dimension_numbers = #tpu.dot_dimension_numbers<[1], [0], [0], [1], [0, 0, 1, 1], [], []>} : vector<76x9xf32>, vector<9x16xf32>, vector<76x16xf32> -> vector<76x16xf32>
      %131 = arith.addf %121, %130 : vector<76x16xf32>
      %cst_78 = arith.constant 0.000000e+00 : f32
      %132 = vector.broadcast %cst_78 : f32 to vector<76x16xf32>
      %133 = arith.maximumf %131, %132 : vector<76x16xf32>
      %134 = arith.maximumf %98, %133 : vector<76x16xf32>
      %cst_79 = arith.constant dense<0.000000e+00> : vector<38x16xf32>
      %135 = tpu.matmul %6, %134, %cst_79 {dimension_numbers = #tpu.dot_dimension_numbers<[1], [0], [0], [1], [0, 0, 1, 1], [], []>} : vector<38x76xf32>, vector<76x16xf32>, vector<38x16xf32> -> vector<38x16xf32>
      %cst_80 = arith.constant dense<0.000000e+00> : vector<38x16xf32>
      %136 = tpu.matmul %13, %134, %cst_80 {dimension_numbers = #tpu.dot_dimension_numbers<[1], [0], [0], [1], [0, 0, 1, 1], [], []>} : vector<38x76xf32>, vector<76x16xf32>, vector<38x16xf32> -> vector<38x16xf32>
      %137 = arith.maximumf %135, %136 : vector<38x16xf32>
      %138 = arith.index_cast %arg10 : i32 to index
      %c0_81 = arith.constant 0 : index
      %c0_82 = arith.constant 0 : index
      %139 = vector.load %arg8[%138, %c0_81, %c0_82] : memref<38x38x16xf32, #tpu.memory_space<vmem>>, vector<1x38x16xf32>
      %140 = vector.shape_cast %139 : vector<1x38x16xf32> to vector<38x16xf32>
      %141 = vector.shape_cast %137 : vector<38x16xf32> to vector<1x38x16xf32>
      tpu.vector_store %arg8[%138, %c0_81, %c0_82], %141 {strides = array<i32>} : memref<38x38x16xf32, #tpu.memory_space<vmem>>, vector<1x38x16xf32>,
    }
    %c38_i32_8 = arith.constant 38 : i32
    %21 = tpu.iota {dimensions = array<i32: 0>} : vector<18x36xi32>
    %22 = tpu.iota {dimensions = array<i32: 1>} : vector<18x36xi32>
    %c2_i32_9 = arith.constant 2 : i32
    %23 = vector.broadcast %c2_i32_9 : i32 to vector<18x36xi32>
    %24 = arith.muli %23, %21 : vector<18x36xi32>
    %25 = arith.cmpi eq, %22, %24 : vector<18x36xi32>
    %26 = arith.extui %25 : vector<18x36xi1> to vector<18x36xi32>
    %27 = arith.sitofp %26 : vector<18x36xi32> to vector<18x36xf32>
    %c2_i32_10 = arith.constant 2 : i32
    %28 = vector.broadcast %c2_i32_10 : i32 to vector<18x36xi32>
    %29 = arith.muli %28, %21 : vector<18x36xi32>
    %c1_i32_11 = arith.constant 1 : i32
    %30 = vector.broadcast %c1_i32_11 : i32 to vector<18x36xi32>
    %31 = arith.addi %29, %30 : vector<18x36xi32>
    %32 = arith.cmpi eq, %22, %31 : vector<18x36xi32>
    %33 = arith.extui %32 : vector<18x36xi1> to vector<18x36xi32>
    %34 = arith.sitofp %33 : vector<18x36xi32> to vector<18x36xf32>
    %c0_12 = arith.constant 0 : index
    %c0_13 = arith.constant 0 : index
    %c0_14 = arith.constant 0 : index
    %35 = vector.load %arg3[%c0_12, %c0_13, %c0_14] : memref<3x48x32xf32, #tpu.memory_space<vmem>>, vector<1x48x32xf32>
    %36 = vector.shape_cast %35 : vector<1x48x32xf32> to vector<48x32xf32>
    %c1_15 = arith.constant 1 : index
    %c0_16 = arith.constant 0 : index
    %c0_17 = arith.constant 0 : index
    %37 = vector.load %arg3[%c1_15, %c0_16, %c0_17] : memref<3x48x32xf32, #tpu.memory_space<vmem>>, vector<1x48x32xf32>
    %38 = vector.shape_cast %37 : vector<1x48x32xf32> to vector<48x32xf32>
    %c2_18 = arith.constant 2 : index
    %c0_19 = arith.constant 0 : index
    %c0_20 = arith.constant 0 : index
    %39 = vector.load %arg3[%c2_18, %c0_19, %c0_20] : memref<3x48x32xf32, #tpu.memory_space<vmem>>, vector<1x48x32xf32>
    %40 = vector.shape_cast %39 : vector<1x48x32xf32> to vector<48x32xf32>
    %c0_i32_21 = arith.constant 0 : i32
    %c18_i32 = arith.constant 18 : i32
    %41 = arith.addi %c0_i32_21, %c18_i32 : i32
    %c1_i32_22 = arith.constant 1 : i32
    scf.for %arg10 = %c0_i32_21 to %41 step %c1_i32_22  : i32 {
      %c2_i32_43 = arith.constant 2 : i32
      %65 = arith.muli %c2_i32_43, %arg10 : i32
      %cst = arith.constant 0.000000e+00 : f32
      %66 = vector.broadcast %cst : f32 to vector<36x32xf32>
      %c0_i32_44 = arith.constant 0 : i32
      %67 = arith.addi %65, %c0_i32_44 : i32
      %68 = arith.index_cast %67 : i32 to index
      %c0_45 = arith.constant 0 : index
      %c0_46 = arith.constant 0 : index
      %69 = vector.load %arg8[%68, %c0_45, %c0_46] : memref<38x38x16xf32, #tpu.memory_space<vmem>>, vector<1x38x16xf32>
      %70 = vector.shape_cast %69 : vector<1x38x16xf32> to vector<38x16xf32>
      %71 = vector.extract_strided_slice %70 {offsets = [0, 0], sizes = [36, 16], strides = [1, 1]} : vector<38x16xf32> to vector<36x16xf32>
      %72 = vector.extract_strided_slice %70 {offsets = [1, 0], sizes = [36, 16], strides = [1, 1]} : vector<38x16xf32> to vector<36x16xf32>
      %73 = vector.extract_strided_slice %70 {offsets = [2, 0], sizes = [36, 16], strides = [1, 1]} : vector<38x16xf32> to vector<36x16xf32>
      %74 = tpu.concatenate %71, %72, %73 in 1 : vector<36x16xf32>, vector<36x16xf32>, vector<36x16xf32> -> vector<36x48xf32>
      %cst_47 = arith.constant dense<0.000000e+00> : vector<36x32xf32>
      %75 = tpu.matmul %74, %36, %cst_47 {dimension_numbers = #tpu.dot_dimension_numbers<[1], [0], [0], [1], [0, 0, 1, 1], [], []>} : vector<36x48xf32>, vector<48x32xf32>, vector<36x32xf32> -> vector<36x32xf32>
      %76 = arith.addf %66, %75 : vector<36x32xf32>
      %c1_i32_48 = arith.constant 1 : i32
      %77 = arith.addi %65, %c1_i32_48 : i32
      %78 = arith.index_cast %77 : i32 to index
      %c0_49 = arith.constant 0 : index
      %c0_50 = arith.constant 0 : index
      %79 = vector.load %arg8[%78, %c0_49, %c0_50] : memref<38x38x16xf32, #tpu.memory_space<vmem>>, vector<1x38x16xf32>
      %80 = vector.shape_cast %79 : vector<1x38x16xf32> to vector<38x16xf32>
      %81 = vector.extract_strided_slice %80 {offsets = [0, 0], sizes = [36, 16], strides = [1, 1]} : vector<38x16xf32> to vector<36x16xf32>
      %82 = vector.extract_strided_slice %80 {offsets = [1, 0], sizes = [36, 16], strides = [1, 1]} : vector<38x16xf32> to vector<36x16xf32>
      %83 = vector.extract_strided_slice %80 {offsets = [2, 0], sizes = [36, 16], strides = [1, 1]} : vector<38x16xf32> to vector<36x16xf32>
      %84 = tpu.concatenate %81, %82, %83 in 1 : vector<36x16xf32>, vector<36x16xf32>, vector<36x16xf32> -> vector<36x48xf32>
      %cst_51 = arith.constant dense<0.000000e+00> : vector<36x32xf32>
      %85 = tpu.matmul %84, %38, %cst_51 {dimension_numbers = #tpu.dot_dimension_numbers<[1], [0], [0], [1], [0, 0, 1, 1], [], []>} : vector<36x48xf32>, vector<48x32xf32>, vector<36x32xf32> -> vector<36x32xf32>
      %86 = arith.addf %76, %85 : vector<36x32xf32>
      %c2_i32_52 = arith.constant 2 : i32
      %87 = arith.addi %65, %c2_i32_52 : i32
      %88 = arith.index_cast %87 : i32 to index
      %c0_53 = arith.constant 0 : index
      %c0_54 = arith.constant 0 : index
      %89 = vector.load %arg8[%88, %c0_53, %c0_54] : memref<38x38x16xf32, #tpu.memory_space<vmem>>, vector<1x38x16xf32>
      %90 = vector.shape_cast %89 : vector<1x38x16xf32> to vector<38x16xf32>
      %91 = vector.extract_strided_slice %90 {offsets = [0, 0], sizes = [36, 16], strides = [1, 1]} : vector<38x16xf32> to vector<36x16xf32>
      %92 = vector.extract_strided_slice %90 {offsets = [1, 0], sizes = [36, 16], strides = [1, 1]} : vector<38x16xf32> to vector<36x16xf32>
      %93 = vector.extract_strided_slice %90 {offsets = [2, 0], sizes = [36, 16], strides = [1, 1]} : vector<38x16xf32> to vector<36x16xf32>
      %94 = tpu.concatenate %91, %92, %93 in 1 : vector<36x16xf32>, vector<36x16xf32>, vector<36x16xf32> -> vector<36x48xf32>
      %cst_55 = arith.constant dense<0.000000e+00> : vector<36x32xf32>
      %95 = tpu.matmul %94, %40, %cst_55 {dimension_numbers = #tpu.dot_dimension_numbers<[1], [0], [0], [1], [0, 0, 1, 1], [], []>} : vector<36x48xf32>, vector<48x32xf32>, vector<36x32xf32> -> vector<36x32xf32>
      %96 = arith.addf %86, %95 : vector<36x32xf32>
      %cst_56 = arith.constant 0.000000e+00 : f32
      %97 = vector.broadcast %cst_56 : f32 to vector<36x32xf32>
      %98 = arith.maximumf %96, %97 : vector<36x32xf32>
      %c2_i32_57 = arith.constant 2 : i32
      %99 = arith.muli %c2_i32_57, %arg10 : i32
      %c1_i32_58 = arith.constant 1 : i32
      %100 = arith.addi %99, %c1_i32_58 : i32
      %cst_59 = arith.constant 0.000000e+00 : f32
      %101 = vector.broadcast %cst_59 : f32 to vector<36x32xf32>
      %c0_i32_60 = arith.constant 0 : i32
      %102 = arith.addi %100, %c0_i32_60 : i32
      %103 = arith.index_cast %102 : i32 to index
      %c0_61 = arith.constant 0 : index
      %c0_62 = arith.constant 0 : index
      %104 = vector.load %arg8[%103, %c0_61, %c0_62] : memref<38x38x16xf32, #tpu.memory_space<vmem>>, vector<1x38x16xf32>
      %105 = vector.shape_cast %104 : vector<1x38x16xf32> to vector<38x16xf32>
      %106 = vector.extract_strided_slice %105 {offsets = [0, 0], sizes = [36, 16], strides = [1, 1]} : vector<38x16xf32> to vector<36x16xf32>
      %107 = vector.extract_strided_slice %105 {offsets = [1, 0], sizes = [36, 16], strides = [1, 1]} : vector<38x16xf32> to vector<36x16xf32>
      %108 = vector.extract_strided_slice %105 {offsets = [2, 0], sizes = [36, 16], strides = [1, 1]} : vector<38x16xf32> to vector<36x16xf32>
      %109 = tpu.concatenate %106, %107, %108 in 1 : vector<36x16xf32>, vector<36x16xf32>, vector<36x16xf32> -> vector<36x48xf32>
      %cst_63 = arith.constant dense<0.000000e+00> : vector<36x32xf32>
      %110 = tpu.matmul %109, %36, %cst_63 {dimension_numbers = #tpu.dot_dimension_numbers<[1], [0], [0], [1], [0, 0, 1, 1], [], []>} : vector<36x48xf32>, vector<48x32xf32>, vector<36x32xf32> -> vector<36x32xf32>
      %111 = arith.addf %101, %110 : vector<36x32xf32>
      %c1_i32_64 = arith.constant 1 : i32
      %112 = arith.addi %100, %c1_i32_64 : i32
      %113 = arith.index_cast %112 : i32 to index
      %c0_65 = arith.constant 0 : index
      %c0_66 = arith.constant 0 : index
      %114 = vector.load %arg8[%113, %c0_65, %c0_66] : memref<38x38x16xf32, #tpu.memory_space<vmem>>, vector<1x38x16xf32>
      %115 = vector.shape_cast %114 : vector<1x38x16xf32> to vector<38x16xf32>
      %116 = vector.extract_strided_slice %115 {offsets = [0, 0], sizes = [36, 16], strides = [1, 1]} : vector<38x16xf32> to vector<36x16xf32>
      %117 = vector.extract_strided_slice %115 {offsets = [1, 0], sizes = [36, 16], strides = [1, 1]} : vector<38x16xf32> to vector<36x16xf32>
      %118 = vector.extract_strided_slice %115 {offsets = [2, 0], sizes = [36, 16], strides = [1, 1]} : vector<38x16xf32> to vector<36x16xf32>
      %119 = tpu.concatenate %116, %117, %118 in 1 : vector<36x16xf32>, vector<36x16xf32>, vector<36x16xf32> -> vector<36x48xf32>
      %cst_67 = arith.constant dense<0.000000e+00> : vector<36x32xf32>
      %120 = tpu.matmul %119, %38, %cst_67 {dimension_numbers = #tpu.dot_dimension_numbers<[1], [0], [0], [1], [0, 0, 1, 1], [], []>} : vector<36x48xf32>, vector<48x32xf32>, vector<36x32xf32> -> vector<36x32xf32>
      %121 = arith.addf %111, %120 : vector<36x32xf32>
      %c2_i32_68 = arith.constant 2 : i32
      %122 = arith.addi %100, %c2_i32_68 : i32
      %123 = arith.index_cast %122 : i32 to index
      %c0_69 = arith.constant 0 : index
      %c0_70 = arith.constant 0 : index
      %124 = vector.load %arg8[%123, %c0_69, %c0_70] : memref<38x38x16xf32, #tpu.memory_space<vmem>>, vector<1x38x16xf32>
      %125 = vector.shape_cast %124 : vector<1x38x16xf32> to vector<38x16xf32>
      %126 = vector.extract_strided_slice %125 {offsets = [0, 0], sizes = [36, 16], strides = [1, 1]} : vector<38x16xf32> to vector<36x16xf32>
      %127 = vector.extract_strided_slice %125 {offsets = [1, 0], sizes = [36, 16], strides = [1, 1]} : vector<38x16xf32> to vector<36x16xf32>
      %128 = vector.extract_strided_slice %125 {offsets = [2, 0], sizes = [36, 16], strides = [1, 1]} : vector<38x16xf32> to vector<36x16xf32>
      %129 = tpu.concatenate %126, %127, %128 in 1 : vector<36x16xf32>, vector<36x16xf32>, vector<36x16xf32> -> vector<36x48xf32>
      %cst_71 = arith.constant dense<0.000000e+00> : vector<36x32xf32>
      %130 = tpu.matmul %129, %40, %cst_71 {dimension_numbers = #tpu.dot_dimension_numbers<[1], [0], [0], [1], [0, 0, 1, 1], [], []>} : vector<36x48xf32>, vector<48x32xf32>, vector<36x32xf32> -> vector<36x32xf32>
      %131 = arith.addf %121, %130 : vector<36x32xf32>
      %cst_72 = arith.constant 0.000000e+00 : f32
      %132 = vector.broadcast %cst_72 : f32 to vector<36x32xf32>
      %133 = arith.maximumf %131, %132 : vector<36x32xf32>
      %134 = arith.maximumf %98, %133 : vector<36x32xf32>
      %cst_73 = arith.constant dense<0.000000e+00> : vector<18x32xf32>
      %135 = tpu.matmul %27, %134, %cst_73 {dimension_numbers = #tpu.dot_dimension_numbers<[1], [0], [0], [1], [0, 0, 1, 1], [], []>} : vector<18x36xf32>, vector<36x32xf32>, vector<18x32xf32> -> vector<18x32xf32>
      %cst_74 = arith.constant dense<0.000000e+00> : vector<18x32xf32>
      %136 = tpu.matmul %34, %134, %cst_74 {dimension_numbers = #tpu.dot_dimension_numbers<[1], [0], [0], [1], [0, 0, 1, 1], [], []>} : vector<18x36xf32>, vector<36x32xf32>, vector<18x32xf32> -> vector<18x32xf32>
      %137 = arith.maximumf %135, %136 : vector<18x32xf32>
      %138 = arith.index_cast %arg10 : i32 to index
      %c0_75 = arith.constant 0 : index
      %c0_76 = arith.constant 0 : index
      %139 = vector.load %arg9[%138, %c0_75, %c0_76] : memref<18x18x32xf32, #tpu.memory_space<vmem>>, vector<1x18x32xf32>
      %140 = vector.shape_cast %139 : vector<1x18x32xf32> to vector<18x32xf32>
      %141 = vector.shape_cast %137 : vector<18x32xf32> to vector<1x18x32xf32>
      tpu.vector_store %arg9[%138, %c0_75, %c0_76], %141 {strides = array<i32>} : memref<18x18x32xf32, #tpu.memory_space<vmem>>, vector<1x18x32xf32>,
    }
    %c18_i32_23 = arith.constant 18 : i32
    %c0_24 = arith.constant 0 : index
    %c0_25 = arith.constant 0 : index
    %42 = vector.load %arg5[%c0_24, %c0_25] : memref<1x64xf32, #tpu.memory_space<vmem>>, vector<1x64xf32>
    %c0_26 = arith.constant 0 : index
    %c0_27 = arith.constant 0 : index
    %43 = vector.load %arg6[%c0_26, %c0_27] : memref<1x64xf32, #tpu.memory_space<vmem>>, vector<1x64xf32>
    %44 = tpu.iota {dimensions = array<i32: 0>} : vector<8x16xi32>
    %45 = tpu.iota {dimensions = array<i32: 1>} : vector<8x16xi32>
    %c2_i32_28 = arith.constant 2 : i32
    %46 = vector.broadcast %c2_i32_28 : i32 to vector<8x16xi32>
    %47 = arith.muli %46, %44 : vector<8x16xi32>
    %48 = arith.cmpi eq, %45, %47 : vector<8x16xi32>
    %49 = arith.extui %48 : vector<8x16xi1> to vector<8x16xi32>
    %50 = arith.sitofp %49 : vector<8x16xi32> to vector<8x16xf32>
    %c2_i32_29 = arith.constant 2 : i32
    %51 = vector.broadcast %c2_i32_29 : i32 to vector<8x16xi32>
    %52 = arith.muli %51, %44 : vector<8x16xi32>
    %c1_i32_30 = arith.constant 1 : i32
    %53 = vector.broadcast %c1_i32_30 : i32 to vector<8x16xi32>
    %54 = arith.addi %52, %53 : vector<8x16xi32>
    %55 = arith.cmpi eq, %45, %54 : vector<8x16xi32>
    %56 = arith.extui %55 : vector<8x16xi1> to vector<8x16xi32>
    %57 = arith.sitofp %56 : vector<8x16xi32> to vector<8x16xf32>
    %c0_31 = arith.constant 0 : index
    %c0_32 = arith.constant 0 : index
    %c0_33 = arith.constant 0 : index
    %58 = vector.load %arg4[%c0_31, %c0_32, %c0_33] : memref<3x96x64xf32, #tpu.memory_space<vmem>>, vector<1x96x64xf32>
    %59 = vector.shape_cast %58 : vector<1x96x64xf32> to vector<96x64xf32>
    %c1_34 = arith.constant 1 : index
    %c0_35 = arith.constant 0 : index
    %c0_36 = arith.constant 0 : index
    %60 = vector.load %arg4[%c1_34, %c0_35, %c0_36] : memref<3x96x64xf32, #tpu.memory_space<vmem>>, vector<1x96x64xf32>
    %61 = vector.shape_cast %60 : vector<1x96x64xf32> to vector<96x64xf32>
    %c2_37 = arith.constant 2 : index
    %c0_38 = arith.constant 0 : index
    %c0_39 = arith.constant 0 : index
    %62 = vector.load %arg4[%c2_37, %c0_38, %c0_39] : memref<3x96x64xf32, #tpu.memory_space<vmem>>, vector<1x96x64xf32>
    %63 = vector.shape_cast %62 : vector<1x96x64xf32> to vector<96x64xf32>
    %c0_i32_40 = arith.constant 0 : i32
    %c8_i32 = arith.constant 8 : i32
    %64 = arith.addi %c0_i32_40, %c8_i32 : i32
    %c1_i32_41 = arith.constant 1 : i32
    scf.for %arg10 = %c0_i32_40 to %64 step %c1_i32_41  : i32 {
      %c2_i32_43 = arith.constant 2 : i32
      %65 = arith.muli %c2_i32_43, %arg10 : i32
      %cst = arith.constant 0.000000e+00 : f32
      %66 = vector.broadcast %cst : f32 to vector<16x64xf32>
      %c0_i32_44 = arith.constant 0 : i32
      %67 = arith.addi %65, %c0_i32_44 : i32
      %68 = arith.index_cast %67 : i32 to index
      %c0_45 = arith.constant 0 : index
      %c0_46 = arith.constant 0 : index
      %69 = vector.load %arg9[%68, %c0_45, %c0_46] : memref<18x18x32xf32, #tpu.memory_space<vmem>>, vector<1x18x32xf32>
      %70 = vector.shape_cast %69 : vector<1x18x32xf32> to vector<18x32xf32>
      %71 = vector.extract_strided_slice %70 {offsets = [0, 0], sizes = [16, 32], strides = [1, 1]} : vector<18x32xf32> to vector<16x32xf32>
      %72 = vector.extract_strided_slice %70 {offsets = [1, 0], sizes = [16, 32], strides = [1, 1]} : vector<18x32xf32> to vector<16x32xf32>
      %73 = vector.extract_strided_slice %70 {offsets = [2, 0], sizes = [16, 32], strides = [1, 1]} : vector<18x32xf32> to vector<16x32xf32>
      %74 = tpu.concatenate %71, %72, %73 in 1 : vector<16x32xf32>, vector<16x32xf32>, vector<16x32xf32> -> vector<16x96xf32>
      %cst_47 = arith.constant dense<0.000000e+00> : vector<16x64xf32>
      %75 = tpu.matmul %74, %59, %cst_47 {dimension_numbers = #tpu.dot_dimension_numbers<[1], [0], [0], [1], [0, 0, 1, 1], [], []>} : vector<16x96xf32>, vector<96x64xf32>, vector<16x64xf32> -> vector<16x64xf32>
      %76 = arith.addf %66, %75 : vector<16x64xf32>
      %c1_i32_48 = arith.constant 1 : i32
      %77 = arith.addi %65, %c1_i32_48 : i32
      %78 = arith.index_cast %77 : i32 to index
      %c0_49 = arith.constant 0 : index
      %c0_50 = arith.constant 0 : index
      %79 = vector.load %arg9[%78, %c0_49, %c0_50] : memref<18x18x32xf32, #tpu.memory_space<vmem>>, vector<1x18x32xf32>
      %80 = vector.shape_cast %79 : vector<1x18x32xf32> to vector<18x32xf32>
      %81 = vector.extract_strided_slice %80 {offsets = [0, 0], sizes = [16, 32], strides = [1, 1]} : vector<18x32xf32> to vector<16x32xf32>
      %82 = vector.extract_strided_slice %80 {offsets = [1, 0], sizes = [16, 32], strides = [1, 1]} : vector<18x32xf32> to vector<16x32xf32>
      %83 = vector.extract_strided_slice %80 {offsets = [2, 0], sizes = [16, 32], strides = [1, 1]} : vector<18x32xf32> to vector<16x32xf32>
      %84 = tpu.concatenate %81, %82, %83 in 1 : vector<16x32xf32>, vector<16x32xf32>, vector<16x32xf32> -> vector<16x96xf32>
      %cst_51 = arith.constant dense<0.000000e+00> : vector<16x64xf32>
      %85 = tpu.matmul %84, %61, %cst_51 {dimension_numbers = #tpu.dot_dimension_numbers<[1], [0], [0], [1], [0, 0, 1, 1], [], []>} : vector<16x96xf32>, vector<96x64xf32>, vector<16x64xf32> -> vector<16x64xf32>
      %86 = arith.addf %76, %85 : vector<16x64xf32>
      %c2_i32_52 = arith.constant 2 : i32
      %87 = arith.addi %65, %c2_i32_52 : i32
      %88 = arith.index_cast %87 : i32 to index
      %c0_53 = arith.constant 0 : index
      %c0_54 = arith.constant 0 : index
      %89 = vector.load %arg9[%88, %c0_53, %c0_54] : memref<18x18x32xf32, #tpu.memory_space<vmem>>, vector<1x18x32xf32>
      %90 = vector.shape_cast %89 : vector<1x18x32xf32> to vector<18x32xf32>
      %91 = vector.extract_strided_slice %90 {offsets = [0, 0], sizes = [16, 32], strides = [1, 1]} : vector<18x32xf32> to vector<16x32xf32>
      %92 = vector.extract_strided_slice %90 {offsets = [1, 0], sizes = [16, 32], strides = [1, 1]} : vector<18x32xf32> to vector<16x32xf32>
      %93 = vector.extract_strided_slice %90 {offsets = [2, 0], sizes = [16, 32], strides = [1, 1]} : vector<18x32xf32> to vector<16x32xf32>
      %94 = tpu.concatenate %91, %92, %93 in 1 : vector<16x32xf32>, vector<16x32xf32>, vector<16x32xf32> -> vector<16x96xf32>
      %cst_55 = arith.constant dense<0.000000e+00> : vector<16x64xf32>
      %95 = tpu.matmul %94, %63, %cst_55 {dimension_numbers = #tpu.dot_dimension_numbers<[1], [0], [0], [1], [0, 0, 1, 1], [], []>} : vector<16x96xf32>, vector<96x64xf32>, vector<16x64xf32> -> vector<16x64xf32>
      %96 = arith.addf %86, %95 : vector<16x64xf32>
      %97 = vector.broadcast %42 : vector<1x64xf32> to vector<16x64xf32>
      %98 = arith.mulf %96, %97 : vector<16x64xf32>
      %99 = vector.broadcast %43 : vector<1x64xf32> to vector<16x64xf32>
      %100 = arith.addf %98, %99 : vector<16x64xf32>
      %cst_56 = arith.constant 0.000000e+00 : f32
      %101 = vector.broadcast %cst_56 : f32 to vector<16x64xf32>
      %102 = arith.maximumf %100, %101 : vector<16x64xf32>
      %c2_i32_57 = arith.constant 2 : i32
      %103 = arith.muli %c2_i32_57, %arg10 : i32
      %c1_i32_58 = arith.constant 1 : i32
      %104 = arith.addi %103, %c1_i32_58 : i32
      %cst_59 = arith.constant 0.000000e+00 : f32
      %105 = vector.broadcast %cst_59 : f32 to vector<16x64xf32>
      %c0_i32_60 = arith.constant 0 : i32
      %106 = arith.addi %104, %c0_i32_60 : i32
      %107 = arith.index_cast %106 : i32 to index
      %c0_61 = arith.constant 0 : index
      %c0_62 = arith.constant 0 : index
      %108 = vector.load %arg9[%107, %c0_61, %c0_62] : memref<18x18x32xf32, #tpu.memory_space<vmem>>, vector<1x18x32xf32>
      %109 = vector.shape_cast %108 : vector<1x18x32xf32> to vector<18x32xf32>
      %110 = vector.extract_strided_slice %109 {offsets = [0, 0], sizes = [16, 32], strides = [1, 1]} : vector<18x32xf32> to vector<16x32xf32>
      %111 = vector.extract_strided_slice %109 {offsets = [1, 0], sizes = [16, 32], strides = [1, 1]} : vector<18x32xf32> to vector<16x32xf32>
      %112 = vector.extract_strided_slice %109 {offsets = [2, 0], sizes = [16, 32], strides = [1, 1]} : vector<18x32xf32> to vector<16x32xf32>
      %113 = tpu.concatenate %110, %111, %112 in 1 : vector<16x32xf32>, vector<16x32xf32>, vector<16x32xf32> -> vector<16x96xf32>
      %cst_63 = arith.constant dense<0.000000e+00> : vector<16x64xf32>
      %114 = tpu.matmul %113, %59, %cst_63 {dimension_numbers = #tpu.dot_dimension_numbers<[1], [0], [0], [1], [0, 0, 1, 1], [], []>} : vector<16x96xf32>, vector<96x64xf32>, vector<16x64xf32> -> vector<16x64xf32>
      %115 = arith.addf %105, %114 : vector<16x64xf32>
      %c1_i32_64 = arith.constant 1 : i32
      %116 = arith.addi %104, %c1_i32_64 : i32
      %117 = arith.index_cast %116 : i32 to index
      %c0_65 = arith.constant 0 : index
      %c0_66 = arith.constant 0 : index
      %118 = vector.load %arg9[%117, %c0_65, %c0_66] : memref<18x18x32xf32, #tpu.memory_space<vmem>>, vector<1x18x32xf32>
      %119 = vector.shape_cast %118 : vector<1x18x32xf32> to vector<18x32xf32>
      %120 = vector.extract_strided_slice %119 {offsets = [0, 0], sizes = [16, 32], strides = [1, 1]} : vector<18x32xf32> to vector<16x32xf32>
      %121 = vector.extract_strided_slice %119 {offsets = [1, 0], sizes = [16, 32], strides = [1, 1]} : vector<18x32xf32> to vector<16x32xf32>
      %122 = vector.extract_strided_slice %119 {offsets = [2, 0], sizes = [16, 32], strides = [1, 1]} : vector<18x32xf32> to vector<16x32xf32>
      %123 = tpu.concatenate %120, %121, %122 in 1 : vector<16x32xf32>, vector<16x32xf32>, vector<16x32xf32> -> vector<16x96xf32>
      %cst_67 = arith.constant dense<0.000000e+00> : vector<16x64xf32>
      %124 = tpu.matmul %123, %61, %cst_67 {dimension_numbers = #tpu.dot_dimension_numbers<[1], [0], [0], [1], [0, 0, 1, 1], [], []>} : vector<16x96xf32>, vector<96x64xf32>, vector<16x64xf32> -> vector<16x64xf32>
      %125 = arith.addf %115, %124 : vector<16x64xf32>
      %c2_i32_68 = arith.constant 2 : i32
      %126 = arith.addi %104, %c2_i32_68 : i32
      %127 = arith.index_cast %126 : i32 to index
      %c0_69 = arith.constant 0 : index
      %c0_70 = arith.constant 0 : index
      %128 = vector.load %arg9[%127, %c0_69, %c0_70] : memref<18x18x32xf32, #tpu.memory_space<vmem>>, vector<1x18x32xf32>
      %129 = vector.shape_cast %128 : vector<1x18x32xf32> to vector<18x32xf32>
      %130 = vector.extract_strided_slice %129 {offsets = [0, 0], sizes = [16, 32], strides = [1, 1]} : vector<18x32xf32> to vector<16x32xf32>
      %131 = vector.extract_strided_slice %129 {offsets = [1, 0], sizes = [16, 32], strides = [1, 1]} : vector<18x32xf32> to vector<16x32xf32>
      %132 = vector.extract_strided_slice %129 {offsets = [2, 0], sizes = [16, 32], strides = [1, 1]} : vector<18x32xf32> to vector<16x32xf32>
      %133 = tpu.concatenate %130, %131, %132 in 1 : vector<16x32xf32>, vector<16x32xf32>, vector<16x32xf32> -> vector<16x96xf32>
      %cst_71 = arith.constant dense<0.000000e+00> : vector<16x64xf32>
      %134 = tpu.matmul %133, %63, %cst_71 {dimension_numbers = #tpu.dot_dimension_numbers<[1], [0], [0], [1], [0, 0, 1, 1], [], []>} : vector<16x96xf32>, vector<96x64xf32>, vector<16x64xf32> -> vector<16x64xf32>
      %135 = arith.addf %125, %134 : vector<16x64xf32>
      %136 = vector.broadcast %42 : vector<1x64xf32> to vector<16x64xf32>
      %137 = arith.mulf %135, %136 : vector<16x64xf32>
      %138 = vector.broadcast %43 : vector<1x64xf32> to vector<16x64xf32>
      %139 = arith.addf %137, %138 : vector<16x64xf32>
      %cst_72 = arith.constant 0.000000e+00 : f32
      %140 = vector.broadcast %cst_72 : f32 to vector<16x64xf32>
      %141 = arith.maximumf %139, %140 : vector<16x64xf32>
      %142 = arith.maximumf %102, %141 : vector<16x64xf32>
      %cst_73 = arith.constant dense<0.000000e+00> : vector<8x64xf32>
      %143 = tpu.matmul %50, %142, %cst_73 {dimension_numbers = #tpu.dot_dimension_numbers<[1], [0], [0], [1], [0, 0, 1, 1], [], []>} : vector<8x16xf32>, vector<16x64xf32>, vector<8x64xf32> -> vector<8x64xf32>
      %cst_74 = arith.constant dense<0.000000e+00> : vector<8x64xf32>
      %144 = tpu.matmul %57, %142, %cst_74 {dimension_numbers = #tpu.dot_dimension_numbers<[1], [0], [0], [1], [0, 0, 1, 1], [], []>} : vector<8x16xf32>, vector<16x64xf32>, vector<8x64xf32> -> vector<8x64xf32>
      %145 = arith.maximumf %143, %144 : vector<8x64xf32>
      %c0_75 = arith.constant 0 : index
      %146 = arith.index_cast %arg10 : i32 to index
      %c0_76 = arith.constant 0 : index
      %c0_77 = arith.constant 0 : index
      %147 = vector.load %arg7[%c0_75, %146, %c0_76, %c0_77] : memref<1x8x8x64xf32, #tpu.memory_space<vmem>>, vector<1x1x8x64xf32>
      %148 = vector.shape_cast %147 : vector<1x1x8x64xf32> to vector<8x64xf32>
      %149 = vector.shape_cast %145 : vector<8x64xf32> to vector<1x1x8x64xf32>
      tpu.vector_store %arg7[%c0_75, %146, %c0_76, %c0_77], %149 {strides = array<i32>} : memref<1x8x8x64xf32, #tpu.memory_space<vmem>>, vector<1x1x8x64xf32>,
    }
    %c8_i32_42 = arith.constant 8 : i32
    return
  }
  func.func @transform_0(%arg0: i32) -> (i32, i32, i32, i32) {
    %c0_i32 = arith.constant 0 : i32
    %c0_i32_0 = arith.constant 0 : i32
    %c0_i32_1 = arith.constant 0 : i32
    %c0_i32_2 = arith.constant 0 : i32
    return %arg0, %c0_i32, %c0_i32_0, %c0_i32_1 : i32, i32, i32, i32
  }
  func.func @transform_1(%arg0: i32) -> (i32, i32, i32) {
    %c0_i32 = arith.constant 0 : i32
    %c0_i32_0 = arith.constant 0 : i32
    %c0_i32_1 = arith.constant 0 : i32
    %c0_i32_2 = arith.constant 0 : i32
    return %c0_i32, %c0_i32_0, %c0_i32_1 : i32, i32, i32
  }
  func.func @transform_2(%arg0: i32) -> (i32, i32, i32) {
    %c0_i32 = arith.constant 0 : i32
    %c0_i32_0 = arith.constant 0 : i32
    %c0_i32_1 = arith.constant 0 : i32
    %c0_i32_2 = arith.constant 0 : i32
    return %c0_i32, %c0_i32_0, %c0_i32_1 : i32, i32, i32
  }
  func.func @transform_3(%arg0: i32) -> (i32, i32, i32) {
    %c0_i32 = arith.constant 0 : i32
    %c0_i32_0 = arith.constant 0 : i32
    %c0_i32_1 = arith.constant 0 : i32
    %c0_i32_2 = arith.constant 0 : i32
    return %c0_i32, %c0_i32_0, %c0_i32_1 : i32, i32, i32
  }
  func.func @transform_4(%arg0: i32) -> (i32, i32) {
    %c0_i32 = arith.constant 0 : i32
    %c0_i32_0 = arith.constant 0 : i32
    %c0_i32_1 = arith.constant 0 : i32
    return %c0_i32, %c0_i32_0 : i32, i32
  }
  func.func @transform_5(%arg0: i32) -> (i32, i32) {
    %c0_i32 = arith.constant 0 : i32
    %c0_i32_0 = arith.constant 0 : i32
    %c0_i32_1 = arith.constant 0 : i32
    return %c0_i32, %c0_i32_0 : i32, i32
  }
  func.func @transform_6(%arg0: i32) -> (i32, i32, i32, i32) {
    %c0_i32 = arith.constant 0 : i32
    %c0_i32_0 = arith.constant 0 : i32
    %c0_i32_1 = arith.constant 0 : i32
    %c0_i32_2 = arith.constant 0 : i32
    return %arg0, %c0_i32, %c0_i32_0, %c0_i32_1 : i32, i32, i32, i32
  }
}

module attributes {stable_mosaic.version = 11 : i64} {
  func.func @_mlp_head_kernel(%arg0: memref<2x4096xf32, #tpu.memory_space<vmem>>, %arg1: memref<4096x200xbf16, #tpu.memory_space<vmem>>, %arg2: memref<1x200xf32, #tpu.memory_space<vmem>>, %arg3: memref<200x10xf32, #tpu.memory_space<vmem>>, %arg4: memref<1x10xf32, #tpu.memory_space<vmem>>, %arg5: memref<2x10xf32, #tpu.memory_space<vmem>>) attributes {dimension_semantics = [], scalar_prefetch = 0 : i64, scratch_operands = 0 : i64, tpu.core_type = #tpu.core_type<tc>} {
    %c0 = arith.constant 0 : index
    %c0_0 = arith.constant 0 : index
    %0 = vector.load %arg0[%c0, %c0_0] : memref<2x4096xf32, #tpu.memory_space<vmem>>, vector<2x4096xf32>
    %1 = arith.truncf %0 : vector<2x4096xf32> to vector<2x4096xbf16>
    %c0_1 = arith.constant 0 : index
    %c0_2 = arith.constant 0 : index
    %2 = vector.load %arg1[%c0_1, %c0_2] : memref<4096x200xbf16, #tpu.memory_space<vmem>>, vector<4096x200xbf16>
    %cst = arith.constant dense<0.000000e+00> : vector<2x200xf32>
    %3 = tpu.matmul %1, %2, %cst {dimension_numbers = #tpu.dot_dimension_numbers<[1], [0], [0], [1], [0, 0, 1, 1], [], []>} : vector<2x4096xbf16>, vector<4096x200xbf16>, vector<2x200xf32> -> vector<2x200xf32>
    %c0_3 = arith.constant 0 : index
    %c0_4 = arith.constant 0 : index
    %4 = vector.load %arg2[%c0_3, %c0_4] : memref<1x200xf32, #tpu.memory_space<vmem>>, vector<1x200xf32>
    %5 = vector.broadcast %4 : vector<1x200xf32> to vector<2x200xf32>
    %6 = arith.addf %3, %5 : vector<2x200xf32>
    %cst_5 = arith.constant 0.000000e+00 : f32
    %7 = vector.broadcast %cst_5 : f32 to vector<2x200xf32>
    %8 = arith.maximumf %6, %7 : vector<2x200xf32>
    %c0_6 = arith.constant 0 : index
    %c0_7 = arith.constant 0 : index
    %9 = vector.load %arg3[%c0_6, %c0_7] : memref<200x10xf32, #tpu.memory_space<vmem>>, vector<200x10xf32>
    %cst_8 = arith.constant dense<0.000000e+00> : vector<2x10xf32>
    %10 = tpu.matmul %8, %9, %cst_8 {dimension_numbers = #tpu.dot_dimension_numbers<[1], [0], [0], [1], [0, 0, 1, 1], [], []>} : vector<2x200xf32>, vector<200x10xf32>, vector<2x10xf32> -> vector<2x10xf32>
    %c0_9 = arith.constant 0 : index
    %c0_10 = arith.constant 0 : index
    %11 = vector.load %arg4[%c0_9, %c0_10] : memref<1x10xf32, #tpu.memory_space<vmem>>, vector<1x10xf32>
    %12 = vector.broadcast %11 : vector<1x10xf32> to vector<2x10xf32>
    %13 = arith.addf %10, %12 : vector<2x10xf32>
    %14 = arith.negf %13 : vector<2x10xf32>
    %15 = math.exp %14 : vector<2x10xf32>
    %cst_11 = arith.constant 1.000000e+00 : f32
    %16 = vector.broadcast %cst_11 : f32 to vector<2x10xf32>
    %17 = arith.addf %16, %15 : vector<2x10xf32>
    %18 = arith.divf %16, %17 : vector<2x10xf32>
    %c0_12 = arith.constant 0 : index
    %c0_13 = arith.constant 0 : index
    %19 = vector.load %arg5[%c0_12, %c0_13] : memref<2x10xf32, #tpu.memory_space<vmem>>, vector<2x10xf32>
    tpu.vector_store %arg5[%c0_12, %c0_13], %18 {strides = array<i32>} : memref<2x10xf32, #tpu.memory_space<vmem>>, vector<2x10xf32>,
    return
  }
}

</mosaic_0001>

<llo_original>
// kernel: cnn_forward.2
$region0: #{cnn_forward.2}
  #allocation0 [shape = 'u32[]', space=smem, size = 0x4, offset = 0x4, fixed_abs, tag = 'smem constant byte address 0x4 - core index']
  #allocation1 [shape = 'u32[144,128]{1,0:T(1,128)}', space=vmem, size = 0x12000, scoped, tag = 'internal scratch']
  #allocation2 [shape = 'f32[38,38,16]{2,1,0:T(8,128)}', space=vmem, size = 0xbe000, scoped, tag = 'scratch operand']
  #allocation3 [shape = 'f32[18,18,32]{2,1,0:T(8,128)}', space=vmem, size = 0x36000, scoped, tag = 'scratch operand']
  %s0 = inlined_call_operand.vmem [shape: f32[2,78,78,3], index: 0, kind: input, shape index: {}]
  %s1 = inlined_call_operand.vmem [shape: f32[3,9,16], index: 1, kind: input, shape index: {}]
  %s2 = inlined_call_operand.vmem [shape: f32[3,48,32], index: 2, kind: input, shape index: {}]
  %s3 = inlined_call_operand.vmem [shape: f32[3,96,64], index: 3, kind: input, shape index: {}]
  %s4 = inlined_call_operand.vmem [shape: f32[1,64], index: 4, kind: input, shape index: {}]
  %s5 = inlined_call_operand.vmem [shape: f32[1,64], index: 5, kind: input, shape index: {}]
  %s6 = inlined_call_operand.vmem [shape: f32[2,8,8,64], index: 6, kind: output, shape index: {}]
  %s7 = sld [smem:[#allocation0]]
  $region78: #{cnn_forward.2} parent=0
    _
  %s9 = ssub.s32 1, %s7
  %s10 = scalar_select 0, %s9, %s7
  loop: start=0, step=1, limit=4
  $region2: #{cnn_forward.2} parent=0 // loop_pre_header
    _
  $region3: #{cnn_forward.2} parent=0 // loop_header
    %s12 = sphi 0, %s16
    %p13 = scmp.ge.s32.totalorder %s12, 4
    %s22 = sphi 0, %s24
    %s25 = sphi 0, %s22
    %s26 = sphi 0, %s25
    %s42 = sphi 0, %s26
    %s46 = sphi 0, %s46
    %s48 = sphi 0, %s46
    %s49 = sphi 0, %s48
    %s63 = sphi 0, %s49
    %s67 = sphi 0, %s67
    %s69 = sphi 0, %s67
    %s70 = sphi 0, %s69
    %s84 = sphi 0, %s70
    %s88 = sphi 0, %s88
    %s90 = sphi 0, %s88
    %s91 = sphi 0, %s90
    %s105 = sphi 0, %s91
    %s109 = sphi 0, %s109
    %s111 = sphi 0, %s109
    %s112 = sphi 0, %s111
    %s126 = sphi 0, %s112
    %s130 = sphi 0, %s130
    %s132 = sphi 0, %s130
    %s133 = sphi 0, %s132
    %s147 = sphi 0, %s133
    %s153 = sphi 0, %s155
    %s156 = sphi 0, %s153
    %s157 = sphi 0, %s156
    %s173 = sphi 0, %s157
  $region4: #{cnn_forward.2} parent=0 // loop_header_branch
    %15 = sbr.rel (%p13) target = $region8
  $region5: #{cnn_forward.2} parent=0 // loop_body
    %s17 = ssub.s32 %s12, 1
    %s18 = ssub.s32 %s12, 2
    %s19 = sadd.s32 %s12, 1
    %s20 = ssub.s32 %s12, %s19
    %p21 = scmp.eq.s32.totalorder %s20, 0
    %s23 = sadd.s32 %s22, 1
    %s24 = scalar_select %p21, %s22, %s23
    %p27 = pneg %p21
    %p28 = scmp.eq.s32.totalorder %s12, 1
    %p29 = por %p27, %p28
    %p30 = scmp.ne.s32.totalorder %s22, %s25
    %p31 = scmp.eq.s32.totalorder %s12, 0
    %p32 = por %p30, %p31
    %p33 = scmp.ne.s32.totalorder %s22, %s25
    %p34 = scmp.eq.s32.totalorder %s17, 1
    %p35 = por %p33, %p34
    %p36 = scmp.ne.s32.totalorder %s25, %s26
    %p37 = scmp.eq.s32.totalorder %s17, 0
    %p38 = por %p36, %p37
    %p39 = scmp.ne.s32.totalorder %s25, %s26
    %p40 = scmp.eq.s32.totalorder %s18, 1
    %p41 = por %p39, %p40
    %p43 = scmp.ne.s32.totalorder %s26, %s42
    %p44 = scmp.eq.s32.totalorder %s18, 0
    %p45 = por %p43, %p44
    %s47 = sadd.s32 %s46, 1
    %p50 = scmp.eq.s32.totalorder %s12, 1
    %p51 = scmp.ne.s32.totalorder %s46, %s48
    %p52 = scmp.eq.s32.totalorder %s12, 0
    %p53 = por %p51, %p52
    %p54 = scmp.ne.s32.totalorder %s46, %s48
    %p55 = scmp.eq.s32.totalorder %s17, 1
    %p56 = por %p54, %p55
    %p57 = scmp.ne.s32.totalorder %s48, %s49
    %p58 = scmp.eq.s32.totalorder %s17, 0
    %p59 = por %p57, %p58
    %p60 = scmp.ne.s32.totalorder %s48, %s49
    %p61 = scmp.eq.s32.totalorder %s18, 1
    %p62 = por %p60, %p61
    %p64 = scmp.ne.s32.totalorder %s49, %s63
    %p65 = scmp.eq.s32.totalorder %s18, 0
    %p66 = por %p64, %p65
    %s68 = sadd.s32 %s67, 1
    %p71 = scmp.eq.s32.totalorder %s12, 1
    %p72 = scmp.ne.s32.totalorder %s67, %s69
    %p73 = scmp.eq.s32.totalorder %s12, 0
    %p74 = por %p72, %p73
    %p75 = scmp.ne.s32.totalorder %s67, %s69
    %p76 = scmp.eq.s32.totalorder %s17, 1
    %p77 = por %p75, %p76
    %p78 = scmp.ne.s32.totalorder %s69, %s70
    %p79 = scmp.eq.s32.totalorder %s17, 0
    %p80 = por %p78, %p79
    %p81 = scmp.ne.s32.totalorder %s69, %s70
    %p82 = scmp.eq.s32.totalorder %s18, 1
    %p83 = por %p81, %p82
    %p85 = scmp.ne.s32.totalorder %s70, %s84
    %p86 = scmp.eq.s32.totalorder %s18, 0
    %p87 = por %p85, %p86
    %s89 = sadd.s32 %s88, 1
    %p92 = scmp.eq.s32.totalorder %s12, 1
    %p93 = scmp.ne.s32.totalorder %s88, %s90
    %p94 = scmp.eq.s32.totalorder %s12, 0
    %p95 = por %p93, %p94
    %p96 = scmp.ne.s32.totalorder %s88, %s90
    %p97 = scmp.eq.s32.totalorder %s17, 1
    %p98 = por %p96, %p97
    %p99 = scmp.ne.s32.totalorder %s90, %s91
    %p100 = scmp.eq.s32.totalorder %s17, 0
    %p101 = por %p99, %p100
    %p102 = scmp.ne.s32.totalorder %s90, %s91
    %p103 = scmp.eq.s32.totalorder %s18, 1
    %p104 = por %p102, %p103
    %p106 = scmp.ne.s32.totalorder %s91, %s105
    %p107 = scmp.eq.s32.totalorder %s18, 0
    %p108 = por %p106, %p107
    %s110 = sadd.s32 %s109, 1
    %p113 = scmp.eq.s32.totalorder %s12, 1
    %p114 = scmp.ne.s32.totalorder %s109, %s111
    %p115 = scmp.eq.s32.totalorder %s12, 0
    %p116 = por %p114, %p115
    %p117 = scmp.ne.s32.totalorder %s109, %s111
    %p118 = scmp.eq.s32.totalorder %s17, 1
    %p119 = por %p117, %p118
    %p120 = scmp.ne.s32.totalorder %s111, %s112
    %p121 = scmp.eq.s32.totalorder %s17, 0
    %p122 = por %p120, %p121
    %p123 = scmp.ne.s32.totalorder %s111, %s112
    %p124 = scmp.eq.s32.totalorder %s18, 1
    %p125 = por %p123, %p124
    %p127 = scmp.ne.s32.totalorder %s112, %s126
    %p128 = scmp.eq.s32.totalorder %s18, 0
    %p129 = por %p127, %p128
    %s131 = sadd.s32 %s130, 1
    %p134 = scmp.eq.s32.totalorder %s12, 1
    %p135 = scmp.ne.s32.totalorder %s130, %s132
    %p136 = scmp.eq.s32.totalorder %s12, 0
    %p137 = por %p135, %p136
    %p138 = scmp.ne.s32.totalorder %s130, %s132
    %p139 = scmp.eq.s32.totalorder %s17, 1
    %p140 = por %p138, %p139
    %p141 = scmp.ne.s32.totalorder %s132, %s133
    %p142 = scmp.eq.s32.totalorder %s17, 0
    %p143 = por %p141, %p142
    %p144 = scmp.ne.s32.totalorder %s132, %s133
    %p145 = scmp.eq.s32.totalorder %s18, 1
    %p146 = por %p144, %p145
    %p148 = scmp.ne.s32.totalorder %s133, %s147
    %p149 = scmp.eq.s32.totalorder %s18, 0
    %p150 = por %p148, %p149
    %s151 = ssub.s32 %s12, %s19
    %p152 = scmp.eq.s32.totalorder %s151, 0
    %s154 = sadd.s32 %s153, 1
    %s155 = scalar_select %p152, %s153, %s154
    %p158 = pneg %p152
    %p159 = scmp.eq.s32.totalorder %s12, 1
    %p160 = por %p158, %p159
    %p161 = scmp.ne.s32.totalorder %s153, %s156
    %p162 = scmp.eq.s32.totalorder %s12, 0
    %p163 = por %p161, %p162
    %p164 = scmp.ne.s32.totalorder %s153, %s156
    %p165 = scmp.eq.s32.totalorder %s17, 1
    %p166 = por %p164, %p165
    %p167 = scmp.ne.s32.totalorder %s156, %s157
    %p168 = scmp.eq.s32.totalorder %s17, 0
    %p169 = por %p167, %p168
    %p170 = scmp.ne.s32.totalorder %s156, %s157
    %p171 = scmp.eq.s32.totalorder %s18, 1
    %p172 = por %p170, %p171
    %p174 = scmp.ne.s32.totalorder %s157, %s173
    %p175 = scmp.eq.s32.totalorder %s18, 0
    %p176 = por %p174, %p175
    %p177 = scmp.le.s32.totalorder 1, %s12
    %p178 = scmp.lt.s32.totalorder %s12, 3
    %p179 = pnand %p177, %p178
    %p180 = pneg %p179
    // Predicated region
    $region9: #{cnn_forward.2} parent=5 // pred_check
      _
    $region10: #{cnn_forward.2} parent=5 // pred_check_branch
      %182 = sbr.rel (%p179) target = $region12
    $region11: #{cnn_forward.2} parent=5 // pred_region
      %s183 = ssub.s32 %s12, 1
      // Predicated region
      $region13: #{cnn_forward.2} parent=11 // pred_check
        %p184 = pneg %p59
      $region14: #{cnn_forward.2} parent=11 // pred_check_branch
        %186 = sbr.rel (%p184) target = $region16
      $region15: #{cnn_forward.2} parent=11 // pred_region
        _
      $region16: #{cnn_forward.2} parent=11 // pred_fallthru
        _
      // Predicated region
      $region17: #{cnn_forward.2} parent=11 // pred_check
        %p187 = pneg %p80
      $region18: #{cnn_forward.2} parent=11 // pred_check_branch
        %189 = sbr.rel (%p187) target = $region20
      $region19: #{cnn_forward.2} parent=11 // pred_region
        _
      $region20: #{cnn_forward.2} parent=11 // pred_fallthru
        _
      // Predicated region
      $region21: #{cnn_forward.2} parent=11 // pred_check
        %p190 = pneg %p101
      $region22: #{cnn_forward.2} parent=11 // pred_check_branch
        %192 = sbr.rel (%p190) target = $region24
      $region23: #{cnn_forward.2} parent=11 // pred_region
        _
      $region24: #{cnn_forward.2} parent=11 // pred_fallthru
        _
      // Predicated region
      $region25: #{cnn_forward.2} parent=11 // pred_check
        %p193 = pneg %p122
      $region26: #{cnn_forward.2} parent=11 // pred_check_branch
        %195 = sbr.rel (%p193) target = $region28
      $region27: #{cnn_forward.2} parent=11 // pred_region
        _
      $region28: #{cnn_forward.2} parent=11 // pred_fallthru
        _
      // Predicated region
      $region29: #{cnn_forward.2} parent=11 // pred_check
        %p196 = pneg %p143
      $region30: #{cnn_forward.2} parent=11 // pred_check_branch
        %198 = sbr.rel (%p196) target = $region32
      $region31: #{cnn_forward.2} parent=11 // pred_region
        _
      $region32: #{cnn_forward.2} parent=11 // pred_fallthru
        _
    $region12: #{cnn_forward.2} parent=5 // pred_fallthru
      _
    %p199 = scmp.lt.s32.totalorder %s12, 2
    // Predicated region
    $region33: #{cnn_forward.2} parent=5 // pred_check
      %p200 = pneg %p199
    $region34: #{cnn_forward.2} parent=5 // pred_check_branch
      %202 = sbr.rel (%p200) target = $region36
    $region35: #{cnn_forward.2} parent=5 // pred_region
      // Predicated region
      $region37: #{cnn_forward.2} parent=35 // pred_check
        %p203 = pneg %p32
      $region38: #{cnn_forward.2} parent=35 // pred_check_branch
        %205 = sbr.rel (%p203) target = $region40
      $region39: #{cnn_forward.2} parent=35 // pred_region
        %p206 = scmp.lt.s32.totalorder %s12, 1
        %s207 = scalar_select %p206, %s12, 1
        %s208 = smul.addr %s207, 780
        %s209 = smul.addr %s208, 8
        %s210 = scalar_lea.vmem %s0, %s209
      $region40: #{cnn_forward.2} parent=35 // pred_fallthru
        _
    $region36: #{cnn_forward.2} parent=5 // pred_fallthru
      _
    %p211 = scmp.le.s32.totalorder 1, %s12
    %p212 = scmp.lt.s32.totalorder %s12, 3
    %p213 = pnand %p211, %p212
    %p214 = pneg %p213
    // Predicated region
    $region41: #{cnn_forward.2} parent=5 // pred_check
      _
    $region42: #{cnn_forward.2} parent=5 // pred_check_branch
      %216 = sbr.rel (%p213) target = $region44
    $region43: #{cnn_forward.2} parent=5 // pred_region
      %s217 = ssub.s32 %s12, 1
      %p218 = scmp.lt.s32.totalorder %s17, 1
      %s219 = scalar_select %p218, %s17, 1
      %s220 = smul.addr %s219, 780
      %s221 = smul.addr %s220, 8
      %s222 = scalar_lea.vmem %s0, %s221
      %p223 = pneg %p38
      %p224 = pneg %p35
      %p225 = pneg %p59
      %p226 = pneg %p56
      %p227 = pneg %p80
      %p228 = pneg %p77
      %p229 = pneg %p101
      %p230 = pneg %p98
      %p231 = pneg %p122
      %p232 = pneg %p119
      %p233 = pneg %p143
      %p234 = pneg %p140
      %p235 = pneg %p169
      %p236 = pneg %p166
      %p237 = scmp.lt.s32.totalorder %s17, 1
      %s238 = scalar_select %p237, %s17, 1
      %s239 = smul.addr %s238, 8
      %s240 = smul.addr %s239, 8
      %s241 = scalar_lea.vmem %s6, %s240
      %p242 = scmp.lt.s32.totalorder %s17, 1
      %s243 = scalar_select %p242, %s17, 1
      %s244 = smul.addr %s243, 780
      %s245 = smul.addr %s244, 8
      %s246 = scalar_lea.vmem %s0, %s245
      %p247 = scmp.lt.s32.totalorder %s17, 1
      %s248 = scalar_select %p247, %s17, 1
      %s249 = smul.addr %s248, 8
      %s250 = smul.addr %s249, 8
      %s251 = scalar_lea.vmem %s6, %s250
      %v252 = vlaneseq
      %v253 = vshrl.u32 %v252, 7
      %v254 = vadd.s32 %v253, 8
      %v255 = vadd.s32 %v253, 16
      %v256 = vadd.s32 %v253, 24
      %v257 = vadd.s32 %v253, 32
      %v258 = vlaneseq
      %v259 = vand.u32 %v258, 127
      %v260 = vmul.u32 %v253, 2
      %v261 = vmul.u32 %v254, 2
      %v262 = vmul.u32 %v255, 2
      %v263 = vmul.u32 %v256, 2
      %v264 = vmul.u32 %v257, 2
      %vm265 = vcmp.eq.s32.totalorder %v259, %v260
      %vm266 = vcmp.eq.s32.totalorder %v259, %v261
      %vm267 = vcmp.eq.s32.totalorder %v259, %v262
      %vm268 = vcmp.eq.s32.totalorder %v259, %v263
      %vm269 = vcmp.eq.s32.totalorder %v259, %v264
      %v270 = vsel %vm265, 1, 0
      %v271 = vsel %vm266, 1, 0
      %v272 = vsel %vm267, 1, 0
      %v273 = vsel %vm268, 1, 0
      %v274 = vsel %vm269, 1, 0
      %v275 = vcvt.s32.f32 %v270
      %v276 = vcvt.s32.f32 %v271
      %v277 = vcvt.s32.f32 %v272
      %v278 = vcvt.s32.f32 %v273
      %v279 = vcvt.s32.f32 %v274
      %v280 = vadd.s32 %v260, 1
      %v281 = vadd.s32 %v261, 1
      %v282 = vadd.s32 %v262, 1
      %v283 = vadd.s32 %v263, 1
      %v284 = vadd.s32 %v264, 1
      %vm285 = vcmp.eq.s32.totalorder %v259, %v280
      %vm286 = vcmp.eq.s32.totalorder %v259, %v281
      %vm287 = vcmp.eq.s32.totalorder %v259, %v282
      %vm288 = vcmp.eq.s32.totalorder %v259, %v283
      %vm289 = vcmp.eq.s32.totalorder %v259, %v284
      %v290 = vsel %vm285, 1, 0
      %v291 = vsel %vm286, 1, 0
      %v292 = vsel %vm287, 1, 0
      %v293 = vsel %vm288, 1, 0
      %v294 = vsel %vm289, 1, 0
      %v295 = vcvt.s32.f32 %v290
      %v296 = vcvt.s32.f32 %v291
      %v297 = vcvt.s32.f32 %v292
      %v298 = vcvt.s32.f32 %v293
      %v299 = vcvt.s32.f32 %v294
      %v300 = vld [vmem:[%s1] sm:$0xff]
      %v301 = vld [vmem:[%s1 + $0x8] sm:$0x1]
      %s302 = scalar_lea.vmem %s1, 16
      %v303 = vld [vmem:[%s302] sm:$0xff]
      %v304 = vld [vmem:[%s302 + $0x8] sm:$0x1]
      %s305 = scalar_lea.vmem %s1, 32
      %v306 = vld [vmem:[%s305] sm:$0xff]
      %v307 = vld [vmem:[%s305 + $0x8] sm:$0x1]
      loop: start=0, step=1, limit=38
      $region45: #{cnn_forward.2} parent=43 // loop_pre_header
        _
      $region46: #{cnn_forward.2} parent=43 // loop_header
        %s309 = sphi 0, %s313
        %p310 = scmp.ge.s32.totalorder %s309, 38
      $region47: #{cnn_forward.2} parent=43 // loop_header_branch
        %312 = sbr.rel (%p310) target = $region51
      $region48: #{cnn_forward.2} parent=43 // loop_body
        %s314 = smul.u32 %s309, 2
        %s315 = smul.u32 %s314, 80
        %s316 = scalar_lea.vmem %s246, %s315
        %v317 = vld [vmem:[%s316] sm:$0xff]
        %v318 = vld [vmem:[%s316 + $0x8] sm:$0xff]
        %v319 = vld [vmem:[%s316 + $0x10] sm:$0xff]
        %v320 = vld [vmem:[%s316 + $0x18] sm:$0xff]
        %v321 = vld [vmem:[%s316 + $0x20] sm:$0xff]
        %v322 = vld [vmem:[%s316 + $0x28] sm:$0xff]
        %v323 = vld [vmem:[%s316 + $0x30] sm:$0xff]
        %v324 = vld [vmem:[%s316 + $0x38] sm:$0xff]
        %v325 = vld [vmem:[%s316 + $0x40] sm:$0xff]
        %v326 = vld [vmem:[%s316 + $0x48] sm:$0x3f]
        %vm337 = vcmask 1046528
        %v338 = vrot.slane %v317, 1
        %v339 = vrot.slane %v318, 1
        %v340 = vsel %vm337, %v338, %v339
        %v341 = vrot.slane %v319, 1
        %v342 = vsel %vm337, %v339, %v341
        %v343 = vrot.slane %v320, 1
        %v344 = vsel %vm337, %v341, %v343
        %v345 = vrot.slane %v321, 1
        %v346 = vsel %vm337, %v343, %v345
        %v347 = vrot.slane %v322, 1
        %v348 = vsel %vm337, %v345, %v347
        %v349 = vrot.slane %v323, 1
        %v350 = vsel %vm337, %v347, %v349
        %v351 = vrot.slane %v324, 1
        %v352 = vsel %vm337, %v349, %v351
        %v353 = vrot.slane %v325, 1
        %v354 = vsel %vm337, %v351, %v353
        %v355 = vrot.slane %v326, 1
        %v356 = vsel %vm337, %v353, %v355
        %357 = vrot.lane.b32.xlu0 %v340, 3
        %v358 = vpop.permute.xlu0 %357
        %359 = vrot.lane.b32.xlu0 %v342, 3
        %v360 = vpop.permute.xlu0 %359
        %361 = vrot.lane.b32.xlu0 %v344, 3
        %v362 = vpop.permute.xlu0 %361
        %363 = vrot.lane.b32.xlu0 %v346, 3
        %v364 = vpop.permute.xlu0 %363
        %365 = vrot.lane.b32.xlu0 %v348, 3
        %v366 = vpop.permute.xlu0 %365
        %367 = vrot.lane.b32.xlu0 %v350, 3
        %v368 = vpop.permute.xlu0 %367
        %369 = vrot.lane.b32.xlu0 %v352, 3
        %v370 = vpop.permute.xlu0 %369
        %371 = vrot.lane.b32.xlu0 %v354, 3
        %v372 = vpop.permute.xlu0 %371
        %373 = vrot.lane.b32.xlu0 %v356, 3
        %v374 = vpop.permute.xlu0 %373
        %375 = vrot.lane.b32.xlu0 %v355, 3
        %v376 = vpop.permute.xlu0 %375
        %vm387 = vcmask 1045504
        %v388 = vrot.slane %v317, 2
        %v389 = vrot.slane %v318, 2
        %v390 = vsel %vm387, %v388, %v389
        %v391 = vrot.slane %v319, 2
        %v392 = vsel %vm387, %v389, %v391
        %v393 = vrot.slane %v320, 2
        %v394 = vsel %vm387, %v391, %v393
        %v395 = vrot.slane %v321, 2
        %v396 = vsel %vm387, %v393, %v395
        %v397 = vrot.slane %v322, 2
        %v398 = vsel %vm387, %v395, %v397
        %v399 = vrot.slane %v323, 2
        %v400 = vsel %vm387, %v397, %v399
        %v401 = vrot.slane %v324, 2
        %v402 = vsel %vm387, %v399, %v401
        %v403 = vrot.slane %v325, 2
        %v404 = vsel %vm387, %v401, %v403
        %v405 = vrot.slane %v326, 2
        %v406 = vsel %vm387, %v403, %v405
        %407 = vrot.lane.b32.xlu0 %v390, 6
        %v408 = vpop.permute.xlu0 %407
        %409 = vrot.lane.b32.xlu0 %v392, 6
        %v410 = vpop.permute.xlu0 %409
        %411 = vrot.lane.b32.xlu0 %v394, 6
        %v412 = vpop.permute.xlu0 %411
        %413 = vrot.lane.b32.xlu0 %v396, 6
        %v414 = vpop.permute.xlu0 %413
        %415 = vrot.lane.b32.xlu0 %v398, 6
        %v416 = vpop.permute.xlu0 %415
        %417 = vrot.lane.b32.xlu0 %v400, 6
        %v418 = vpop.permute.xlu0 %417
        %419 = vrot.lane.b32.xlu0 %v402, 6
        %v420 = vpop.permute.xlu0 %419
        %421 = vrot.lane.b32.xlu0 %v404, 6
        %v422 = vpop.permute.xlu0 %421
        %423 = vrot.lane.b32.xlu0 %v406, 6
        %v424 = vpop.permute.xlu0 %423
        %425 = vrot.lane.b32.xlu0 %v405, 6
        %v426 = vpop.permute.xlu0 %425
        %vm437 = vcmask 23552
        %v438 = vsel %vm437, %v317, %v358
        %v439 = vsel %vm437, %v318, %v360
        %v440 = vsel %vm437, %v319, %v362
        %v441 = vsel %vm437, %v320, %v364
        %v442 = vsel %vm437, %v321, %v366
        %v443 = vsel %vm437, %v322, %v368
        %v444 = vsel %vm437, %v323, %v370
        %v445 = vsel %vm437, %v324, %v372
        %v446 = vsel %vm437, %v325, %v374
        %v447 = vsel %vm437, %v326, %v376
        %vm448 = vcmask 48128
        %v449 = vsel %vm448, %v438, %v408
        %v450 = vsel %vm448, %v439, %v410
        %v451 = vsel %vm448, %v440, %v412
        %v452 = vsel %vm448, %v441, %v414
        %v453 = vsel %vm448, %v442, %v416
        %v454 = vsel %vm448, %v443, %v418
        %v455 = vsel %vm448, %v444, %v420
        %v456 = vsel %vm448, %v445, %v422
        %v457 = vsel %vm448, %v446, %v424
        %v458 = vsel %vm448, %v447, %v426
        %s459 = sadd.s32 %s314, 1
        %s460 = smul.u32 %s459, 80
        %s461 = scalar_lea.vmem %s246, %s460
        %v462 = vld [vmem:[%s461] sm:$0xff]
        %v463 = vld [vmem:[%s461 + $0x8] sm:$0xff]
        %v464 = vld [vmem:[%s461 + $0x10] sm:$0xff]
        %v465 = vld [vmem:[%s461 + $0x18] sm:$0xff]
        %v466 = vld [vmem:[%s461 + $0x20] sm:$0xff]
        %v467 = vld [vmem:[%s461 + $0x28] sm:$0xff]
        %v468 = vld [vmem:[%s461 + $0x30] sm:$0xff]
        %v469 = vld [vmem:[%s461 + $0x38] sm:$0xff]
        %v470 = vld [vmem:[%s461 + $0x40] sm:$0xff]
        %v471 = vld [vmem:[%s461 + $0x48] sm:$0x3f]
        %v482 = vrot.slane %v462, 1
        %v483 = vrot.slane %v463, 1
        %v484 = vsel %vm337, %v482, %v483
        %v485 = vrot.slane %v464, 1
        %v486 = vsel %vm337, %v483, %v485
        %v487 = vrot.slane %v465, 1
        %v488 = vsel %vm337, %v485, %v487
        %v489 = vrot.slane %v466, 1
        %v490 = vsel %vm337, %v487, %v489
        %v491 = vrot.slane %v467, 1
        %v492 = vsel %vm337, %v489, %v491
        %v493 = vrot.slane %v468, 1
        %v494 = vsel %vm337, %v491, %v493
        %v495 = vrot.slane %v469, 1
        %v496 = vsel %vm337, %v493, %v495
        %v497 = vrot.slane %v470, 1
        %v498 = vsel %vm337, %v495, %v497
        %v499 = vrot.slane %v471, 1
        %v500 = vsel %vm337, %v497, %v499
        %501 = vrot.lane.b32.xlu0 %v484, 3
        %v502 = vpop.permute.xlu0 %501
        %503 = vrot.lane.b32.xlu0 %v486, 3
        %v504 = vpop.permute.xlu0 %503
        %505 = vrot.lane.b32.xlu0 %v488, 3
        %v506 = vpop.permute.xlu0 %505
        %507 = vrot.lane.b32.xlu0 %v490, 3
        %v508 = vpop.permute.xlu0 %507
        %509 = vrot.lane.b32.xlu0 %v492, 3
        %v510 = vpop.permute.xlu0 %509
        %511 = vrot.lane.b32.xlu0 %v494, 3
        %v512 = vpop.permute.xlu0 %511
        %513 = vrot.lane.b32.xlu0 %v496, 3
        %v514 = vpop.permute.xlu0 %513
        %515 = vrot.lane.b32.xlu0 %v498, 3
        %v516 = vpop.permute.xlu0 %515
        %517 = vrot.lane.b32.xlu0 %v500, 3
        %v518 = vpop.permute.xlu0 %517
        %519 = vrot.lane.b32.xlu0 %v499, 3
        %v520 = vpop.permute.xlu0 %519
        %v531 = vrot.slane %v462, 2
        %v532 = vrot.slane %v463, 2
        %v533 = vsel %vm387, %v531, %v532
        %v534 = vrot.slane %v464, 2
        %v535 = vsel %vm387, %v532, %v534
        %v536 = vrot.slane %v465, 2
        %v537 = vsel %vm387, %v534, %v536
        %v538 = vrot.slane %v466, 2
        %v539 = vsel %vm387, %v536, %v538
        %v540 = vrot.slane %v467, 2
        %v541 = vsel %vm387, %v538, %v540
        %v542 = vrot.slane %v468, 2
        %v543 = vsel %vm387, %v540, %v542
        %v544 = vrot.slane %v469, 2
        %v545 = vsel %vm387, %v542, %v544
        %v546 = vrot.slane %v470, 2
        %v547 = vsel %vm387, %v544, %v546
        %v548 = vrot.slane %v471, 2
        %v549 = vsel %vm387, %v546, %v548
        %550 = vrot.lane.b32.xlu0 %v533, 6
        %v551 = vpop.permute.xlu0 %550
        %552 = vrot.lane.b32.xlu0 %v535, 6
        %v553 = vpop.permute.xlu0 %552
        %554 = vrot.lane.b32.xlu0 %v537, 6
        %v555 = vpop.permute.xlu0 %554
        %556 = vrot.lane.b32.xlu0 %v539, 6
        %v557 = vpop.permute.xlu0 %556
        %558 = vrot.lane.b32.xlu0 %v541, 6
        %v559 = vpop.permute.xlu0 %558
        %560 = vrot.lane.b32.xlu0 %v543, 6
        %v561 = vpop.permute.xlu0 %560
        %562 = vrot.lane.b32.xlu0 %v545, 6
        %v563 = vpop.permute.xlu0 %562
        %564 = vrot.lane.b32.xlu0 %v547, 6
        %v565 = vpop.permute.xlu0 %564
        %566 = vrot.lane.b32.xlu0 %v549, 6
        %v567 = vpop.permute.xlu0 %566
        %568 = vrot.lane.b32.xlu0 %v548, 6
        %v569 = vpop.permute.xlu0 %568
        %v580 = vsel %vm437, %v462, %v502
        %v581 = vsel %vm437, %v463, %v504
        %v582 = vsel %vm437, %v464, %v506
        %v583 = vsel %vm437, %v465, %v508
        %v584 = vsel %vm437, %v466, %v510
        %v585 = vsel %vm437, %v467, %v512
        %v586 = vsel %vm437, %v468, %v514
        %v587 = vsel %vm437, %v469, %v516
        %v588 = vsel %vm437, %v470, %v518
        %v589 = vsel %vm437, %v471, %v520
        %v590 = vsel %vm448, %v580, %v551
        %v591 = vsel %vm448, %v581, %v553
        %v592 = vsel %vm448, %v582, %v555
        %v593 = vsel %vm448, %v583, %v557
        %v594 = vsel %vm448, %v584, %v559
        %v595 = vsel %vm448, %v585, %v561
        %v596 = vsel %vm448, %v586, %v563
        %v597 = vsel %vm448, %v587, %v565
        %v598 = vsel %vm448, %v588, %v567
        %v599 = vsel %vm448, %v589, %v569
        %vm600 = vcmask 72704
        %v602 = vsel %vm600, %v590, 0
        %v605 = vsel %vm600, %v591, 0
        %v608 = vsel %vm600, %v592, 0
        %v611 = vsel %vm600, %v593, 0
        %v614 = vsel %vm600, %v594, 0
        %v617 = vsel %vm600, %v595, 0
        %v620 = vsel %vm600, %v596, 0
        %v623 = vsel %vm600, %v597, 0
        %v626 = vsel %vm600, %v598, 0
        %v629 = vsel %vm600, %v599, 0
        %vm631 = vcmask 1040384
        %v633 = vsel %vm631, %v304, 0
        %635 = vmatprep.subr.mxu0 0.0
        %636 = vmatpush1.msra.mxu0 0.0
        %637 = vmatprep.subr.mxu0 0.0
        %638 = vmatpush1.msra.mxu0 0.0
        %639 = vmatprep.subr.mxu0 0.0
        %640 = vmatpush1.msra.mxu0 0.0
        %641 = vmatprep.subr.mxu0 0.0
        %642 = vmatpush1.msra.mxu0 0.0
        %643 = vmatprep.subr.mxu0 0.0
        %644 = vmatpush1.msra.mxu0 0.0
        %645 = vmatprep.subr.mxu0 0.0
        %646 = vmatpush1.msra.mxu0 0.0
        %647 = vmatprep.subr.mxu0 0.0
        %648 = vmatpush1.msra.mxu0 0.0
        %649 = vmatprep.subr.mxu0 0.0
        %650 = vmatpush1.msra.mxu0 0.0
        %651 = vmatprep.subr.mxu0 0.0
        %652 = vmatpush1.msra.mxu0 0.0
        %653 = vmatprep.subr.mxu0 0.0
        %654 = vmatpush1.msra.mxu0 0.0
        %655 = vmatprep.subr.mxu0 0.0
        %656 = vmatpush1.msra.mxu0 0.0
        %657 = vmatprep.subr.mxu0 0.0
        %658 = vmatpush1.msra.mxu0 0.0
        %659 = vmatprep.subr.mxu0 0.0
        %660 = vmatpush1.msra.mxu0 0.0
        %661 = vmatprep.subr.mxu0 0.0
        %662 = vmatpush1.msra.mxu0 0.0
        %663 = vmatprep.subr.mxu0 0.0
        %664 = vmatpush1.msra.mxu0 %v633
        %665 = vmatprep.subr.mxu0 0.0
        %666 = vmatpush1.msra.mxu0 %v303
        %667 = vmatprep.subr.mxu0 0.0
        %668 = vmatpush2.msra.mxu0 0.0
        %669 = vmatprep.subr.mxu0 0.0
        %670 = vmatpush2.msra.mxu0 0.0
        %671 = vmatprep.subr.mxu0 0.0
        %672 = vmatpush2.msra.mxu0 0.0
        %673 = vmatprep.subr.mxu0 0.0
        %674 = vmatpush2.msra.mxu0 0.0
        %675 = vmatprep.subr.mxu0 0.0
        %676 = vmatpush2.msra.mxu0 0.0
        %677 = vmatprep.subr.mxu0 0.0
        %678 = vmatpush2.msra.mxu0 0.0
        %679 = vmatprep.subr.mxu0 0.0
        %680 = vmatpush2.msra.mxu0 0.0
        %681 = vmatprep.subr.mxu0 0.0
        %682 = vmatpush2.msra.mxu0 0.0
        %683 = vmatprep.subr.mxu0 0.0
        %684 = vmatpush2.msra.mxu0 0.0
        %685 = vmatprep.subr.mxu0 0.0
        %686 = vmatpush2.msra.mxu0 0.0
        %687 = vmatprep.subr.mxu0 0.0
        %688 = vmatpush2.msra.mxu0 0.0
        %689 = vmatprep.subr.mxu0 0.0
        %690 = vmatpush2.msra.mxu0 0.0
        %691 = vmatprep.subr.mxu0 0.0
        %692 = vmatpush2.msra.mxu0 0.0
        %693 = vmatprep.subr.mxu0 0.0
        %694 = vmatpush2.msra.mxu0 0.0
        %695 = vmatprep.subr.mxu0 0.0
        %696 = vmatpush2.msra.mxu0 0.0
        %697 = vmatprep.subr.mxu0 0.0
        %698 = vmatpush2.msra.mxu0 0.0
        %699 = vmatprep.mubr.f32.mxu0 0.0
        %700 = vmatmul.mubr.f32.gmra.mxu0 %v602
        %v701 = vpop.f32.mrf.mxu0
        %v702 = vadd.f32 0.0, %v701
        %v703 = vpop.f32.mrf.mxu0
        %704 = vmatprep.mubr.f32.mxu0 0.0
        %705 = vmatmul.mubr.f32.gmra.mxu0 %v605
        %v706 = vpop.f32.mrf.mxu0
        %v707 = vadd.f32 0.0, %v706
        %v708 = vpop.f32.mrf.mxu0
        %709 = vmatprep.mubr.f32.mxu0 0.0
        %710 = vmatmul.mubr.f32.gmra.mxu0 %v608
        %v711 = vpop.f32.mrf.mxu0
        %v712 = vadd.f32 0.0, %v711
        %v713 = vpop.f32.mrf.mxu0
        %714 = vmatprep.mubr.f32.mxu0 0.0
        %715 = vmatmul.mubr.f32.gmra.mxu0 %v611
        %v716 = vpop.f32.mrf.mxu0
        %v717 = vadd.f32 0.0, %v716
        %v718 = vpop.f32.mrf.mxu0
        %719 = vmatprep.mubr.f32.mxu0 0.0
        %720 = vmatmul.mubr.f32.gmra.mxu0 %v614
        %v721 = vpop.f32.mrf.mxu0
        %v722 = vadd.f32 0.0, %v721
        %v723 = vpop.f32.mrf.mxu0
        %724 = vmatprep.mubr.f32.mxu0 0.0
        %725 = vmatmul.mubr.f32.gmra.mxu0 %v617
        %v726 = vpop.f32.mrf.mxu0
        %v727 = vadd.f32 0.0, %v726
        %v728 = vpop.f32.mrf.mxu0
        %729 = vmatprep.mubr.f32.mxu0 0.0
        %730 = vmatmul.mubr.f32.gmra.mxu0 %v620
        %v731 = vpop.f32.mrf.mxu0
        %v732 = vadd.f32 0.0, %v731
        %v733 = vpop.f32.mrf.mxu0
        %734 = vmatprep.mubr.f32.mxu0 0.0
        %735 = vmatmul.mubr.f32.gmra.mxu0 %v623
        %v736 = vpop.f32.mrf.mxu0
        %v737 = vadd.f32 0.0, %v736
        %v738 = vpop.f32.mrf.mxu0
        %739 = vmatprep.mubr.f32.mxu0 0.0
        %740 = vmatmul.mubr.f32.gmra.mxu0 %v626
        %v741 = vpop.f32.mrf.mxu0
        %v742 = vadd.f32 0.0, %v741
        %v743 = vpop.f32.mrf.mxu0
        %744 = vmatprep.mubr.f32.mxu0 0.0
        %745 = vmatmul.mubr.f32.gmra.mxu0 %v629
        %v746 = vpop.f32.mrf.mxu0
        %v747 = vadd.f32 0.0, %v746
        %v748 = vpop.f32.mrf.mxu0
        %749 = vdwg.mxu0
        %v751 = vsel %vm600, %v449, 0
        %v754 = vsel %vm600, %v450, 0
        %v757 = vsel %vm600, %v451, 0
        %v760 = vsel %vm600, %v452, 0
        %v763 = vsel %vm600, %v453, 0
        %v766 = vsel %vm600, %v454, 0
        %v769 = vsel %vm600, %v455, 0
        %v772 = vsel %vm600, %v456, 0
        %v775 = vsel %vm600, %v457, 0
        %v778 = vsel %vm600, %v458, 0
        %v781 = vsel %vm631, %v301, 0
        %783 = vmatprep.subr.mxu0 0.0
        %784 = vmatpush1.msra.mxu0 0.0
        %785 = vmatprep.subr.mxu0 0.0
        %786 = vmatpush1.msra.mxu0 0.0
        %787 = vmatprep.subr.mxu0 0.0
        %788 = vmatpush1.msra.mxu0 0.0
        %789 = vmatprep.subr.mxu0 0.0
        %790 = vmatpush1.msra.mxu0 0.0
        %791 = vmatprep.subr.mxu0 0.0
        %792 = vmatpush1.msra.mxu0 0.0
        %793 = vmatprep.subr.mxu0 0.0
        %794 = vmatpush1.msra.mxu0 0.0
        %795 = vmatprep.subr.mxu0 0.0
        %796 = vmatpush1.msra.mxu0 0.0
        %797 = vmatprep.subr.mxu0 0.0
        %798 = vmatpush1.msra.mxu0 0.0
        %799 = vmatprep.subr.mxu0 0.0
        %800 = vmatpush1.msra.mxu0 0.0
        %801 = vmatprep.subr.mxu0 0.0
        %802 = vmatpush1.msra.mxu0 0.0
        %803 = vmatprep.subr.mxu0 0.0
        %804 = vmatpush1.msra.mxu0 0.0
        %805 = vmatprep.subr.mxu0 0.0
        %806 = vmatpush1.msra.mxu0 0.0
        %807 = vmatprep.subr.mxu0 0.0
        %808 = vmatpush1.msra.mxu0 0.0
        %809 = vmatprep.subr.mxu0 0.0
        %810 = vmatpush1.msra.mxu0 0.0
        %811 = vmatprep.subr.mxu0 0.0
        %812 = vmatpush1.msra.mxu0 %v781
        %813 = vmatprep.subr.mxu0 0.0
        %814 = vmatpush1.msra.mxu0 %v300
        %815 = vmatprep.subr.mxu0 0.0
        %816 = vmatpush2.msra.mxu0 0.0
        %817 = vmatprep.subr.mxu0 0.0
        %818 = vmatpush2.msra.mxu0 0.0
        %819 = vmatprep.subr.mxu0 0.0
        %820 = vmatpush2.msra.mxu0 0.0
        %821 = vmatprep.subr.mxu0 0.0
        %822 = vmatpush2.msra.mxu0 0.0
        %823 = vmatprep.subr.mxu0 0.0
        %824 = vmatpush2.msra.mxu0 0.0
        %825 = vmatprep.subr.mxu0 0.0
        %826 = vmatpush2.msra.mxu0 0.0
        %827 = vmatprep.subr.mxu0 0.0
        %828 = vmatpush2.msra.mxu0 0.0
        %829 = vmatprep.subr.mxu0 0.0
        %830 = vmatpush2.msra.mxu0 0.0
        %831 = vmatprep.subr.mxu0 0.0
        %832 = vmatpush2.msra.mxu0 0.0
        %833 = vmatprep.subr.mxu0 0.0
        %834 = vmatpush2.msra.mxu0 0.0
        %835 = vmatprep.subr.mxu0 0.0
        %836 = vmatpush2.msra.mxu0 0.0
        %837 = vmatprep.subr.mxu0 0.0
        %838 = vmatpush2.msra.mxu0 0.0
        %839 = vmatprep.subr.mxu0 0.0
        %840 = vmatpush2.msra.mxu0 0.0
        %841 = vmatprep.subr.mxu0 0.0
        %842 = vmatpush2.msra.mxu0 0.0
        %843 = vmatprep.subr.mxu0 0.0
        %844 = vmatpush2.msra.mxu0 0.0
        %845 = vmatprep.subr.mxu0 0.0
        %846 = vmatpush2.msra.mxu0 0.0
        %847 = vmatprep.mubr.f32.mxu0 0.0
        %848 = vmatmul.mubr.f32.gmra.mxu0 %v751
        %v849 = vpop.f32.mrf.mxu0
        %v850 = vadd.f32 %v702, %v849
        %v851 = vpop.f32.mrf.mxu0
        %852 = vmatprep.mubr.f32.mxu0 0.0
        %853 = vmatmul.mubr.f32.gmra.mxu0 %v754
        %v854 = vpop.f32.mrf.mxu0
        %v855 = vadd.f32 %v707, %v854
        %v856 = vpop.f32.mrf.mxu0
        %857 = vmatprep.mubr.f32.mxu0 0.0
        %858 = vmatmul.mubr.f32.gmra.mxu0 %v757
        %v859 = vpop.f32.mrf.mxu0
        %v860 = vadd.f32 %v712, %v859
        %v861 = vpop.f32.mrf.mxu0
        %862 = vmatprep.mubr.f32.mxu0 0.0
        %863 = vmatmul.mubr.f32.gmra.mxu0 %v760
        %v864 = vpop.f32.mrf.mxu0
        %v865 = vadd.f32 %v717, %v864
        %v866 = vpop.f32.mrf.mxu0
        %867 = vmatprep.mubr.f32.mxu0 0.0
        %868 = vmatmul.mubr.f32.gmra.mxu0 %v763
        %v869 = vpop.f32.mrf.mxu0
        %v870 = vadd.f32 %v722, %v869
        %v871 = vpop.f32.mrf.mxu0
        %872 = vmatprep.mubr.f32.mxu0 0.0
        %873 = vmatmul.mubr.f32.gmra.mxu0 %v766
        %v874 = vpop.f32.mrf.mxu0
        %v875 = vadd.f32 %v727, %v874
        %v876 = vpop.f32.mrf.mxu0
        %877 = vmatprep.mubr.f32.mxu0 0.0
        %878 = vmatmul.mubr.f32.gmra.mxu0 %v769
        %v879 = vpop.f32.mrf.mxu0
        %v880 = vadd.f32 %v732, %v879
        %v881 = vpop.f32.mrf.mxu0
        %882 = vmatprep.mubr.f32.mxu0 0.0
        %883 = vmatmul.mubr.f32.gmra.mxu0 %v772
        %v884 = vpop.f32.mrf.mxu0
        %v885 = vadd.f32 %v737, %v884
        %v886 = vpop.f32.mrf.mxu0
        %887 = vmatprep.mubr.f32.mxu0 0.0
        %888 = vmatmul.mubr.f32.gmra.mxu0 %v775
        %v889 = vpop.f32.mrf.mxu0
        %v890 = vadd.f32 %v742, %v889
        %v891 = vpop.f32.mrf.mxu0
        %892 = vmatprep.mubr.f32.mxu0 0.0
        %893 = vmatmul.mubr.f32.gmra.mxu0 %v778
        %v894 = vpop.f32.mrf.mxu0
        %v895 = vadd.f32 %v747, %v894
        %v896 = vpop.f32.mrf.mxu0
        %897 = vdwg.mxu0
        %s898 = sadd.s32 %s314, 2
        %s899 = smul.u32 %s898, 80
        %s900 = scalar_lea.vmem %s246, %s899
        %v901 = vld [vmem:[%s900] sm:$0xff]
        %v902 = vld [vmem:[%s900 + $0x8] sm:$0xff]
        %v903 = vld [vmem:[%s900 + $0x10] sm:$0xff]
        %v904 = vld [vmem:[%s900 + $0x18] sm:$0xff]
        %v905 = vld [vmem:[%s900 + $0x20] sm:$0xff]
        %v906 = vld [vmem:[%s900 + $0x28] sm:$0xff]
        %v907 = vld [vmem:[%s900 + $0x30] sm:$0xff]
        %v908 = vld [vmem:[%s900 + $0x38] sm:$0xff]
        %v909 = vld [vmem:[%s900 + $0x40] sm:$0xff]
        %v910 = vld [vmem:[%s900 + $0x48] sm:$0x3f]
        %v921 = vrot.slane %v901, 1
        %v922 = vrot.slane %v902, 1
        %v923 = vsel %vm337, %v921, %v922
        %v924 = vrot.slane %v903, 1
        %v925 = vsel %vm337, %v922, %v924
        %v926 = vrot.slane %v904, 1
        %v927 = vsel %vm337, %v924, %v926
        %v928 = vrot.slane %v905, 1
        %v929 = vsel %vm337, %v926, %v928
        %v930 = vrot.slane %v906, 1
        %v931 = vsel %vm337, %v928, %v930
        %v932 = vrot.slane %v907, 1
        %v933 = vsel %vm337, %v930, %v932
        %v934 = vrot.slane %v908, 1
        %v935 = vsel %vm337, %v932, %v934
        %v936 = vrot.slane %v909, 1
        %v937 = vsel %vm337, %v934, %v936
        %v938 = vrot.slane %v910, 1
        %v939 = vsel %vm337, %v936, %v938
        %940 = vrot.lane.b32.xlu0 %v923, 3
        %v941 = vpop.permute.xlu0 %940
        %942 = vrot.lane.b32.xlu0 %v925, 3
        %v943 = vpop.permute.xlu0 %942
        %944 = vrot.lane.b32.xlu0 %v927, 3
        %v945 = vpop.permute.xlu0 %944
        %946 = vrot.lane.b32.xlu0 %v929, 3
        %v947 = vpop.permute.xlu0 %946
        %948 = vrot.lane.b32.xlu0 %v931, 3
        %v949 = vpop.permute.xlu0 %948
        %950 = vrot.lane.b32.xlu0 %v933, 3
        %v951 = vpop.permute.xlu0 %950
        %952 = vrot.lane.b32.xlu0 %v935, 3
        %v953 = vpop.permute.xlu0 %952
        %954 = vrot.lane.b32.xlu0 %v937, 3
        %v955 = vpop.permute.xlu0 %954
        %956 = vrot.lane.b32.xlu0 %v939, 3
        %v957 = vpop.permute.xlu0 %956
        %958 = vrot.lane.b32.xlu0 %v938, 3
        %v959 = vpop.permute.xlu0 %958
        %v970 = vrot.slane %v901, 2
        %v971 = vrot.slane %v902, 2
        %v972 = vsel %vm387, %v970, %v971
        %v973 = vrot.slane %v903, 2
        %v974 = vsel %vm387, %v971, %v973
        %v975 = vrot.slane %v904, 2
        %v976 = vsel %vm387, %v973, %v975
        %v977 = vrot.slane %v905, 2
        %v978 = vsel %vm387, %v975, %v977
        %v979 = vrot.slane %v906, 2
        %v980 = vsel %vm387, %v977, %v979
        %v981 = vrot.slane %v907, 2
        %v982 = vsel %vm387, %v979, %v981
        %v983 = vrot.slane %v908, 2
        %v984 = vsel %vm387, %v981, %v983
        %v985 = vrot.slane %v909, 2
        %v986 = vsel %vm387, %v983, %v985
        %v987 = vrot.slane %v910, 2
        %v988 = vsel %vm387, %v985, %v987
        %989 = vrot.lane.b32.xlu0 %v972, 6
        %v990 = vpop.permute.xlu0 %989
        %991 = vrot.lane.b32.xlu0 %v974, 6
        %v992 = vpop.permute.xlu0 %991
        %993 = vrot.lane.b32.xlu0 %v976, 6
        %v994 = vpop.permute.xlu0 %993
        %995 = vrot.lane.b32.xlu0 %v978, 6
        %v996 = vpop.permute.xlu0 %995
        %997 = vrot.lane.b32.xlu0 %v980, 6
        %v998 = vpop.permute.xlu0 %997
        %999 = vrot.lane.b32.xlu0 %v982, 6
        %v1000 = vpop.permute.xlu0 %999
        %1001 = vrot.lane.b32.xlu0 %v984, 6
        %v1002 = vpop.permute.xlu0 %1001
        %1003 = vrot.lane.b32.xlu0 %v986, 6
        %v1004 = vpop.permute.xlu0 %1003
        %1005 = vrot.lane.b32.xlu0 %v988, 6
        %v1006 = vpop.permute.xlu0 %1005
        %1007 = vrot.lane.b32.xlu0 %v987, 6
        %v1008 = vpop.permute.xlu0 %1007
        %v1019 = vsel %vm437, %v901, %v941
        %v1020 = vsel %vm437, %v902, %v943
        %v1021 = vsel %vm437, %v903, %v945
        %v1022 = vsel %vm437, %v904, %v947
        %v1023 = vsel %vm437, %v905, %v949
        %v1024 = vsel %vm437, %v906, %v951
        %v1025 = vsel %vm437, %v907, %v953
        %v1026 = vsel %vm437, %v908, %v955
        %v1027 = vsel %vm437, %v909, %v957
        %v1028 = vsel %vm437, %v910, %v959
        %v1029 = vsel %vm448, %v1019, %v990
        %v1030 = vsel %vm448, %v1020, %v992
        %v1031 = vsel %vm448, %v1021, %v994
        %v1032 = vsel %vm448, %v1022, %v996
        %v1033 = vsel %vm448, %v1023, %v998
        %v1034 = vsel %vm448, %v1024, %v1000
        %v1035 = vsel %vm448, %v1025, %v1002
        %v1036 = vsel %vm448, %v1026, %v1004
        %v1037 = vsel %vm448, %v1027, %v1006
        %v1038 = vsel %vm448, %v1028, %v1008
        %v1040 = vsel %vm600, %v1029, 0
        %v1043 = vsel %vm600, %v1030, 0
        %v1046 = vsel %vm600, %v1031, 0
        %v1049 = vsel %vm600, %v1032, 0
        %v1052 = vsel %vm600, %v1033, 0
        %v1055 = vsel %vm600, %v1034, 0
        %v1058 = vsel %vm600, %v1035, 0
        %v1061 = vsel %vm600, %v1036, 0
        %v1064 = vsel %vm600, %v1037, 0
        %v1067 = vsel %vm600, %v1038, 0
        %v1070 = vsel %vm631, %v307, 0
        %1072 = vmatprep.subr.mxu0 0.0
        %1073 = vmatpush1.msra.mxu0 0.0
        %1074 = vmatprep.subr.mxu0 0.0
        %1075 = vmatpush1.msra.mxu0 0.0
        %1076 = vmatprep.subr.mxu0 0.0
        %1077 = vmatpush1.msra.mxu0 0.0
        %1078 = vmatprep.subr.mxu0 0.0
        %1079 = vmatpush1.msra.mxu0 0.0
        %1080 = vmatprep.subr.mxu0 0.0
        %1081 = vmatpush1.msra.mxu0 0.0
        %1082 = vmatprep.subr.mxu0 0.0
        %1083 = vmatpush1.msra.mxu0 0.0
        %1084 = vmatprep.subr.mxu0 0.0
        %1085 = vmatpush1.msra.mxu0 0.0
        %1086 = vmatprep.subr.mxu0 0.0
        %1087 = vmatpush1.msra.mxu0 0.0
        %1088 = vmatprep.subr.mxu0 0.0
        %1089 = vmatpush1.msra.mxu0 0.0
        %1090 = vmatprep.subr.mxu0 0.0
        %1091 = vmatpush1.msra.mxu0 0.0
        %1092 = vmatprep.subr.mxu0 0.0
        %1093 = vmatpush1.msra.mxu0 0.0
        %1094 = vmatprep.subr.mxu0 0.0
        %1095 = vmatpush1.msra.mxu0 0.0
        %1096 = vmatprep.subr.mxu0 0.0
        %1097 = vmatpush1.msra.mxu0 0.0
        %1098 = vmatprep.subr.mxu0 0.0
        %1099 = vmatpush1.msra.mxu0 0.0
        %1100 = vmatprep.subr.mxu0 0.0
        %1101 = vmatpush1.msra.mxu0 %v1070
        %1102 = vmatprep.subr.mxu0 0.0
        %1103 = vmatpush1.msra.mxu0 %v306
        %1104 = vmatprep.subr.mxu0 0.0
        %1105 = vmatpush2.msra.mxu0 0.0
        %1106 = vmatprep.subr.mxu0 0.0
        %1107 = vmatpush2.msra.mxu0 0.0
        %1108 = vmatprep.subr.mxu0 0.0
        %1109 = vmatpush2.msra.mxu0 0.0
        %1110 = vmatprep.subr.mxu0 0.0
        %1111 = vmatpush2.msra.mxu0 0.0
        %1112 = vmatprep.subr.mxu0 0.0
        %1113 = vmatpush2.msra.mxu0 0.0
        %1114 = vmatprep.subr.mxu0 0.0
        %1115 = vmatpush2.msra.mxu0 0.0
        %1116 = vmatprep.subr.mxu0 0.0
        %1117 = vmatpush2.msra.mxu0 0.0
        %1118 = vmatprep.subr.mxu0 0.0
        %1119 = vmatpush2.msra.mxu0 0.0
        %1120 = vmatprep.subr.mxu0 0.0
        %1121 = vmatpush2.msra.mxu0 0.0
        %1122 = vmatprep.subr.mxu0 0.0
        %1123 = vmatpush2.msra.mxu0 0.0
        %1124 = vmatprep.subr.mxu0 0.0
        %1125 = vmatpush2.msra.mxu0 0.0
        %1126 = vmatprep.subr.mxu0 0.0
        %1127 = vmatpush2.msra.mxu0 0.0
        %1128 = vmatprep.subr.mxu0 0.0
        %1129 = vmatpush2.msra.mxu0 0.0
        %1130 = vmatprep.subr.mxu0 0.0
        %1131 = vmatpush2.msra.mxu0 0.0
        %1132 = vmatprep.subr.mxu0 0.0
        %1133 = vmatpush2.msra.mxu0 0.0
        %1134 = vmatprep.subr.mxu0 0.0
        %1135 = vmatpush2.msra.mxu0 0.0
        %1136 = vmatprep.mubr.f32.mxu0 0.0
        %1137 = vmatmul.mubr.f32.gmra.mxu0 %v1040
        %v1138 = vpop.f32.mrf.mxu0
        %v1139 = vadd.f32 0.0, %v1138
        %v1140 = vpop.f32.mrf.mxu0
        %1141 = vmatprep.mubr.f32.mxu0 0.0
        %1142 = vmatmul.mubr.f32.gmra.mxu0 %v1043
        %v1143 = vpop.f32.mrf.mxu0
        %v1144 = vadd.f32 0.0, %v1143
        %v1145 = vpop.f32.mrf.mxu0
        %1146 = vmatprep.mubr.f32.mxu0 0.0
        %1147 = vmatmul.mubr.f32.gmra.mxu0 %v1046
        %v1148 = vpop.f32.mrf.mxu0
        %v1149 = vadd.f32 0.0, %v1148
        %v1150 = vpop.f32.mrf.mxu0
        %1151 = vmatprep.mubr.f32.mxu0 0.0
        %1152 = vmatmul.mubr.f32.gmra.mxu0 %v1049
        %v1153 = vpop.f32.mrf.mxu0
        %v1154 = vadd.f32 0.0, %v1153
        %v1155 = vpop.f32.mrf.mxu0
        %1156 = vmatprep.mubr.f32.mxu0 0.0
        %1157 = vmatmul.mubr.f32.gmra.mxu0 %v1052
        %v1158 = vpop.f32.mrf.mxu0
        %v1159 = vadd.f32 0.0, %v1158
        %v1160 = vpop.f32.mrf.mxu0
        %1161 = vmatprep.mubr.f32.mxu0 0.0
        %1162 = vmatmul.mubr.f32.gmra.mxu0 %v1055
        %v1163 = vpop.f32.mrf.mxu0
        %v1164 = vadd.f32 0.0, %v1163
        %v1165 = vpop.f32.mrf.mxu0
        %1166 = vmatprep.mubr.f32.mxu0 0.0
        %1167 = vmatmul.mubr.f32.gmra.mxu0 %v1058
        %v1168 = vpop.f32.mrf.mxu0
        %v1169 = vadd.f32 0.0, %v1168
        %v1170 = vpop.f32.mrf.mxu0
        %1171 = vmatprep.mubr.f32.mxu0 0.0
        %1172 = vmatmul.mubr.f32.gmra.mxu0 %v1061
        %v1173 = vpop.f32.mrf.mxu0
        %v1174 = vadd.f32 0.0, %v1173
        %v1175 = vpop.f32.mrf.mxu0
        %1176 = vmatprep.mubr.f32.mxu0 0.0
        %1177 = vmatmul.mubr.f32.gmra.mxu0 %v1064
        %v1178 = vpop.f32.mrf.mxu0
        %v1179 = vadd.f32 0.0, %v1178
        %v1180 = vpop.f32.mrf.mxu0
        %1181 = vmatprep.mubr.f32.mxu0 0.0
        %1182 = vmatmul.mubr.f32.gmra.mxu0 %v1067
        %v1183 = vpop.f32.mrf.mxu0
        %v1184 = vadd.f32 0.0, %v1183
        %v1185 = vpop.f32.mrf.mxu0
        %1186 = vdwg.mxu0
        %v1187 = vadd.f32 %v850, %v1139
        %v1188 = vadd.f32 %v855, %v1144
        %v1189 = vadd.f32 %v860, %v1149
        %v1190 = vadd.f32 %v865, %v1154
        %v1191 = vadd.f32 %v870, %v1159
        %v1192 = vadd.f32 %v875, %v1164
        %v1193 = vadd.f32 %v880, %v1169
        %v1194 = vadd.f32 %v885, %v1174
        %v1195 = vadd.f32 %v890, %v1179
        %v1196 = vadd.f32 %v895, %v1184
        %v1197 = vmax.f32 %v1187, 0.0
        %v1198 = vmax.f32 %v1188, 0.0
        %v1199 = vmax.f32 %v1189, 0.0
        %v1200 = vmax.f32 %v1190, 0.0
        %v1201 = vmax.f32 %v1191, 0.0
        %v1202 = vmax.f32 %v1192, 0.0
        %v1203 = vmax.f32 %v1193, 0.0
        %v1204 = vmax.f32 %v1194, 0.0
        %v1205 = vmax.f32 %v1195, 0.0
        %v1206 = vmax.f32 %v1196, 0.0
        %1207 = vmatprep.subr.mxu0 0.0
        %1208 = vmatpush1.msra.mxu0 0.0
        %1209 = vmatprep.subr.mxu0 0.0
        %1210 = vmatpush1.msra.mxu0 0.0
        %1211 = vmatprep.subr.mxu0 0.0
        %1212 = vmatpush1.msra.mxu0 0.0
        %1213 = vmatprep.subr.mxu0 0.0
        %1214 = vmatpush1.msra.mxu0 0.0
        %1215 = vmatprep.subr.mxu0 0.0
        %1216 = vmatpush1.msra.mxu0 0.0
        %1217 = vmatprep.subr.mxu0 0.0
        %1218 = vmatpush1.msra.mxu0 0.0
        %1219 = vmatprep.subr.mxu0 0.0
        %1220 = vmatpush1.msra.mxu0 0.0
        %1221 = vmatprep.subr.mxu0 0.0
        %1222 = vmatpush1.msra.mxu0 0.0
        %1223 = vmatprep.subr.mxu0 0.0
        %1224 = vmatpush1.msra.mxu0 0.0
        %1225 = vmatprep.subr.mxu0 0.0
        %1226 = vmatpush1.msra.mxu0 0.0
        %1227 = vmatprep.subr.mxu0 0.0
        %1228 = vmatpush1.msra.mxu0 0.0
        %1229 = vmatprep.subr.mxu0 0.0
        %1230 = vmatpush1.msra.mxu0 0.0
        %1231 = vmatprep.subr.mxu0 0.0
        %1232 = vmatpush1.msra.mxu0 0.0
        %1233 = vmatprep.subr.mxu0 0.0
        %1234 = vmatpush1.msra.mxu0 0.0
        %1235 = vmatprep.subr.mxu0 0.0
        %1236 = vmatpush1.msra.mxu0 %v633
        %1237 = vmatprep.subr.mxu0 0.0
        %1238 = vmatpush1.msra.mxu0 %v303
        %1239 = vmatprep.subr.mxu0 0.0
        %1240 = vmatpush2.msra.mxu0 0.0
        %1241 = vmatprep.subr.mxu0 0.0
        %1242 = vmatpush2.msra.mxu0 0.0
        %1243 = vmatprep.subr.mxu0 0.0
        %1244 = vmatpush2.msra.mxu0 0.0
        %1245 = vmatprep.subr.mxu0 0.0
        %1246 = vmatpush2.msra.mxu0 0.0
        %1247 = vmatprep.subr.mxu0 0.0
        %1248 = vmatpush2.msra.mxu0 0.0
        %1249 = vmatprep.subr.mxu0 0.0
        %1250 = vmatpush2.msra.mxu0 0.0
        %1251 = vmatprep.subr.mxu0 0.0
        %1252 = vmatpush2.msra.mxu0 0.0
        %1253 = vmatprep.subr.mxu0 0.0
        %1254 = vmatpush2.msra.mxu0 0.0
        %1255 = vmatprep.subr.mxu0 0.0
        %1256 = vmatpush2.msra.mxu0 0.0
        %1257 = vmatprep.subr.mxu0 0.0
        %1258 = vmatpush2.msra.mxu0 0.0
        %1259 = vmatprep.subr.mxu0 0.0
        %1260 = vmatpush2.msra.mxu0 0.0
        %1261 = vmatprep.subr.mxu0 0.0
        %1262 = vmatpush2.msra.mxu0 0.0
        %1263 = vmatprep.subr.mxu0 0.0
        %1264 = vmatpush2.msra.mxu0 0.0
        %1265 = vmatprep.subr.mxu0 0.0
        %1266 = vmatpush2.msra.mxu0 0.0
        %1267 = vmatprep.subr.mxu0 0.0
        %1268 = vmatpush2.msra.mxu0 0.0
        %1269 = vmatprep.subr.mxu0 0.0
        %1270 = vmatpush2.msra.mxu0 0.0
        %1271 = vmatprep.mubr.f32.mxu0 0.0
        %1272 = vmatmul.mubr.f32.gmra.mxu0 %v1040
        %v1273 = vpop.f32.mrf.mxu0
        %v1274 = vadd.f32 0.0, %v1273
        %v1275 = vpop.f32.mrf.mxu0
        %1276 = vmatprep.mubr.f32.mxu0 0.0
        %1277 = vmatmul.mubr.f32.gmra.mxu0 %v1043
        %v1278 = vpop.f32.mrf.mxu0
        %v1279 = vadd.f32 0.0, %v1278
        %v1280 = vpop.f32.mrf.mxu0
        %1281 = vmatprep.mubr.f32.mxu0 0.0
        %1282 = vmatmul.mubr.f32.gmra.mxu0 %v1046
        %v1283 = vpop.f32.mrf.mxu0
        %v1284 = vadd.f32 0.0, %v1283
        %v1285 = vpop.f32.mrf.mxu0
        %1286 = vmatprep.mubr.f32.mxu0 0.0
        %1287 = vmatmul.mubr.f32.gmra.mxu0 %v1049
        %v1288 = vpop.f32.mrf.mxu0
        %v1289 = vadd.f32 0.0, %v1288
        %v1290 = vpop.f32.mrf.mxu0
        %1291 = vmatprep.mubr.f32.mxu0 0.0
        %1292 = vmatmul.mubr.f32.gmra.mxu0 %v1052
        %v1293 = vpop.f32.mrf.mxu0
        %v1294 = vadd.f32 0.0, %v1293
        %v1295 = vpop.f32.mrf.mxu0
        %1296 = vmatprep.mubr.f32.mxu0 0.0
        %1297 = vmatmul.mubr.f32.gmra.mxu0 %v1055
        %v1298 = vpop.f32.mrf.mxu0
        %v1299 = vadd.f32 0.0, %v1298
        %v1300 = vpop.f32.mrf.mxu0
        %1301 = vmatprep.mubr.f32.mxu0 0.0
        %1302 = vmatmul.mubr.f32.gmra.mxu0 %v1058
        %v1303 = vpop.f32.mrf.mxu0
        %v1304 = vadd.f32 0.0, %v1303
        %v1305 = vpop.f32.mrf.mxu0
        %1306 = vmatprep.mubr.f32.mxu0 0.0
        %1307 = vmatmul.mubr.f32.gmra.mxu0 %v1061
        %v1308 = vpop.f32.mrf.mxu0
        %v1309 = vadd.f32 0.0, %v1308
        %v1310 = vpop.f32.mrf.mxu0
        %1311 = vmatprep.mubr.f32.mxu0 0.0
        %1312 = vmatmul.mubr.f32.gmra.mxu0 %v1064
        %v1313 = vpop.f32.mrf.mxu0
        %v1314 = vadd.f32 0.0, %v1313
        %v1315 = vpop.f32.mrf.mxu0
        %1316 = vmatprep.mubr.f32.mxu0 0.0
        %1317 = vmatmul.mubr.f32.gmra.mxu0 %v1067
        %v1318 = vpop.f32.mrf.mxu0
        %v1319 = vadd.f32 0.0, %v1318
        %v1320 = vpop.f32.mrf.mxu0
        %1321 = vdwg.mxu0
        %1322 = vmatprep.subr.mxu0 0.0
        %1323 = vmatpush1.msra.mxu0 0.0
        %1324 = vmatprep.subr.mxu0 0.0
        %1325 = vmatpush1.msra.mxu0 0.0
        %1326 = vmatprep.subr.mxu0 0.0
        %1327 = vmatpush1.msra.mxu0 0.0
        %1328 = vmatprep.subr.mxu0 0.0
        %1329 = vmatpush1.msra.mxu0 0.0
        %1330 = vmatprep.subr.mxu0 0.0
        %1331 = vmatpush1.msra.mxu0 0.0
        %1332 = vmatprep.subr.mxu0 0.0
        %1333 = vmatpush1.msra.mxu0 0.0
        %1334 = vmatprep.subr.mxu0 0.0
        %1335 = vmatpush1.msra.mxu0 0.0
        %1336 = vmatprep.subr.mxu0 0.0
        %1337 = vmatpush1.msra.mxu0 0.0
        %1338 = vmatprep.subr.mxu0 0.0
        %1339 = vmatpush1.msra.mxu0 0.0
        %1340 = vmatprep.subr.mxu0 0.0
        %1341 = vmatpush1.msra.mxu0 0.0
        %1342 = vmatprep.subr.mxu0 0.0
        %1343 = vmatpush1.msra.mxu0 0.0
        %1344 = vmatprep.subr.mxu0 0.0
        %1345 = vmatpush1.msra.mxu0 0.0
        %1346 = vmatprep.subr.mxu0 0.0
        %1347 = vmatpush1.msra.mxu0 0.0
        %1348 = vmatprep.subr.mxu0 0.0
        %1349 = vmatpush1.msra.mxu0 0.0
        %1350 = vmatprep.subr.mxu0 0.0
        %1351 = vmatpush1.msra.mxu0 %v781
        %1352 = vmatprep.subr.mxu0 0.0
        %1353 = vmatpush1.msra.mxu0 %v300
        %1354 = vmatprep.subr.mxu0 0.0
        %1355 = vmatpush2.msra.mxu0 0.0
        %1356 = vmatprep.subr.mxu0 0.0
        %1357 = vmatpush2.msra.mxu0 0.0
        %1358 = vmatprep.subr.mxu0 0.0
        %1359 = vmatpush2.msra.mxu0 0.0
        %1360 = vmatprep.subr.mxu0 0.0
        %1361 = vmatpush2.msra.mxu0 0.0
        %1362 = vmatprep.subr.mxu0 0.0
        %1363 = vmatpush2.msra.mxu0 0.0
        %1364 = vmatprep.subr.mxu0 0.0
        %1365 = vmatpush2.msra.mxu0 0.0
        %1366 = vmatprep.subr.mxu0 0.0
        %1367 = vmatpush2.msra.mxu0 0.0
        %1368 = vmatprep.subr.mxu0 0.0
        %1369 = vmatpush2.msra.mxu0 0.0
        %1370 = vmatprep.subr.mxu0 0.0
        %1371 = vmatpush2.msra.mxu0 0.0
        %1372 = vmatprep.subr.mxu0 0.0
        %1373 = vmatpush2.msra.mxu0 0.0
        %1374 = vmatprep.subr.mxu0 0.0
        %1375 = vmatpush2.msra.mxu0 0.0
        %1376 = vmatprep.subr.mxu0 0.0
        %1377 = vmatpush2.msra.mxu0 0.0
        %1378 = vmatprep.subr.mxu0 0.0
        %1379 = vmatpush2.msra.mxu0 0.0
        %1380 = vmatprep.subr.mxu0 0.0
        %1381 = vmatpush2.msra.mxu0 0.0
        %1382 = vmatprep.subr.mxu0 0.0
        %1383 = vmatpush2.msra.mxu0 0.0
        %1384 = vmatprep.subr.mxu0 0.0
        %1385 = vmatpush2.msra.mxu0 0.0
        %1386 = vmatprep.mubr.f32.mxu0 0.0
        %1387 = vmatmul.mubr.f32.gmra.mxu0 %v602
        %v1388 = vpop.f32.mrf.mxu0
        %v1389 = vadd.f32 %v1274, %v1388
        %v1390 = vpop.f32.mrf.mxu0
        %1391 = vmatprep.mubr.f32.mxu0 0.0
        %1392 = vmatmul.mubr.f32.gmra.mxu0 %v605
        %v1393 = vpop.f32.mrf.mxu0
        %v1394 = vadd.f32 %v1279, %v1393
        %v1395 = vpop.f32.mrf.mxu0
        %1396 = vmatprep.mubr.f32.mxu0 0.0
        %1397 = vmatmul.mubr.f32.gmra.mxu0 %v608
        %v1398 = vpop.f32.mrf.mxu0
        %v1399 = vadd.f32 %v1284, %v1398
        %v1400 = vpop.f32.mrf.mxu0
        %1401 = vmatprep.mubr.f32.mxu0 0.0
        %1402 = vmatmul.mubr.f32.gmra.mxu0 %v611
        %v1403 = vpop.f32.mrf.mxu0
        %v1404 = vadd.f32 %v1289, %v1403
        %v1405 = vpop.f32.mrf.mxu0
        %1406 = vmatprep.mubr.f32.mxu0 0.0
        %1407 = vmatmul.mubr.f32.gmra.mxu0 %v614
        %v1408 = vpop.f32.mrf.mxu0
        %v1409 = vadd.f32 %v1294, %v1408
        %v1410 = vpop.f32.mrf.mxu0
        %1411 = vmatprep.mubr.f32.mxu0 0.0
        %1412 = vmatmul.mubr.f32.gmra.mxu0 %v617
        %v1413 = vpop.f32.mrf.mxu0
        %v1414 = vadd.f32 %v1299, %v1413
        %v1415 = vpop.f32.mrf.mxu0
        %1416 = vmatprep.mubr.f32.mxu0 0.0
        %1417 = vmatmul.mubr.f32.gmra.mxu0 %v620
        %v1418 = vpop.f32.mrf.mxu0
        %v1419 = vadd.f32 %v1304, %v1418
        %v1420 = vpop.f32.mrf.mxu0
        %1421 = vmatprep.mubr.f32.mxu0 0.0
        %1422 = vmatmul.mubr.f32.gmra.mxu0 %v623
        %v1423 = vpop.f32.mrf.mxu0
        %v1424 = vadd.f32 %v1309, %v1423
        %v1425 = vpop.f32.mrf.mxu0
        %1426 = vmatprep.mubr.f32.mxu0 0.0
        %1427 = vmatmul.mubr.f32.gmra.mxu0 %v626
        %v1428 = vpop.f32.mrf.mxu0
        %v1429 = vadd.f32 %v1314, %v1428
        %v1430 = vpop.f32.mrf.mxu0
        %1431 = vmatprep.mubr.f32.mxu0 0.0
        %1432 = vmatmul.mubr.f32.gmra.mxu0 %v629
        %v1433 = vpop.f32.mrf.mxu0
        %v1434 = vadd.f32 %v1319, %v1433
        %v1435 = vpop.f32.mrf.mxu0
        %1436 = vdwg.mxu0
        %s1437 = sadd.s32 %s314, 3
        %s1438 = smul.u32 %s1437, 80
        %s1439 = scalar_lea.vmem %s246, %s1438
        %v1440 = vld [vmem:[%s1439] sm:$0xff]
        %v1441 = vld [vmem:[%s1439 + $0x8] sm:$0xff]
        %v1442 = vld [vmem:[%s1439 + $0x10] sm:$0xff]
        %v1443 = vld [vmem:[%s1439 + $0x18] sm:$0xff]
        %v1444 = vld [vmem:[%s1439 + $0x20] sm:$0xff]
        %v1445 = vld [vmem:[%s1439 + $0x28] sm:$0xff]
        %v1446 = vld [vmem:[%s1439 + $0x30] sm:$0xff]
        %v1447 = vld [vmem:[%s1439 + $0x38] sm:$0xff]
        %v1448 = vld [vmem:[%s1439 + $0x40] sm:$0xff]
        %v1449 = vld [vmem:[%s1439 + $0x48] sm:$0x3f]
        %v1460 = vrot.slane %v1440, 1
        %v1461 = vrot.slane %v1441, 1
        %v1462 = vsel %vm337, %v1460, %v1461
        %v1463 = vrot.slane %v1442, 1
        %v1464 = vsel %vm337, %v1461, %v1463
        %v1465 = vrot.slane %v1443, 1
        %v1466 = vsel %vm337, %v1463, %v1465
        %v1467 = vrot.slane %v1444, 1
        %v1468 = vsel %vm337, %v1465, %v1467
        %v1469 = vrot.slane %v1445, 1
        %v1470 = vsel %vm337, %v1467, %v1469
        %v1471 = vrot.slane %v1446, 1
        %v1472 = vsel %vm337, %v1469, %v1471
        %v1473 = vrot.slane %v1447, 1
        %v1474 = vsel %vm337, %v1471, %v1473
        %v1475 = vrot.slane %v1448, 1
        %v1476 = vsel %vm337, %v1473, %v1475
        %v1477 = vrot.slane %v1449, 1
        %v1478 = vsel %vm337, %v1475, %v1477
        %1479 = vrot.lane.b32.xlu0 %v1462, 3
        %v1480 = vpop.permute.xlu0 %1479
        %1481 = vrot.lane.b32.xlu0 %v1464, 3
        %v1482 = vpop.permute.xlu0 %1481
        %1483 = vrot.lane.b32.xlu0 %v1466, 3
        %v1484 = vpop.permute.xlu0 %1483
        %1485 = vrot.lane.b32.xlu0 %v1468, 3
        %v1486 = vpop.permute.xlu0 %1485
        %1487 = vrot.lane.b32.xlu0 %v1470, 3
        %v1488 = vpop.permute.xlu0 %1487
        %1489 = vrot.lane.b32.xlu0 %v1472, 3
        %v1490 = vpop.permute.xlu0 %1489
        %1491 = vrot.lane.b32.xlu0 %v1474, 3
        %v1492 = vpop.permute.xlu0 %1491
        %1493 = vrot.lane.b32.xlu0 %v1476, 3
        %v1494 = vpop.permute.xlu0 %1493
        %1495 = vrot.lane.b32.xlu0 %v1478, 3
        %v1496 = vpop.permute.xlu0 %1495
        %1497 = vrot.lane.b32.xlu0 %v1477, 3
        %v1498 = vpop.permute.xlu0 %1497
        %v1509 = vrot.slane %v1440, 2
        %v1510 = vrot.slane %v1441, 2
        %v1511 = vsel %vm387, %v1509, %v1510
        %v1512 = vrot.slane %v1442, 2
        %v1513 = vsel %vm387, %v1510, %v1512
        %v1514 = vrot.slane %v1443, 2
        %v1515 = vsel %vm387, %v1512, %v1514
        %v1516 = vrot.slane %v1444, 2
        %v1517 = vsel %vm387, %v1514, %v1516
        %v1518 = vrot.slane %v1445, 2
        %v1519 = vsel %vm387, %v1516, %v1518
        %v1520 = vrot.slane %v1446, 2
        %v1521 = vsel %vm387, %v1518, %v1520
        %v1522 = vrot.slane %v1447, 2
        %v1523 = vsel %vm387, %v1520, %v1522
        %v1524 = vrot.slane %v1448, 2
        %v1525 = vsel %vm387, %v1522, %v1524
        %v1526 = vrot.slane %v1449, 2
        %v1527 = vsel %vm387, %v1524, %v1526
        %1528 = vrot.lane.b32.xlu0 %v1511, 6
        %v1529 = vpop.permute.xlu0 %1528
        %1530 = vrot.lane.b32.xlu0 %v1513, 6
        %v1531 = vpop.permute.xlu0 %1530
        %1532 = vrot.lane.b32.xlu0 %v1515, 6
        %v1533 = vpop.permute.xlu0 %1532
        %1534 = vrot.lane.b32.xlu0 %v1517, 6
        %v1535 = vpop.permute.xlu0 %1534
        %1536 = vrot.lane.b32.xlu0 %v1519, 6
        %v1537 = vpop.permute.xlu0 %1536
        %1538 = vrot.lane.b32.xlu0 %v1521, 6
        %v1539 = vpop.permute.xlu0 %1538
        %1540 = vrot.lane.b32.xlu0 %v1523, 6
        %v1541 = vpop.permute.xlu0 %1540
        %1542 = vrot.lane.b32.xlu0 %v1525, 6
        %v1543 = vpop.permute.xlu0 %1542
        %1544 = vrot.lane.b32.xlu0 %v1527, 6
        %v1545 = vpop.permute.xlu0 %1544
        %1546 = vrot.lane.b32.xlu0 %v1526, 6
        %v1547 = vpop.permute.xlu0 %1546
        %v1558 = vsel %vm437, %v1440, %v1480
        %v1559 = vsel %vm437, %v1441, %v1482
        %v1560 = vsel %vm437, %v1442, %v1484
        %v1561 = vsel %vm437, %v1443, %v1486
        %v1562 = vsel %vm437, %v1444, %v1488
        %v1563 = vsel %vm437, %v1445, %v1490
        %v1564 = vsel %vm437, %v1446, %v1492
        %v1565 = vsel %vm437, %v1447, %v1494
        %v1566 = vsel %vm437, %v1448, %v1496
        %v1567 = vsel %vm437, %v1449, %v1498
        %v1568 = vsel %vm448, %v1558, %v1529
        %v1569 = vsel %vm448, %v1559, %v1531
        %v1570 = vsel %vm448, %v1560, %v1533
        %v1571 = vsel %vm448, %v1561, %v1535
        %v1572 = vsel %vm448, %v1562, %v1537
        %v1573 = vsel %vm448, %v1563, %v1539
        %v1574 = vsel %vm448, %v1564, %v1541
        %v1575 = vsel %vm448, %v1565, %v1543
        %v1576 = vsel %vm448, %v1566, %v1545
        %v1577 = vsel %vm448, %v1567, %v1547
        %v1579 = vsel %vm600, %v1568, 0
        %v1582 = vsel %vm600, %v1569, 0
        %v1585 = vsel %vm600, %v1570, 0
        %v1588 = vsel %vm600, %v1571, 0
        %v1591 = vsel %vm600, %v1572, 0
        %v1594 = vsel %vm600, %v1573, 0
        %v1597 = vsel %vm600, %v1574, 0
        %v1600 = vsel %vm600, %v1575, 0
        %v1603 = vsel %vm600, %v1576, 0
        %v1606 = vsel %vm600, %v1577, 0
        %1608 = vmatprep.subr.mxu0 0.0
        %1609 = vmatpush1.msra.mxu0 0.0
        %1610 = vmatprep.subr.mxu0 0.0
        %1611 = vmatpush1.msra.mxu0 0.0
        %1612 = vmatprep.subr.mxu0 0.0
        %1613 = vmatpush1.msra.mxu0 0.0
        %1614 = vmatprep.subr.mxu0 0.0
        %1615 = vmatpush1.msra.mxu0 0.0
        %1616 = vmatprep.subr.mxu0 0.0
        %1617 = vmatpush1.msra.mxu0 0.0
        %1618 = vmatprep.subr.mxu0 0.0
        %1619 = vmatpush1.msra.mxu0 0.0
        %1620 = vmatprep.subr.mxu0 0.0
        %1621 = vmatpush1.msra.mxu0 0.0
        %1622 = vmatprep.subr.mxu0 0.0
        %1623 = vmatpush1.msra.mxu0 0.0
        %1624 = vmatprep.subr.mxu0 0.0
        %1625 = vmatpush1.msra.mxu0 0.0
        %1626 = vmatprep.subr.mxu0 0.0
        %1627 = vmatpush1.msra.mxu0 0.0
        %1628 = vmatprep.subr.mxu0 0.0
        %1629 = vmatpush1.msra.mxu0 0.0
        %1630 = vmatprep.subr.mxu0 0.0
        %1631 = vmatpush1.msra.mxu0 0.0
        %1632 = vmatprep.subr.mxu0 0.0
        %1633 = vmatpush1.msra.mxu0 0.0
        %1634 = vmatprep.subr.mxu0 0.0
        %1635 = vmatpush1.msra.mxu0 0.0
        %1636 = vmatprep.subr.mxu0 0.0
        %1637 = vmatpush1.msra.mxu0 %v1070
        %1638 = vmatprep.subr.mxu0 0.0
        %1639 = vmatpush1.msra.mxu0 %v306
        %1640 = vmatprep.subr.mxu0 0.0
        %1641 = vmatpush2.msra.mxu0 0.0
        %1642 = vmatprep.subr.mxu0 0.0
        %1643 = vmatpush2.msra.mxu0 0.0
        %1644 = vmatprep.subr.mxu0 0.0
        %1645 = vmatpush2.msra.mxu0 0.0
        %1646 = vmatprep.subr.mxu0 0.0
        %1647 = vmatpush2.msra.mxu0 0.0
        %1648 = vmatprep.subr.mxu0 0.0
        %1649 = vmatpush2.msra.mxu0 0.0
        %1650 = vmatprep.subr.mxu0 0.0
        %1651 = vmatpush2.msra.mxu0 0.0
        %1652 = vmatprep.subr.mxu0 0.0
        %1653 = vmatpush2.msra.mxu0 0.0
        %1654 = vmatprep.subr.mxu0 0.0
        %1655 = vmatpush2.msra.mxu0 0.0
        %1656 = vmatprep.subr.mxu0 0.0
        %1657 = vmatpush2.msra.mxu0 0.0
        %1658 = vmatprep.subr.mxu0 0.0
        %1659 = vmatpush2.msra.mxu0 0.0
        %1660 = vmatprep.subr.mxu0 0.0
        %1661 = vmatpush2.msra.mxu0 0.0
        %1662 = vmatprep.subr.mxu0 0.0
        %1663 = vmatpush2.msra.mxu0 0.0
        %1664 = vmatprep.subr.mxu0 0.0
        %1665 = vmatpush2.msra.mxu0 0.0
        %1666 = vmatprep.subr.mxu0 0.0
        %1667 = vmatpush2.msra.mxu0 0.0
        %1668 = vmatprep.subr.mxu0 0.0
        %1669 = vmatpush2.msra.mxu0 0.0
        %1670 = vmatprep.subr.mxu0 0.0
        %1671 = vmatpush2.msra.mxu0 0.0
        %1672 = vmatprep.mubr.f32.mxu0 0.0
        %1673 = vmatmul.mubr.f32.gmra.mxu0 %v1579
        %v1674 = vpop.f32.mrf.mxu0
        %v1675 = vadd.f32 0.0, %v1674
        %v1676 = vpop.f32.mrf.mxu0
        %1677 = vmatprep.mubr.f32.mxu0 0.0
        %1678 = vmatmul.mubr.f32.gmra.mxu0 %v1582
        %v1679 = vpop.f32.mrf.mxu0
        %v1680 = vadd.f32 0.0, %v1679
        %v1681 = vpop.f32.mrf.mxu0
        %1682 = vmatprep.mubr.f32.mxu0 0.0
        %1683 = vmatmul.mubr.f32.gmra.mxu0 %v1585
        %v1684 = vpop.f32.mrf.mxu0
        %v1685 = vadd.f32 0.0, %v1684
        %v1686 = vpop.f32.mrf.mxu0
        %1687 = vmatprep.mubr.f32.mxu0 0.0
        %1688 = vmatmul.mubr.f32.gmra.mxu0 %v1588
        %v1689 = vpop.f32.mrf.mxu0
        %v1690 = vadd.f32 0.0, %v1689
        %v1691 = vpop.f32.mrf.mxu0
        %1692 = vmatprep.mubr.f32.mxu0 0.0
        %1693 = vmatmul.mubr.f32.gmra.mxu0 %v1591
        %v1694 = vpop.f32.mrf.mxu0
        %v1695 = vadd.f32 0.0, %v1694
        %v1696 = vpop.f32.mrf.mxu0
        %1697 = vmatprep.mubr.f32.mxu0 0.0
        %1698 = vmatmul.mubr.f32.gmra.mxu0 %v1594
        %v1699 = vpop.f32.mrf.mxu0
        %v1700 = vadd.f32 0.0, %v1699
        %v1701 = vpop.f32.mrf.mxu0
        %1702 = vmatprep.mubr.f32.mxu0 0.0
        %1703 = vmatmul.mubr.f32.gmra.mxu0 %v1597
        %v1704 = vpop.f32.mrf.mxu0
        %v1705 = vadd.f32 0.0, %v1704
        %v1706 = vpop.f32.mrf.mxu0
        %1707 = vmatprep.mubr.f32.mxu0 0.0
        %1708 = vmatmul.mubr.f32.gmra.mxu0 %v1600
        %v1709 = vpop.f32.mrf.mxu0
        %v1710 = vadd.f32 0.0, %v1709
        %v1711 = vpop.f32.mrf.mxu0
        %1712 = vmatprep.mubr.f32.mxu0 0.0
        %1713 = vmatmul.mubr.f32.gmra.mxu0 %v1603
        %v1714 = vpop.f32.mrf.mxu0
        %v1715 = vadd.f32 0.0, %v1714
        %v1716 = vpop.f32.mrf.mxu0
        %1717 = vmatprep.mubr.f32.mxu0 0.0
        %1718 = vmatmul.mubr.f32.gmra.mxu0 %v1606
        %v1719 = vpop.f32.mrf.mxu0
        %v1720 = vadd.f32 0.0, %v1719
        %v1721 = vpop.f32.mrf.mxu0
        %1722 = vdwg.mxu0
        %v1723 = vadd.f32 %v1389, %v1675
        %v1724 = vadd.f32 %v1394, %v1680
        %v1725 = vadd.f32 %v1399, %v1685
        %v1726 = vadd.f32 %v1404, %v1690
        %v1727 = vadd.f32 %v1409, %v1695
        %v1728 = vadd.f32 %v1414, %v1700
        %v1729 = vadd.f32 %v1419, %v1705
        %v1730 = vadd.f32 %v1424, %v1710
        %v1731 = vadd.f32 %v1429, %v1715
        %v1732 = vadd.f32 %v1434, %v1720
        %v1733 = vmax.f32 %v1723, 0.0
        %v1734 = vmax.f32 %v1724, 0.0
        %v1735 = vmax.f32 %v1725, 0.0
        %v1736 = vmax.f32 %v1726, 0.0
        %v1737 = vmax.f32 %v1727, 0.0
        %v1738 = vmax.f32 %v1728, 0.0
        %v1739 = vmax.f32 %v1729, 0.0
        %v1740 = vmax.f32 %v1730, 0.0
        %v1741 = vmax.f32 %v1731, 0.0
        %v1742 = vmax.f32 %v1732, 0.0
        %v1743 = vmax.f32 %v1197, %v1733
        %v1744 = vmax.f32 %v1198, %v1734
        %v1745 = vmax.f32 %v1199, %v1735
        %v1746 = vmax.f32 %v1200, %v1736
        %v1747 = vmax.f32 %v1201, %v1737
        %v1748 = vmax.f32 %v1202, %v1738
        %v1749 = vmax.f32 %v1203, %v1739
        %v1750 = vmax.f32 %v1204, %v1740
        %v1751 = vmax.f32 %v1205, %v1741
        %v1752 = vmax.f32 %v1206, %v1742
        %vm1753 = vcmask 621568
        %v1755 = vsel %vm1753, %v275, 0
        %v1758 = vsel %vm1753, %v276, 0
        %v1761 = vsel %vm1753, %v277, 0
        %v1764 = vsel %vm1753, %v278, 0
        %v1767 = vsel %vm1753, %v279, 0
        %vm1769 = vcmask 1043456
        %v1771 = vsel %vm1769, %v1752, 0
        %1773 = vmatprep.subr.mxu0 0.0
        %1774 = vmatpush1.msra.mxu0 0.0
        %1775 = vmatprep.subr.mxu0 0.0
        %1776 = vmatpush1.msra.mxu0 0.0
        %1777 = vmatprep.subr.mxu0 0.0
        %1778 = vmatpush1.msra.mxu0 0.0
        %1779 = vmatprep.subr.mxu0 0.0
        %1780 = vmatpush1.msra.mxu0 0.0
        %1781 = vmatprep.subr.mxu0 0.0
        %1782 = vmatpush1.msra.mxu0 0.0
        %1783 = vmatprep.subr.mxu0 0.0
        %1784 = vmatpush1.msra.mxu0 0.0
        %1785 = vmatprep.subr.mxu0 0.0
        %1786 = vmatpush1.msra.mxu0 %v1771
        %1787 = vmatprep.subr.mxu0 0.0
        %1788 = vmatpush1.msra.mxu0 %v1751
        %1789 = vmatprep.subr.mxu0 0.0
        %1790 = vmatpush1.msra.mxu0 %v1750
        %1791 = vmatprep.subr.mxu0 0.0
        %1792 = vmatpush1.msra.mxu0 %v1749
        %1793 = vmatprep.subr.mxu0 0.0
        %1794 = vmatpush1.msra.mxu0 %v1748
        %1795 = vmatprep.subr.mxu0 0.0
        %1796 = vmatpush1.msra.mxu0 %v1747
        %1797 = vmatprep.subr.mxu0 0.0
        %1798 = vmatpush1.msra.mxu0 %v1746
        %1799 = vmatprep.subr.mxu0 0.0
        %1800 = vmatpush1.msra.mxu0 %v1745
        %1801 = vmatprep.subr.mxu0 0.0
        %1802 = vmatpush1.msra.mxu0 %v1744
        %1803 = vmatprep.subr.mxu0 0.0
        %1804 = vmatpush1.msra.mxu0 %v1743
        %1805 = vmatprep.subr.mxu0 0.0
        %1806 = vmatpush2.msra.mxu0 0.0
        %1807 = vmatprep.subr.mxu0 0.0
        %1808 = vmatpush2.msra.mxu0 0.0
        %1809 = vmatprep.subr.mxu0 0.0
        %1810 = vmatpush2.msra.mxu0 0.0
        %1811 = vmatprep.subr.mxu0 0.0
        %1812 = vmatpush2.msra.mxu0 0.0
        %1813 = vmatprep.subr.mxu0 0.0
        %1814 = vmatpush2.msra.mxu0 0.0
        %1815 = vmatprep.subr.mxu0 0.0
        %1816 = vmatpush2.msra.mxu0 0.0
        %1817 = vmatprep.subr.mxu0 0.0
        %1818 = vmatpush2.msra.mxu0 0.0
        %1819 = vmatprep.subr.mxu0 0.0
        %1820 = vmatpush2.msra.mxu0 0.0
        %1821 = vmatprep.subr.mxu0 0.0
        %1822 = vmatpush2.msra.mxu0 0.0
        %1823 = vmatprep.subr.mxu0 0.0
        %1824 = vmatpush2.msra.mxu0 0.0
        %1825 = vmatprep.subr.mxu0 0.0
        %1826 = vmatpush2.msra.mxu0 0.0
        %1827 = vmatprep.subr.mxu0 0.0
        %1828 = vmatpush2.msra.mxu0 0.0
        %1829 = vmatprep.subr.mxu0 0.0
        %1830 = vmatpush2.msra.mxu0 0.0
        %1831 = vmatprep.subr.mxu0 0.0
        %1832 = vmatpush2.msra.mxu0 0.0
        %1833 = vmatprep.subr.mxu0 0.0
        %1834 = vmatpush2.msra.mxu0 0.0
        %1835 = vmatprep.subr.mxu0 0.0
        %1836 = vmatpush2.msra.mxu0 0.0
        %1837 = vmatprep.mubr.f32.mxu0 0.0
        %1838 = vmatmul.mubr.f32.gmra.mxu0 %v1755
        %v1839 = vpop.f32.mrf.mxu0
        %v1840 = vadd.f32 0.0, %v1839
        %v1841 = vpop.f32.mrf.mxu0
        %1842 = vmatprep.mubr.f32.mxu0 0.0
        %1843 = vmatmul.mubr.f32.gmra.mxu0 %v1758
        %v1844 = vpop.f32.mrf.mxu0
        %v1845 = vadd.f32 0.0, %v1844
        %v1846 = vpop.f32.mrf.mxu0
        %1847 = vmatprep.mubr.f32.mxu0 0.0
        %1848 = vmatmul.mubr.f32.gmra.mxu0 %v1761
        %v1849 = vpop.f32.mrf.mxu0
        %v1850 = vadd.f32 0.0, %v1849
        %v1851 = vpop.f32.mrf.mxu0
        %1852 = vmatprep.mubr.f32.mxu0 0.0
        %1853 = vmatmul.mubr.f32.gmra.mxu0 %v1764
        %v1854 = vpop.f32.mrf.mxu0
        %v1855 = vadd.f32 0.0, %v1854
        %v1856 = vpop.f32.mrf.mxu0
        %1857 = vmatprep.mubr.f32.mxu0 0.0
        %1858 = vmatmul.mubr.f32.gmra.mxu0 %v1767
        %v1859 = vpop.f32.mrf.mxu0
        %v1860 = vadd.f32 0.0, %v1859
        %v1861 = vpop.f32.mrf.mxu0
        %1862 = vdwg.mxu0
        %v1864 = vsel %vm1753, %v295, 0
        %v1867 = vsel %vm1753, %v296, 0
        %v1870 = vsel %vm1753, %v297, 0
        %v1873 = vsel %vm1753, %v298, 0
        %v1876 = vsel %vm1753, %v299, 0
        %1878 = vmatprep.subr.mxu0 0.0
        %1879 = vmatpush1.msra.mxu0 0.0
        %1880 = vmatprep.subr.mxu0 0.0
        %1881 = vmatpush1.msra.mxu0 0.0
        %1882 = vmatprep.subr.mxu0 0.0
        %1883 = vmatpush1.msra.mxu0 0.0
        %1884 = vmatprep.subr.mxu0 0.0
        %1885 = vmatpush1.msra.mxu0 0.0
        %1886 = vmatprep.subr.mxu0 0.0
        %1887 = vmatpush1.msra.mxu0 0.0
        %1888 = vmatprep.subr.mxu0 0.0
        %1889 = vmatpush1.msra.mxu0 0.0
        %1890 = vmatprep.subr.mxu0 0.0
        %1891 = vmatpush1.msra.mxu0 %v1771
        %1892 = vmatprep.subr.mxu0 0.0
        %1893 = vmatpush1.msra.mxu0 %v1751
        %1894 = vmatprep.subr.mxu0 0.0
        %1895 = vmatpush1.msra.mxu0 %v1750
        %1896 = vmatprep.subr.mxu0 0.0
        %1897 = vmatpush1.msra.mxu0 %v1749
        %1898 = vmatprep.subr.mxu0 0.0
        %1899 = vmatpush1.msra.mxu0 %v1748
        %1900 = vmatprep.subr.mxu0 0.0
        %1901 = vmatpush1.msra.mxu0 %v1747
        %1902 = vmatprep.subr.mxu0 0.0
        %1903 = vmatpush1.msra.mxu0 %v1746
        %1904 = vmatprep.subr.mxu0 0.0
        %1905 = vmatpush1.msra.mxu0 %v1745
        %1906 = vmatprep.subr.mxu0 0.0
        %1907 = vmatpush1.msra.mxu0 %v1744
        %1908 = vmatprep.subr.mxu0 0.0
        %1909 = vmatpush1.msra.mxu0 %v1743
        %1910 = vmatprep.subr.mxu0 0.0
        %1911 = vmatpush2.msra.mxu0 0.0
        %1912 = vmatprep.subr.mxu0 0.0
        %1913 = vmatpush2.msra.mxu0 0.0
        %1914 = vmatprep.subr.mxu0 0.0
        %1915 = vmatpush2.msra.mxu0 0.0
        %1916 = vmatprep.subr.mxu0 0.0
        %1917 = vmatpush2.msra.mxu0 0.0
        %1918 = vmatprep.subr.mxu0 0.0
        %1919 = vmatpush2.msra.mxu0 0.0
        %1920 = vmatprep.subr.mxu0 0.0
        %1921 = vmatpush2.msra.mxu0 0.0
        %1922 = vmatprep.subr.mxu0 0.0
        %1923 = vmatpush2.msra.mxu0 0.0
        %1924 = vmatprep.subr.mxu0 0.0
        %1925 = vmatpush2.msra.mxu0 0.0
        %1926 = vmatprep.subr.mxu0 0.0
        %1927 = vmatpush2.msra.mxu0 0.0
        %1928 = vmatprep.subr.mxu0 0.0
        %1929 = vmatpush2.msra.mxu0 0.0
        %1930 = vmatprep.subr.mxu0 0.0
        %1931 = vmatpush2.msra.mxu0 0.0
        %1932 = vmatprep.subr.mxu0 0.0
        %1933 = vmatpush2.msra.mxu0 0.0
        %1934 = vmatprep.subr.mxu0 0.0
        %1935 = vmatpush2.msra.mxu0 0.0
        %1936 = vmatprep.subr.mxu0 0.0
        %1937 = vmatpush2.msra.mxu0 0.0
        %1938 = vmatprep.subr.mxu0 0.0
        %1939 = vmatpush2.msra.mxu0 0.0
        %1940 = vmatprep.subr.mxu0 0.0
        %1941 = vmatpush2.msra.mxu0 0.0
        %1942 = vmatprep.mubr.f32.mxu0 0.0
        %1943 = vmatmul.mubr.f32.gmra.mxu0 %v1864
        %v1944 = vpop.f32.mrf.mxu0
        %v1945 = vadd.f32 0.0, %v1944
        %v1946 = vpop.f32.mrf.mxu0
        %1947 = vmatprep.mubr.f32.mxu0 0.0
        %1948 = vmatmul.mubr.f32.gmra.mxu0 %v1867
        %v1949 = vpop.f32.mrf.mxu0
        %v1950 = vadd.f32 0.0, %v1949
        %v1951 = vpop.f32.mrf.mxu0
        %1952 = vmatprep.mubr.f32.mxu0 0.0
        %1953 = vmatmul.mubr.f32.gmra.mxu0 %v1870
        %v1954 = vpop.f32.mrf.mxu0
        %v1955 = vadd.f32 0.0, %v1954
        %v1956 = vpop.f32.mrf.mxu0
        %1957 = vmatprep.mubr.f32.mxu0 0.0
        %1958 = vmatmul.mubr.f32.gmra.mxu0 %v1873
        %v1959 = vpop.f32.mrf.mxu0
        %v1960 = vadd.f32 0.0, %v1959
        %v1961 = vpop.f32.mrf.mxu0
        %1962 = vmatprep.mubr.f32.mxu0 0.0
        %1963 = vmatmul.mubr.f32.gmra.mxu0 %v1876
        %v1964 = vpop.f32.mrf.mxu0
        %v1965 = vadd.f32 0.0, %v1964
        %v1966 = vpop.f32.mrf.mxu0
        %1967 = vdwg.mxu0
        %v1968 = vmax.f32 %v1840, %v1945
        %v1969 = vmax.f32 %v1845, %v1950
        %v1970 = vmax.f32 %v1850, %v1955
        %v1971 = vmax.f32 %v1855, %v1960
        %v1972 = vmax.f32 %v1860, %v1965
        %s1973 = smul.u32 %s309, 40
        %s1974 = scalar_lea.vmem [#allocation2], %s1973
        %vm1975 = vcmask 130048
        %1976 = vst.msk [vmem:[%s1974] sm:$0xff] %vm1975, %v1968
        %1977 = vst.msk [vmem:[%s1974 + $0x8] sm:$0xff] %vm1975, %v1969
        %1978 = vst.msk [vmem:[%s1974 + $0x10] sm:$0xff] %vm1975, %v1970
        %1979 = vst.msk [vmem:[%s1974 + $0x18] sm:$0xff] %vm1975, %v1971
        %vm1980 = vcmask 128000
        %1981 = vst.msk [vmem:[%s1974 + $0x20] sm:$0x3f] %vm1980, %v1972
      $region49: #{cnn_forward.2} parent=43 // loop_footer
        %s313 = sadd.s32 1, %s309
      $region50: #{cnn_forward.2} parent=43 // loop_footer_branch
        %308 = sbr.rel target = $region46
      $region51: #{cnn_forward.2} parent=43 // loop_exit
        _
      %v1982 = vld [vmem:[%s2] sm:$0xff]
      %v1983 = vld [vmem:[%s2 + $0x8] sm:$0xff]
      %v1984 = vld [vmem:[%s2 + $0x10] sm:$0xff]
      %v1985 = vld [vmem:[%s2 + $0x18] sm:$0xff]
      %v1986 = vld [vmem:[%s2 + $0x20] sm:$0xff]
      %v1987 = vld [vmem:[%s2 + $0x28] sm:$0xff]
      %s1988 = scalar_lea.vmem %s2, 48
      %v1989 = vld [vmem:[%s1988] sm:$0xff]
      %v1990 = vld [vmem:[%s1988 + $0x8] sm:$0xff]
      %v1991 = vld [vmem:[%s1988 + $0x10] sm:$0xff]
      %v1992 = vld [vmem:[%s1988 + $0x18] sm:$0xff]
      %v1993 = vld [vmem:[%s1988 + $0x20] sm:$0xff]
      %v1994 = vld [vmem:[%s1988 + $0x28] sm:$0xff]
      %s1995 = scalar_lea.vmem %s2, 96
      %v1996 = vld [vmem:[%s1995] sm:$0xff]
      %v1997 = vld [vmem:[%s1995 + $0x8] sm:$0xff]
      %v1998 = vld [vmem:[%s1995 + $0x10] sm:$0xff]
      %v1999 = vld [vmem:[%s1995 + $0x18] sm:$0xff]
      %v2000 = vld [vmem:[%s1995 + $0x20] sm:$0xff]
      %v2001 = vld [vmem:[%s1995 + $0x28] sm:$0xff]
      loop: start=0, step=1, limit=18
      $region52: #{cnn_forward.2} parent=43 // loop_pre_header
        _
      $region53: #{cnn_forward.2} parent=43 // loop_header
        %s2003 = sphi 0, %s2007
        %p2004 = scmp.ge.s32.totalorder %s2003, 18
      $region54: #{cnn_forward.2} parent=43 // loop_header_branch
        %2006 = sbr.rel (%p2004) target = $region58
      $region55: #{cnn_forward.2} parent=43 // loop_body
        %s2008 = smul.u32 %s2003, 2
        %s2009 = smul.u32 %s2008, 40
        %s2010 = scalar_lea.vmem [#allocation2], %s2009
        %v2011 = vld [vmem:[%s2010] sm:$0xff]
        %v2012 = vld [vmem:[%s2010 + $0x8] sm:$0xff]
        %v2013 = vld [vmem:[%s2010 + $0x10] sm:$0xff]
        %v2014 = vld [vmem:[%s2010 + $0x18] sm:$0xff]
        %v2015 = vld [vmem:[%s2010 + $0x20] sm:$0x3f]
        %vm2021 = vcmask 1046528
        %v2022 = vrot.slane %v2011, 1
        %v2023 = vrot.slane %v2012, 1
        %v2024 = vsel %vm2021, %v2022, %v2023
        %v2025 = vrot.slane %v2013, 1
        %v2026 = vsel %vm2021, %v2023, %v2025
        %v2027 = vrot.slane %v2014, 1
        %v2028 = vsel %vm2021, %v2025, %v2027
        %v2029 = vrot.slane %v2015, 1
        %v2030 = vsel %vm2021, %v2027, %v2029
        %2031 = vrot.lane.b32.xlu0 %v2024, 16
        %v2032 = vpop.permute.xlu0 %2031
        %2033 = vrot.lane.b32.xlu0 %v2026, 16
        %v2034 = vpop.permute.xlu0 %2033
        %2035 = vrot.lane.b32.xlu0 %v2028, 16
        %v2036 = vpop.permute.xlu0 %2035
        %2037 = vrot.lane.b32.xlu0 %v2030, 16
        %v2038 = vpop.permute.xlu0 %2037
        %2039 = vrot.lane.b32.xlu0 %v2029, 16
        %v2040 = vpop.permute.xlu0 %2039
        %vm2046 = vcmask 1045504
        %v2047 = vrot.slane %v2011, 2
        %v2048 = vrot.slane %v2012, 2
        %v2049 = vsel %vm2046, %v2047, %v2048
        %v2050 = vrot.slane %v2013, 2
        %v2051 = vsel %vm2046, %v2048, %v2050
        %v2052 = vrot.slane %v2014, 2
        %v2053 = vsel %vm2046, %v2050, %v2052
        %v2054 = vrot.slane %v2015, 2
        %v2055 = vsel %vm2046, %v2052, %v2054
        %2056 = vrot.lane.b32.xlu0 %v2049, 32
        %v2057 = vpop.permute.xlu0 %2056
        %2058 = vrot.lane.b32.xlu0 %v2051, 32
        %v2059 = vpop.permute.xlu0 %2058
        %2060 = vrot.lane.b32.xlu0 %v2053, 32
        %v2061 = vpop.permute.xlu0 %2060
        %2062 = vrot.lane.b32.xlu0 %v2055, 32
        %v2063 = vpop.permute.xlu0 %2062
        %2064 = vrot.lane.b32.xlu0 %v2054, 32
        %v2065 = vpop.permute.xlu0 %2064
        %vm2071 = vcmask 130048
        %v2072 = vsel %vm2071, %v2011, %v2032
        %v2073 = vsel %vm2071, %v2012, %v2034
        %v2074 = vsel %vm2071, %v2013, %v2036
        %v2075 = vsel %vm2071, %v2014, %v2038
        %v2076 = vsel %vm2071, %v2015, %v2040
        %vm2077 = vcmask 261120
        %v2078 = vsel %vm2077, %v2072, %v2057
        %v2079 = vsel %vm2077, %v2073, %v2059
        %v2080 = vsel %vm2077, %v2074, %v2061
        %v2081 = vsel %vm2077, %v2075, %v2063
        %v2082 = vsel %vm2077, %v2076, %v2065
        %s2083 = sadd.s32 %s2008, 1
        %s2084 = smul.u32 %s2083, 40
        %s2085 = scalar_lea.vmem [#allocation2], %s2084
        %v2086 = vld [vmem:[%s2085] sm:$0xff]
        %v2087 = vld [vmem:[%s2085 + $0x8] sm:$0xff]
        %v2088 = vld [vmem:[%s2085 + $0x10] sm:$0xff]
        %v2089 = vld [vmem:[%s2085 + $0x18] sm:$0xff]
        %v2090 = vld [vmem:[%s2085 + $0x20] sm:$0x3f]
        %v2096 = vrot.slane %v2086, 1
        %v2097 = vrot.slane %v2087, 1
        %v2098 = vsel %vm2021, %v2096, %v2097
        %v2099 = vrot.slane %v2088, 1
        %v2100 = vsel %vm2021, %v2097, %v2099
        %v2101 = vrot.slane %v2089, 1
        %v2102 = vsel %vm2021, %v2099, %v2101
        %v2103 = vrot.slane %v2090, 1
        %v2104 = vsel %vm2021, %v2101, %v2103
        %2105 = vrot.lane.b32.xlu0 %v2098, 16
        %v2106 = vpop.permute.xlu0 %2105
        %2107 = vrot.lane.b32.xlu0 %v2100, 16
        %v2108 = vpop.permute.xlu0 %2107
        %2109 = vrot.lane.b32.xlu0 %v2102, 16
        %v2110 = vpop.permute.xlu0 %2109
        %2111 = vrot.lane.b32.xlu0 %v2104, 16
        %v2112 = vpop.permute.xlu0 %2111
        %2113 = vrot.lane.b32.xlu0 %v2103, 16
        %v2114 = vpop.permute.xlu0 %2113
        %v2120 = vrot.slane %v2086, 2
        %v2121 = vrot.slane %v2087, 2
        %v2122 = vsel %vm2046, %v2120, %v2121
        %v2123 = vrot.slane %v2088, 2
        %v2124 = vsel %vm2046, %v2121, %v2123
        %v2125 = vrot.slane %v2089, 2
        %v2126 = vsel %vm2046, %v2123, %v2125
        %v2127 = vrot.slane %v2090, 2
        %v2128 = vsel %vm2046, %v2125, %v2127
        %2129 = vrot.lane.b32.xlu0 %v2122, 32
        %v2130 = vpop.permute.xlu0 %2129
        %2131 = vrot.lane.b32.xlu0 %v2124, 32
        %v2132 = vpop.permute.xlu0 %2131
        %2133 = vrot.lane.b32.xlu0 %v2126, 32
        %v2134 = vpop.permute.xlu0 %2133
        %2135 = vrot.lane.b32.xlu0 %v2128, 32
        %v2136 = vpop.permute.xlu0 %2135
        %2137 = vrot.lane.b32.xlu0 %v2127, 32
        %v2138 = vpop.permute.xlu0 %2137
        %v2144 = vsel %vm2071, %v2086, %v2106
        %v2145 = vsel %vm2071, %v2087, %v2108
        %v2146 = vsel %vm2071, %v2088, %v2110
        %v2147 = vsel %vm2071, %v2089, %v2112
        %v2148 = vsel %vm2071, %v2090, %v2114
        %v2149 = vsel %vm2077, %v2144, %v2130
        %v2150 = vsel %vm2077, %v2145, %v2132
        %v2151 = vsel %vm2077, %v2146, %v2134
        %v2152 = vsel %vm2077, %v2147, %v2136
        %v2153 = vsel %vm2077, %v2148, %v2138
        %vm2154 = vcmask 392192
        %v2156 = vsel %vm2154, %v2149, 0
        %v2159 = vsel %vm2154, %v2150, 0
        %v2162 = vsel %vm2154, %v2151, 0
        %v2165 = vsel %vm2154, %v2152, 0
        %v2168 = vsel %vm2154, %v2153, 0
        %2170 = vmatprep.subr.mxu0 0.0
        %2171 = vmatpush1.msra.mxu0 0.0
        %2172 = vmatprep.subr.mxu0 0.0
        %2173 = vmatpush1.msra.mxu0 0.0
        %2174 = vmatprep.subr.mxu0 0.0
        %2175 = vmatpush1.msra.mxu0 0.0
        %2176 = vmatprep.subr.mxu0 0.0
        %2177 = vmatpush1.msra.mxu0 0.0
        %2178 = vmatprep.subr.mxu0 0.0
        %2179 = vmatpush1.msra.mxu0 0.0
        %2180 = vmatprep.subr.mxu0 0.0
        %2181 = vmatpush1.msra.mxu0 0.0
        %2182 = vmatprep.subr.mxu0 0.0
        %2183 = vmatpush1.msra.mxu0 0.0
        %2184 = vmatprep.subr.mxu0 0.0
        %2185 = vmatpush1.msra.mxu0 0.0
        %2186 = vmatprep.subr.mxu0 0.0
        %2187 = vmatpush1.msra.mxu0 0.0
        %2188 = vmatprep.subr.mxu0 0.0
        %2189 = vmatpush1.msra.mxu0 0.0
        %2190 = vmatprep.subr.mxu0 0.0
        %2191 = vmatpush1.msra.mxu0 %v1994
        %2192 = vmatprep.subr.mxu0 0.0
        %2193 = vmatpush1.msra.mxu0 %v1993
        %2194 = vmatprep.subr.mxu0 0.0
        %2195 = vmatpush1.msra.mxu0 %v1992
        %2196 = vmatprep.subr.mxu0 0.0
        %2197 = vmatpush1.msra.mxu0 %v1991
        %2198 = vmatprep.subr.mxu0 0.0
        %2199 = vmatpush1.msra.mxu0 %v1990
        %2200 = vmatprep.subr.mxu0 0.0
        %2201 = vmatpush1.msra.mxu0 %v1989
        %2202 = vmatprep.subr.mxu0 0.0
        %2203 = vmatpush2.msra.mxu0 0.0
        %2204 = vmatprep.subr.mxu0 0.0
        %2205 = vmatpush2.msra.mxu0 0.0
        %2206 = vmatprep.subr.mxu0 0.0
        %2207 = vmatpush2.msra.mxu0 0.0
        %2208 = vmatprep.subr.mxu0 0.0
        %2209 = vmatpush2.msra.mxu0 0.0
        %2210 = vmatprep.subr.mxu0 0.0
        %2211 = vmatpush2.msra.mxu0 0.0
        %2212 = vmatprep.subr.mxu0 0.0
        %2213 = vmatpush2.msra.mxu0 0.0
        %2214 = vmatprep.subr.mxu0 0.0
        %2215 = vmatpush2.msra.mxu0 0.0
        %2216 = vmatprep.subr.mxu0 0.0
        %2217 = vmatpush2.msra.mxu0 0.0
        %2218 = vmatprep.subr.mxu0 0.0
        %2219 = vmatpush2.msra.mxu0 0.0
        %2220 = vmatprep.subr.mxu0 0.0
        %2221 = vmatpush2.msra.mxu0 0.0
        %2222 = vmatprep.subr.mxu0 0.0
        %2223 = vmatpush2.msra.mxu0 0.0
        %2224 = vmatprep.subr.mxu0 0.0
        %2225 = vmatpush2.msra.mxu0 0.0
        %2226 = vmatprep.subr.mxu0 0.0
        %2227 = vmatpush2.msra.mxu0 0.0
        %2228 = vmatprep.subr.mxu0 0.0
        %2229 = vmatpush2.msra.mxu0 0.0
        %2230 = vmatprep.subr.mxu0 0.0
        %2231 = vmatpush2.msra.mxu0 0.0
        %2232 = vmatprep.subr.mxu0 0.0
        %2233 = vmatpush2.msra.mxu0 0.0
        %2234 = vmatprep.mubr.f32.mxu0 0.0
        %2235 = vmatmul.mubr.f32.gmra.mxu0 %v2156
        %v2236 = vpop.f32.mrf.mxu0
        %v2237 = vadd.f32 0.0, %v2236
        %v2238 = vpop.f32.mrf.mxu0
        %2239 = vmatprep.mubr.f32.mxu0 0.0
        %2240 = vmatmul.mubr.f32.gmra.mxu0 %v2159
        %v2241 = vpop.f32.mrf.mxu0
        %v2242 = vadd.f32 0.0, %v2241
        %v2243 = vpop.f32.mrf.mxu0
        %2244 = vmatprep.mubr.f32.mxu0 0.0
        %2245 = vmatmul.mubr.f32.gmra.mxu0 %v2162
        %v2246 = vpop.f32.mrf.mxu0
        %v2247 = vadd.f32 0.0, %v2246
        %v2248 = vpop.f32.mrf.mxu0
        %2249 = vmatprep.mubr.f32.mxu0 0.0
        %2250 = vmatmul.mubr.f32.gmra.mxu0 %v2165
        %v2251 = vpop.f32.mrf.mxu0
        %v2252 = vadd.f32 0.0, %v2251
        %v2253 = vpop.f32.mrf.mxu0
        %2254 = vmatprep.mubr.f32.mxu0 0.0
        %2255 = vmatmul.mubr.f32.gmra.mxu0 %v2168
        %v2256 = vpop.f32.mrf.mxu0
        %v2257 = vadd.f32 0.0, %v2256
        %v2258 = vpop.f32.mrf.mxu0
        %2259 = vdwg.mxu0
        %v2261 = vsel %vm2154, %v2078, 0
        %v2264 = vsel %vm2154, %v2079, 0
        %v2267 = vsel %vm2154, %v2080, 0
        %v2270 = vsel %vm2154, %v2081, 0
        %v2273 = vsel %vm2154, %v2082, 0
        %2275 = vmatprep.subr.mxu0 0.0
        %2276 = vmatpush1.msra.mxu0 0.0
        %2277 = vmatprep.subr.mxu0 0.0
        %2278 = vmatpush1.msra.mxu0 0.0
        %2279 = vmatprep.subr.mxu0 0.0
        %2280 = vmatpush1.msra.mxu0 0.0
        %2281 = vmatprep.subr.mxu0 0.0
        %2282 = vmatpush1.msra.mxu0 0.0
        %2283 = vmatprep.subr.mxu0 0.0
        %2284 = vmatpush1.msra.mxu0 0.0
        %2285 = vmatprep.subr.mxu0 0.0
        %2286 = vmatpush1.msra.mxu0 0.0
        %2287 = vmatprep.subr.mxu0 0.0
        %2288 = vmatpush1.msra.mxu0 0.0
        %2289 = vmatprep.subr.mxu0 0.0
        %2290 = vmatpush1.msra.mxu0 0.0
        %2291 = vmatprep.subr.mxu0 0.0
        %2292 = vmatpush1.msra.mxu0 0.0
        %2293 = vmatprep.subr.mxu0 0.0
        %2294 = vmatpush1.msra.mxu0 0.0
        %2295 = vmatprep.subr.mxu0 0.0
        %2296 = vmatpush1.msra.mxu0 %v1987
        %2297 = vmatprep.subr.mxu0 0.0
        %2298 = vmatpush1.msra.mxu0 %v1986
        %2299 = vmatprep.subr.mxu0 0.0
        %2300 = vmatpush1.msra.mxu0 %v1985
        %2301 = vmatprep.subr.mxu0 0.0
        %2302 = vmatpush1.msra.mxu0 %v1984
        %2303 = vmatprep.subr.mxu0 0.0
        %2304 = vmatpush1.msra.mxu0 %v1983
        %2305 = vmatprep.subr.mxu0 0.0
        %2306 = vmatpush1.msra.mxu0 %v1982
        %2307 = vmatprep.subr.mxu0 0.0
        %2308 = vmatpush2.msra.mxu0 0.0
        %2309 = vmatprep.subr.mxu0 0.0
        %2310 = vmatpush2.msra.mxu0 0.0
        %2311 = vmatprep.subr.mxu0 0.0
        %2312 = vmatpush2.msra.mxu0 0.0
        %2313 = vmatprep.subr.mxu0 0.0
        %2314 = vmatpush2.msra.mxu0 0.0
        %2315 = vmatprep.subr.mxu0 0.0
        %2316 = vmatpush2.msra.mxu0 0.0
        %2317 = vmatprep.subr.mxu0 0.0
        %2318 = vmatpush2.msra.mxu0 0.0
        %2319 = vmatprep.subr.mxu0 0.0
        %2320 = vmatpush2.msra.mxu0 0.0
        %2321 = vmatprep.subr.mxu0 0.0
        %2322 = vmatpush2.msra.mxu0 0.0
        %2323 = vmatprep.subr.mxu0 0.0
        %2324 = vmatpush2.msra.mxu0 0.0
        %2325 = vmatprep.subr.mxu0 0.0
        %2326 = vmatpush2.msra.mxu0 0.0
        %2327 = vmatprep.subr.mxu0 0.0
        %2328 = vmatpush2.msra.mxu0 0.0
        %2329 = vmatprep.subr.mxu0 0.0
        %2330 = vmatpush2.msra.mxu0 0.0
        %2331 = vmatprep.subr.mxu0 0.0
        %2332 = vmatpush2.msra.mxu0 0.0
        %2333 = vmatprep.subr.mxu0 0.0
        %2334 = vmatpush2.msra.mxu0 0.0
        %2335 = vmatprep.subr.mxu0 0.0
        %2336 = vmatpush2.msra.mxu0 0.0
        %2337 = vmatprep.subr.mxu0 0.0
        %2338 = vmatpush2.msra.mxu0 0.0
        %2339 = vmatprep.mubr.f32.mxu0 0.0
        %2340 = vmatmul.mubr.f32.gmra.mxu0 %v2261
        %v2341 = vpop.f32.mrf.mxu0
        %v2342 = vadd.f32 %v2237, %v2341
        %v2343 = vpop.f32.mrf.mxu0
        %2344 = vmatprep.mubr.f32.mxu0 0.0
        %2345 = vmatmul.mubr.f32.gmra.mxu0 %v2264
        %v2346 = vpop.f32.mrf.mxu0
        %v2347 = vadd.f32 %v2242, %v2346
        %v2348 = vpop.f32.mrf.mxu0
        %2349 = vmatprep.mubr.f32.mxu0 0.0
        %2350 = vmatmul.mubr.f32.gmra.mxu0 %v2267
        %v2351 = vpop.f32.mrf.mxu0
        %v2352 = vadd.f32 %v2247, %v2351
        %v2353 = vpop.f32.mrf.mxu0
        %2354 = vmatprep.mubr.f32.mxu0 0.0
        %2355 = vmatmul.mubr.f32.gmra.mxu0 %v2270
        %v2356 = vpop.f32.mrf.mxu0
        %v2357 = vadd.f32 %v2252, %v2356
        %v2358 = vpop.f32.mrf.mxu0
        %2359 = vmatprep.mubr.f32.mxu0 0.0
        %2360 = vmatmul.mubr.f32.gmra.mxu0 %v2273
        %v2361 = vpop.f32.mrf.mxu0
        %v2362 = vadd.f32 %v2257, %v2361
        %v2363 = vpop.f32.mrf.mxu0
        %2364 = vdwg.mxu0
        %s2365 = sadd.s32 %s2008, 2
        %s2366 = smul.u32 %s2365, 40
        %s2367 = scalar_lea.vmem [#allocation2], %s2366
        %v2368 = vld [vmem:[%s2367] sm:$0xff]
        %v2369 = vld [vmem:[%s2367 + $0x8] sm:$0xff]
        %v2370 = vld [vmem:[%s2367 + $0x10] sm:$0xff]
        %v2371 = vld [vmem:[%s2367 + $0x18] sm:$0xff]
        %v2372 = vld [vmem:[%s2367 + $0x20] sm:$0x3f]
        %v2378 = vrot.slane %v2368, 1
        %v2379 = vrot.slane %v2369, 1
        %v2380 = vsel %vm2021, %v2378, %v2379
        %v2381 = vrot.slane %v2370, 1
        %v2382 = vsel %vm2021, %v2379, %v2381
        %v2383 = vrot.slane %v2371, 1
        %v2384 = vsel %vm2021, %v2381, %v2383
        %v2385 = vrot.slane %v2372, 1
        %v2386 = vsel %vm2021, %v2383, %v2385
        %2387 = vrot.lane.b32.xlu0 %v2380, 16
        %v2388 = vpop.permute.xlu0 %2387
        %2389 = vrot.lane.b32.xlu0 %v2382, 16
        %v2390 = vpop.permute.xlu0 %2389
        %2391 = vrot.lane.b32.xlu0 %v2384, 16
        %v2392 = vpop.permute.xlu0 %2391
        %2393 = vrot.lane.b32.xlu0 %v2386, 16
        %v2394 = vpop.permute.xlu0 %2393
        %2395 = vrot.lane.b32.xlu0 %v2385, 16
        %v2396 = vpop.permute.xlu0 %2395
        %v2402 = vrot.slane %v2368, 2
        %v2403 = vrot.slane %v2369, 2
        %v2404 = vsel %vm2046, %v2402, %v2403
        %v2405 = vrot.slane %v2370, 2
        %v2406 = vsel %vm2046, %v2403, %v2405
        %v2407 = vrot.slane %v2371, 2
        %v2408 = vsel %vm2046, %v2405, %v2407
        %v2409 = vrot.slane %v2372, 2
        %v2410 = vsel %vm2046, %v2407, %v2409
        %2411 = vrot.lane.b32.xlu0 %v2404, 32
        %v2412 = vpop.permute.xlu0 %2411
        %2413 = vrot.lane.b32.xlu0 %v2406, 32
        %v2414 = vpop.permute.xlu0 %2413
        %2415 = vrot.lane.b32.xlu0 %v2408, 32
        %v2416 = vpop.permute.xlu0 %2415
        %2417 = vrot.lane.b32.xlu0 %v2410, 32
        %v2418 = vpop.permute.xlu0 %2417
        %2419 = vrot.lane.b32.xlu0 %v2409, 32
        %v2420 = vpop.permute.xlu0 %2419
        %v2426 = vsel %vm2071, %v2368, %v2388
        %v2427 = vsel %vm2071, %v2369, %v2390
        %v2428 = vsel %vm2071, %v2370, %v2392
        %v2429 = vsel %vm2071, %v2371, %v2394
        %v2430 = vsel %vm2071, %v2372, %v2396
        %v2431 = vsel %vm2077, %v2426, %v2412
        %v2432 = vsel %vm2077, %v2427, %v2414
        %v2433 = vsel %vm2077, %v2428, %v2416
        %v2434 = vsel %vm2077, %v2429, %v2418
        %v2435 = vsel %vm2077, %v2430, %v2420
        %v2437 = vsel %vm2154, %v2431, 0
        %v2440 = vsel %vm2154, %v2432, 0
        %v2443 = vsel %vm2154, %v2433, 0
        %v2446 = vsel %vm2154, %v2434, 0
        %v2449 = vsel %vm2154, %v2435, 0
        %2451 = vmatprep.subr.mxu0 0.0
        %2452 = vmatpush1.msra.mxu0 0.0
        %2453 = vmatprep.subr.mxu0 0.0
        %2454 = vmatpush1.msra.mxu0 0.0
        %2455 = vmatprep.subr.mxu0 0.0
        %2456 = vmatpush1.msra.mxu0 0.0
        %2457 = vmatprep.subr.mxu0 0.0
        %2458 = vmatpush1.msra.mxu0 0.0
        %2459 = vmatprep.subr.mxu0 0.0
        %2460 = vmatpush1.msra.mxu0 0.0
        %2461 = vmatprep.subr.mxu0 0.0
        %2462 = vmatpush1.msra.mxu0 0.0
        %2463 = vmatprep.subr.mxu0 0.0
        %2464 = vmatpush1.msra.mxu0 0.0
        %2465 = vmatprep.subr.mxu0 0.0
        %2466 = vmatpush1.msra.mxu0 0.0
        %2467 = vmatprep.subr.mxu0 0.0
        %2468 = vmatpush1.msra.mxu0 0.0
        %2469 = vmatprep.subr.mxu0 0.0
        %2470 = vmatpush1.msra.mxu0 0.0
        %2471 = vmatprep.subr.mxu0 0.0
        %2472 = vmatpush1.msra.mxu0 %v2001
        %2473 = vmatprep.subr.mxu0 0.0
        %2474 = vmatpush1.msra.mxu0 %v2000
        %2475 = vmatprep.subr.mxu0 0.0
        %2476 = vmatpush1.msra.mxu0 %v1999
        %2477 = vmatprep.subr.mxu0 0.0
        %2478 = vmatpush1.msra.mxu0 %v1998
        %2479 = vmatprep.subr.mxu0 0.0
        %2480 = vmatpush1.msra.mxu0 %v1997
        %2481 = vmatprep.subr.mxu0 0.0
        %2482 = vmatpush1.msra.mxu0 %v1996
        %2483 = vmatprep.subr.mxu0 0.0
        %2484 = vmatpush2.msra.mxu0 0.0
        %2485 = vmatprep.subr.mxu0 0.0
        %2486 = vmatpush2.msra.mxu0 0.0
        %2487 = vmatprep.subr.mxu0 0.0
        %2488 = vmatpush2.msra.mxu0 0.0
        %2489 = vmatprep.subr.mxu0 0.0
        %2490 = vmatpush2.msra.mxu0 0.0
        %2491 = vmatprep.subr.mxu0 0.0
        %2492 = vmatpush2.msra.mxu0 0.0
        %2493 = vmatprep.subr.mxu0 0.0
        %2494 = vmatpush2.msra.mxu0 0.0
        %2495 = vmatprep.subr.mxu0 0.0
        %2496 = vmatpush2.msra.mxu0 0.0
        %2497 = vmatprep.subr.mxu0 0.0
        %2498 = vmatpush2.msra.mxu0 0.0
        %2499 = vmatprep.subr.mxu0 0.0
        %2500 = vmatpush2.msra.mxu0 0.0
        %2501 = vmatprep.subr.mxu0 0.0
        %2502 = vmatpush2.msra.mxu0 0.0
        %2503 = vmatprep.subr.mxu0 0.0
        %2504 = vmatpush2.msra.mxu0 0.0
        %2505 = vmatprep.subr.mxu0 0.0
        %2506 = vmatpush2.msra.mxu0 0.0
        %2507 = vmatprep.subr.mxu0 0.0
        %2508 = vmatpush2.msra.mxu0 0.0
        %2509 = vmatprep.subr.mxu0 0.0
        %2510 = vmatpush2.msra.mxu0 0.0
        %2511 = vmatprep.subr.mxu0 0.0
        %2512 = vmatpush2.msra.mxu0 0.0
        %2513 = vmatprep.subr.mxu0 0.0
        %2514 = vmatpush2.msra.mxu0 0.0
        %2515 = vmatprep.mubr.f32.mxu0 0.0
        %2516 = vmatmul.mubr.f32.gmra.mxu0 %v2437
        %v2517 = vpop.f32.mrf.mxu0
        %v2518 = vadd.f32 0.0, %v2517
        %v2519 = vpop.f32.mrf.mxu0
        %2520 = vmatprep.mubr.f32.mxu0 0.0
        %2521 = vmatmul.mubr.f32.gmra.mxu0 %v2440
        %v2522 = vpop.f32.mrf.mxu0
        %v2523 = vadd.f32 0.0, %v2522
        %v2524 = vpop.f32.mrf.mxu0
        %2525 = vmatprep.mubr.f32.mxu0 0.0
        %2526 = vmatmul.mubr.f32.gmra.mxu0 %v2443
        %v2527 = vpop.f32.mrf.mxu0
        %v2528 = vadd.f32 0.0, %v2527
        %v2529 = vpop.f32.mrf.mxu0
        %2530 = vmatprep.mubr.f32.mxu0 0.0
        %2531 = vmatmul.mubr.f32.gmra.mxu0 %v2446
        %v2532 = vpop.f32.mrf.mxu0
        %v2533 = vadd.f32 0.0, %v2532
        %v2534 = vpop.f32.mrf.mxu0
        %2535 = vmatprep.mubr.f32.mxu0 0.0
        %2536 = vmatmul.mubr.f32.gmra.mxu0 %v2449
        %v2537 = vpop.f32.mrf.mxu0
        %v2538 = vadd.f32 0.0, %v2537
        %v2539 = vpop.f32.mrf.mxu0
        %2540 = vdwg.mxu0
        %v2541 = vadd.f32 %v2342, %v2518
        %v2542 = vadd.f32 %v2347, %v2523
        %v2543 = vadd.f32 %v2352, %v2528
        %v2544 = vadd.f32 %v2357, %v2533
        %v2545 = vadd.f32 %v2362, %v2538
        %v2546 = vmax.f32 %v2541, 0.0
        %v2547 = vmax.f32 %v2542, 0.0
        %v2548 = vmax.f32 %v2543, 0.0
        %v2549 = vmax.f32 %v2544, 0.0
        %v2550 = vmax.f32 %v2545, 0.0
        %2551 = vmatprep.subr.mxu0 0.0
        %2552 = vmatpush1.msra.mxu0 0.0
        %2553 = vmatprep.subr.mxu0 0.0
        %2554 = vmatpush1.msra.mxu0 0.0
        %2555 = vmatprep.subr.mxu0 0.0
        %2556 = vmatpush1.msra.mxu0 0.0
        %2557 = vmatprep.subr.mxu0 0.0
        %2558 = vmatpush1.msra.mxu0 0.0
        %2559 = vmatprep.subr.mxu0 0.0
        %2560 = vmatpush1.msra.mxu0 0.0
        %2561 = vmatprep.subr.mxu0 0.0
        %2562 = vmatpush1.msra.mxu0 0.0
        %2563 = vmatprep.subr.mxu0 0.0
        %2564 = vmatpush1.msra.mxu0 0.0
        %2565 = vmatprep.subr.mxu0 0.0
        %2566 = vmatpush1.msra.mxu0 0.0
        %2567 = vmatprep.subr.mxu0 0.0
        %2568 = vmatpush1.msra.mxu0 0.0
        %2569 = vmatprep.subr.mxu0 0.0
        %2570 = vmatpush1.msra.mxu0 0.0
        %2571 = vmatprep.subr.mxu0 0.0
        %2572 = vmatpush1.msra.mxu0 %v1994
        %2573 = vmatprep.subr.mxu0 0.0
        %2574 = vmatpush1.msra.mxu0 %v1993
        %2575 = vmatprep.subr.mxu0 0.0
        %2576 = vmatpush1.msra.mxu0 %v1992
        %2577 = vmatprep.subr.mxu0 0.0
        %2578 = vmatpush1.msra.mxu0 %v1991
        %2579 = vmatprep.subr.mxu0 0.0
        %2580 = vmatpush1.msra.mxu0 %v1990
        %2581 = vmatprep.subr.mxu0 0.0
        %2582 = vmatpush1.msra.mxu0 %v1989
        %2583 = vmatprep.subr.mxu0 0.0
        %2584 = vmatpush2.msra.mxu0 0.0
        %2585 = vmatprep.subr.mxu0 0.0
        %2586 = vmatpush2.msra.mxu0 0.0
        %2587 = vmatprep.subr.mxu0 0.0
        %2588 = vmatpush2.msra.mxu0 0.0
        %2589 = vmatprep.subr.mxu0 0.0
        %2590 = vmatpush2.msra.mxu0 0.0
        %2591 = vmatprep.subr.mxu0 0.0
        %2592 = vmatpush2.msra.mxu0 0.0
        %2593 = vmatprep.subr.mxu0 0.0
        %2594 = vmatpush2.msra.mxu0 0.0
        %2595 = vmatprep.subr.mxu0 0.0
        %2596 = vmatpush2.msra.mxu0 0.0
        %2597 = vmatprep.subr.mxu0 0.0
        %2598 = vmatpush2.msra.mxu0 0.0
        %2599 = vmatprep.subr.mxu0 0.0
        %2600 = vmatpush2.msra.mxu0 0.0
        %2601 = vmatprep.subr.mxu0 0.0
        %2602 = vmatpush2.msra.mxu0 0.0
        %2603 = vmatprep.subr.mxu0 0.0
        %2604 = vmatpush2.msra.mxu0 0.0
        %2605 = vmatprep.subr.mxu0 0.0
        %2606 = vmatpush2.msra.mxu0 0.0
        %2607 = vmatprep.subr.mxu0 0.0
        %2608 = vmatpush2.msra.mxu0 0.0
        %2609 = vmatprep.subr.mxu0 0.0
        %2610 = vmatpush2.msra.mxu0 0.0
        %2611 = vmatprep.subr.mxu0 0.0
        %2612 = vmatpush2.msra.mxu0 0.0
        %2613 = vmatprep.subr.mxu0 0.0
        %2614 = vmatpush2.msra.mxu0 0.0
        %2615 = vmatprep.mubr.f32.mxu0 0.0
        %2616 = vmatmul.mubr.f32.gmra.mxu0 %v2437
        %v2617 = vpop.f32.mrf.mxu0
        %v2618 = vadd.f32 0.0, %v2617
        %v2619 = vpop.f32.mrf.mxu0
        %2620 = vmatprep.mubr.f32.mxu0 0.0
        %2621 = vmatmul.mubr.f32.gmra.mxu0 %v2440
        %v2622 = vpop.f32.mrf.mxu0
        %v2623 = vadd.f32 0.0, %v2622
        %v2624 = vpop.f32.mrf.mxu0
        %2625 = vmatprep.mubr.f32.mxu0 0.0
        %2626 = vmatmul.mubr.f32.gmra.mxu0 %v2443
        %v2627 = vpop.f32.mrf.mxu0
        %v2628 = vadd.f32 0.0, %v2627
        %v2629 = vpop.f32.mrf.mxu0
        %2630 = vmatprep.mubr.f32.mxu0 0.0
        %2631 = vmatmul.mubr.f32.gmra.mxu0 %v2446
        %v2632 = vpop.f32.mrf.mxu0
        %v2633 = vadd.f32 0.0, %v2632
        %v2634 = vpop.f32.mrf.mxu0
        %2635 = vmatprep.mubr.f32.mxu0 0.0
        %2636 = vmatmul.mubr.f32.gmra.mxu0 %v2449
        %v2637 = vpop.f32.mrf.mxu0
        %v2638 = vadd.f32 0.0, %v2637
        %v2639 = vpop.f32.mrf.mxu0
        %2640 = vdwg.mxu0
        %2641 = vmatprep.subr.mxu0 0.0
        %2642 = vmatpush1.msra.mxu0 0.0
        %2643 = vmatprep.subr.mxu0 0.0
        %2644 = vmatpush1.msra.mxu0 0.0
        %2645 = vmatprep.subr.mxu0 0.0
        %2646 = vmatpush1.msra.mxu0 0.0
        %2647 = vmatprep.subr.mxu0 0.0
        %2648 = vmatpush1.msra.mxu0 0.0
        %2649 = vmatprep.subr.mxu0 0.0
        %2650 = vmatpush1.msra.mxu0 0.0
        %2651 = vmatprep.subr.mxu0 0.0
        %2652 = vmatpush1.msra.mxu0 0.0
        %2653 = vmatprep.subr.mxu0 0.0
        %2654 = vmatpush1.msra.mxu0 0.0
        %2655 = vmatprep.subr.mxu0 0.0
        %2656 = vmatpush1.msra.mxu0 0.0
        %2657 = vmatprep.subr.mxu0 0.0
        %2658 = vmatpush1.msra.mxu0 0.0
        %2659 = vmatprep.subr.mxu0 0.0
        %2660 = vmatpush1.msra.mxu0 0.0
        %2661 = vmatprep.subr.mxu0 0.0
        %2662 = vmatpush1.msra.mxu0 %v1987
        %2663 = vmatprep.subr.mxu0 0.0
        %2664 = vmatpush1.msra.mxu0 %v1986
        %2665 = vmatprep.subr.mxu0 0.0
        %2666 = vmatpush1.msra.mxu0 %v1985
        %2667 = vmatprep.subr.mxu0 0.0
        %2668 = vmatpush1.msra.mxu0 %v1984
        %2669 = vmatprep.subr.mxu0 0.0
        %2670 = vmatpush1.msra.mxu0 %v1983
        %2671 = vmatprep.subr.mxu0 0.0
        %2672 = vmatpush1.msra.mxu0 %v1982
        %2673 = vmatprep.subr.mxu0 0.0
        %2674 = vmatpush2.msra.mxu0 0.0
        %2675 = vmatprep.subr.mxu0 0.0
        %2676 = vmatpush2.msra.mxu0 0.0
        %2677 = vmatprep.subr.mxu0 0.0
        %2678 = vmatpush2.msra.mxu0 0.0
        %2679 = vmatprep.subr.mxu0 0.0
        %2680 = vmatpush2.msra.mxu0 0.0
        %2681 = vmatprep.subr.mxu0 0.0
        %2682 = vmatpush2.msra.mxu0 0.0
        %2683 = vmatprep.subr.mxu0 0.0
        %2684 = vmatpush2.msra.mxu0 0.0
        %2685 = vmatprep.subr.mxu0 0.0
        %2686 = vmatpush2.msra.mxu0 0.0
        %2687 = vmatprep.subr.mxu0 0.0
        %2688 = vmatpush2.msra.mxu0 0.0
        %2689 = vmatprep.subr.mxu0 0.0
        %2690 = vmatpush2.msra.mxu0 0.0
        %2691 = vmatprep.subr.mxu0 0.0
        %2692 = vmatpush2.msra.mxu0 0.0
        %2693 = vmatprep.subr.mxu0 0.0
        %2694 = vmatpush2.msra.mxu0 0.0
        %2695 = vmatprep.subr.mxu0 0.0
        %2696 = vmatpush2.msra.mxu0 0.0
        %2697 = vmatprep.subr.mxu0 0.0
        %2698 = vmatpush2.msra.mxu0 0.0
        %2699 = vmatprep.subr.mxu0 0.0
        %2700 = vmatpush2.msra.mxu0 0.0
        %2701 = vmatprep.subr.mxu0 0.0
        %2702 = vmatpush2.msra.mxu0 0.0
        %2703 = vmatprep.subr.mxu0 0.0
        %2704 = vmatpush2.msra.mxu0 0.0
        %2705 = vmatprep.mubr.f32.mxu0 0.0
        %2706 = vmatmul.mubr.f32.gmra.mxu0 %v2156
        %v2707 = vpop.f32.mrf.mxu0
        %v2708 = vadd.f32 %v2618, %v2707
        %v2709 = vpop.f32.mrf.mxu0
        %2710 = vmatprep.mubr.f32.mxu0 0.0
        %2711 = vmatmul.mubr.f32.gmra.mxu0 %v2159
        %v2712 = vpop.f32.mrf.mxu0
        %v2713 = vadd.f32 %v2623, %v2712
        %v2714 = vpop.f32.mrf.mxu0
        %2715 = vmatprep.mubr.f32.mxu0 0.0
        %2716 = vmatmul.mubr.f32.gmra.mxu0 %v2162
        %v2717 = vpop.f32.mrf.mxu0
        %v2718 = vadd.f32 %v2628, %v2717
        %v2719 = vpop.f32.mrf.mxu0
        %2720 = vmatprep.mubr.f32.mxu0 0.0
        %2721 = vmatmul.mubr.f32.gmra.mxu0 %v2165
        %v2722 = vpop.f32.mrf.mxu0
        %v2723 = vadd.f32 %v2633, %v2722
        %v2724 = vpop.f32.mrf.mxu0
        %2725 = vmatprep.mubr.f32.mxu0 0.0
        %2726 = vmatmul.mubr.f32.gmra.mxu0 %v2168
        %v2727 = vpop.f32.mrf.mxu0
        %v2728 = vadd.f32 %v2638, %v2727
        %v2729 = vpop.f32.mrf.mxu0
        %2730 = vdwg.mxu0
        %s2731 = sadd.s32 %s2008, 3
        %s2732 = smul.u32 %s2731, 40
        %s2733 = scalar_lea.vmem [#allocation2], %s2732
        %v2734 = vld [vmem:[%s2733] sm:$0xff]
        %v2735 = vld [vmem:[%s2733 + $0x8] sm:$0xff]
        %v2736 = vld [vmem:[%s2733 + $0x10] sm:$0xff]
        %v2737 = vld [vmem:[%s2733 + $0x18] sm:$0xff]
        %v2738 = vld [vmem:[%s2733 + $0x20] sm:$0x3f]
        %v2744 = vrot.slane %v2734, 1
        %v2745 = vrot.slane %v2735, 1
        %v2746 = vsel %vm2021, %v2744, %v2745
        %v2747 = vrot.slane %v2736, 1
        %v2748 = vsel %vm2021, %v2745, %v2747
        %v2749 = vrot.slane %v2737, 1
        %v2750 = vsel %vm2021, %v2747, %v2749
        %v2751 = vrot.slane %v2738, 1
        %v2752 = vsel %vm2021, %v2749, %v2751
        %2753 = vrot.lane.b32.xlu0 %v2746, 16
        %v2754 = vpop.permute.xlu0 %2753
        %2755 = vrot.lane.b32.xlu0 %v2748, 16
        %v2756 = vpop.permute.xlu0 %2755
        %2757 = vrot.lane.b32.xlu0 %v2750, 16
        %v2758 = vpop.permute.xlu0 %2757
        %2759 = vrot.lane.b32.xlu0 %v2752, 16
        %v2760 = vpop.permute.xlu0 %2759
        %2761 = vrot.lane.b32.xlu0 %v2751, 16
        %v2762 = vpop.permute.xlu0 %2761
        %v2768 = vrot.slane %v2734, 2
        %v2769 = vrot.slane %v2735, 2
        %v2770 = vsel %vm2046, %v2768, %v2769
        %v2771 = vrot.slane %v2736, 2
        %v2772 = vsel %vm2046, %v2769, %v2771
        %v2773 = vrot.slane %v2737, 2
        %v2774 = vsel %vm2046, %v2771, %v2773
        %v2775 = vrot.slane %v2738, 2
        %v2776 = vsel %vm2046, %v2773, %v2775
        %2777 = vrot.lane.b32.xlu0 %v2770, 32
        %v2778 = vpop.permute.xlu0 %2777
        %2779 = vrot.lane.b32.xlu0 %v2772, 32
        %v2780 = vpop.permute.xlu0 %2779
        %2781 = vrot.lane.b32.xlu0 %v2774, 32
        %v2782 = vpop.permute.xlu0 %2781
        %2783 = vrot.lane.b32.xlu0 %v2776, 32
        %v2784 = vpop.permute.xlu0 %2783
        %2785 = vrot.lane.b32.xlu0 %v2775, 32
        %v2786 = vpop.permute.xlu0 %2785
        %v2792 = vsel %vm2071, %v2734, %v2754
        %v2793 = vsel %vm2071, %v2735, %v2756
        %v2794 = vsel %vm2071, %v2736, %v2758
        %v2795 = vsel %vm2071, %v2737, %v2760
        %v2796 = vsel %vm2071, %v2738, %v2762
        %v2797 = vsel %vm2077, %v2792, %v2778
        %v2798 = vsel %vm2077, %v2793, %v2780
        %v2799 = vsel %vm2077, %v2794, %v2782
        %v2800 = vsel %vm2077, %v2795, %v2784
        %v2801 = vsel %vm2077, %v2796, %v2786
        %v2803 = vsel %vm2154, %v2797, 0
        %v2806 = vsel %vm2154, %v2798, 0
        %v2809 = vsel %vm2154, %v2799, 0
        %v2812 = vsel %vm2154, %v2800, 0
        %v2815 = vsel %vm2154, %v2801, 0
        %2817 = vmatprep.subr.mxu0 0.0
        %2818 = vmatpush1.msra.mxu0 0.0
        %2819 = vmatprep.subr.mxu0 0.0
        %2820 = vmatpush1.msra.mxu0 0.0
        %2821 = vmatprep.subr.mxu0 0.0
        %2822 = vmatpush1.msra.mxu0 0.0
        %2823 = vmatprep.subr.mxu0 0.0
        %2824 = vmatpush1.msra.mxu0 0.0
        %2825 = vmatprep.subr.mxu0 0.0
        %2826 = vmatpush1.msra.mxu0 0.0
        %2827 = vmatprep.subr.mxu0 0.0
        %2828 = vmatpush1.msra.mxu0 0.0
        %2829 = vmatprep.subr.mxu0 0.0
        %2830 = vmatpush1.msra.mxu0 0.0
        %2831 = vmatprep.subr.mxu0 0.0
        %2832 = vmatpush1.msra.mxu0 0.0
        %2833 = vmatprep.subr.mxu0 0.0
        %2834 = vmatpush1.msra.mxu0 0.0
        %2835 = vmatprep.subr.mxu0 0.0
        %2836 = vmatpush1.msra.mxu0 0.0
        %2837 = vmatprep.subr.mxu0 0.0
        %2838 = vmatpush1.msra.mxu0 %v2001
        %2839 = vmatprep.subr.mxu0 0.0
        %2840 = vmatpush1.msra.mxu0 %v2000
        %2841 = vmatprep.subr.mxu0 0.0
        %2842 = vmatpush1.msra.mxu0 %v1999
        %2843 = vmatprep.subr.mxu0 0.0
        %2844 = vmatpush1.msra.mxu0 %v1998
        %2845 = vmatprep.subr.mxu0 0.0
        %2846 = vmatpush1.msra.mxu0 %v1997
        %2847 = vmatprep.subr.mxu0 0.0
        %2848 = vmatpush1.msra.mxu0 %v1996
        %2849 = vmatprep.subr.mxu0 0.0
        %2850 = vmatpush2.msra.mxu0 0.0
        %2851 = vmatprep.subr.mxu0 0.0
        %2852 = vmatpush2.msra.mxu0 0.0
        %2853 = vmatprep.subr.mxu0 0.0
        %2854 = vmatpush2.msra.mxu0 0.0
        %2855 = vmatprep.subr.mxu0 0.0
        %2856 = vmatpush2.msra.mxu0 0.0
        %2857 = vmatprep.subr.mxu0 0.0
        %2858 = vmatpush2.msra.mxu0 0.0
        %2859 = vmatprep.subr.mxu0 0.0
        %2860 = vmatpush2.msra.mxu0 0.0
        %2861 = vmatprep.subr.mxu0 0.0
        %2862 = vmatpush2.msra.mxu0 0.0
        %2863 = vmatprep.subr.mxu0 0.0
        %2864 = vmatpush2.msra.mxu0 0.0
        %2865 = vmatprep.subr.mxu0 0.0
        %2866 = vmatpush2.msra.mxu0 0.0
        %2867 = vmatprep.subr.mxu0 0.0
        %2868 = vmatpush2.msra.mxu0 0.0
        %2869 = vmatprep.subr.mxu0 0.0
        %2870 = vmatpush2.msra.mxu0 0.0
        %2871 = vmatprep.subr.mxu0 0.0
        %2872 = vmatpush2.msra.mxu0 0.0
        %2873 = vmatprep.subr.mxu0 0.0
        %2874 = vmatpush2.msra.mxu0 0.0
        %2875 = vmatprep.subr.mxu0 0.0
        %2876 = vmatpush2.msra.mxu0 0.0
        %2877 = vmatprep.subr.mxu0 0.0
        %2878 = vmatpush2.msra.mxu0 0.0
        %2879 = vmatprep.subr.mxu0 0.0
        %2880 = vmatpush2.msra.mxu0 0.0
        %2881 = vmatprep.mubr.f32.mxu0 0.0
        %2882 = vmatmul.mubr.f32.gmra.mxu0 %v2803
        %v2883 = vpop.f32.mrf.mxu0
        %v2884 = vadd.f32 0.0, %v2883
        %v2885 = vpop.f32.mrf.mxu0
        %2886 = vmatprep.mubr.f32.mxu0 0.0
        %2887 = vmatmul.mubr.f32.gmra.mxu0 %v2806
        %v2888 = vpop.f32.mrf.mxu0
        %v2889 = vadd.f32 0.0, %v2888
        %v2890 = vpop.f32.mrf.mxu0
        %2891 = vmatprep.mubr.f32.mxu0 0.0
        %2892 = vmatmul.mubr.f32.gmra.mxu0 %v2809
        %v2893 = vpop.f32.mrf.mxu0
        %v2894 = vadd.f32 0.0, %v2893
        %v2895 = vpop.f32.mrf.mxu0
        %2896 = vmatprep.mubr.f32.mxu0 0.0
        %2897 = vmatmul.mubr.f32.gmra.mxu0 %v2812
        %v2898 = vpop.f32.mrf.mxu0
        %v2899 = vadd.f32 0.0, %v2898
        %v2900 = vpop.f32.mrf.mxu0
        %2901 = vmatprep.mubr.f32.mxu0 0.0
        %2902 = vmatmul.mubr.f32.gmra.mxu0 %v2815
        %v2903 = vpop.f32.mrf.mxu0
        %v2904 = vadd.f32 0.0, %v2903
        %v2905 = vpop.f32.mrf.mxu0
        %2906 = vdwg.mxu0
        %v2907 = vadd.f32 %v2708, %v2884
        %v2908 = vadd.f32 %v2713, %v2889
        %v2909 = vadd.f32 %v2718, %v2894
        %v2910 = vadd.f32 %v2723, %v2899
        %v2911 = vadd.f32 %v2728, %v2904
        %v2912 = vmax.f32 %v2907, 0.0
        %v2913 = vmax.f32 %v2908, 0.0
        %v2914 = vmax.f32 %v2909, 0.0
        %v2915 = vmax.f32 %v2910, 0.0
        %v2916 = vmax.f32 %v2911, 0.0
        %v2917 = vmax.f32 %v2546, %v2912
        %v2918 = vmax.f32 %v2547, %v2913
        %v2919 = vmax.f32 %v2548, %v2914
        %v2920 = vmax.f32 %v2549, %v2915
        %v2921 = vmax.f32 %v2550, %v2916
        %vm2922 = vcmask 293888
        %v2924 = vsel %vm2922, %v275, 0
        %v2927 = vsel %vm2922, %v276, 0
        %v2930 = vsel %vm2922, %v277, 0
        %vm2932 = vcmask 1043456
        %v2934 = vsel %vm2932, %v2921, 0
        %2936 = vmatprep.subr.mxu0 0.0
        %2937 = vmatpush1.msra.mxu0 0.0
        %2938 = vmatprep.subr.mxu0 0.0
        %2939 = vmatpush1.msra.mxu0 0.0
        %2940 = vmatprep.subr.mxu0 0.0
        %2941 = vmatpush1.msra.mxu0 0.0
        %2942 = vmatprep.subr.mxu0 0.0
        %2943 = vmatpush1.msra.mxu0 0.0
        %2944 = vmatprep.subr.mxu0 0.0
        %2945 = vmatpush1.msra.mxu0 0.0
        %2946 = vmatprep.subr.mxu0 0.0
        %2947 = vmatpush1.msra.mxu0 0.0
        %2948 = vmatprep.subr.mxu0 0.0
        %2949 = vmatpush1.msra.mxu0 0.0
        %2950 = vmatprep.subr.mxu0 0.0
        %2951 = vmatpush1.msra.mxu0 0.0
        %2952 = vmatprep.subr.mxu0 0.0
        %2953 = vmatpush1.msra.mxu0 0.0
        %2954 = vmatprep.subr.mxu0 0.0
        %2955 = vmatpush1.msra.mxu0 0.0
        %2956 = vmatprep.subr.mxu0 0.0
        %2957 = vmatpush1.msra.mxu0 0.0
        %2958 = vmatprep.subr.mxu0 0.0
        %2959 = vmatpush1.msra.mxu0 %v2934
        %2960 = vmatprep.subr.mxu0 0.0
        %2961 = vmatpush1.msra.mxu0 %v2920
        %2962 = vmatprep.subr.mxu0 0.0
        %2963 = vmatpush1.msra.mxu0 %v2919
        %2964 = vmatprep.subr.mxu0 0.0
        %2965 = vmatpush1.msra.mxu0 %v2918
        %2966 = vmatprep.subr.mxu0 0.0
        %2967 = vmatpush1.msra.mxu0 %v2917
        %2968 = vmatprep.subr.mxu0 0.0
        %2969 = vmatpush2.msra.mxu0 0.0
        %2970 = vmatprep.subr.mxu0 0.0
        %2971 = vmatpush2.msra.mxu0 0.0
        %2972 = vmatprep.subr.mxu0 0.0
        %2973 = vmatpush2.msra.mxu0 0.0
        %2974 = vmatprep.subr.mxu0 0.0
        %2975 = vmatpush2.msra.mxu0 0.0
        %2976 = vmatprep.subr.mxu0 0.0
        %2977 = vmatpush2.msra.mxu0 0.0
        %2978 = vmatprep.subr.mxu0 0.0
        %2979 = vmatpush2.msra.mxu0 0.0
        %2980 = vmatprep.subr.mxu0 0.0
        %2981 = vmatpush2.msra.mxu0 0.0
        %2982 = vmatprep.subr.mxu0 0.0
        %2983 = vmatpush2.msra.mxu0 0.0
        %2984 = vmatprep.subr.mxu0 0.0
        %2985 = vmatpush2.msra.mxu0 0.0
        %2986 = vmatprep.subr.mxu0 0.0
        %2987 = vmatpush2.msra.mxu0 0.0
        %2988 = vmatprep.subr.mxu0 0.0
        %2989 = vmatpush2.msra.mxu0 0.0
        %2990 = vmatprep.subr.mxu0 0.0
        %2991 = vmatpush2.msra.mxu0 0.0
        %2992 = vmatprep.subr.mxu0 0.0
        %2993 = vmatpush2.msra.mxu0 0.0
        %2994 = vmatprep.subr.mxu0 0.0
        %2995 = vmatpush2.msra.mxu0 0.0
        %2996 = vmatprep.subr.mxu0 0.0
        %2997 = vmatpush2.msra.mxu0 0.0
        %2998 = vmatprep.subr.mxu0 0.0
        %2999 = vmatpush2.msra.mxu0 0.0
        %3000 = vmatprep.mubr.f32.mxu0 0.0
        %3001 = vmatmul.mubr.f32.gmra.mxu0 %v2924
        %v3002 = vpop.f32.mrf.mxu0
        %v3003 = vadd.f32 0.0, %v3002
        %v3004 = vpop.f32.mrf.mxu0
        %3005 = vmatprep.mubr.f32.mxu0 0.0
        %3006 = vmatmul.mubr.f32.gmra.mxu0 %v2927
        %v3007 = vpop.f32.mrf.mxu0
        %v3008 = vadd.f32 0.0, %v3007
        %v3009 = vpop.f32.mrf.mxu0
        %3010 = vmatprep.mubr.f32.mxu0 0.0
        %3011 = vmatmul.mubr.f32.gmra.mxu0 %v2930
        %v3012 = vpop.f32.mrf.mxu0
        %v3013 = vadd.f32 0.0, %v3012
        %v3014 = vpop.f32.mrf.mxu0
        %3015 = vdwg.mxu0
        %v3017 = vsel %vm2922, %v295, 0
        %v3020 = vsel %vm2922, %v296, 0
        %v3023 = vsel %vm2922, %v297, 0
        %3025 = vmatprep.subr.mxu0 0.0
        %3026 = vmatpush1.msra.mxu0 0.0
        %3027 = vmatprep.subr.mxu0 0.0
        %3028 = vmatpush1.msra.mxu0 0.0
        %3029 = vmatprep.subr.mxu0 0.0
        %3030 = vmatpush1.msra.mxu0 0.0
        %3031 = vmatprep.subr.mxu0 0.0
        %3032 = vmatpush1.msra.mxu0 0.0
        %3033 = vmatprep.subr.mxu0 0.0
        %3034 = vmatpush1.msra.mxu0 0.0
        %3035 = vmatprep.subr.mxu0 0.0
        %3036 = vmatpush1.msra.mxu0 0.0
        %3037 = vmatprep.subr.mxu0 0.0
        %3038 = vmatpush1.msra.mxu0 0.0
        %3039 = vmatprep.subr.mxu0 0.0
        %3040 = vmatpush1.msra.mxu0 0.0
        %3041 = vmatprep.subr.mxu0 0.0
        %3042 = vmatpush1.msra.mxu0 0.0
        %3043 = vmatprep.subr.mxu0 0.0
        %3044 = vmatpush1.msra.mxu0 0.0
        %3045 = vmatprep.subr.mxu0 0.0
        %3046 = vmatpush1.msra.mxu0 0.0
        %3047 = vmatprep.subr.mxu0 0.0
        %3048 = vmatpush1.msra.mxu0 %v2934
        %3049 = vmatprep.subr.mxu0 0.0
        %3050 = vmatpush1.msra.mxu0 %v2920
        %3051 = vmatprep.subr.mxu0 0.0
        %3052 = vmatpush1.msra.mxu0 %v2919
        %3053 = vmatprep.subr.mxu0 0.0
        %3054 = vmatpush1.msra.mxu0 %v2918
        %3055 = vmatprep.subr.mxu0 0.0
        %3056 = vmatpush1.msra.mxu0 %v2917
        %3057 = vmatprep.subr.mxu0 0.0
        %3058 = vmatpush2.msra.mxu0 0.0
        %3059 = vmatprep.subr.mxu0 0.0
        %3060 = vmatpush2.msra.mxu0 0.0
        %3061 = vmatprep.subr.mxu0 0.0
        %3062 = vmatpush2.msra.mxu0 0.0
        %3063 = vmatprep.subr.mxu0 0.0
        %3064 = vmatpush2.msra.mxu0 0.0
        %3065 = vmatprep.subr.mxu0 0.0
        %3066 = vmatpush2.msra.mxu0 0.0
        %3067 = vmatprep.subr.mxu0 0.0
        %3068 = vmatpush2.msra.mxu0 0.0
        %3069 = vmatprep.subr.mxu0 0.0
        %3070 = vmatpush2.msra.mxu0 0.0
        %3071 = vmatprep.subr.mxu0 0.0
        %3072 = vmatpush2.msra.mxu0 0.0
        %3073 = vmatprep.subr.mxu0 0.0
        %3074 = vmatpush2.msra.mxu0 0.0
        %3075 = vmatprep.subr.mxu0 0.0
        %3076 = vmatpush2.msra.mxu0 0.0
        %3077 = vmatprep.subr.mxu0 0.0
        %3078 = vmatpush2.msra.mxu0 0.0
        %3079 = vmatprep.subr.mxu0 0.0
        %3080 = vmatpush2.msra.mxu0 0.0
        %3081 = vmatprep.subr.mxu0 0.0
        %3082 = vmatpush2.msra.mxu0 0.0
        %3083 = vmatprep.subr.mxu0 0.0
        %3084 = vmatpush2.msra.mxu0 0.0
        %3085 = vmatprep.subr.mxu0 0.0
        %3086 = vmatpush2.msra.mxu0 0.0
        %3087 = vmatprep.subr.mxu0 0.0
        %3088 = vmatpush2.msra.mxu0 0.0
        %3089 = vmatprep.mubr.f32.mxu0 0.0
        %3090 = vmatmul.mubr.f32.gmra.mxu0 %v3017
        %v3091 = vpop.f32.mrf.mxu0
        %v3092 = vadd.f32 0.0, %v3091
        %v3093 = vpop.f32.mrf.mxu0
        %3094 = vmatprep.mubr.f32.mxu0 0.0
        %3095 = vmatmul.mubr.f32.gmra.mxu0 %v3020
        %v3096 = vpop.f32.mrf.mxu0
        %v3097 = vadd.f32 0.0, %v3096
        %v3098 = vpop.f32.mrf.mxu0
        %3099 = vmatprep.mubr.f32.mxu0 0.0
        %3100 = vmatmul.mubr.f32.gmra.mxu0 %v3023
        %v3101 = vpop.f32.mrf.mxu0
        %v3102 = vadd.f32 0.0, %v3101
        %v3103 = vpop.f32.mrf.mxu0
        %3104 = vdwg.mxu0
        %v3105 = vmax.f32 %v3003, %v3092
        %v3106 = vmax.f32 %v3008, %v3097
        %v3107 = vmax.f32 %v3013, %v3102
        %s3108 = smul.u32 %s2003, 24
        %s3109 = scalar_lea.vmem [#allocation3], %s3108
        %3110 = vst.msk [vmem:[%s3109] sm:$0xff] %vm2077, %v3105
        %3111 = vst.msk [vmem:[%s3109 + $0x8] sm:$0xff] %vm2077, %v3106
        %vm3112 = vcmask 254976
        %3113 = vst.msk [vmem:[%s3109 + $0x10] sm:$0x3] %vm3112, %v3107
      $region56: #{cnn_forward.2} parent=43 // loop_footer
        %s2007 = sadd.s32 1, %s2003
      $region57: #{cnn_forward.2} parent=43 // loop_footer_branch
        %2002 = sbr.rel target = $region53
      $region58: #{cnn_forward.2} parent=43 // loop_exit
        _
      %v3114 = vld [vmem:[%s4] sm:$0x1]
      %v3115 = vld [vmem:[%s5] sm:$0x1]
      %v3116 = vld [vmem:[%s3] sm:$0xff]
      %v3117 = vld [vmem:[%s3 + $0x8] sm:$0xff]
      %v3118 = vld [vmem:[%s3 + $0x10] sm:$0xff]
      %v3119 = vld [vmem:[%s3 + $0x18] sm:$0xff]
      %v3120 = vld [vmem:[%s3 + $0x20] sm:$0xff]
      %v3121 = vld [vmem:[%s3 + $0x28] sm:$0xff]
      %v3122 = vld [vmem:[%s3 + $0x30] sm:$0xff]
      %v3123 = vld [vmem:[%s3 + $0x38] sm:$0xff]
      %v3124 = vld [vmem:[%s3 + $0x40] sm:$0xff]
      %v3125 = vld [vmem:[%s3 + $0x48] sm:$0xff]
      %v3126 = vld [vmem:[%s3 + $0x50] sm:$0xff]
      %v3127 = vld [vmem:[%s3 + $0x58] sm:$0xff]
      %s3128 = scalar_lea.vmem %s3, 96
      %v3129 = vld [vmem:[%s3128] sm:$0xff]
      %v3130 = vld [vmem:[%s3128 + $0x8] sm:$0xff]
      %v3131 = vld [vmem:[%s3128 + $0x10] sm:$0xff]
      %v3132 = vld [vmem:[%s3128 + $0x18] sm:$0xff]
      %v3133 = vld [vmem:[%s3128 + $0x20] sm:$0xff]
      %v3134 = vld [vmem:[%s3128 + $0x28] sm:$0xff]
      %v3135 = vld [vmem:[%s3128 + $0x30] sm:$0xff]
      %v3136 = vld [vmem:[%s3128 + $0x38] sm:$0xff]
      %v3137 = vld [vmem:[%s3128 + $0x40] sm:$0xff]
      %v3138 = vld [vmem:[%s3128 + $0x48] sm:$0xff]
      %v3139 = vld [vmem:[%s3128 + $0x50] sm:$0xff]
      %v3140 = vld [vmem:[%s3128 + $0x58] sm:$0xff]
      %s3141 = scalar_lea.vmem %s3, 192
      %v3142 = vld [vmem:[%s3141] sm:$0xff]
      %v3143 = vld [vmem:[%s3141 + $0x8] sm:$0xff]
      %v3144 = vld [vmem:[%s3141 + $0x10] sm:$0xff]
      %v3145 = vld [vmem:[%s3141 + $0x18] sm:$0xff]
      %v3146 = vld [vmem:[%s3141 + $0x20] sm:$0xff]
      %v3147 = vld [vmem:[%s3141 + $0x28] sm:$0xff]
      %v3148 = vld [vmem:[%s3141 + $0x30] sm:$0xff]
      %v3149 = vld [vmem:[%s3141 + $0x38] sm:$0xff]
      %v3150 = vld [vmem:[%s3141 + $0x40] sm:$0xff]
      %v3151 = vld [vmem:[%s3141 + $0x48] sm:$0xff]
      %v3152 = vld [vmem:[%s3141 + $0x50] sm:$0xff]
      %v3153 = vld [vmem:[%s3141 + $0x58] sm:$0xff]
      loop: start=0, step=1, limit=8
      $region59: #{cnn_forward.2} parent=43 // loop_pre_header
        _
      $region60: #{cnn_forward.2} parent=43 // loop_header
        %s3155 = sphi 0, %s3159
        %p3156 = scmp.ge.s32.totalorder %s3155, 8
      $region61: #{cnn_forward.2} parent=43 // loop_header_branch
        %3158 = sbr.rel (%p3156) target = $region65
      $region62: #{cnn_forward.2} parent=43 // loop_body
        %s3160 = smul.u32 %s3155, 2
        %s3161 = smul.u32 %s3160, 24
        %s3162 = scalar_lea.vmem [#allocation3], %s3161
        %v3163 = vld [vmem:[%s3162] sm:$0xff]
        %v3164 = vld [vmem:[%s3162 + $0x8] sm:$0xff]
        %v3165 = vld [vmem:[%s3162 + $0x10] sm:$0x3]
        %vm3169 = vcmask 1046528
        %v3170 = vrot.slane %v3163, 1
        %v3171 = vrot.slane %v3164, 1
        %v3172 = vsel %vm3169, %v3170, %v3171
        %v3173 = vrot.slane %v3165, 1
        %v3174 = vsel %vm3169, %v3171, %v3173
        %3175 = vrot.lane.b32.xlu0 %v3172, 32
        %v3176 = vpop.permute.xlu0 %3175
        %3177 = vrot.lane.b32.xlu0 %v3174, 32
        %v3178 = vpop.permute.xlu0 %3177
        %vm3181 = vcmask 1045504
        %v3182 = vrot.slane %v3163, 2
        %v3183 = vrot.slane %v3164, 2
        %v3184 = vsel %vm3181, %v3182, %v3183
        %v3185 = vrot.slane %v3165, 2
        %v3186 = vsel %vm3181, %v3183, %v3185
        %3187 = vrot.lane.b32.xlu0 %v3184, 64
        %v3188 = vpop.permute.xlu0 %3187
        %3189 = vrot.lane.b32.xlu0 %v3186, 64
        %v3190 = vpop.permute.xlu0 %3189
        %vm3193 = vcmask 261120
        %v3194 = vsel %vm3193, %v3163, %v3176
        %v3195 = vsel %vm3193, %v3164, %v3178
        %vm3196 = vcmask 523264
        %v3197 = vsel %vm3196, %v3194, %v3188
        %v3198 = vsel %vm3196, %v3195, %v3190
        %s3199 = sadd.s32 %s3160, 1
        %s3200 = smul.u32 %s3199, 24
        %s3201 = scalar_lea.vmem [#allocation3], %s3200
        %v3202 = vld [vmem:[%s3201] sm:$0xff]
        %v3203 = vld [vmem:[%s3201 + $0x8] sm:$0xff]
        %v3204 = vld [vmem:[%s3201 + $0x10] sm:$0x3]
        %v3208 = vrot.slane %v3202, 1
        %v3209 = vrot.slane %v3203, 1
        %v3210 = vsel %vm3169, %v3208, %v3209
        %v3211 = vrot.slane %v3204, 1
        %v3212 = vsel %vm3169, %v3209, %v3211
        %3213 = vrot.lane.b32.xlu0 %v3210, 32
        %v3214 = vpop.permute.xlu0 %3213
        %3215 = vrot.lane.b32.xlu0 %v3212, 32
        %v3216 = vpop.permute.xlu0 %3215
        %v3219 = vrot.slane %v3202, 2
        %v3220 = vrot.slane %v3203, 2
        %v3221 = vsel %vm3181, %v3219, %v3220
        %v3222 = vrot.slane %v3204, 2
        %v3223 = vsel %vm3181, %v3220, %v3222
        %3224 = vrot.lane.b32.xlu0 %v3221, 64
        %v3225 = vpop.permute.xlu0 %3224
        %3226 = vrot.lane.b32.xlu0 %v3223, 64
        %v3227 = vpop.permute.xlu0 %3226
        %v3230 = vsel %vm3193, %v3202, %v3214
        %v3231 = vsel %vm3193, %v3203, %v3216
        %v3232 = vsel %vm3196, %v3230, %v3225
        %v3233 = vsel %vm3196, %v3231, %v3227
        %vm3234 = vcmask 785408
        %v3236 = vsel %vm3234, %v3232, 0
        %v3239 = vsel %vm3234, %v3233, 0
        %3241 = vmatprep.subr.mxu0 0.0
        %3242 = vmatpush1.msra.mxu0 0.0
        %3243 = vmatprep.subr.mxu0 0.0
        %3244 = vmatpush1.msra.mxu0 0.0
        %3245 = vmatprep.subr.mxu0 0.0
        %3246 = vmatpush1.msra.mxu0 0.0
        %3247 = vmatprep.subr.mxu0 0.0
        %3248 = vmatpush1.msra.mxu0 0.0
        %3249 = vmatprep.subr.mxu0 0.0
        %3250 = vmatpush1.msra.mxu0 %v3140
        %3251 = vmatprep.subr.mxu0 0.0
        %3252 = vmatpush1.msra.mxu0 %v3139
        %3253 = vmatprep.subr.mxu0 0.0
        %3254 = vmatpush1.msra.mxu0 %v3138
        %3255 = vmatprep.subr.mxu0 0.0
        %3256 = vmatpush1.msra.mxu0 %v3137
        %3257 = vmatprep.subr.mxu0 0.0
        %3258 = vmatpush1.msra.mxu0 %v3136
        %3259 = vmatprep.subr.mxu0 0.0
        %3260 = vmatpush1.msra.mxu0 %v3135
        %3261 = vmatprep.subr.mxu0 0.0
        %3262 = vmatpush1.msra.mxu0 %v3134
        %3263 = vmatprep.subr.mxu0 0.0
        %3264 = vmatpush1.msra.mxu0 %v3133
        %3265 = vmatprep.subr.mxu0 0.0
        %3266 = vmatpush1.msra.mxu0 %v3132
        %3267 = vmatprep.subr.mxu0 0.0
        %3268 = vmatpush1.msra.mxu0 %v3131
        %3269 = vmatprep.subr.mxu0 0.0
        %3270 = vmatpush1.msra.mxu0 %v3130
        %3271 = vmatprep.subr.mxu0 0.0
        %3272 = vmatpush1.msra.mxu0 %v3129
        %3273 = vmatprep.subr.mxu0 0.0
        %3274 = vmatpush2.msra.mxu0 0.0
        %3275 = vmatprep.subr.mxu0 0.0
        %3276 = vmatpush2.msra.mxu0 0.0
        %3277 = vmatprep.subr.mxu0 0.0
        %3278 = vmatpush2.msra.mxu0 0.0
        %3279 = vmatprep.subr.mxu0 0.0
        %3280 = vmatpush2.msra.mxu0 0.0
        %3281 = vmatprep.subr.mxu0 0.0
        %3282 = vmatpush2.msra.mxu0 0.0
        %3283 = vmatprep.subr.mxu0 0.0
        %3284 = vmatpush2.msra.mxu0 0.0
        %3285 = vmatprep.subr.mxu0 0.0
        %3286 = vmatpush2.msra.mxu0 0.0
        %3287 = vmatprep.subr.mxu0 0.0
        %3288 = vmatpush2.msra.mxu0 0.0
        %3289 = vmatprep.subr.mxu0 0.0
        %3290 = vmatpush2.msra.mxu0 0.0
        %3291 = vmatprep.subr.mxu0 0.0
        %3292 = vmatpush2.msra.mxu0 0.0
        %3293 = vmatprep.subr.mxu0 0.0
        %3294 = vmatpush2.msra.mxu0 0.0
        %3295 = vmatprep.subr.mxu0 0.0
        %3296 = vmatpush2.msra.mxu0 0.0
        %3297 = vmatprep.subr.mxu0 0.0
        %3298 = vmatpush2.msra.mxu0 0.0
        %3299 = vmatprep.subr.mxu0 0.0
        %3300 = vmatpush2.msra.mxu0 0.0
        %3301 = vmatprep.subr.mxu0 0.0
        %3302 = vmatpush2.msra.mxu0 0.0
        %3303 = vmatprep.subr.mxu0 0.0
        %3304 = vmatpush2.msra.mxu0 0.0
        %3305 = vmatprep.mubr.f32.mxu0 0.0
        %3306 = vmatmul.mubr.f32.gmra.mxu0 %v3236
        %v3307 = vpop.f32.mrf.mxu0
        %v3308 = vadd.f32 0.0, %v3307
        %v3309 = vpop.f32.mrf.mxu0
        %3310 = vmatprep.mubr.f32.mxu0 0.0
        %3311 = vmatmul.mubr.f32.gmra.mxu0 %v3239
        %v3312 = vpop.f32.mrf.mxu0
        %v3313 = vadd.f32 0.0, %v3312
        %v3314 = vpop.f32.mrf.mxu0
        %3315 = vdwg.mxu0
        %v3317 = vsel %vm3234, %v3197, 0
        %v3320 = vsel %vm3234, %v3198, 0
        %3322 = vmatprep.subr.mxu0 0.0
        %3323 = vmatpush1.msra.mxu0 0.0
        %3324 = vmatprep.subr.mxu0 0.0
        %3325 = vmatpush1.msra.mxu0 0.0
        %3326 = vmatprep.subr.mxu0 0.0
        %3327 = vmatpush1.msra.mxu0 0.0
        %3328 = vmatprep.subr.mxu0 0.0
        %3329 = vmatpush1.msra.mxu0 0.0
        %3330 = vmatprep.subr.mxu0 0.0
        %3331 = vmatpush1.msra.mxu0 %v3127
        %3332 = vmatprep.subr.mxu0 0.0
        %3333 = vmatpush1.msra.mxu0 %v3126
        %3334 = vmatprep.subr.mxu0 0.0
        %3335 = vmatpush1.msra.mxu0 %v3125
        %3336 = vmatprep.subr.mxu0 0.0
        %3337 = vmatpush1.msra.mxu0 %v3124
        %3338 = vmatprep.subr.mxu0 0.0
        %3339 = vmatpush1.msra.mxu0 %v3123
        %3340 = vmatprep.subr.mxu0 0.0
        %3341 = vmatpush1.msra.mxu0 %v3122
        %3342 = vmatprep.subr.mxu0 0.0
        %3343 = vmatpush1.msra.mxu0 %v3121
        %3344 = vmatprep.subr.mxu0 0.0
        %3345 = vmatpush1.msra.mxu0 %v3120
        %3346 = vmatprep.subr.mxu0 0.0
        %3347 = vmatpush1.msra.mxu0 %v3119
        %3348 = vmatprep.subr.mxu0 0.0
        %3349 = vmatpush1.msra.mxu0 %v3118
        %3350 = vmatprep.subr.mxu0 0.0
        %3351 = vmatpush1.msra.mxu0 %v3117
        %3352 = vmatprep.subr.mxu0 0.0
        %3353 = vmatpush1.msra.mxu0 %v3116
        %3354 = vmatprep.subr.mxu0 0.0
        %3355 = vmatpush2.msra.mxu0 0.0
        %3356 = vmatprep.subr.mxu0 0.0
        %3357 = vmatpush2.msra.mxu0 0.0
        %3358 = vmatprep.subr.mxu0 0.0
        %3359 = vmatpush2.msra.mxu0 0.0
        %3360 = vmatprep.subr.mxu0 0.0
        %3361 = vmatpush2.msra.mxu0 0.0
        %3362 = vmatprep.subr.mxu0 0.0
        %3363 = vmatpush2.msra.mxu0 0.0
        %3364 = vmatprep.subr.mxu0 0.0
        %3365 = vmatpush2.msra.mxu0 0.0
        %3366 = vmatprep.subr.mxu0 0.0
        %3367 = vmatpush2.msra.mxu0 0.0
        %3368 = vmatprep.subr.mxu0 0.0
        %3369 = vmatpush2.msra.mxu0 0.0
        %3370 = vmatprep.subr.mxu0 0.0
        %3371 = vmatpush2.msra.mxu0 0.0
        %3372 = vmatprep.subr.mxu0 0.0
        %3373 = vmatpush2.msra.mxu0 0.0
        %3374 = vmatprep.subr.mxu0 0.0
        %3375 = vmatpush2.msra.mxu0 0.0
        %3376 = vmatprep.subr.mxu0 0.0
        %3377 = vmatpush2.msra.mxu0 0.0
        %3378 = vmatprep.subr.mxu0 0.0
        %3379 = vmatpush2.msra.mxu0 0.0
        %3380 = vmatprep.subr.mxu0 0.0
        %3381 = vmatpush2.msra.mxu0 0.0
        %3382 = vmatprep.subr.mxu0 0.0
        %3383 = vmatpush2.msra.mxu0 0.0
        %3384 = vmatprep.subr.mxu0 0.0
        %3385 = vmatpush2.msra.mxu0 0.0
        %3386 = vmatprep.mubr.f32.mxu0 0.0
        %3387 = vmatmul.mubr.f32.gmra.mxu0 %v3317
        %v3388 = vpop.f32.mrf.mxu0
        %v3389 = vadd.f32 %v3308, %v3388
        %v3390 = vpop.f32.mrf.mxu0
        %3391 = vmatprep.mubr.f32.mxu0 0.0
        %3392 = vmatmul.mubr.f32.gmra.mxu0 %v3320
        %v3393 = vpop.f32.mrf.mxu0
        %v3394 = vadd.f32 %v3313, %v3393
        %v3395 = vpop.f32.mrf.mxu0
        %3396 = vdwg.mxu0
        %s3397 = sadd.s32 %s3160, 2
        %s3398 = smul.u32 %s3397, 24
        %s3399 = scalar_lea.vmem [#allocation3], %s3398
        %v3400 = vld [vmem:[%s3399] sm:$0xff]
        %v3401 = vld [vmem:[%s3399 + $0x8] sm:$0xff]
        %v3402 = vld [vmem:[%s3399 + $0x10] sm:$0x3]
        %v3406 = vrot.slane %v3400, 1
        %v3407 = vrot.slane %v3401, 1
        %v3408 = vsel %vm3169, %v3406, %v3407
        %v3409 = vrot.slane %v3402, 1
        %v3410 = vsel %vm3169, %v3407, %v3409
        %3411 = vrot.lane.b32.xlu0 %v3408, 32
        %v3412 = vpop.permute.xlu0 %3411
        %3413 = vrot.lane.b32.xlu0 %v3410, 32
        %v3414 = vpop.permute.xlu0 %3413
        %v3417 = vrot.slane %v3400, 2
        %v3418 = vrot.slane %v3401, 2
        %v3419 = vsel %vm3181, %v3417, %v3418
        %v3420 = vrot.slane %v3402, 2
        %v3421 = vsel %vm3181, %v3418, %v3420
        %3422 = vrot.lane.b32.xlu0 %v3419, 64
        %v3423 = vpop.permute.xlu0 %3422
        %3424 = vrot.lane.b32.xlu0 %v3421, 64
        %v3425 = vpop.permute.xlu0 %3424
        %v3428 = vsel %vm3193, %v3400, %v3412
        %v3429 = vsel %vm3193, %v3401, %v3414
        %v3430 = vsel %vm3196, %v3428, %v3423
        %v3431 = vsel %vm3196, %v3429, %v3425
        %v3433 = vsel %vm3234, %v3430, 0
        %v3436 = vsel %vm3234, %v3431, 0
        %3438 = vmatprep.subr.mxu0 0.0
        %3439 = vmatpush1.msra.mxu0 0.0
        %3440 = vmatprep.subr.mxu0 0.0
        %3441 = vmatpush1.msra.mxu0 0.0
        %3442 = vmatprep.subr.mxu0 0.0
        %3443 = vmatpush1.msra.mxu0 0.0
        %3444 = vmatprep.subr.mxu0 0.0
        %3445 = vmatpush1.msra.mxu0 0.0
        %3446 = vmatprep.subr.mxu0 0.0
        %3447 = vmatpush1.msra.mxu0 %v3153
        %3448 = vmatprep.subr.mxu0 0.0
        %3449 = vmatpush1.msra.mxu0 %v3152
        %3450 = vmatprep.subr.mxu0 0.0
        %3451 = vmatpush1.msra.mxu0 %v3151
        %3452 = vmatprep.subr.mxu0 0.0
        %3453 = vmatpush1.msra.mxu0 %v3150
        %3454 = vmatprep.subr.mxu0 0.0
        %3455 = vmatpush1.msra.mxu0 %v3149
        %3456 = vmatprep.subr.mxu0 0.0
        %3457 = vmatpush1.msra.mxu0 %v3148
        %3458 = vmatprep.subr.mxu0 0.0
        %3459 = vmatpush1.msra.mxu0 %v3147
        %3460 = vmatprep.subr.mxu0 0.0
        %3461 = vmatpush1.msra.mxu0 %v3146
        %3462 = vmatprep.subr.mxu0 0.0
        %3463 = vmatpush1.msra.mxu0 %v3145
        %3464 = vmatprep.subr.mxu0 0.0
        %3465 = vmatpush1.msra.mxu0 %v3144
        %3466 = vmatprep.subr.mxu0 0.0
        %3467 = vmatpush1.msra.mxu0 %v3143
        %3468 = vmatprep.subr.mxu0 0.0
        %3469 = vmatpush1.msra.mxu0 %v3142
        %3470 = vmatprep.subr.mxu0 0.0
        %3471 = vmatpush2.msra.mxu0 0.0
        %3472 = vmatprep.subr.mxu0 0.0
        %3473 = vmatpush2.msra.mxu0 0.0
        %3474 = vmatprep.subr.mxu0 0.0
        %3475 = vmatpush2.msra.mxu0 0.0
        %3476 = vmatprep.subr.mxu0 0.0
        %3477 = vmatpush2.msra.mxu0 0.0
        %3478 = vmatprep.subr.mxu0 0.0
        %3479 = vmatpush2.msra.mxu0 0.0
        %3480 = vmatprep.subr.mxu0 0.0
        %3481 = vmatpush2.msra.mxu0 0.0
        %3482 = vmatprep.subr.mxu0 0.0
        %3483 = vmatpush2.msra.mxu0 0.0
        %3484 = vmatprep.subr.mxu0 0.0
        %3485 = vmatpush2.msra.mxu0 0.0
        %3486 = vmatprep.subr.mxu0 0.0
        %3487 = vmatpush2.msra.mxu0 0.0
        %3488 = vmatprep.subr.mxu0 0.0
        %3489 = vmatpush2.msra.mxu0 0.0
        %3490 = vmatprep.subr.mxu0 0.0
        %3491 = vmatpush2.msra.mxu0 0.0
        %3492 = vmatprep.subr.mxu0 0.0
        %3493 = vmatpush2.msra.mxu0 0.0
        %3494 = vmatprep.subr.mxu0 0.0
        %3495 = vmatpush2.msra.mxu0 0.0
        %3496 = vmatprep.subr.mxu0 0.0
        %3497 = vmatpush2.msra.mxu0 0.0
        %3498 = vmatprep.subr.mxu0 0.0
        %3499 = vmatpush2.msra.mxu0 0.0
        %3500 = vmatprep.subr.mxu0 0.0
        %3501 = vmatpush2.msra.mxu0 0.0
        %3502 = vmatprep.mubr.f32.mxu0 0.0
        %3503 = vmatmul.mubr.f32.gmra.mxu0 %v3433
        %v3504 = vpop.f32.mrf.mxu0
        %v3505 = vadd.f32 0.0, %v3504
        %v3506 = vpop.f32.mrf.mxu0
        %3507 = vmatprep.mubr.f32.mxu0 0.0
        %3508 = vmatmul.mubr.f32.gmra.mxu0 %v3436
        %v3509 = vpop.f32.mrf.mxu0
        %v3510 = vadd.f32 0.0, %v3509
        %v3511 = vpop.f32.mrf.mxu0
        %3512 = vdwg.mxu0
        %v3513 = vadd.f32 %v3389, %v3505
        %v3514 = vadd.f32 %v3394, %v3510
        %v3516 = vlaneseq
        %v3517 = vshrl.u32 %v3516, 7
        %v3518 = vsub.s32 0, %v3517
        %v3519 = vrot.slane %v3114, %v3518
        %v3521 = vmul.f32 %v3513, %v3519
        %v3522 = vmul.f32 %v3514, %v3519
        %v3524 = vlaneseq
        %v3525 = vshrl.u32 %v3524, 7
        %v3526 = vsub.s32 0, %v3525
        %v3527 = vrot.slane %v3115, %v3526
        %v3529 = vadd.f32 %v3521, %v3527
        %v3530 = vadd.f32 %v3522, %v3527
        %v3531 = vmax.f32 %v3529, 0.0
        %v3532 = vmax.f32 %v3530, 0.0
        %3533 = vmatprep.subr.mxu0 0.0
        %3534 = vmatpush1.msra.mxu0 0.0
        %3535 = vmatprep.subr.mxu0 0.0
        %3536 = vmatpush1.msra.mxu0 0.0
        %3537 = vmatprep.subr.mxu0 0.0
        %3538 = vmatpush1.msra.mxu0 0.0
        %3539 = vmatprep.subr.mxu0 0.0
        %3540 = vmatpush1.msra.mxu0 0.0
        %3541 = vmatprep.subr.mxu0 0.0
        %3542 = vmatpush1.msra.mxu0 %v3140
        %3543 = vmatprep.subr.mxu0 0.0
        %3544 = vmatpush1.msra.mxu0 %v3139
        %3545 = vmatprep.subr.mxu0 0.0
        %3546 = vmatpush1.msra.mxu0 %v3138
        %3547 = vmatprep.subr.mxu0 0.0
        %3548 = vmatpush1.msra.mxu0 %v3137
        %3549 = vmatprep.subr.mxu0 0.0
        %3550 = vmatpush1.msra.mxu0 %v3136
        %3551 = vmatprep.subr.mxu0 0.0
        %3552 = vmatpush1.msra.mxu0 %v3135
        %3553 = vmatprep.subr.mxu0 0.0
        %3554 = vmatpush1.msra.mxu0 %v3134
        %3555 = vmatprep.subr.mxu0 0.0
        %3556 = vmatpush1.msra.mxu0 %v3133
        %3557 = vmatprep.subr.mxu0 0.0
        %3558 = vmatpush1.msra.mxu0 %v3132
        %3559 = vmatprep.subr.mxu0 0.0
        %3560 = vmatpush1.msra.mxu0 %v3131
        %3561 = vmatprep.subr.mxu0 0.0
        %3562 = vmatpush1.msra.mxu0 %v3130
        %3563 = vmatprep.subr.mxu0 0.0
        %3564 = vmatpush1.msra.mxu0 %v3129
        %3565 = vmatprep.subr.mxu0 0.0
        %3566 = vmatpush2.msra.mxu0 0.0
        %3567 = vmatprep.subr.mxu0 0.0
        %3568 = vmatpush2.msra.mxu0 0.0
        %3569 = vmatprep.subr.mxu0 0.0
        %3570 = vmatpush2.msra.mxu0 0.0
        %3571 = vmatprep.subr.mxu0 0.0
        %3572 = vmatpush2.msra.mxu0 0.0
        %3573 = vmatprep.subr.mxu0 0.0
        %3574 = vmatpush2.msra.mxu0 0.0
        %3575 = vmatprep.subr.mxu0 0.0
        %3576 = vmatpush2.msra.mxu0 0.0
        %3577 = vmatprep.subr.mxu0 0.0
        %3578 = vmatpush2.msra.mxu0 0.0
        %3579 = vmatprep.subr.mxu0 0.0
        %3580 = vmatpush2.msra.mxu0 0.0
        %3581 = vmatprep.subr.mxu0 0.0
        %3582 = vmatpush2.msra.mxu0 0.0
        %3583 = vmatprep.subr.mxu0 0.0
        %3584 = vmatpush2.msra.mxu0 0.0
        %3585 = vmatprep.subr.mxu0 0.0
        %3586 = vmatpush2.msra.mxu0 0.0
        %3587 = vmatprep.subr.mxu0 0.0
        %3588 = vmatpush2.msra.mxu0 0.0
        %3589 = vmatprep.subr.mxu0 0.0
        %3590 = vmatpush2.msra.mxu0 0.0
        %3591 = vmatprep.subr.mxu0 0.0
        %3592 = vmatpush2.msra.mxu0 0.0
        %3593 = vmatprep.subr.mxu0 0.0
        %3594 = vmatpush2.msra.mxu0 0.0
        %3595 = vmatprep.subr.mxu0 0.0
        %3596 = vmatpush2.msra.mxu0 0.0
        %3597 = vmatprep.mubr.f32.mxu0 0.0
        %3598 = vmatmul.mubr.f32.gmra.mxu0 %v3433
        %v3599 = vpop.f32.mrf.mxu0
        %v3600 = vadd.f32 0.0, %v3599
        %v3601 = vpop.f32.mrf.mxu0
        %3602 = vmatprep.mubr.f32.mxu0 0.0
        %3603 = vmatmul.mubr.f32.gmra.mxu0 %v3436
        %v3604 = vpop.f32.mrf.mxu0
        %v3605 = vadd.f32 0.0, %v3604
        %v3606 = vpop.f32.mrf.mxu0
        %3607 = vdwg.mxu0
        %3608 = vmatprep.subr.mxu0 0.0
        %3609 = vmatpush1.msra.mxu0 0.0
        %3610 = vmatprep.subr.mxu0 0.0
        %3611 = vmatpush1.msra.mxu0 0.0
        %3612 = vmatprep.subr.mxu0 0.0
        %3613 = vmatpush1.msra.mxu0 0.0
        %3614 = vmatprep.subr.mxu0 0.0
        %3615 = vmatpush1.msra.mxu0 0.0
        %3616 = vmatprep.subr.mxu0 0.0
        %3617 = vmatpush1.msra.mxu0 %v3127
        %3618 = vmatprep.subr.mxu0 0.0
        %3619 = vmatpush1.msra.mxu0 %v3126
        %3620 = vmatprep.subr.mxu0 0.0
        %3621 = vmatpush1.msra.mxu0 %v3125
        %3622 = vmatprep.subr.mxu0 0.0
        %3623 = vmatpush1.msra.mxu0 %v3124
        %3624 = vmatprep.subr.mxu0 0.0
        %3625 = vmatpush1.msra.mxu0 %v3123
        %3626 = vmatprep.subr.mxu0 0.0
        %3627 = vmatpush1.msra.mxu0 %v3122
        %3628 = vmatprep.subr.mxu0 0.0
        %3629 = vmatpush1.msra.mxu0 %v3121
        %3630 = vmatprep.subr.mxu0 0.0
        %3631 = vmatpush1.msra.mxu0 %v3120
        %3632 = vmatprep.subr.mxu0 0.0
        %3633 = vmatpush1.msra.mxu0 %v3119
        %3634 = vmatprep.subr.mxu0 0.0
        %3635 = vmatpush1.msra.mxu0 %v3118
        %3636 = vmatprep.subr.mxu0 0.0
        %3637 = vmatpush1.msra.mxu0 %v3117
        %3638 = vmatprep.subr.mxu0 0.0
        %3639 = vmatpush1.msra.mxu0 %v3116
        %3640 = vmatprep.subr.mxu0 0.0
        %3641 = vmatpush2.msra.mxu0 0.0
        %3642 = vmatprep.subr.mxu0 0.0
        %3643 = vmatpush2.msra.mxu0 0.0
        %3644 = vmatprep.subr.mxu0 0.0
        %3645 = vmatpush2.msra.mxu0 0.0
        %3646 = vmatprep.subr.mxu0 0.0
        %3647 = vmatpush2.msra.mxu0 0.0
        %3648 = vmatprep.subr.mxu0 0.0
        %3649 = vmatpush2.msra.mxu0 0.0
        %3650 = vmatprep.subr.mxu0 0.0
        %3651 = vmatpush2.msra.mxu0 0.0
        %3652 = vmatprep.subr.mxu0 0.0
        %3653 = vmatpush2.msra.mxu0 0.0
        %3654 = vmatprep.subr.mxu0 0.0
        %3655 = vmatpush2.msra.mxu0 0.0
        %3656 = vmatprep.subr.mxu0 0.0
        %3657 = vmatpush2.msra.mxu0 0.0
        %3658 = vmatprep.subr.mxu0 0.0
        %3659 = vmatpush2.msra.mxu0 0.0
        %3660 = vmatprep.subr.mxu0 0.0
        %3661 = vmatpush2.msra.mxu0 0.0
        %3662 = vmatprep.subr.mxu0 0.0
        %3663 = vmatpush2.msra.mxu0 0.0
        %3664 = vmatprep.subr.mxu0 0.0
        %3665 = vmatpush2.msra.mxu0 0.0
        %3666 = vmatprep.subr.mxu0 0.0
        %3667 = vmatpush2.msra.mxu0 0.0
        %3668 = vmatprep.subr.mxu0 0.0
        %3669 = vmatpush2.msra.mxu0 0.0
        %3670 = vmatprep.subr.mxu0 0.0
        %3671 = vmatpush2.msra.mxu0 0.0
        %3672 = vmatprep.mubr.f32.mxu0 0.0
        %3673 = vmatmul.mubr.f32.gmra.mxu0 %v3236
        %v3674 = vpop.f32.mrf.mxu0
        %v3675 = vadd.f32 %v3600, %v3674
        %v3676 = vpop.f32.mrf.mxu0
        %3677 = vmatprep.mubr.f32.mxu0 0.0
        %3678 = vmatmul.mubr.f32.gmra.mxu0 %v3239
        %v3679 = vpop.f32.mrf.mxu0
        %v3680 = vadd.f32 %v3605, %v3679
        %v3681 = vpop.f32.mrf.mxu0
        %3682 = vdwg.mxu0
        %s3683 = sadd.s32 %s3160, 3
        %s3684 = smul.u32 %s3683, 24
        %s3685 = scalar_lea.vmem [#allocation3], %s3684
        %v3686 = vld [vmem:[%s3685] sm:$0xff]
        %v3687 = vld [vmem:[%s3685 + $0x8] sm:$0xff]
        %v3688 = vld [vmem:[%s3685 + $0x10] sm:$0x3]
        %v3692 = vrot.slane %v3686, 1
        %v3693 = vrot.slane %v3687, 1
        %v3694 = vsel %vm3169, %v3692, %v3693
        %v3695 = vrot.slane %v3688, 1
        %v3696 = vsel %vm3169, %v3693, %v3695
        %3697 = vrot.lane.b32.xlu0 %v3694, 32
        %v3698 = vpop.permute.xlu0 %3697
        %3699 = vrot.lane.b32.xlu0 %v3696, 32
        %v3700 = vpop.permute.xlu0 %3699
        %v3703 = vrot.slane %v3686, 2
        %v3704 = vrot.slane %v3687, 2
        %v3705 = vsel %vm3181, %v3703, %v3704
        %v3706 = vrot.slane %v3688, 2
        %v3707 = vsel %vm3181, %v3704, %v3706
        %3708 = vrot.lane.b32.xlu0 %v3705, 64
        %v3709 = vpop.permute.xlu0 %3708
        %3710 = vrot.lane.b32.xlu0 %v3707, 64
        %v3711 = vpop.permute.xlu0 %3710
        %v3714 = vsel %vm3193, %v3686, %v3698
        %v3715 = vsel %vm3193, %v3687, %v3700
        %v3716 = vsel %vm3196, %v3714, %v3709
        %v3717 = vsel %vm3196, %v3715, %v3711
        %v3719 = vsel %vm3234, %v3716, 0
        %v3722 = vsel %vm3234, %v3717, 0
        %3724 = vmatprep.subr.mxu0 0.0
        %3725 = vmatpush1.msra.mxu0 0.0
        %3726 = vmatprep.subr.mxu0 0.0
        %3727 = vmatpush1.msra.mxu0 0.0
        %3728 = vmatprep.subr.mxu0 0.0
        %3729 = vmatpush1.msra.mxu0 0.0
        %3730 = vmatprep.subr.mxu0 0.0
        %3731 = vmatpush1.msra.mxu0 0.0
        %3732 = vmatprep.subr.mxu0 0.0
        %3733 = vmatpush1.msra.mxu0 %v3153
        %3734 = vmatprep.subr.mxu0 0.0
        %3735 = vmatpush1.msra.mxu0 %v3152
        %3736 = vmatprep.subr.mxu0 0.0
        %3737 = vmatpush1.msra.mxu0 %v3151
        %3738 = vmatprep.subr.mxu0 0.0
        %3739 = vmatpush1.msra.mxu0 %v3150
        %3740 = vmatprep.subr.mxu0 0.0
        %3741 = vmatpush1.msra.mxu0 %v3149
        %3742 = vmatprep.subr.mxu0 0.0
        %3743 = vmatpush1.msra.mxu0 %v3148
        %3744 = vmatprep.subr.mxu0 0.0
        %3745 = vmatpush1.msra.mxu0 %v3147
        %3746 = vmatprep.subr.mxu0 0.0
        %3747 = vmatpush1.msra.mxu0 %v3146
        %3748 = vmatprep.subr.mxu0 0.0
        %3749 = vmatpush1.msra.mxu0 %v3145
        %3750 = vmatprep.subr.mxu0 0.0
        %3751 = vmatpush1.msra.mxu0 %v3144
        %3752 = vmatprep.subr.mxu0 0.0
        %3753 = vmatpush1.msra.mxu0 %v3143
        %3754 = vmatprep.subr.mxu0 0.0
        %3755 = vmatpush1.msra.mxu0 %v3142
        %3756 = vmatprep.subr.mxu0 0.0
        %3757 = vmatpush2.msra.mxu0 0.0
        %3758 = vmatprep.subr.mxu0 0.0
        %3759 = vmatpush2.msra.mxu0 0.0
        %3760 = vmatprep.subr.mxu0 0.0
        %3761 = vmatpush2.msra.mxu0 0.0
        %3762 = vmatprep.subr.mxu0 0.0
        %3763 = vmatpush2.msra.mxu0 0.0
        %3764 = vmatprep.subr.mxu0 0.0
        %3765 = vmatpush2.msra.mxu0 0.0
        %3766 = vmatprep.subr.mxu0 0.0
        %3767 = vmatpush2.msra.mxu0 0.0
        %3768 = vmatprep.subr.mxu0 0.0
        %3769 = vmatpush2.msra.mxu0 0.0
        %3770 = vmatprep.subr.mxu0 0.0
        %3771 = vmatpush2.msra.mxu0 0.0
        %3772 = vmatprep.subr.mxu0 0.0
        %3773 = vmatpush2.msra.mxu0 0.0
        %3774 = vmatprep.subr.mxu0 0.0
        %3775 = vmatpush2.msra.mxu0 0.0
        %3776 = vmatprep.subr.mxu0 0.0
        %3777 = vmatpush2.msra.mxu0 0.0
        %3778 = vmatprep.subr.mxu0 0.0
        %3779 = vmatpush2.msra.mxu0 0.0
        %3780 = vmatprep.subr.mxu0 0.0
        %3781 = vmatpush2.msra.mxu0 0.0
        %3782 = vmatprep.subr.mxu0 0.0
        %3783 = vmatpush2.msra.mxu0 0.0
        %3784 = vmatprep.subr.mxu0 0.0
        %3785 = vmatpush2.msra.mxu0 0.0
        %3786 = vmatprep.subr.mxu0 0.0
        %3787 = vmatpush2.msra.mxu0 0.0
        %3788 = vmatprep.mubr.f32.mxu0 0.0
        %3789 = vmatmul.mubr.f32.gmra.mxu0 %v3719
        %v3790 = vpop.f32.mrf.mxu0
        %v3791 = vadd.f32 0.0, %v3790
        %v3792 = vpop.f32.mrf.mxu0
        %3793 = vmatprep.mubr.f32.mxu0 0.0
        %3794 = vmatmul.mubr.f32.gmra.mxu0 %v3722
        %v3795 = vpop.f32.mrf.mxu0
        %v3796 = vadd.f32 0.0, %v3795
        %v3797 = vpop.f32.mrf.mxu0
        %3798 = vdwg.mxu0
        %v3799 = vadd.f32 %v3675, %v3791
        %v3800 = vadd.f32 %v3680, %v3796
        %v3801 = vmul.f32 %v3799, %v3519
        %v3802 = vmul.f32 %v3800, %v3519
        %v3803 = vadd.f32 %v3801, %v3527
        %v3804 = vadd.f32 %v3802, %v3527
        %v3805 = vmax.f32 %v3803, 0.0
        %v3806 = vmax.f32 %v3804, 0.0
        %v3807 = vmax.f32 %v3531, %v3805
        %v3808 = vmax.f32 %v3532, %v3806
        %vm3809 = vcmask 130048
        %v3811 = vsel %vm3809, %v275, 0
        %3813 = vmatprep.subr.mxu0 0.0
        %3814 = vmatpush1.msra.mxu0 0.0
        %3815 = vmatprep.subr.mxu0 0.0
        %3816 = vmatpush1.msra.mxu0 0.0
        %3817 = vmatprep.subr.mxu0 0.0
        %3818 = vmatpush1.msra.mxu0 0.0
        %3819 = vmatprep.subr.mxu0 0.0
        %3820 = vmatpush1.msra.mxu0 0.0
        %3821 = vmatprep.subr.mxu0 0.0
        %3822 = vmatpush1.msra.mxu0 0.0
        %3823 = vmatprep.subr.mxu0 0.0
        %3824 = vmatpush1.msra.mxu0 0.0
        %3825 = vmatprep.subr.mxu0 0.0
        %3826 = vmatpush1.msra.mxu0 0.0
        %3827 = vmatprep.subr.mxu0 0.0
        %3828 = vmatpush1.msra.mxu0 0.0
        %3829 = vmatprep.subr.mxu0 0.0
        %3830 = vmatpush1.msra.mxu0 0.0
        %3831 = vmatprep.subr.mxu0 0.0
        %3832 = vmatpush1.msra.mxu0 0.0
        %3833 = vmatprep.subr.mxu0 0.0
        %3834 = vmatpush1.msra.mxu0 0.0
        %3835 = vmatprep.subr.mxu0 0.0
        %3836 = vmatpush1.msra.mxu0 0.0
        %3837 = vmatprep.subr.mxu0 0.0
        %3838 = vmatpush1.msra.mxu0 0.0
        %3839 = vmatprep.subr.mxu0 0.0
        %3840 = vmatpush1.msra.mxu0 0.0
        %3841 = vmatprep.subr.mxu0 0.0
        %3842 = vmatpush1.msra.mxu0 %v3808
        %3843 = vmatprep.subr.mxu0 0.0
        %3844 = vmatpush1.msra.mxu0 %v3807
        %3845 = vmatprep.subr.mxu0 0.0
        %3846 = vmatpush2.msra.mxu0 0.0
        %3847 = vmatprep.subr.mxu0 0.0
        %3848 = vmatpush2.msra.mxu0 0.0
        %3849 = vmatprep.subr.mxu0 0.0
        %3850 = vmatpush2.msra.mxu0 0.0
        %3851 = vmatprep.subr.mxu0 0.0
        %3852 = vmatpush2.msra.mxu0 0.0
        %3853 = vmatprep.subr.mxu0 0.0
        %3854 = vmatpush2.msra.mxu0 0.0
        %3855 = vmatprep.subr.mxu0 0.0
        %3856 = vmatpush2.msra.mxu0 0.0
        %3857 = vmatprep.subr.mxu0 0.0
        %3858 = vmatpush2.msra.mxu0 0.0
        %3859 = vmatprep.subr.mxu0 0.0
        %3860 = vmatpush2.msra.mxu0 0.0
        %3861 = vmatprep.subr.mxu0 0.0
        %3862 = vmatpush2.msra.mxu0 0.0
        %3863 = vmatprep.subr.mxu0 0.0
        %3864 = vmatpush2.msra.mxu0 0.0
        %3865 = vmatprep.subr.mxu0 0.0
        %3866 = vmatpush2.msra.mxu0 0.0
        %3867 = vmatprep.subr.mxu0 0.0
        %3868 = vmatpush2.msra.mxu0 0.0
        %3869 = vmatprep.subr.mxu0 0.0
        %3870 = vmatpush2.msra.mxu0 0.0
        %3871 = vmatprep.subr.mxu0 0.0
        %3872 = vmatpush2.msra.mxu0 0.0
        %3873 = vmatprep.subr.mxu0 0.0
        %3874 = vmatpush2.msra.mxu0 0.0
        %3875 = vmatprep.subr.mxu0 0.0
        %3876 = vmatpush2.msra.mxu0 0.0
        %3877 = vmatprep.mubr.f32.mxu0 0.0
        %3878 = vmatmul.mubr.f32.gmra.mxu0 %v3811
        %v3879 = vpop.f32.mrf.mxu0
        %v3880 = vadd.f32 0.0, %v3879
        %v3881 = vpop.f32.mrf.mxu0
        %3882 = vdwg.mxu0
        %v3884 = vsel %vm3809, %v295, 0
        %3886 = vmatprep.subr.mxu0 0.0
        %3887 = vmatpush1.msra.mxu0 0.0
        %3888 = vmatprep.subr.mxu0 0.0
        %3889 = vmatpush1.msra.mxu0 0.0
        %3890 = vmatprep.subr.mxu0 0.0
        %3891 = vmatpush1.msra.mxu0 0.0
        %3892 = vmatprep.subr.mxu0 0.0
        %3893 = vmatpush1.msra.mxu0 0.0
        %3894 = vmatprep.subr.mxu0 0.0
        %3895 = vmatpush1.msra.mxu0 0.0
        %3896 = vmatprep.subr.mxu0 0.0
        %3897 = vmatpush1.msra.mxu0 0.0
        %3898 = vmatprep.subr.mxu0 0.0
        %3899 = vmatpush1.msra.mxu0 0.0
        %3900 = vmatprep.subr.mxu0 0.0
        %3901 = vmatpush1.msra.mxu0 0.0
        %3902 = vmatprep.subr.mxu0 0.0
        %3903 = vmatpush1.msra.mxu0 0.0
        %3904 = vmatprep.subr.mxu0 0.0
        %3905 = vmatpush1.msra.mxu0 0.0
        %3906 = vmatprep.subr.mxu0 0.0
        %3907 = vmatpush1.msra.mxu0 0.0
        %3908 = vmatprep.subr.mxu0 0.0
        %3909 = vmatpush1.msra.mxu0 0.0
        %3910 = vmatprep.subr.mxu0 0.0
        %3911 = vmatpush1.msra.mxu0 0.0
        %3912 = vmatprep.subr.mxu0 0.0
        %3913 = vmatpush1.msra.mxu0 0.0
        %3914 = vmatprep.subr.mxu0 0.0
        %3915 = vmatpush1.msra.mxu0 %v3808
        %3916 = vmatprep.subr.mxu0 0.0
        %3917 = vmatpush1.msra.mxu0 %v3807
        %3918 = vmatprep.subr.mxu0 0.0
        %3919 = vmatpush2.msra.mxu0 0.0
        %3920 = vmatprep.subr.mxu0 0.0
        %3921 = vmatpush2.msra.mxu0 0.0
        %3922 = vmatprep.subr.mxu0 0.0
        %3923 = vmatpush2.msra.mxu0 0.0
        %3924 = vmatprep.subr.mxu0 0.0
        %3925 = vmatpush2.msra.mxu0 0.0
        %3926 = vmatprep.subr.mxu0 0.0
        %3927 = vmatpush2.msra.mxu0 0.0
        %3928 = vmatprep.subr.mxu0 0.0
        %3929 = vmatpush2.msra.mxu0 0.0
        %3930 = vmatprep.subr.mxu0 0.0
        %3931 = vmatpush2.msra.mxu0 0.0
        %3932 = vmatprep.subr.mxu0 0.0
        %3933 = vmatpush2.msra.mxu0 0.0
        %3934 = vmatprep.subr.mxu0 0.0
        %3935 = vmatpush2.msra.mxu0 0.0
        %3936 = vmatprep.subr.mxu0 0.0
        %3937 = vmatpush2.msra.mxu0 0.0
        %3938 = vmatprep.subr.mxu0 0.0
        %3939 = vmatpush2.msra.mxu0 0.0
        %3940 = vmatprep.subr.mxu0 0.0
        %3941 = vmatpush2.msra.mxu0 0.0
        %3942 = vmatprep.subr.mxu0 0.0
        %3943 = vmatpush2.msra.mxu0 0.0
        %3944 = vmatprep.subr.mxu0 0.0
        %3945 = vmatpush2.msra.mxu0 0.0
        %3946 = vmatprep.subr.mxu0 0.0
        %3947 = vmatpush2.msra.mxu0 0.0
        %3948 = vmatprep.subr.mxu0 0.0
        %3949 = vmatpush2.msra.mxu0 0.0
        %3950 = vmatprep.mubr.f32.mxu0 0.0
        %3951 = vmatmul.mubr.f32.gmra.mxu0 %v3884
        %v3952 = vpop.f32.mrf.mxu0
        %v3953 = vadd.f32 0.0, %v3952
        %v3954 = vpop.f32.mrf.mxu0
        %3955 = vdwg.mxu0
        %v3956 = vmax.f32 %v3880, %v3953
        %s3957 = smul.u32 %s3155, 8
        %s3958 = scalar_lea.vmem %s251, %s3957
        %3959 = vst.msk [vmem:[%s3958] sm:$0xff] %vm3196, %v3956
      $region63: #{cnn_forward.2} parent=43 // loop_footer
        %s3159 = sadd.s32 1, %s3155
      $region64: #{cnn_forward.2} parent=43 // loop_footer_branch
        %3154 = sbr.rel target = $region60
      $region65: #{cnn_forward.2} parent=43 // loop_exit
        _
      %p3960 = scmp.lt.s32.totalorder %s17, 1
      %s3961 = scalar_select %p3960, %s17, 1
      %s3962 = smul.addr %s3961, 8
      %s3963 = smul.addr %s3962, 8
      %s3964 = scalar_lea.vmem %s6, %s3963
      // Predicated region
      $region66: #{cnn_forward.2} parent=43 // pred_check
        %p3965 = pneg %p166
      $region67: #{cnn_forward.2} parent=43 // pred_check_branch
        %3967 = sbr.rel (%p3965) target = $region69
      $region68: #{cnn_forward.2} parent=43 // pred_region
        _
      $region69: #{cnn_forward.2} parent=43 // pred_fallthru
        _
    $region44: #{cnn_forward.2} parent=5 // pred_fallthru
      _
    %p3968 = scmp.le.s32.totalorder 2, %s12
    // Predicated region
    $region70: #{cnn_forward.2} parent=5 // pred_check
      %p3969 = pneg %p3968
    $region71: #{cnn_forward.2} parent=5 // pred_check_branch
      %3971 = sbr.rel (%p3969) target = $region73
    $region72: #{cnn_forward.2} parent=5 // pred_region
      %s3972 = ssub.s32 %s12, 2
      // Predicated region
      $region74: #{cnn_forward.2} parent=72 // pred_check
        %p3973 = pneg %p172
      $region75: #{cnn_forward.2} parent=72 // pred_check_branch
        %3975 = sbr.rel (%p3973) target = $region77
      $region76: #{cnn_forward.2} parent=72 // pred_region
        %p3976 = scmp.lt.s32.totalorder %s18, 1
        %s3977 = scalar_select %p3976, %s18, 1
        %s3978 = smul.addr %s3977, 8
        %s3979 = smul.addr %s3978, 8
        %s3980 = scalar_lea.vmem %s6, %s3979
      $region77: #{cnn_forward.2} parent=72 // pred_fallthru
        _
    $region73: #{cnn_forward.2} parent=5 // pred_fallthru
      _
  $region6: #{cnn_forward.2} parent=0 // loop_footer
    %s16 = sadd.s32 1, %s12
  $region7: #{cnn_forward.2} parent=0 // loop_footer_branch
    %11 = sbr.rel target = $region3
  $region8: #{cnn_forward.2} parent=0 // loop_exit
    _

// kernel: cnn_forward.3
$region0: #{cnn_forward.3}
  #allocation0 [shape = 'u32[]', space=smem, size = 0x4, offset = 0x4, fixed_abs, tag = 'smem constant byte address 0x4 - core index']
  #allocation1 [shape = 'u32[144,128]{1,0:T(1,128)}', space=vmem, size = 0x12000, scoped, tag = 'internal scratch']
  %s0 = inlined_call_operand.vmem [shape: f32[2,4096], index: 0, kind: input, shape index: {}]
  %s1 = inlined_call_operand.vmem [shape: bf16[4096,200], index: 1, kind: input, shape index: {}]
  %s2 = inlined_call_operand.vmem [shape: f32[1,200], index: 2, kind: input, shape index: {}]
  %s3 = inlined_call_operand.vmem [shape: f32[200,10], index: 3, kind: input, shape index: {}]
  %s4 = inlined_call_operand.vmem [shape: f32[1,10], index: 4, kind: input, shape index: {}]
  %s5 = inlined_call_operand.hbm [shape: f32[2,10], index: 5, kind: output, shape index: {}]
  %s6 = sld [smem:[#allocation0]]
  $region30: #{cnn_forward.3} parent=0
    _
  %s8 = ssub.s32 1, %s6
  %s9 = scalar_select 0, %s8, %s6
  $region1: #{cnn_forward.3} parent=0
    #allocation2 [shape = 'u8[1024]{0}', space=vmem, size = 0x400, scoped, tag = 'output window, operand 0, single buffered']
    #allocation3 [shape = 's32[1]{0}', space=sflag, size = 0x4, scoped, tag = 'scoped memory for cnn_forward.3']
    %10 = vsyncpa [#allocation3], 0
    // Predicated region
    $region2: #{cnn_forward.3} parent=1 // pred_check
      _
    $region3: #{cnn_forward.3} parent=1 // pred_check_branch
      %12 = sbr.rel (0) target = $region5
    $region4: #{cnn_forward.3} parent=1 // pred_region
      _
    $region5: #{cnn_forward.3} parent=1 // pred_fallthru
      _
    // Predicated region
    $region6: #{cnn_forward.3} parent=1 // pred_check
      _
    $region7: #{cnn_forward.3} parent=1 // pred_check_branch
      %14 = sbr.rel (0) target = $region9
    $region8: #{cnn_forward.3} parent=1 // pred_region
      _
    $region9: #{cnn_forward.3} parent=1 // pred_fallthru
      _
    // Predicated region
    $region10: #{cnn_forward.3} parent=1 // pred_check
      _
    $region11: #{cnn_forward.3} parent=1 // pred_check_branch
      %16 = sbr.rel (0) target = $region13
    $region12: #{cnn_forward.3} parent=1 // pred_region
      _
    $region13: #{cnn_forward.3} parent=1 // pred_fallthru
      _
    // Predicated region
    $region14: #{cnn_forward.3} parent=1 // pred_check
      _
    $region15: #{cnn_forward.3} parent=1 // pred_check_branch
      %18 = sbr.rel (0) target = $region17
    $region16: #{cnn_forward.3} parent=1 // pred_region
      _
    $region17: #{cnn_forward.3} parent=1 // pred_fallthru
      _
    // Predicated region
    $region18: #{cnn_forward.3} parent=1 // pred_check
      _
    $region19: #{cnn_forward.3} parent=1 // pred_check_branch
      %20 = sbr.rel (0) target = $region21
    $region20: #{cnn_forward.3} parent=1 // pred_region
      _
    $region21: #{cnn_forward.3} parent=1 // pred_fallthru
      _
    %v21 = vld [vmem:[%s0] sm:$0xff]
    %v22 = vld [vmem:[%s0 + $0x8] sm:$0xff]
    %v23 = vld [vmem:[%s0 + $0x10] sm:$0xff]
    %v24 = vld [vmem:[%s0 + $0x18] sm:$0xff]
    %v25 = vld [vmem:[%s0 + $0x20] sm:$0xff]
    %v26 = vld [vmem:[%s0 + $0x28] sm:$0xff]
    %v27 = vld [vmem:[%s0 + $0x30] sm:$0xff]
    %v28 = vld [vmem:[%s0 + $0x38] sm:$0xff]
    %v37 = vcombine.high %v21, %v21
    %v39 = vunpack.c.l.s4 1983009808
    %v40 = vunpack.c.0.s8 %v39
    %v41 = vlaneseq
    %v42 = vshrl.u32 %v41, 7
    %v43 = vsub.s32 %v40, %v42
    %v44 = vrot.slane %v21, %v43
    %v46 = vunpack.c.l.s4 1983009808
    %v47 = vunpack.c.0.s8 %v46
    %v48 = vlaneseq
    %v49 = vshrl.u32 %v48, 7
    %v50 = vsub.s32 %v47, %v49
    %v51 = vrot.slane %v37, %v50
    %v52 = vcombine.high %v44, %v44
    %v53 = vcombine.high %v51, %v51
    %v54 = vcombine.high %v22, %v22
    %v56 = vunpack.c.l.s4 1983009808
    %v57 = vunpack.c.0.s8 %v56
    %v58 = vlaneseq
    %v59 = vshrl.u32 %v58, 7
    %v60 = vsub.s32 %v57, %v59
    %v61 = vrot.slane %v22, %v60
    %v63 = vunpack.c.l.s4 1983009808
    %v64 = vunpack.c.0.s8 %v63
    %v65 = vlaneseq
    %v66 = vshrl.u32 %v65, 7
    %v67 = vsub.s32 %v64, %v66
    %v68 = vrot.slane %v54, %v67
    %v69 = vcombine.high %v61, %v61
    %v70 = vcombine.high %v68, %v68
    %v71 = vcombine.high %v23, %v23
    %v73 = vunpack.c.l.s4 1983009808
    %v74 = vunpack.c.0.s8 %v73
    %v75 = vlaneseq
    %v76 = vshrl.u32 %v75, 7
    %v77 = vsub.s32 %v74, %v76
    %v78 = vrot.slane %v23, %v77
    %v80 = vunpack.c.l.s4 1983009808
    %v81 = vunpack.c.0.s8 %v80
    %v82 = vlaneseq
    %v83 = vshrl.u32 %v82, 7
    %v84 = vsub.s32 %v81, %v83
    %v85 = vrot.slane %v71, %v84
    %v86 = vcombine.high %v78, %v78
    %v87 = vcombine.high %v85, %v85
    %v88 = vcombine.high %v24, %v24
    %v90 = vunpack.c.l.s4 1983009808
    %v91 = vunpack.c.0.s8 %v90
    %v92 = vlaneseq
    %v93 = vshrl.u32 %v92, 7
    %v94 = vsub.s32 %v91, %v93
    %v95 = vrot.slane %v24, %v94
    %v97 = vunpack.c.l.s4 1983009808
    %v98 = vunpack.c.0.s8 %v97
    %v99 = vlaneseq
    %v100 = vshrl.u32 %v99, 7
    %v101 = vsub.s32 %v98, %v100
    %v102 = vrot.slane %v88, %v101
    %v103 = vcombine.high %v95, %v95
    %v104 = vcombine.high %v102, %v102
    %v105 = vcombine.high %v25, %v25
    %v107 = vunpack.c.l.s4 1983009808
    %v108 = vunpack.c.0.s8 %v107
    %v109 = vlaneseq
    %v110 = vshrl.u32 %v109, 7
    %v111 = vsub.s32 %v108, %v110
    %v112 = vrot.slane %v25, %v111
    %v114 = vunpack.c.l.s4 1983009808
    %v115 = vunpack.c.0.s8 %v114
    %v116 = vlaneseq
    %v117 = vshrl.u32 %v116, 7
    %v118 = vsub.s32 %v115, %v117
    %v119 = vrot.slane %v105, %v118
    %v120 = vcombine.high %v112, %v112
    %v121 = vcombine.high %v119, %v119
    %v122 = vcombine.high %v26, %v26
    %v124 = vunpack.c.l.s4 1983009808
    %v125 = vunpack.c.0.s8 %v124
    %v126 = vlaneseq
    %v127 = vshrl.u32 %v126, 7
    %v128 = vsub.s32 %v125, %v127
    %v129 = vrot.slane %v26, %v128
    %v131 = vunpack.c.l.s4 1983009808
    %v132 = vunpack.c.0.s8 %v131
    %v133 = vlaneseq
    %v134 = vshrl.u32 %v133, 7
    %v135 = vsub.s32 %v132, %v134
    %v136 = vrot.slane %v122, %v135
    %v137 = vcombine.high %v129, %v129
    %v138 = vcombine.high %v136, %v136
    %v139 = vcombine.high %v27, %v27
    %v141 = vunpack.c.l.s4 1983009808
    %v142 = vunpack.c.0.s8 %v141
    %v143 = vlaneseq
    %v144 = vshrl.u32 %v143, 7
    %v145 = vsub.s32 %v142, %v144
    %v146 = vrot.slane %v27, %v145
    %v148 = vunpack.c.l.s4 1983009808
    %v149 = vunpack.c.0.s8 %v148
    %v150 = vlaneseq
    %v151 = vshrl.u32 %v150, 7
    %v152 = vsub.s32 %v149, %v151
    %v153 = vrot.slane %v139, %v152
    %v154 = vcombine.high %v146, %v146
    %v155 = vcombine.high %v153, %v153
    %v156 = vcombine.high %v28, %v28
    %v158 = vunpack.c.l.s4 1983009808
    %v159 = vunpack.c.0.s8 %v158
    %v160 = vlaneseq
    %v161 = vshrl.u32 %v160, 7
    %v162 = vsub.s32 %v159, %v161
    %v163 = vrot.slane %v28, %v162
    %v165 = vunpack.c.l.s4 1983009808
    %v166 = vunpack.c.0.s8 %v165
    %v167 = vlaneseq
    %v168 = vshrl.u32 %v167, 7
    %v169 = vsub.s32 %v166, %v168
    %v170 = vrot.slane %v156, %v169
    %v171 = vcombine.high %v163, %v163
    %v172 = vcombine.high %v170, %v170
    %v205 = vpack.c.bf16 %v44, %v44
    %v206 = vpack.c.bf16 %v52, %v52
    %v207 = vpack.c.bf16 %v51, %v51
    %v208 = vpack.c.bf16 %v53, %v53
    %v209 = vpack.c.bf16 %v61, %v61
    %v210 = vpack.c.bf16 %v69, %v69
    %v211 = vpack.c.bf16 %v68, %v68
    %v212 = vpack.c.bf16 %v70, %v70
    %v213 = vpack.c.bf16 %v78, %v78
    %v214 = vpack.c.bf16 %v86, %v86
    %v215 = vpack.c.bf16 %v85, %v85
    %v216 = vpack.c.bf16 %v87, %v87
    %v217 = vpack.c.bf16 %v95, %v95
    %v218 = vpack.c.bf16 %v103, %v103
    %v219 = vpack.c.bf16 %v102, %v102
    %v220 = vpack.c.bf16 %v104, %v104
    %v221 = vpack.c.bf16 %v112, %v112
    %v222 = vpack.c.bf16 %v120, %v120
    %v223 = vpack.c.bf16 %v119, %v119
    %v224 = vpack.c.bf16 %v121, %v121
    %v225 = vpack.c.bf16 %v129, %v129
    %v226 = vpack.c.bf16 %v137, %v137
    %v227 = vpack.c.bf16 %v136, %v136
    %v228 = vpack.c.bf16 %v138, %v138
    %v229 = vpack.c.bf16 %v146, %v146
    %v230 = vpack.c.bf16 %v154, %v154
    %v231 = vpack.c.bf16 %v153, %v153
    %v232 = vpack.c.bf16 %v155, %v155
    %v233 = vpack.c.bf16 %v163, %v163
    %v234 = vpack.c.bf16 %v171, %v171
    %v235 = vpack.c.bf16 %v170, %v170
    %v236 = vpack.c.bf16 %v172, %v172
    %v237 = vld [vmem:[%s1] sm:$0xff]
    %v238 = vld [vmem:[%s1 + $0x8] sm:$0xff]
    %v239 = vld [vmem:[%s1 + $0x10] sm:$0xff]
    %v240 = vld [vmem:[%s1 + $0x18] sm:$0xff]
    %v241 = vld [vmem:[%s1 + $0x20] sm:$0xff]
    %v242 = vld [vmem:[%s1 + $0x28] sm:$0xff]
    %v243 = vld [vmem:[%s1 + $0x30] sm:$0xff]
    %v244 = vld [vmem:[%s1 + $0x38] sm:$0xff]
    %v245 = vld [vmem:[%s1 + $0x40] sm:$0xff]
    %v246 = vld [vmem:[%s1 + $0x48] sm:$0xff]
    %v247 = vld [vmem:[%s1 + $0x50] sm:$0xff]
    %v248 = vld [vmem:[%s1 + $0x58] sm:$0xff]
    %v249 = vld [vmem:[%s1 + $0x60] sm:$0xff]
    %v250 = vld [vmem:[%s1 + $0x68] sm:$0xff]
    %v251 = vld [vmem:[%s1 + $0x70] sm:$0xff]
    %v252 = vld [vmem:[%s1 + $0x78] sm:$0xff]
    %v253 = vld [vmem:[%s1 + $0x80] sm:$0xff]
    %v254 = vld [vmem:[%s1 + $0x88] sm:$0xff]
    %v255 = vld [vmem:[%s1 + $0x90] sm:$0xff]
    %v256 = vld [vmem:[%s1 + $0x98] sm:$0xff]
    %v257 = vld [vmem:[%s1 + $0xa0] sm:$0xff]
    %v258 = vld [vmem:[%s1 + $0xa8] sm:$0xff]
    %v259 = vld [vmem:[%s1 + $0xb0] sm:$0xff]
    %v260 = vld [vmem:[%s1 + $0xb8] sm:$0xff]
    %v261 = vld [vmem:[%s1 + $0xc0] sm:$0xff]
    %v262 = vld [vmem:[%s1 + $0xc8] sm:$0xff]
    %v263 = vld [vmem:[%s1 + $0xd0] sm:$0xff]
    %v264 = vld [vmem:[%s1 + $0xd8] sm:$0xff]
    %v265 = vld [vmem:[%s1 + $0xe0] sm:$0xff]
    %v266 = vld [vmem:[%s1 + $0xe8] sm:$0xff]
    %v267 = vld [vmem:[%s1 + $0xf0] sm:$0xff]
    %v268 = vld [vmem:[%s1 + $0xf8] sm:$0xff]
    %v269 = vld [vmem:[%s1 + $0x100] sm:$0xff]
    %v270 = vld [vmem:[%s1 + $0x108] sm:$0xff]
    %v271 = vld [vmem:[%s1 + $0x110] sm:$0xff]
    %v272 = vld [vmem:[%s1 + $0x118] sm:$0xff]
    %v273 = vld [vmem:[%s1 + $0x120] sm:$0xff]
    %v274 = vld [vmem:[%s1 + $0x128] sm:$0xff]
    %v275 = vld [vmem:[%s1 + $0x130] sm:$0xff]
    %v276 = vld [vmem:[%s1 + $0x138] sm:$0xff]
    %v277 = vld [vmem:[%s1 + $0x140] sm:$0xff]
    %v278 = vld [vmem:[%s1 + $0x148] sm:$0xff]
    %v279 = vld [vmem:[%s1 + $0x150] sm:$0xff]
    %v280 = vld [vmem:[%s1 + $0x158] sm:$0xff]
    %v281 = vld [vmem:[%s1 + $0x160] sm:$0xff]
    %v282 = vld [vmem:[%s1 + $0x168] sm:$0xff]
    %v283 = vld [vmem:[%s1 + $0x170] sm:$0xff]
    %v284 = vld [vmem:[%s1 + $0x178] sm:$0xff]
    %v285 = vld [vmem:[%s1 + $0x180] sm:$0xff]
    %v286 = vld [vmem:[%s1 + $0x188] sm:$0xff]
    %v287 = vld [vmem:[%s1 + $0x190] sm:$0xff]
    %v288 = vld [vmem:[%s1 + $0x198] sm:$0xff]
    %v289 = vld [vmem:[%s1 + $0x1a0] sm:$0xff]
    %v290 = vld [vmem:[%s1 + $0x1a8] sm:$0xff]
    %v291 = vld [vmem:[%s1 + $0x1b0] sm:$0xff]
    %v292 = vld [vmem:[%s1 + $0x1b8] sm:$0xff]
    %v293 = vld [vmem:[%s1 + $0x1c0] sm:$0xff]
    %v294 = vld [vmem:[%s1 + $0x1c8] sm:$0xff]
    %v295 = vld [vmem:[%s1 + $0x1d0] sm:$0xff]
    %v296 = vld [vmem:[%s1 + $0x1d8] sm:$0xff]
    %v297 = vld [vmem:[%s1 + $0x1e0] sm:$0xff]
    %v298 = vld [vmem:[%s1 + $0x1e8] sm:$0xff]
    %v299 = vld [vmem:[%s1 + $0x1f0] sm:$0xff]
    %v300 = vld [vmem:[%s1 + $0x1f8] sm:$0xff]
    %v301 = vld [vmem:[%s1 + $0x200] sm:$0xff]
    %v302 = vld [vmem:[%s1 + $0x208] sm:$0xff]
    %v303 = vld [vmem:[%s1 + $0x210] sm:$0xff]
    %v304 = vld [vmem:[%s1 + $0x218] sm:$0xff]
    %v305 = vld [vmem:[%s1 + $0x220] sm:$0xff]
    %v306 = vld [vmem:[%s1 + $0x228] sm:$0xff]
    %v307 = vld [vmem:[%s1 + $0x230] sm:$0xff]
    %v308 = vld [vmem:[%s1 + $0x238] sm:$0xff]
    %v309 = vld [vmem:[%s1 + $0x240] sm:$0xff]
    %v310 = vld [vmem:[%s1 + $0x248] sm:$0xff]
    %v311 = vld [vmem:[%s1 + $0x250] sm:$0xff]
    %v312 = vld [vmem:[%s1 + $0x258] sm:$0xff]
    %v313 = vld [vmem:[%s1 + $0x260] sm:$0xff]
    %v314 = vld [vmem:[%s1 + $0x268] sm:$0xff]
    %v315 = vld [vmem:[%s1 + $0x270] sm:$0xff]
    %v316 = vld [vmem:[%s1 + $0x278] sm:$0xff]
    %v317 = vld [vmem:[%s1 + $0x280] sm:$0xff]
    %v318 = vld [vmem:[%s1 + $0x288] sm:$0xff]
    %v319 = vld [vmem:[%s1 + $0x290] sm:$0xff]
    %v320 = vld [vmem:[%s1 + $0x298] sm:$0xff]
    %v321 = vld [vmem:[%s1 + $0x2a0] sm:$0xff]
    %v322 = vld [vmem:[%s1 + $0x2a8] sm:$0xff]
    %v323 = vld [vmem:[%s1 + $0x2b0] sm:$0xff]
    %v324 = vld [vmem:[%s1 + $0x2b8] sm:$0xff]
    %v325 = vld [vmem:[%s1 + $0x2c0] sm:$0xff]
    %v326 = vld [vmem:[%s1 + $0x2c8] sm:$0xff]
    %v327 = vld [vmem:[%s1 + $0x2d0] sm:$0xff]
    %v328 = vld [vmem:[%s1 + $0x2d8] sm:$0xff]
    %v329 = vld [vmem:[%s1 + $0x2e0] sm:$0xff]
    %v330 = vld [vmem:[%s1 + $0x2e8] sm:$0xff]
    %v331 = vld [vmem:[%s1 + $0x2f0] sm:$0xff]
    %v332 = vld [vmem:[%s1 + $0x2f8] sm:$0xff]
    %v333 = vld [vmem:[%s1 + $0x300] sm:$0xff]
    %v334 = vld [vmem:[%s1 + $0x308] sm:$0xff]
    %v335 = vld [vmem:[%s1 + $0x310] sm:$0xff]
    %v336 = vld [vmem:[%s1 + $0x318] sm:$0xff]
    %v337 = vld [vmem:[%s1 + $0x320] sm:$0xff]
    %v338 = vld [vmem:[%s1 + $0x328] sm:$0xff]
    %v339 = vld [vmem:[%s1 + $0x330] sm:$0xff]
    %v340 = vld [vmem:[%s1 + $0x338] sm:$0xff]
    %v341 = vld [vmem:[%s1 + $0x340] sm:$0xff]
    %v342 = vld [vmem:[%s1 + $0x348] sm:$0xff]
    %v343 = vld [vmem:[%s1 + $0x350] sm:$0xff]
    %v344 = vld [vmem:[%s1 + $0x358] sm:$0xff]
    %v345 = vld [vmem:[%s1 + $0x360] sm:$0xff]
    %v346 = vld [vmem:[%s1 + $0x368] sm:$0xff]
    %v347 = vld [vmem:[%s1 + $0x370] sm:$0xff]
    %v348 = vld [vmem:[%s1 + $0x378] sm:$0xff]
    %v349 = vld [vmem:[%s1 + $0x380] sm:$0xff]
    %v350 = vld [vmem:[%s1 + $0x388] sm:$0xff]
    %v351 = vld [vmem:[%s1 + $0x390] sm:$0xff]
    %v352 = vld [vmem:[%s1 + $0x398] sm:$0xff]
    %v353 = vld [vmem:[%s1 + $0x3a0] sm:$0xff]
    %v354 = vld [vmem:[%s1 + $0x3a8] sm:$0xff]
    %v355 = vld [vmem:[%s1 + $0x3b0] sm:$0xff]
    %v356 = vld [vmem:[%s1 + $0x3b8] sm:$0xff]
    %v357 = vld [vmem:[%s1 + $0x3c0] sm:$0xff]
    %v358 = vld [vmem:[%s1 + $0x3c8] sm:$0xff]
    %v359 = vld [vmem:[%s1 + $0x3d0] sm:$0xff]
    %v360 = vld [vmem:[%s1 + $0x3d8] sm:$0xff]
    %v361 = vld [vmem:[%s1 + $0x3e0] sm:$0xff]
    %v362 = vld [vmem:[%s1 + $0x3e8] sm:$0xff]
    %v363 = vld [vmem:[%s1 + $0x3f0] sm:$0xff]
    %v364 = vld [vmem:[%s1 + $0x3f8] sm:$0xff]
    %v365 = vld [vmem:[%s1 + $0x400] sm:$0xff]
    %v366 = vld [vmem:[%s1 + $0x408] sm:$0xff]
    %v367 = vld [vmem:[%s1 + $0x410] sm:$0xff]
    %v368 = vld [vmem:[%s1 + $0x418] sm:$0xff]
    %v369 = vld [vmem:[%s1 + $0x420] sm:$0xff]
    %v370 = vld [vmem:[%s1 + $0x428] sm:$0xff]
    %v371 = vld [vmem:[%s1 + $0x430] sm:$0xff]
    %v372 = vld [vmem:[%s1 + $0x438] sm:$0xff]
    %v373 = vld [vmem:[%s1 + $0x440] sm:$0xff]
    %v374 = vld [vmem:[%s1 + $0x448] sm:$0xff]
    %v375 = vld [vmem:[%s1 + $0x450] sm:$0xff]
    %v376 = vld [vmem:[%s1 + $0x458] sm:$0xff]
    %v377 = vld [vmem:[%s1 + $0x460] sm:$0xff]
    %v378 = vld [vmem:[%s1 + $0x468] sm:$0xff]
    %v379 = vld [vmem:[%s1 + $0x470] sm:$0xff]
    %v380 = vld [vmem:[%s1 + $0x478] sm:$0xff]
    %v381 = vld [vmem:[%s1 + $0x480] sm:$0xff]
    %v382 = vld [vmem:[%s1 + $0x488] sm:$0xff]
    %v383 = vld [vmem:[%s1 + $0x490] sm:$0xff]
    %v384 = vld [vmem:[%s1 + $0x498] sm:$0xff]
    %v385 = vld [vmem:[%s1 + $0x4a0] sm:$0xff]
    %v386 = vld [vmem:[%s1 + $0x4a8] sm:$0xff]
    %v387 = vld [vmem:[%s1 + $0x4b0] sm:$0xff]
    %v388 = vld [vmem:[%s1 + $0x4b8] sm:$0xff]
    %v389 = vld [vmem:[%s1 + $0x4c0] sm:$0xff]
    %v390 = vld [vmem:[%s1 + $0x4c8] sm:$0xff]
    %v391 = vld [vmem:[%s1 + $0x4d0] sm:$0xff]
    %v392 = vld [vmem:[%s1 + $0x4d8] sm:$0xff]
    %v393 = vld [vmem:[%s1 + $0x4e0] sm:$0xff]
    %v394 = vld [vmem:[%s1 + $0x4e8] sm:$0xff]
    %v395 = vld [vmem:[%s1 + $0x4f0] sm:$0xff]
    %v396 = vld [vmem:[%s1 + $0x4f8] sm:$0xff]
    %v397 = vld [vmem:[%s1 + $0x500] sm:$0xff]
    %v398 = vld [vmem:[%s1 + $0x508] sm:$0xff]
    %v399 = vld [vmem:[%s1 + $0x510] sm:$0xff]
    %v400 = vld [vmem:[%s1 + $0x518] sm:$0xff]
    %v401 = vld [vmem:[%s1 + $0x520] sm:$0xff]
    %v402 = vld [vmem:[%s1 + $0x528] sm:$0xff]
    %v403 = vld [vmem:[%s1 + $0x530] sm:$0xff]
    %v404 = vld [vmem:[%s1 + $0x538] sm:$0xff]
    %v405 = vld [vmem:[%s1 + $0x540] sm:$0xff]
    %v406 = vld [vmem:[%s1 + $0x548] sm:$0xff]
    %v407 = vld [vmem:[%s1 + $0x550] sm:$0xff]
    %v408 = vld [vmem:[%s1 + $0x558] sm:$0xff]
    %v409 = vld [vmem:[%s1 + $0x560] sm:$0xff]
    %v410 = vld [vmem:[%s1 + $0x568] sm:$0xff]
    %v411 = vld [vmem:[%s1 + $0x570] sm:$0xff]
    %v412 = vld [vmem:[%s1 + $0x578] sm:$0xff]
    %v413 = vld [vmem:[%s1 + $0x580] sm:$0xff]
    %v414 = vld [vmem:[%s1 + $0x588] sm:$0xff]
    %v415 = vld [vmem:[%s1 + $0x590] sm:$0xff]
    %v416 = vld [vmem:[%s1 + $0x598] sm:$0xff]
    %v417 = vld [vmem:[%s1 + $0x5a0] sm:$0xff]
    %v418 = vld [vmem:[%s1 + $0x5a8] sm:$0xff]
    %v419 = vld [vmem:[%s1 + $0x5b0] sm:$0xff]
    %v420 = vld [vmem:[%s1 + $0x5b8] sm:$0xff]
    %v421 = vld [vmem:[%s1 + $0x5c0] sm:$0xff]
    %v422 = vld [vmem:[%s1 + $0x5c8] sm:$0xff]
    %v423 = vld [vmem:[%s1 + $0x5d0] sm:$0xff]
    %v424 = vld [vmem:[%s1 + $0x5d8] sm:$0xff]
    %v425 = vld [vmem:[%s1 + $0x5e0] sm:$0xff]
    %v426 = vld [vmem:[%s1 + $0x5e8] sm:$0xff]
    %v427 = vld [vmem:[%s1 + $0x5f0] sm:$0xff]
    %v428 = vld [vmem:[%s1 + $0x5f8] sm:$0xff]
    %v429 = vld [vmem:[%s1 + $0x600] sm:$0xff]
    %v430 = vld [vmem:[%s1 + $0x608] sm:$0xff]
    %v431 = vld [vmem:[%s1 + $0x610] sm:$0xff]
    %v432 = vld [vmem:[%s1 + $0x618] sm:$0xff]
    %v433 = vld [vmem:[%s1 + $0x620] sm:$0xff]
    %v434 = vld [vmem:[%s1 + $0x628] sm:$0xff]
    %v435 = vld [vmem:[%s1 + $0x630] sm:$0xff]
    %v436 = vld [vmem:[%s1 + $0x638] sm:$0xff]
    %v437 = vld [vmem:[%s1 + $0x640] sm:$0xff]
    %v438 = vld [vmem:[%s1 + $0x648] sm:$0xff]
    %v439 = vld [vmem:[%s1 + $0x650] sm:$0xff]
    %v440 = vld [vmem:[%s1 + $0x658] sm:$0xff]
    %v441 = vld [vmem:[%s1 + $0x660] sm:$0xff]
    %v442 = vld [vmem:[%s1 + $0x668] sm:$0xff]
    %v443 = vld [vmem:[%s1 + $0x670] sm:$0xff]
    %v444 = vld [vmem:[%s1 + $0x678] sm:$0xff]
    %v445 = vld [vmem:[%s1 + $0x680] sm:$0xff]
    %v446 = vld [vmem:[%s1 + $0x688] sm:$0xff]
    %v447 = vld [vmem:[%s1 + $0x690] sm:$0xff]
    %v448 = vld [vmem:[%s1 + $0x698] sm:$0xff]
    %v449 = vld [vmem:[%s1 + $0x6a0] sm:$0xff]
    %v450 = vld [vmem:[%s1 + $0x6a8] sm:$0xff]
    %v451 = vld [vmem:[%s1 + $0x6b0] sm:$0xff]
    %v452 = vld [vmem:[%s1 + $0x6b8] sm:$0xff]
    %v453 = vld [vmem:[%s1 + $0x6c0] sm:$0xff]
    %v454 = vld [vmem:[%s1 + $0x6c8] sm:$0xff]
    %v455 = vld [vmem:[%s1 + $0x6d0] sm:$0xff]
    %v456 = vld [vmem:[%s1 + $0x6d8] sm:$0xff]
    %v457 = vld [vmem:[%s1 + $0x6e0] sm:$0xff]
    %v458 = vld [vmem:[%s1 + $0x6e8] sm:$0xff]
    %v459 = vld [vmem:[%s1 + $0x6f0] sm:$0xff]
    %v460 = vld [vmem:[%s1 + $0x6f8] sm:$0xff]
    %v461 = vld [vmem:[%s1 + $0x700] sm:$0xff]
    %v462 = vld [vmem:[%s1 + $0x708] sm:$0xff]
    %v463 = vld [vmem:[%s1 + $0x710] sm:$0xff]
    %v464 = vld [vmem:[%s1 + $0x718] sm:$0xff]
    %v465 = vld [vmem:[%s1 + $0x720] sm:$0xff]
    %v466 = vld [vmem:[%s1 + $0x728] sm:$0xff]
    %v467 = vld [vmem:[%s1 + $0x730] sm:$0xff]
    %v468 = vld [vmem:[%s1 + $0x738] sm:$0xff]
    %v469 = vld [vmem:[%s1 + $0x740] sm:$0xff]
    %v470 = vld [vmem:[%s1 + $0x748] sm:$0xff]
    %v471 = vld [vmem:[%s1 + $0x750] sm:$0xff]
    %v472 = vld [vmem:[%s1 + $0x758] sm:$0xff]
    %v473 = vld [vmem:[%s1 + $0x760] sm:$0xff]
    %v474 = vld [vmem:[%s1 + $0x768] sm:$0xff]
    %v475 = vld [vmem:[%s1 + $0x770] sm:$0xff]
    %v476 = vld [vmem:[%s1 + $0x778] sm:$0xff]
    %v477 = vld [vmem:[%s1 + $0x780] sm:$0xff]
    %v478 = vld [vmem:[%s1 + $0x788] sm:$0xff]
    %v479 = vld [vmem:[%s1 + $0x790] sm:$0xff]
    %v480 = vld [vmem:[%s1 + $0x798] sm:$0xff]
    %v481 = vld [vmem:[%s1 + $0x7a0] sm:$0xff]
    %v482 = vld [vmem:[%s1 + $0x7a8] sm:$0xff]
    %v483 = vld [vmem:[%s1 + $0x7b0] sm:$0xff]
    %v484 = vld [vmem:[%s1 + $0x7b8] sm:$0xff]
    %v485 = vld [vmem:[%s1 + $0x7c0] sm:$0xff]
    %v486 = vld [vmem:[%s1 + $0x7c8] sm:$0xff]
    %v487 = vld [vmem:[%s1 + $0x7d0] sm:$0xff]
    %v488 = vld [vmem:[%s1 + $0x7d8] sm:$0xff]
    %v489 = vld [vmem:[%s1 + $0x7e0] sm:$0xff]
    %v490 = vld [vmem:[%s1 + $0x7e8] sm:$0xff]
    %v491 = vld [vmem:[%s1 + $0x7f0] sm:$0xff]
    %v492 = vld [vmem:[%s1 + $0x7f8] sm:$0xff]
    %v493 = vld [vmem:[%s1 + $0x800] sm:$0xff]
    %v494 = vld [vmem:[%s1 + $0x808] sm:$0xff]
    %v495 = vld [vmem:[%s1 + $0x810] sm:$0xff]
    %v496 = vld [vmem:[%s1 + $0x818] sm:$0xff]
    %v497 = vld [vmem:[%s1 + $0x820] sm:$0xff]
    %v498 = vld [vmem:[%s1 + $0x828] sm:$0xff]
    %v499 = vld [vmem:[%s1 + $0x830] sm:$0xff]
    %v500 = vld [vmem:[%s1 + $0x838] sm:$0xff]
    %v501 = vld [vmem:[%s1 + $0x840] sm:$0xff]
    %v502 = vld [vmem:[%s1 + $0x848] sm:$0xff]
    %v503 = vld [vmem:[%s1 + $0x850] sm:$0xff]
    %v504 = vld [vmem:[%s1 + $0x858] sm:$0xff]
    %v505 = vld [vmem:[%s1 + $0x860] sm:$0xff]
    %v506 = vld [vmem:[%s1 + $0x868] sm:$0xff]
    %v507 = vld [vmem:[%s1 + $0x870] sm:$0xff]
    %v508 = vld [vmem:[%s1 + $0x878] sm:$0xff]
    %v509 = vld [vmem:[%s1 + $0x880] sm:$0xff]
    %v510 = vld [vmem:[%s1 + $0x888] sm:$0xff]
    %v511 = vld [vmem:[%s1 + $0x890] sm:$0xff]
    %v512 = vld [vmem:[%s1 + $0x898] sm:$0xff]
    %v513 = vld [vmem:[%s1 + $0x8a0] sm:$0xff]
    %v514 = vld [vmem:[%s1 + $0x8a8] sm:$0xff]
    %v515 = vld [vmem:[%s1 + $0x8b0] sm:$0xff]
    %v516 = vld [vmem:[%s1 + $0x8b8] sm:$0xff]
    %v517 = vld [vmem:[%s1 + $0x8c0] sm:$0xff]
    %v518 = vld [vmem:[%s1 + $0x8c8] sm:$0xff]
    %v519 = vld [vmem:[%s1 + $0x8d0] sm:$0xff]
    %v520 = vld [vmem:[%s1 + $0x8d8] sm:$0xff]
    %v521 = vld [vmem:[%s1 + $0x8e0] sm:$0xff]
    %v522 = vld [vmem:[%s1 + $0x8e8] sm:$0xff]
    %v523 = vld [vmem:[%s1 + $0x8f0] sm:$0xff]
    %v524 = vld [vmem:[%s1 + $0x8f8] sm:$0xff]
    %v525 = vld [vmem:[%s1 + $0x900] sm:$0xff]
    %v526 = vld [vmem:[%s1 + $0x908] sm:$0xff]
    %v527 = vld [vmem:[%s1 + $0x910] sm:$0xff]
    %v528 = vld [vmem:[%s1 + $0x918] sm:$0xff]
    %v529 = vld [vmem:[%s1 + $0x920] sm:$0xff]
    %v530 = vld [vmem:[%s1 + $0x928] sm:$0xff]
    %v531 = vld [vmem:[%s1 + $0x930] sm:$0xff]
    %v532 = vld [vmem:[%s1 + $0x938] sm:$0xff]
    %v533 = vld [vmem:[%s1 + $0x940] sm:$0xff]
    %v534 = vld [vmem:[%s1 + $0x948] sm:$0xff]
    %v535 = vld [vmem:[%s1 + $0x950] sm:$0xff]
    %v536 = vld [vmem:[%s1 + $0x958] sm:$0xff]
    %v537 = vld [vmem:[%s1 + $0x960] sm:$0xff]
    %v538 = vld [vmem:[%s1 + $0x968] sm:$0xff]
    %v539 = vld [vmem:[%s1 + $0x970] sm:$0xff]
    %v540 = vld [vmem:[%s1 + $0x978] sm:$0xff]
    %v541 = vld [vmem:[%s1 + $0x980] sm:$0xff]
    %v542 = vld [vmem:[%s1 + $0x988] sm:$0xff]
    %v543 = vld [vmem:[%s1 + $0x990] sm:$0xff]
    %v544 = vld [vmem:[%s1 + $0x998] sm:$0xff]
    %v545 = vld [vmem:[%s1 + $0x9a0] sm:$0xff]
    %v546 = vld [vmem:[%s1 + $0x9a8] sm:$0xff]
    %v547 = vld [vmem:[%s1 + $0x9b0] sm:$0xff]
    %v548 = vld [vmem:[%s1 + $0x9b8] sm:$0xff]
    %v549 = vld [vmem:[%s1 + $0x9c0] sm:$0xff]
    %v550 = vld [vmem:[%s1 + $0x9c8] sm:$0xff]
    %v551 = vld [vmem:[%s1 + $0x9d0] sm:$0xff]
    %v552 = vld [vmem:[%s1 + $0x9d8] sm:$0xff]
    %v553 = vld [vmem:[%s1 + $0x9e0] sm:$0xff]
    %v554 = vld [vmem:[%s1 + $0x9e8] sm:$0xff]
    %v555 = vld [vmem:[%s1 + $0x9f0] sm:$0xff]
    %v556 = vld [vmem:[%s1 + $0x9f8] sm:$0xff]
    %v557 = vld [vmem:[%s1 + $0xa00] sm:$0xff]
    %v558 = vld [vmem:[%s1 + $0xa08] sm:$0xff]
    %v559 = vld [vmem:[%s1 + $0xa10] sm:$0xff]
    %v560 = vld [vmem:[%s1 + $0xa18] sm:$0xff]
    %v561 = vld [vmem:[%s1 + $0xa20] sm:$0xff]
    %v562 = vld [vmem:[%s1 + $0xa28] sm:$0xff]
    %v563 = vld [vmem:[%s1 + $0xa30] sm:$0xff]
    %v564 = vld [vmem:[%s1 + $0xa38] sm:$0xff]
    %v565 = vld [vmem:[%s1 + $0xa40] sm:$0xff]
    %v566 = vld [vmem:[%s1 + $0xa48] sm:$0xff]
    %v567 = vld [vmem:[%s1 + $0xa50] sm:$0xff]
    %v568 = vld [vmem:[%s1 + $0xa58] sm:$0xff]
    %v569 = vld [vmem:[%s1 + $0xa60] sm:$0xff]
    %v570 = vld [vmem:[%s1 + $0xa68] sm:$0xff]
    %v571 = vld [vmem:[%s1 + $0xa70] sm:$0xff]
    %v572 = vld [vmem:[%s1 + $0xa78] sm:$0xff]
    %v573 = vld [vmem:[%s1 + $0xa80] sm:$0xff]
    %v574 = vld [vmem:[%s1 + $0xa88] sm:$0xff]
    %v575 = vld [vmem:[%s1 + $0xa90] sm:$0xff]
    %v576 = vld [vmem:[%s1 + $0xa98] sm:$0xff]
    %v577 = vld [vmem:[%s1 + $0xaa0] sm:$0xff]
    %v578 = vld [vmem:[%s1 + $0xaa8] sm:$0xff]
    %v579 = vld [vmem:[%s1 + $0xab0] sm:$0xff]
    %v580 = vld [vmem:[%s1 + $0xab8] sm:$0xff]
    %v581 = vld [vmem:[%s1 + $0xac0] sm:$0xff]
    %v582 = vld [vmem:[%s1 + $0xac8] sm:$0xff]
    %v583 = vld [vmem:[%s1 + $0xad0] sm:$0xff]
    %v584 = vld [vmem:[%s1 + $0xad8] sm:$0xff]
    %v585 = vld [vmem:[%s1 + $0xae0] sm:$0xff]
    %v586 = vld [vmem:[%s1 + $0xae8] sm:$0xff]
    %v587 = vld [vmem:[%s1 + $0xaf0] sm:$0xff]
    %v588 = vld [vmem:[%s1 + $0xaf8] sm:$0xff]
    %v589 = vld [vmem:[%s1 + $0xb00] sm:$0xff]
    %v590 = vld [vmem:[%s1 + $0xb08] sm:$0xff]
    %v591 = vld [vmem:[%s1 + $0xb10] sm:$0xff]
    %v592 = vld [vmem:[%s1 + $0xb18] sm:$0xff]
    %v593 = vld [vmem:[%s1 + $0xb20] sm:$0xff]
    %v594 = vld [vmem:[%s1 + $0xb28] sm:$0xff]
    %v595 = vld [vmem:[%s1 + $0xb30] sm:$0xff]
    %v596 = vld [vmem:[%s1 + $0xb38] sm:$0xff]
    %v597 = vld [vmem:[%s1 + $0xb40] sm:$0xff]
    %v598 = vld [vmem:[%s1 + $0xb48] sm:$0xff]
    %v599 = vld [vmem:[%s1 + $0xb50] sm:$0xff]
    %v600 = vld [vmem:[%s1 + $0xb58] sm:$0xff]
    %v601 = vld [vmem:[%s1 + $0xb60] sm:$0xff]
    %v602 = vld [vmem:[%s1 + $0xb68] sm:$0xff]
    %v603 = vld [vmem:[%s1 + $0xb70] sm:$0xff]
    %v604 = vld [vmem:[%s1 + $0xb78] sm:$0xff]
    %v605 = vld [vmem:[%s1 + $0xb80] sm:$0xff]
    %v606 = vld [vmem:[%s1 + $0xb88] sm:$0xff]
    %v607 = vld [vmem:[%s1 + $0xb90] sm:$0xff]
    %v608 = vld [vmem:[%s1 + $0xb98] sm:$0xff]
    %v609 = vld [vmem:[%s1 + $0xba0] sm:$0xff]
    %v610 = vld [vmem:[%s1 + $0xba8] sm:$0xff]
    %v611 = vld [vmem:[%s1 + $0xbb0] sm:$0xff]
    %v612 = vld [vmem:[%s1 + $0xbb8] sm:$0xff]
    %v613 = vld [vmem:[%s1 + $0xbc0] sm:$0xff]
    %v614 = vld [vmem:[%s1 + $0xbc8] sm:$0xff]
    %v615 = vld [vmem:[%s1 + $0xbd0] sm:$0xff]
    %v616 = vld [vmem:[%s1 + $0xbd8] sm:$0xff]
    %v617 = vld [vmem:[%s1 + $0xbe0] sm:$0xff]
    %v618 = vld [vmem:[%s1 + $0xbe8] sm:$0xff]
    %v619 = vld [vmem:[%s1 + $0xbf0] sm:$0xff]
    %v620 = vld [vmem:[%s1 + $0xbf8] sm:$0xff]
    %v621 = vld [vmem:[%s1 + $0xc00] sm:$0xff]
    %v622 = vld [vmem:[%s1 + $0xc08] sm:$0xff]
    %v623 = vld [vmem:[%s1 + $0xc10] sm:$0xff]
    %v624 = vld [vmem:[%s1 + $0xc18] sm:$0xff]
    %v625 = vld [vmem:[%s1 + $0xc20] sm:$0xff]
    %v626 = vld [vmem:[%s1 + $0xc28] sm:$0xff]
    %v627 = vld [vmem:[%s1 + $0xc30] sm:$0xff]
    %v628 = vld [vmem:[%s1 + $0xc38] sm:$0xff]
    %v629 = vld [vmem:[%s1 + $0xc40] sm:$0xff]
    %v630 = vld [vmem:[%s1 + $0xc48] sm:$0xff]
    %v631 = vld [vmem:[%s1 + $0xc50] sm:$0xff]
    %v632 = vld [vmem:[%s1 + $0xc58] sm:$0xff]
    %v633 = vld [vmem:[%s1 + $0xc60] sm:$0xff]
    %v634 = vld [vmem:[%s1 + $0xc68] sm:$0xff]
    %v635 = vld [vmem:[%s1 + $0xc70] sm:$0xff]
    %v636 = vld [vmem:[%s1 + $0xc78] sm:$0xff]
    %v637 = vld [vmem:[%s1 + $0xc80] sm:$0xff]
    %v638 = vld [vmem:[%s1 + $0xc88] sm:$0xff]
    %v639 = vld [vmem:[%s1 + $0xc90] sm:$0xff]
    %v640 = vld [vmem:[%s1 + $0xc98] sm:$0xff]
    %v641 = vld [vmem:[%s1 + $0xca0] sm:$0xff]
    %v642 = vld [vmem:[%s1 + $0xca8] sm:$0xff]
    %v643 = vld [vmem:[%s1 + $0xcb0] sm:$0xff]
    %v644 = vld [vmem:[%s1 + $0xcb8] sm:$0xff]
    %v645 = vld [vmem:[%s1 + $0xcc0] sm:$0xff]
    %v646 = vld [vmem:[%s1 + $0xcc8] sm:$0xff]
    %v647 = vld [vmem:[%s1 + $0xcd0] sm:$0xff]
    %v648 = vld [vmem:[%s1 + $0xcd8] sm:$0xff]
    %v649 = vld [vmem:[%s1 + $0xce0] sm:$0xff]
    %v650 = vld [vmem:[%s1 + $0xce8] sm:$0xff]
    %v651 = vld [vmem:[%s1 + $0xcf0] sm:$0xff]
    %v652 = vld [vmem:[%s1 + $0xcf8] sm:$0xff]
    %v653 = vld [vmem:[%s1 + $0xd00] sm:$0xff]
    %v654 = vld [vmem:[%s1 + $0xd08] sm:$0xff]
    %v655 = vld [vmem:[%s1 + $0xd10] sm:$0xff]
    %v656 = vld [vmem:[%s1 + $0xd18] sm:$0xff]
    %v657 = vld [vmem:[%s1 + $0xd20] sm:$0xff]
    %v658 = vld [vmem:[%s1 + $0xd28] sm:$0xff]
    %v659 = vld [vmem:[%s1 + $0xd30] sm:$0xff]
    %v660 = vld [vmem:[%s1 + $0xd38] sm:$0xff]
    %v661 = vld [vmem:[%s1 + $0xd40] sm:$0xff]
    %v662 = vld [vmem:[%s1 + $0xd48] sm:$0xff]
    %v663 = vld [vmem:[%s1 + $0xd50] sm:$0xff]
    %v664 = vld [vmem:[%s1 + $0xd58] sm:$0xff]
    %v665 = vld [vmem:[%s1 + $0xd60] sm:$0xff]
    %v666 = vld [vmem:[%s1 + $0xd68] sm:$0xff]
    %v667 = vld [vmem:[%s1 + $0xd70] sm:$0xff]
    %v668 = vld [vmem:[%s1 + $0xd78] sm:$0xff]
    %v669 = vld [vmem:[%s1 + $0xd80] sm:$0xff]
    %v670 = vld [vmem:[%s1 + $0xd88] sm:$0xff]
    %v671 = vld [vmem:[%s1 + $0xd90] sm:$0xff]
    %v672 = vld [vmem:[%s1 + $0xd98] sm:$0xff]
    %v673 = vld [vmem:[%s1 + $0xda0] sm:$0xff]
    %v674 = vld [vmem:[%s1 + $0xda8] sm:$0xff]
    %v675 = vld [vmem:[%s1 + $0xdb0] sm:$0xff]
    %v676 = vld [vmem:[%s1 + $0xdb8] sm:$0xff]
    %v677 = vld [vmem:[%s1 + $0xdc0] sm:$0xff]
    %v678 = vld [vmem:[%s1 + $0xdc8] sm:$0xff]
    %v679 = vld [vmem:[%s1 + $0xdd0] sm:$0xff]
    %v680 = vld [vmem:[%s1 + $0xdd8] sm:$0xff]
    %v681 = vld [vmem:[%s1 + $0xde0] sm:$0xff]
    %v682 = vld [vmem:[%s1 + $0xde8] sm:$0xff]
    %v683 = vld [vmem:[%s1 + $0xdf0] sm:$0xff]
    %v684 = vld [vmem:[%s1 + $0xdf8] sm:$0xff]
    %v685 = vld [vmem:[%s1 + $0xe00] sm:$0xff]
    %v686 = vld [vmem:[%s1 + $0xe08] sm:$0xff]
    %v687 = vld [vmem:[%s1 + $0xe10] sm:$0xff]
    %v688 = vld [vmem:[%s1 + $0xe18] sm:$0xff]
    %v689 = vld [vmem:[%s1 + $0xe20] sm:$0xff]
    %v690 = vld [vmem:[%s1 + $0xe28] sm:$0xff]
    %v691 = vld [vmem:[%s1 + $0xe30] sm:$0xff]
    %v692 = vld [vmem:[%s1 + $0xe38] sm:$0xff]
    %v693 = vld [vmem:[%s1 + $0xe40] sm:$0xff]
    %v694 = vld [vmem:[%s1 + $0xe48] sm:$0xff]
    %v695 = vld [vmem:[%s1 + $0xe50] sm:$0xff]
    %v696 = vld [vmem:[%s1 + $0xe58] sm:$0xff]
    %v697 = vld [vmem:[%s1 + $0xe60] sm:$0xff]
    %v698 = vld [vmem:[%s1 + $0xe68] sm:$0xff]
    %v699 = vld [vmem:[%s1 + $0xe70] sm:$0xff]
    %v700 = vld [vmem:[%s1 + $0xe78] sm:$0xff]
    %v701 = vld [vmem:[%s1 + $0xe80] sm:$0xff]
    %v702 = vld [vmem:[%s1 + $0xe88] sm:$0xff]
    %v703 = vld [vmem:[%s1 + $0xe90] sm:$0xff]
    %v704 = vld [vmem:[%s1 + $0xe98] sm:$0xff]
    %v705 = vld [vmem:[%s1 + $0xea0] sm:$0xff]
    %v706 = vld [vmem:[%s1 + $0xea8] sm:$0xff]
    %v707 = vld [vmem:[%s1 + $0xeb0] sm:$0xff]
    %v708 = vld [vmem:[%s1 + $0xeb8] sm:$0xff]
    %v709 = vld [vmem:[%s1 + $0xec0] sm:$0xff]
    %v710 = vld [vmem:[%s1 + $0xec8] sm:$0xff]
    %v711 = vld [vmem:[%s1 + $0xed0] sm:$0xff]
    %v712 = vld [vmem:[%s1 + $0xed8] sm:$0xff]
    %v713 = vld [vmem:[%s1 + $0xee0] sm:$0xff]
    %v714 = vld [vmem:[%s1 + $0xee8] sm:$0xff]
    %v715 = vld [vmem:[%s1 + $0xef0] sm:$0xff]
    %v716 = vld [vmem:[%s1 + $0xef8] sm:$0xff]
    %v717 = vld [vmem:[%s1 + $0xf00] sm:$0xff]
    %v718 = vld [vmem:[%s1 + $0xf08] sm:$0xff]
    %v719 = vld [vmem:[%s1 + $0xf10] sm:$0xff]
    %v720 = vld [vmem:[%s1 + $0xf18] sm:$0xff]
    %v721 = vld [vmem:[%s1 + $0xf20] sm:$0xff]
    %v722 = vld [vmem:[%s1 + $0xf28] sm:$0xff]
    %v723 = vld [vmem:[%s1 + $0xf30] sm:$0xff]
    %v724 = vld [vmem:[%s1 + $0xf38] sm:$0xff]
    %v725 = vld [vmem:[%s1 + $0xf40] sm:$0xff]
    %v726 = vld [vmem:[%s1 + $0xf48] sm:$0xff]
    %v727 = vld [vmem:[%s1 + $0xf50] sm:$0xff]
    %v728 = vld [vmem:[%s1 + $0xf58] sm:$0xff]
    %v729 = vld [vmem:[%s1 + $0xf60] sm:$0xff]
    %v730 = vld [vmem:[%s1 + $0xf68] sm:$0xff]
    %v731 = vld [vmem:[%s1 + $0xf70] sm:$0xff]
    %v732 = vld [vmem:[%s1 + $0xf78] sm:$0xff]
    %v733 = vld [vmem:[%s1 + $0xf80] sm:$0xff]
    %v734 = vld [vmem:[%s1 + $0xf88] sm:$0xff]
    %v735 = vld [vmem:[%s1 + $0xf90] sm:$0xff]
    %v736 = vld [vmem:[%s1 + $0xf98] sm:$0xff]
    %v737 = vld [vmem:[%s1 + $0xfa0] sm:$0xff]
    %v738 = vld [vmem:[%s1 + $0xfa8] sm:$0xff]
    %v739 = vld [vmem:[%s1 + $0xfb0] sm:$0xff]
    %v740 = vld [vmem:[%s1 + $0xfb8] sm:$0xff]
    %v741 = vld [vmem:[%s1 + $0xfc0] sm:$0xff]
    %v742 = vld [vmem:[%s1 + $0xfc8] sm:$0xff]
    %v743 = vld [vmem:[%s1 + $0xfd0] sm:$0xff]
    %v744 = vld [vmem:[%s1 + $0xfd8] sm:$0xff]
    %v745 = vld [vmem:[%s1 + $0xfe0] sm:$0xff]
    %v746 = vld [vmem:[%s1 + $0xfe8] sm:$0xff]
    %v747 = vld [vmem:[%s1 + $0xff0] sm:$0xff]
    %v748 = vld [vmem:[%s1 + $0xff8] sm:$0xff]
    %v749 = vld [vmem:[%s2] sm:$0x3]
    %v751 = vlaneseq
    %v752 = vshrl.u32 %v751, 7
    %v753 = vsub.s32 0, %v752
    %v754 = vrot.slane %v749, %v753
    %v755 = vlaneseq
    %v756 = vshrl.u32 %v755, 7
    %v757 = vsub.s32 1, %v756
    %v758 = vrot.slane %v749, %v757
    %v1273 = vunpack.c.l.b16 %v237
    %v1274 = vunpack.c.h.b16 %v237
    %v1275 = vunpack.c.l.b16 %v238
    %v1276 = vunpack.c.h.b16 %v238
    %v1277 = vunpack.c.l.b16 %v239
    %v1278 = vunpack.c.h.b16 %v239
    %v1279 = vunpack.c.l.b16 %v240
    %v1280 = vunpack.c.h.b16 %v240
    %v1281 = vunpack.c.l.b16 %v241
    %v1282 = vunpack.c.h.b16 %v241
    %v1283 = vunpack.c.l.b16 %v242
    %v1284 = vunpack.c.h.b16 %v242
    %v1285 = vunpack.c.l.b16 %v243
    %v1286 = vunpack.c.h.b16 %v243
    %v1287 = vunpack.c.l.b16 %v244
    %v1288 = vunpack.c.h.b16 %v244
    %v1289 = vunpack.c.l.b16 %v245
    %v1290 = vunpack.c.h.b16 %v245
    %v1291 = vunpack.c.l.b16 %v246
    %v1292 = vunpack.c.h.b16 %v246
    %v1293 = vunpack.c.l.b16 %v247
    %v1294 = vunpack.c.h.b16 %v247
    %v1295 = vunpack.c.l.b16 %v248
    %v1296 = vunpack.c.h.b16 %v248
    %v1297 = vunpack.c.l.b16 %v249
    %v1298 = vunpack.c.h.b16 %v249
    %v1299 = vunpack.c.l.b16 %v250
    %v1300 = vunpack.c.h.b16 %v250
    %v1301 = vunpack.c.l.b16 %v251
    %v1302 = vunpack.c.h.b16 %v251
    %v1303 = vunpack.c.l.b16 %v252
    %v1304 = vunpack.c.h.b16 %v252
    %v1305 = vunpack.c.l.b16 %v253
    %v1306 = vunpack.c.h.b16 %v253
    %v1307 = vunpack.c.l.b16 %v254
    %v1308 = vunpack.c.h.b16 %v254
    %v1309 = vunpack.c.l.b16 %v255
    %v1310 = vunpack.c.h.b16 %v255
    %v1311 = vunpack.c.l.b16 %v256
    %v1312 = vunpack.c.h.b16 %v256
    %v1313 = vunpack.c.l.b16 %v257
    %v1314 = vunpack.c.h.b16 %v257
    %v1315 = vunpack.c.l.b16 %v258
    %v1316 = vunpack.c.h.b16 %v258
    %v1317 = vunpack.c.l.b16 %v259
    %v1318 = vunpack.c.h.b16 %v259
    %v1319 = vunpack.c.l.b16 %v260
    %v1320 = vunpack.c.h.b16 %v260
    %v1321 = vunpack.c.l.b16 %v261
    %v1322 = vunpack.c.h.b16 %v261
    %v1323 = vunpack.c.l.b16 %v262
    %v1324 = vunpack.c.h.b16 %v262
    %v1325 = vunpack.c.l.b16 %v263
    %v1326 = vunpack.c.h.b16 %v263
    %v1327 = vunpack.c.l.b16 %v264
    %v1328 = vunpack.c.h.b16 %v264
    %v1329 = vunpack.c.l.b16 %v265
    %v1330 = vunpack.c.h.b16 %v265
    %v1331 = vunpack.c.l.b16 %v266
    %v1332 = vunpack.c.h.b16 %v266
    %v1333 = vunpack.c.l.b16 %v267
    %v1334 = vunpack.c.h.b16 %v267
    %v1335 = vunpack.c.l.b16 %v268
    %v1336 = vunpack.c.h.b16 %v268
    %v1337 = vunpack.c.l.b16 %v269
    %v1338 = vunpack.c.h.b16 %v269
    %v1339 = vunpack.c.l.b16 %v270
    %v1340 = vunpack.c.h.b16 %v270
    %v1341 = vunpack.c.l.b16 %v271
    %v1342 = vunpack.c.h.b16 %v271
    %v1343 = vunpack.c.l.b16 %v272
    %v1344 = vunpack.c.h.b16 %v272
    %v1345 = vunpack.c.l.b16 %v273
    %v1346 = vunpack.c.h.b16 %v273
    %v1347 = vunpack.c.l.b16 %v274
    %v1348 = vunpack.c.h.b16 %v274
    %v1349 = vunpack.c.l.b16 %v275
    %v1350 = vunpack.c.h.b16 %v275
    %v1351 = vunpack.c.l.b16 %v276
    %v1352 = vunpack.c.h.b16 %v276
    %v1353 = vunpack.c.l.b16 %v277
    %v1354 = vunpack.c.h.b16 %v277
    %v1355 = vunpack.c.l.b16 %v278
    %v1356 = vunpack.c.h.b16 %v278
    %v1357 = vunpack.c.l.b16 %v279
    %v1358 = vunpack.c.h.b16 %v279
    %v1359 = vunpack.c.l.b16 %v280
    %v1360 = vunpack.c.h.b16 %v280
    %v1361 = vunpack.c.l.b16 %v281
    %v1362 = vunpack.c.h.b16 %v281
    %v1363 = vunpack.c.l.b16 %v282
    %v1364 = vunpack.c.h.b16 %v282
    %v1365 = vunpack.c.l.b16 %v283
    %v1366 = vunpack.c.h.b16 %v283
    %v1367 = vunpack.c.l.b16 %v284
    %v1368 = vunpack.c.h.b16 %v284
    %v1369 = vunpack.c.l.b16 %v285
    %v1370 = vunpack.c.h.b16 %v285
    %v1371 = vunpack.c.l.b16 %v286
    %v1372 = vunpack.c.h.b16 %v286
    %v1373 = vunpack.c.l.b16 %v287
    %v1374 = vunpack.c.h.b16 %v287
    %v1375 = vunpack.c.l.b16 %v288
    %v1376 = vunpack.c.h.b16 %v288
    %v1377 = vunpack.c.l.b16 %v289
    %v1378 = vunpack.c.h.b16 %v289
    %v1379 = vunpack.c.l.b16 %v290
    %v1380 = vunpack.c.h.b16 %v290
    %v1381 = vunpack.c.l.b16 %v291
    %v1382 = vunpack.c.h.b16 %v291
    %v1383 = vunpack.c.l.b16 %v292
    %v1384 = vunpack.c.h.b16 %v292
    %v1385 = vunpack.c.l.b16 %v293
    %v1386 = vunpack.c.h.b16 %v293
    %v1387 = vunpack.c.l.b16 %v294
    %v1388 = vunpack.c.h.b16 %v294
    %v1389 = vunpack.c.l.b16 %v295
    %v1390 = vunpack.c.h.b16 %v295
    %v1391 = vunpack.c.l.b16 %v296
    %v1392 = vunpack.c.h.b16 %v296
    %v1393 = vunpack.c.l.b16 %v297
    %v1394 = vunpack.c.h.b16 %v297
    %v1395 = vunpack.c.l.b16 %v298
    %v1396 = vunpack.c.h.b16 %v298
    %v1397 = vunpack.c.l.b16 %v299
    %v1398 = vunpack.c.h.b16 %v299
    %v1399 = vunpack.c.l.b16 %v300
    %v1400 = vunpack.c.h.b16 %v300
    %v1401 = vunpack.c.l.b16 %v301
    %v1402 = vunpack.c.h.b16 %v301
    %v1403 = vunpack.c.l.b16 %v302
    %v1404 = vunpack.c.h.b16 %v302
    %v1405 = vunpack.c.l.b16 %v303
    %v1406 = vunpack.c.h.b16 %v303
    %v1407 = vunpack.c.l.b16 %v304
    %v1408 = vunpack.c.h.b16 %v304
    %v1409 = vunpack.c.l.b16 %v305
    %v1410 = vunpack.c.h.b16 %v305
    %v1411 = vunpack.c.l.b16 %v306
    %v1412 = vunpack.c.h.b16 %v306
    %v1413 = vunpack.c.l.b16 %v307
    %v1414 = vunpack.c.h.b16 %v307
    %v1415 = vunpack.c.l.b16 %v308
    %v1416 = vunpack.c.h.b16 %v308
    %v1417 = vunpack.c.l.b16 %v309
    %v1418 = vunpack.c.h.b16 %v309
    %v1419 = vunpack.c.l.b16 %v310
    %v1420 = vunpack.c.h.b16 %v310
    %v1421 = vunpack.c.l.b16 %v311
    %v1422 = vunpack.c.h.b16 %v311
    %v1423 = vunpack.c.l.b16 %v312
    %v1424 = vunpack.c.h.b16 %v312
    %v1425 = vunpack.c.l.b16 %v313
    %v1426 = vunpack.c.h.b16 %v313
    %v1427 = vunpack.c.l.b16 %v314
    %v1428 = vunpack.c.h.b16 %v314
    %v1429 = vunpack.c.l.b16 %v315
    %v1430 = vunpack.c.h.b16 %v315
    %v1431 = vunpack.c.l.b16 %v316
    %v1432 = vunpack.c.h.b16 %v316
    %v1433 = vunpack.c.l.b16 %v317
    %v1434 = vunpack.c.h.b16 %v317
    %v1435 = vunpack.c.l.b16 %v318
    %v1436 = vunpack.c.h.b16 %v318
    %v1437 = vunpack.c.l.b16 %v319
    %v1438 = vunpack.c.h.b16 %v319
    %v1439 = vunpack.c.l.b16 %v320
    %v1440 = vunpack.c.h.b16 %v320
    %v1441 = vunpack.c.l.b16 %v321
    %v1442 = vunpack.c.h.b16 %v321
    %v1443 = vunpack.c.l.b16 %v322
    %v1444 = vunpack.c.h.b16 %v322
    %v1445 = vunpack.c.l.b16 %v323
    %v1446 = vunpack.c.h.b16 %v323
    %v1447 = vunpack.c.l.b16 %v324
    %v1448 = vunpack.c.h.b16 %v324
    %v1449 = vunpack.c.l.b16 %v325
    %v1450 = vunpack.c.h.b16 %v325
    %v1451 = vunpack.c.l.b16 %v326
    %v1452 = vunpack.c.h.b16 %v326
    %v1453 = vunpack.c.l.b16 %v327
    %v1454 = vunpack.c.h.b16 %v327
    %v1455 = vunpack.c.l.b16 %v328
    %v1456 = vunpack.c.h.b16 %v328
    %v1457 = vunpack.c.l.b16 %v329
    %v1458 = vunpack.c.h.b16 %v329
    %v1459 = vunpack.c.l.b16 %v330
    %v1460 = vunpack.c.h.b16 %v330
    %v1461 = vunpack.c.l.b16 %v331
    %v1462 = vunpack.c.h.b16 %v331
    %v1463 = vunpack.c.l.b16 %v332
    %v1464 = vunpack.c.h.b16 %v332
    %v1465 = vunpack.c.l.b16 %v333
    %v1466 = vunpack.c.h.b16 %v333
    %v1467 = vunpack.c.l.b16 %v334
    %v1468 = vunpack.c.h.b16 %v334
    %v1469 = vunpack.c.l.b16 %v335
    %v1470 = vunpack.c.h.b16 %v335
    %v1471 = vunpack.c.l.b16 %v336
    %v1472 = vunpack.c.h.b16 %v336
    %v1473 = vunpack.c.l.b16 %v337
    %v1474 = vunpack.c.h.b16 %v337
    %v1475 = vunpack.c.l.b16 %v338
    %v1476 = vunpack.c.h.b16 %v338
    %v1477 = vunpack.c.l.b16 %v339
    %v1478 = vunpack.c.h.b16 %v339
    %v1479 = vunpack.c.l.b16 %v340
    %v1480 = vunpack.c.h.b16 %v340
    %v1481 = vunpack.c.l.b16 %v341
    %v1482 = vunpack.c.h.b16 %v341
    %v1483 = vunpack.c.l.b16 %v342
    %v1484 = vunpack.c.h.b16 %v342
    %v1485 = vunpack.c.l.b16 %v343
    %v1486 = vunpack.c.h.b16 %v343
    %v1487 = vunpack.c.l.b16 %v344
    %v1488 = vunpack.c.h.b16 %v344
    %v1489 = vunpack.c.l.b16 %v345
    %v1490 = vunpack.c.h.b16 %v345
    %v1491 = vunpack.c.l.b16 %v346
    %v1492 = vunpack.c.h.b16 %v346
    %v1493 = vunpack.c.l.b16 %v347
    %v1494 = vunpack.c.h.b16 %v347
    %v1495 = vunpack.c.l.b16 %v348
    %v1496 = vunpack.c.h.b16 %v348
    %v1497 = vunpack.c.l.b16 %v349
    %v1498 = vunpack.c.h.b16 %v349
    %v1499 = vunpack.c.l.b16 %v350
    %v1500 = vunpack.c.h.b16 %v350
    %v1501 = vunpack.c.l.b16 %v351
    %v1502 = vunpack.c.h.b16 %v351
    %v1503 = vunpack.c.l.b16 %v352
    %v1504 = vunpack.c.h.b16 %v352
    %v1505 = vunpack.c.l.b16 %v353
    %v1506 = vunpack.c.h.b16 %v353
    %v1507 = vunpack.c.l.b16 %v354
    %v1508 = vunpack.c.h.b16 %v354
    %v1509 = vunpack.c.l.b16 %v355
    %v1510 = vunpack.c.h.b16 %v355
    %v1511 = vunpack.c.l.b16 %v356
    %v1512 = vunpack.c.h.b16 %v356
    %v1513 = vunpack.c.l.b16 %v357
    %v1514 = vunpack.c.h.b16 %v357
    %v1515 = vunpack.c.l.b16 %v358
    %v1516 = vunpack.c.h.b16 %v358
    %v1517 = vunpack.c.l.b16 %v359
    %v1518 = vunpack.c.h.b16 %v359
    %v1519 = vunpack.c.l.b16 %v360
    %v1520 = vunpack.c.h.b16 %v360
    %v1521 = vunpack.c.l.b16 %v361
    %v1522 = vunpack.c.h.b16 %v361
    %v1523 = vunpack.c.l.b16 %v362
    %v1524 = vunpack.c.h.b16 %v362
    %v1525 = vunpack.c.l.b16 %v363
    %v1526 = vunpack.c.h.b16 %v363
    %v1527 = vunpack.c.l.b16 %v364
    %v1528 = vunpack.c.h.b16 %v364
    %v1529 = vunpack.c.l.b16 %v365
    %v1530 = vunpack.c.h.b16 %v365
    %v1531 = vunpack.c.l.b16 %v366
    %v1532 = vunpack.c.h.b16 %v366
    %v1533 = vunpack.c.l.b16 %v367
    %v1534 = vunpack.c.h.b16 %v367
    %v1535 = vunpack.c.l.b16 %v368
    %v1536 = vunpack.c.h.b16 %v368
    %v1537 = vunpack.c.l.b16 %v369
    %v1538 = vunpack.c.h.b16 %v369
    %v1539 = vunpack.c.l.b16 %v370
    %v1540 = vunpack.c.h.b16 %v370
    %v1541 = vunpack.c.l.b16 %v371
    %v1542 = vunpack.c.h.b16 %v371
    %v1543 = vunpack.c.l.b16 %v372
    %v1544 = vunpack.c.h.b16 %v372
    %v1545 = vunpack.c.l.b16 %v373
    %v1546 = vunpack.c.h.b16 %v373
    %v1547 = vunpack.c.l.b16 %v374
    %v1548 = vunpack.c.h.b16 %v374
    %v1549 = vunpack.c.l.b16 %v375
    %v1550 = vunpack.c.h.b16 %v375
    %v1551 = vunpack.c.l.b16 %v376
    %v1552 = vunpack.c.h.b16 %v376
    %v1553 = vunpack.c.l.b16 %v377
    %v1554 = vunpack.c.h.b16 %v377
    %v1555 = vunpack.c.l.b16 %v378
    %v1556 = vunpack.c.h.b16 %v378
    %v1557 = vunpack.c.l.b16 %v379
    %v1558 = vunpack.c.h.b16 %v379
    %v1559 = vunpack.c.l.b16 %v380
    %v1560 = vunpack.c.h.b16 %v380
    %v1561 = vunpack.c.l.b16 %v381
    %v1562 = vunpack.c.h.b16 %v381
    %v1563 = vunpack.c.l.b16 %v382
    %v1564 = vunpack.c.h.b16 %v382
    %v1565 = vunpack.c.l.b16 %v383
    %v1566 = vunpack.c.h.b16 %v383
    %v1567 = vunpack.c.l.b16 %v384
    %v1568 = vunpack.c.h.b16 %v384
    %v1569 = vunpack.c.l.b16 %v385
    %v1570 = vunpack.c.h.b16 %v385
    %v1571 = vunpack.c.l.b16 %v386
    %v1572 = vunpack.c.h.b16 %v386
    %v1573 = vunpack.c.l.b16 %v387
    %v1574 = vunpack.c.h.b16 %v387
    %v1575 = vunpack.c.l.b16 %v388
    %v1576 = vunpack.c.h.b16 %v388
    %v1577 = vunpack.c.l.b16 %v389
    %v1578 = vunpack.c.h.b16 %v389
    %v1579 = vunpack.c.l.b16 %v390
    %v1580 = vunpack.c.h.b16 %v390
    %v1581 = vunpack.c.l.b16 %v391
    %v1582 = vunpack.c.h.b16 %v391
    %v1583 = vunpack.c.l.b16 %v392
    %v1584 = vunpack.c.h.b16 %v392
    %v1585 = vunpack.c.l.b16 %v393
    %v1586 = vunpack.c.h.b16 %v393
    %v1587 = vunpack.c.l.b16 %v394
    %v1588 = vunpack.c.h.b16 %v394
    %v1589 = vunpack.c.l.b16 %v395
    %v1590 = vunpack.c.h.b16 %v395
    %v1591 = vunpack.c.l.b16 %v396
    %v1592 = vunpack.c.h.b16 %v396
    %v1593 = vunpack.c.l.b16 %v397
    %v1594 = vunpack.c.h.b16 %v397
    %v1595 = vunpack.c.l.b16 %v398
    %v1596 = vunpack.c.h.b16 %v398
    %v1597 = vunpack.c.l.b16 %v399
    %v1598 = vunpack.c.h.b16 %v399
    %v1599 = vunpack.c.l.b16 %v400
    %v1600 = vunpack.c.h.b16 %v400
    %v1601 = vunpack.c.l.b16 %v401
    %v1602 = vunpack.c.h.b16 %v401
    %v1603 = vunpack.c.l.b16 %v402
    %v1604 = vunpack.c.h.b16 %v402
    %v1605 = vunpack.c.l.b16 %v403
    %v1606 = vunpack.c.h.b16 %v403
    %v1607 = vunpack.c.l.b16 %v404
    %v1608 = vunpack.c.h.b16 %v404
    %v1609 = vunpack.c.l.b16 %v405
    %v1610 = vunpack.c.h.b16 %v405
    %v1611 = vunpack.c.l.b16 %v406
    %v1612 = vunpack.c.h.b16 %v406
    %v1613 = vunpack.c.l.b16 %v407
    %v1614 = vunpack.c.h.b16 %v407
    %v1615 = vunpack.c.l.b16 %v408
    %v1616 = vunpack.c.h.b16 %v408
    %v1617 = vunpack.c.l.b16 %v409
    %v1618 = vunpack.c.h.b16 %v409
    %v1619 = vunpack.c.l.b16 %v410
    %v1620 = vunpack.c.h.b16 %v410
    %v1621 = vunpack.c.l.b16 %v411
    %v1622 = vunpack.c.h.b16 %v411
    %v1623 = vunpack.c.l.b16 %v412
    %v1624 = vunpack.c.h.b16 %v412
    %v1625 = vunpack.c.l.b16 %v413
    %v1626 = vunpack.c.h.b16 %v413
    %v1627 = vunpack.c.l.b16 %v414
    %v1628 = vunpack.c.h.b16 %v414
    %v1629 = vunpack.c.l.b16 %v415
    %v1630 = vunpack.c.h.b16 %v415
    %v1631 = vunpack.c.l.b16 %v416
    %v1632 = vunpack.c.h.b16 %v416
    %v1633 = vunpack.c.l.b16 %v417
    %v1634 = vunpack.c.h.b16 %v417
    %v1635 = vunpack.c.l.b16 %v418
    %v1636 = vunpack.c.h.b16 %v418
    %v1637 = vunpack.c.l.b16 %v419
    %v1638 = vunpack.c.h.b16 %v419
    %v1639 = vunpack.c.l.b16 %v420
    %v1640 = vunpack.c.h.b16 %v420
    %v1641 = vunpack.c.l.b16 %v421
    %v1642 = vunpack.c.h.b16 %v421
    %v1643 = vunpack.c.l.b16 %v422
    %v1644 = vunpack.c.h.b16 %v422
    %v1645 = vunpack.c.l.b16 %v423
    %v1646 = vunpack.c.h.b16 %v423
    %v1647 = vunpack.c.l.b16 %v424
    %v1648 = vunpack.c.h.b16 %v424
    %v1649 = vunpack.c.l.b16 %v425
    %v1650 = vunpack.c.h.b16 %v425
    %v1651 = vunpack.c.l.b16 %v426
    %v1652 = vunpack.c.h.b16 %v426
    %v1653 = vunpack.c.l.b16 %v427
    %v1654 = vunpack.c.h.b16 %v427
    %v1655 = vunpack.c.l.b16 %v428
    %v1656 = vunpack.c.h.b16 %v428
    %v1657 = vunpack.c.l.b16 %v429
    %v1658 = vunpack.c.h.b16 %v429
    %v1659 = vunpack.c.l.b16 %v430
    %v1660 = vunpack.c.h.b16 %v430
    %v1661 = vunpack.c.l.b16 %v431
    %v1662 = vunpack.c.h.b16 %v431
    %v1663 = vunpack.c.l.b16 %v432
    %v1664 = vunpack.c.h.b16 %v432
    %v1665 = vunpack.c.l.b16 %v433
    %v1666 = vunpack.c.h.b16 %v433
    %v1667 = vunpack.c.l.b16 %v434
    %v1668 = vunpack.c.h.b16 %v434
    %v1669 = vunpack.c.l.b16 %v435
    %v1670 = vunpack.c.h.b16 %v435
    %v1671 = vunpack.c.l.b16 %v436
    %v1672 = vunpack.c.h.b16 %v436
    %v1673 = vunpack.c.l.b16 %v437
    %v1674 = vunpack.c.h.b16 %v437
    %v1675 = vunpack.c.l.b16 %v438
    %v1676 = vunpack.c.h.b16 %v438
    %v1677 = vunpack.c.l.b16 %v439
    %v1678 = vunpack.c.h.b16 %v439
    %v1679 = vunpack.c.l.b16 %v440
    %v1680 = vunpack.c.h.b16 %v440
    %v1681 = vunpack.c.l.b16 %v441
    %v1682 = vunpack.c.h.b16 %v441
    %v1683 = vunpack.c.l.b16 %v442
    %v1684 = vunpack.c.h.b16 %v442
    %v1685 = vunpack.c.l.b16 %v443
    %v1686 = vunpack.c.h.b16 %v443
    %v1687 = vunpack.c.l.b16 %v444
    %v1688 = vunpack.c.h.b16 %v444
    %v1689 = vunpack.c.l.b16 %v445
    %v1690 = vunpack.c.h.b16 %v445
    %v1691 = vunpack.c.l.b16 %v446
    %v1692 = vunpack.c.h.b16 %v446
    %v1693 = vunpack.c.l.b16 %v447
    %v1694 = vunpack.c.h.b16 %v447
    %v1695 = vunpack.c.l.b16 %v448
    %v1696 = vunpack.c.h.b16 %v448
    %v1697 = vunpack.c.l.b16 %v449
    %v1698 = vunpack.c.h.b16 %v449
    %v1699 = vunpack.c.l.b16 %v450
    %v1700 = vunpack.c.h.b16 %v450
    %v1701 = vunpack.c.l.b16 %v451
    %v1702 = vunpack.c.h.b16 %v451
    %v1703 = vunpack.c.l.b16 %v452
    %v1704 = vunpack.c.h.b16 %v452
    %v1705 = vunpack.c.l.b16 %v453
    %v1706 = vunpack.c.h.b16 %v453
    %v1707 = vunpack.c.l.b16 %v454
    %v1708 = vunpack.c.h.b16 %v454
    %v1709 = vunpack.c.l.b16 %v455
    %v1710 = vunpack.c.h.b16 %v455
    %v1711 = vunpack.c.l.b16 %v456
    %v1712 = vunpack.c.h.b16 %v456
    %v1713 = vunpack.c.l.b16 %v457
    %v1714 = vunpack.c.h.b16 %v457
    %v1715 = vunpack.c.l.b16 %v458
    %v1716 = vunpack.c.h.b16 %v458
    %v1717 = vunpack.c.l.b16 %v459
    %v1718 = vunpack.c.h.b16 %v459
    %v1719 = vunpack.c.l.b16 %v460
    %v1720 = vunpack.c.h.b16 %v460
    %v1721 = vunpack.c.l.b16 %v461
    %v1722 = vunpack.c.h.b16 %v461
    %v1723 = vunpack.c.l.b16 %v462
    %v1724 = vunpack.c.h.b16 %v462
    %v1725 = vunpack.c.l.b16 %v463
    %v1726 = vunpack.c.h.b16 %v463
    %v1727 = vunpack.c.l.b16 %v464
    %v1728 = vunpack.c.h.b16 %v464
    %v1729 = vunpack.c.l.b16 %v465
    %v1730 = vunpack.c.h.b16 %v465
    %v1731 = vunpack.c.l.b16 %v466
    %v1732 = vunpack.c.h.b16 %v466
    %v1733 = vunpack.c.l.b16 %v467
    %v1734 = vunpack.c.h.b16 %v467
    %v1735 = vunpack.c.l.b16 %v468
    %v1736 = vunpack.c.h.b16 %v468
    %v1737 = vunpack.c.l.b16 %v469
    %v1738 = vunpack.c.h.b16 %v469
    %v1739 = vunpack.c.l.b16 %v470
    %v1740 = vunpack.c.h.b16 %v470
    %v1741 = vunpack.c.l.b16 %v471
    %v1742 = vunpack.c.h.b16 %v471
    %v1743 = vunpack.c.l.b16 %v472
    %v1744 = vunpack.c.h.b16 %v472
    %v1745 = vunpack.c.l.b16 %v473
    %v1746 = vunpack.c.h.b16 %v473
    %v1747 = vunpack.c.l.b16 %v474
    %v1748 = vunpack.c.h.b16 %v474
    %v1749 = vunpack.c.l.b16 %v475
    %v1750 = vunpack.c.h.b16 %v475
    %v1751 = vunpack.c.l.b16 %v476
    %v1752 = vunpack.c.h.b16 %v476
    %v1753 = vunpack.c.l.b16 %v477
    %v1754 = vunpack.c.h.b16 %v477
    %v1755 = vunpack.c.l.b16 %v478
    %v1756 = vunpack.c.h.b16 %v478
    %v1757 = vunpack.c.l.b16 %v479
    %v1758 = vunpack.c.h.b16 %v479
    %v1759 = vunpack.c.l.b16 %v480
    %v1760 = vunpack.c.h.b16 %v480
    %v1761 = vunpack.c.l.b16 %v481
    %v1762 = vunpack.c.h.b16 %v481
    %v1763 = vunpack.c.l.b16 %v482
    %v1764 = vunpack.c.h.b16 %v482
    %v1765 = vunpack.c.l.b16 %v483
    %v1766 = vunpack.c.h.b16 %v483
    %v1767 = vunpack.c.l.b16 %v484
    %v1768 = vunpack.c.h.b16 %v484
    %v1769 = vunpack.c.l.b16 %v485
    %v1770 = vunpack.c.h.b16 %v485
    %v1771 = vunpack.c.l.b16 %v486
    %v1772 = vunpack.c.h.b16 %v486
    %v1773 = vunpack.c.l.b16 %v487
    %v1774 = vunpack.c.h.b16 %v487
    %v1775 = vunpack.c.l.b16 %v488
    %v1776 = vunpack.c.h.b16 %v488
    %v1777 = vunpack.c.l.b16 %v489
    %v1778 = vunpack.c.h.b16 %v489
    %v1779 = vunpack.c.l.b16 %v490
    %v1780 = vunpack.c.h.b16 %v490
    %v1781 = vunpack.c.l.b16 %v491
    %v1782 = vunpack.c.h.b16 %v491
    %v1783 = vunpack.c.l.b16 %v492
    %v1784 = vunpack.c.h.b16 %v492
    %v1785 = vunpack.c.l.b16 %v493
    %v1786 = vunpack.c.h.b16 %v493
    %v1787 = vunpack.c.l.b16 %v494
    %v1788 = vunpack.c.h.b16 %v494
    %v1789 = vunpack.c.l.b16 %v495
    %v1790 = vunpack.c.h.b16 %v495
    %v1791 = vunpack.c.l.b16 %v496
    %v1792 = vunpack.c.h.b16 %v496
    %v1793 = vunpack.c.l.b16 %v497
    %v1794 = vunpack.c.h.b16 %v497
    %v1795 = vunpack.c.l.b16 %v498
    %v1796 = vunpack.c.h.b16 %v498
    %v1797 = vunpack.c.l.b16 %v499
    %v1798 = vunpack.c.h.b16 %v499
    %v1799 = vunpack.c.l.b16 %v500
    %v1800 = vunpack.c.h.b16 %v500
    %v1801 = vunpack.c.l.b16 %v501
    %v1802 = vunpack.c.h.b16 %v501
    %v1803 = vunpack.c.l.b16 %v502
    %v1804 = vunpack.c.h.b16 %v502
    %v1805 = vunpack.c.l.b16 %v503
    %v1806 = vunpack.c.h.b16 %v503
    %v1807 = vunpack.c.l.b16 %v504
    %v1808 = vunpack.c.h.b16 %v504
    %v1809 = vunpack.c.l.b16 %v505
    %v1810 = vunpack.c.h.b16 %v505
    %v1811 = vunpack.c.l.b16 %v506
    %v1812 = vunpack.c.h.b16 %v506
    %v1813 = vunpack.c.l.b16 %v507
    %v1814 = vunpack.c.h.b16 %v507
    %v1815 = vunpack.c.l.b16 %v508
    %v1816 = vunpack.c.h.b16 %v508
    %v1817 = vunpack.c.l.b16 %v509
    %v1818 = vunpack.c.h.b16 %v509
    %v1819 = vunpack.c.l.b16 %v510
    %v1820 = vunpack.c.h.b16 %v510
    %v1821 = vunpack.c.l.b16 %v511
    %v1822 = vunpack.c.h.b16 %v511
    %v1823 = vunpack.c.l.b16 %v512
    %v1824 = vunpack.c.h.b16 %v512
    %v1825 = vunpack.c.l.b16 %v513
    %v1826 = vunpack.c.h.b16 %v513
    %v1827 = vunpack.c.l.b16 %v514
    %v1828 = vunpack.c.h.b16 %v514
    %v1829 = vunpack.c.l.b16 %v515
    %v1830 = vunpack.c.h.b16 %v515
    %v1831 = vunpack.c.l.b16 %v516
    %v1832 = vunpack.c.h.b16 %v516
    %v1833 = vunpack.c.l.b16 %v517
    %v1834 = vunpack.c.h.b16 %v517
    %v1835 = vunpack.c.l.b16 %v518
    %v1836 = vunpack.c.h.b16 %v518
    %v1837 = vunpack.c.l.b16 %v519
    %v1838 = vunpack.c.h.b16 %v519
    %v1839 = vunpack.c.l.b16 %v520
    %v1840 = vunpack.c.h.b16 %v520
    %v1841 = vunpack.c.l.b16 %v521
    %v1842 = vunpack.c.h.b16 %v521
    %v1843 = vunpack.c.l.b16 %v522
    %v1844 = vunpack.c.h.b16 %v522
    %v1845 = vunpack.c.l.b16 %v523
    %v1846 = vunpack.c.h.b16 %v523
    %v1847 = vunpack.c.l.b16 %v524
    %v1848 = vunpack.c.h.b16 %v524
    %v1849 = vunpack.c.l.b16 %v525
    %v1850 = vunpack.c.h.b16 %v525
    %v1851 = vunpack.c.l.b16 %v526
    %v1852 = vunpack.c.h.b16 %v526
    %v1853 = vunpack.c.l.b16 %v527
    %v1854 = vunpack.c.h.b16 %v527
    %v1855 = vunpack.c.l.b16 %v528
    %v1856 = vunpack.c.h.b16 %v528
    %v1857 = vunpack.c.l.b16 %v529
    %v1858 = vunpack.c.h.b16 %v529
    %v1859 = vunpack.c.l.b16 %v530
    %v1860 = vunpack.c.h.b16 %v530
    %v1861 = vunpack.c.l.b16 %v531
    %v1862 = vunpack.c.h.b16 %v531
    %v1863 = vunpack.c.l.b16 %v532
    %v1864 = vunpack.c.h.b16 %v532
    %v1865 = vunpack.c.l.b16 %v533
    %v1866 = vunpack.c.h.b16 %v533
    %v1867 = vunpack.c.l.b16 %v534
    %v1868 = vunpack.c.h.b16 %v534
    %v1869 = vunpack.c.l.b16 %v535
    %v1870 = vunpack.c.h.b16 %v535
    %v1871 = vunpack.c.l.b16 %v536
    %v1872 = vunpack.c.h.b16 %v536
    %v1873 = vunpack.c.l.b16 %v537
    %v1874 = vunpack.c.h.b16 %v537
    %v1875 = vunpack.c.l.b16 %v538
    %v1876 = vunpack.c.h.b16 %v538
    %v1877 = vunpack.c.l.b16 %v539
    %v1878 = vunpack.c.h.b16 %v539
    %v1879 = vunpack.c.l.b16 %v540
    %v1880 = vunpack.c.h.b16 %v540
    %v1881 = vunpack.c.l.b16 %v541
    %v1882 = vunpack.c.h.b16 %v541
    %v1883 = vunpack.c.l.b16 %v542
    %v1884 = vunpack.c.h.b16 %v542
    %v1885 = vunpack.c.l.b16 %v543
    %v1886 = vunpack.c.h.b16 %v543
    %v1887 = vunpack.c.l.b16 %v544
    %v1888 = vunpack.c.h.b16 %v544
    %v1889 = vunpack.c.l.b16 %v545
    %v1890 = vunpack.c.h.b16 %v545
    %v1891 = vunpack.c.l.b16 %v546
    %v1892 = vunpack.c.h.b16 %v546
    %v1893 = vunpack.c.l.b16 %v547
    %v1894 = vunpack.c.h.b16 %v547
    %v1895 = vunpack.c.l.b16 %v548
    %v1896 = vunpack.c.h.b16 %v548
    %v1897 = vunpack.c.l.b16 %v549
    %v1898 = vunpack.c.h.b16 %v549
    %v1899 = vunpack.c.l.b16 %v550
    %v1900 = vunpack.c.h.b16 %v550
    %v1901 = vunpack.c.l.b16 %v551
    %v1902 = vunpack.c.h.b16 %v551
    %v1903 = vunpack.c.l.b16 %v552
    %v1904 = vunpack.c.h.b16 %v552
    %v1905 = vunpack.c.l.b16 %v553
    %v1906 = vunpack.c.h.b16 %v553
    %v1907 = vunpack.c.l.b16 %v554
    %v1908 = vunpack.c.h.b16 %v554
    %v1909 = vunpack.c.l.b16 %v555
    %v1910 = vunpack.c.h.b16 %v555
    %v1911 = vunpack.c.l.b16 %v556
    %v1912 = vunpack.c.h.b16 %v556
    %v1913 = vunpack.c.l.b16 %v557
    %v1914 = vunpack.c.h.b16 %v557
    %v1915 = vunpack.c.l.b16 %v558
    %v1916 = vunpack.c.h.b16 %v558
    %v1917 = vunpack.c.l.b16 %v559
    %v1918 = vunpack.c.h.b16 %v559
    %v1919 = vunpack.c.l.b16 %v560
    %v1920 = vunpack.c.h.b16 %v560
    %v1921 = vunpack.c.l.b16 %v561
    %v1922 = vunpack.c.h.b16 %v561
    %v1923 = vunpack.c.l.b16 %v562
    %v1924 = vunpack.c.h.b16 %v562
    %v1925 = vunpack.c.l.b16 %v563
    %v1926 = vunpack.c.h.b16 %v563
    %v1927 = vunpack.c.l.b16 %v564
    %v1928 = vunpack.c.h.b16 %v564
    %v1929 = vunpack.c.l.b16 %v565
    %v1930 = vunpack.c.h.b16 %v565
    %v1931 = vunpack.c.l.b16 %v566
    %v1932 = vunpack.c.h.b16 %v566
    %v1933 = vunpack.c.l.b16 %v567
    %v1934 = vunpack.c.h.b16 %v567
    %v1935 = vunpack.c.l.b16 %v568
    %v1936 = vunpack.c.h.b16 %v568
    %v1937 = vunpack.c.l.b16 %v569
    %v1938 = vunpack.c.h.b16 %v569
    %v1939 = vunpack.c.l.b16 %v570
    %v1940 = vunpack.c.h.b16 %v570
    %v1941 = vunpack.c.l.b16 %v571
    %v1942 = vunpack.c.h.b16 %v571
    %v1943 = vunpack.c.l.b16 %v572
    %v1944 = vunpack.c.h.b16 %v572
    %v1945 = vunpack.c.l.b16 %v573
    %v1946 = vunpack.c.h.b16 %v573
    %v1947 = vunpack.c.l.b16 %v574
    %v1948 = vunpack.c.h.b16 %v574
    %v1949 = vunpack.c.l.b16 %v575
    %v1950 = vunpack.c.h.b16 %v575
    %v1951 = vunpack.c.l.b16 %v576
    %v1952 = vunpack.c.h.b16 %v576
    %v1953 = vunpack.c.l.b16 %v577
    %v1954 = vunpack.c.h.b16 %v577
    %v1955 = vunpack.c.l.b16 %v578
    %v1956 = vunpack.c.h.b16 %v578
    %v1957 = vunpack.c.l.b16 %v579
    %v1958 = vunpack.c.h.b16 %v579
    %v1959 = vunpack.c.l.b16 %v580
    %v1960 = vunpack.c.h.b16 %v580
    %v1961 = vunpack.c.l.b16 %v581
    %v1962 = vunpack.c.h.b16 %v581
    %v1963 = vunpack.c.l.b16 %v582
    %v1964 = vunpack.c.h.b16 %v582
    %v1965 = vunpack.c.l.b16 %v583
    %v1966 = vunpack.c.h.b16 %v583
    %v1967 = vunpack.c.l.b16 %v584
    %v1968 = vunpack.c.h.b16 %v584
    %v1969 = vunpack.c.l.b16 %v585
    %v1970 = vunpack.c.h.b16 %v585
    %v1971 = vunpack.c.l.b16 %v586
    %v1972 = vunpack.c.h.b16 %v586
    %v1973 = vunpack.c.l.b16 %v587
    %v1974 = vunpack.c.h.b16 %v587
    %v1975 = vunpack.c.l.b16 %v588
    %v1976 = vunpack.c.h.b16 %v588
    %v1977 = vunpack.c.l.b16 %v589
    %v1978 = vunpack.c.h.b16 %v589
    %v1979 = vunpack.c.l.b16 %v590
    %v1980 = vunpack.c.h.b16 %v590
    %v1981 = vunpack.c.l.b16 %v591
    %v1982 = vunpack.c.h.b16 %v591
    %v1983 = vunpack.c.l.b16 %v592
    %v1984 = vunpack.c.h.b16 %v592
    %v1985 = vunpack.c.l.b16 %v593
    %v1986 = vunpack.c.h.b16 %v593
    %v1987 = vunpack.c.l.b16 %v594
    %v1988 = vunpack.c.h.b16 %v594
    %v1989 = vunpack.c.l.b16 %v595
    %v1990 = vunpack.c.h.b16 %v595
    %v1991 = vunpack.c.l.b16 %v596
    %v1992 = vunpack.c.h.b16 %v596
    %v1993 = vunpack.c.l.b16 %v597
    %v1994 = vunpack.c.h.b16 %v597
    %v1995 = vunpack.c.l.b16 %v598
    %v1996 = vunpack.c.h.b16 %v598
    %v1997 = vunpack.c.l.b16 %v599
    %v1998 = vunpack.c.h.b16 %v599
    %v1999 = vunpack.c.l.b16 %v600
    %v2000 = vunpack.c.h.b16 %v600
    %v2001 = vunpack.c.l.b16 %v601
    %v2002 = vunpack.c.h.b16 %v601
    %v2003 = vunpack.c.l.b16 %v602
    %v2004 = vunpack.c.h.b16 %v602
    %v2005 = vunpack.c.l.b16 %v603
    %v2006 = vunpack.c.h.b16 %v603
    %v2007 = vunpack.c.l.b16 %v604
    %v2008 = vunpack.c.h.b16 %v604
    %v2009 = vunpack.c.l.b16 %v605
    %v2010 = vunpack.c.h.b16 %v605
    %v2011 = vunpack.c.l.b16 %v606
    %v2012 = vunpack.c.h.b16 %v606
    %v2013 = vunpack.c.l.b16 %v607
    %v2014 = vunpack.c.h.b16 %v607
    %v2015 = vunpack.c.l.b16 %v608
    %v2016 = vunpack.c.h.b16 %v608
    %v2017 = vunpack.c.l.b16 %v609
    %v2018 = vunpack.c.h.b16 %v609
    %v2019 = vunpack.c.l.b16 %v610
    %v2020 = vunpack.c.h.b16 %v610
    %v2021 = vunpack.c.l.b16 %v611
    %v2022 = vunpack.c.h.b16 %v611
    %v2023 = vunpack.c.l.b16 %v612
    %v2024 = vunpack.c.h.b16 %v612
    %v2025 = vunpack.c.l.b16 %v613
    %v2026 = vunpack.c.h.b16 %v613
    %v2027 = vunpack.c.l.b16 %v614
    %v2028 = vunpack.c.h.b16 %v614
    %v2029 = vunpack.c.l.b16 %v615
    %v2030 = vunpack.c.h.b16 %v615
    %v2031 = vunpack.c.l.b16 %v616
    %v2032 = vunpack.c.h.b16 %v616
    %v2033 = vunpack.c.l.b16 %v617
    %v2034 = vunpack.c.h.b16 %v617
    %v2035 = vunpack.c.l.b16 %v618
    %v2036 = vunpack.c.h.b16 %v618
    %v2037 = vunpack.c.l.b16 %v619
    %v2038 = vunpack.c.h.b16 %v619
    %v2039 = vunpack.c.l.b16 %v620
    %v2040 = vunpack.c.h.b16 %v620
    %v2041 = vunpack.c.l.b16 %v621
    %v2042 = vunpack.c.h.b16 %v621
    %v2043 = vunpack.c.l.b16 %v622
    %v2044 = vunpack.c.h.b16 %v622
    %v2045 = vunpack.c.l.b16 %v623
    %v2046 = vunpack.c.h.b16 %v623
    %v2047 = vunpack.c.l.b16 %v624
    %v2048 = vunpack.c.h.b16 %v624
    %v2049 = vunpack.c.l.b16 %v625
    %v2050 = vunpack.c.h.b16 %v625
    %v2051 = vunpack.c.l.b16 %v626
    %v2052 = vunpack.c.h.b16 %v626
    %v2053 = vunpack.c.l.b16 %v627
    %v2054 = vunpack.c.h.b16 %v627
    %v2055 = vunpack.c.l.b16 %v628
    %v2056 = vunpack.c.h.b16 %v628
    %v2057 = vunpack.c.l.b16 %v629
    %v2058 = vunpack.c.h.b16 %v629
    %v2059 = vunpack.c.l.b16 %v630
    %v2060 = vunpack.c.h.b16 %v630
    %v2061 = vunpack.c.l.b16 %v631
    %v2062 = vunpack.c.h.b16 %v631
    %v2063 = vunpack.c.l.b16 %v632
    %v2064 = vunpack.c.h.b16 %v632
    %v2065 = vunpack.c.l.b16 %v633
    %v2066 = vunpack.c.h.b16 %v633
    %v2067 = vunpack.c.l.b16 %v634
    %v2068 = vunpack.c.h.b16 %v634
    %v2069 = vunpack.c.l.b16 %v635
    %v2070 = vunpack.c.h.b16 %v635
    %v2071 = vunpack.c.l.b16 %v636
    %v2072 = vunpack.c.h.b16 %v636
    %v2073 = vunpack.c.l.b16 %v637
    %v2074 = vunpack.c.h.b16 %v637
    %v2075 = vunpack.c.l.b16 %v638
    %v2076 = vunpack.c.h.b16 %v638
    %v2077 = vunpack.c.l.b16 %v639
    %v2078 = vunpack.c.h.b16 %v639
    %v2079 = vunpack.c.l.b16 %v640
    %v2080 = vunpack.c.h.b16 %v640
    %v2081 = vunpack.c.l.b16 %v641
    %v2082 = vunpack.c.h.b16 %v641
    %v2083 = vunpack.c.l.b16 %v642
    %v2084 = vunpack.c.h.b16 %v642
    %v2085 = vunpack.c.l.b16 %v643
    %v2086 = vunpack.c.h.b16 %v643
    %v2087 = vunpack.c.l.b16 %v644
    %v2088 = vunpack.c.h.b16 %v644
    %v2089 = vunpack.c.l.b16 %v645
    %v2090 = vunpack.c.h.b16 %v645
    %v2091 = vunpack.c.l.b16 %v646
    %v2092 = vunpack.c.h.b16 %v646
    %v2093 = vunpack.c.l.b16 %v647
    %v2094 = vunpack.c.h.b16 %v647
    %v2095 = vunpack.c.l.b16 %v648
    %v2096 = vunpack.c.h.b16 %v648
    %v2097 = vunpack.c.l.b16 %v649
    %v2098 = vunpack.c.h.b16 %v649
    %v2099 = vunpack.c.l.b16 %v650
    %v2100 = vunpack.c.h.b16 %v650
    %v2101 = vunpack.c.l.b16 %v651
    %v2102 = vunpack.c.h.b16 %v651
    %v2103 = vunpack.c.l.b16 %v652
    %v2104 = vunpack.c.h.b16 %v652
    %v2105 = vunpack.c.l.b16 %v653
    %v2106 = vunpack.c.h.b16 %v653
    %v2107 = vunpack.c.l.b16 %v654
    %v2108 = vunpack.c.h.b16 %v654
    %v2109 = vunpack.c.l.b16 %v655
    %v2110 = vunpack.c.h.b16 %v655
    %v2111 = vunpack.c.l.b16 %v656
    %v2112 = vunpack.c.h.b16 %v656
    %v2113 = vunpack.c.l.b16 %v657
    %v2114 = vunpack.c.h.b16 %v657
    %v2115 = vunpack.c.l.b16 %v658
    %v2116 = vunpack.c.h.b16 %v658
    %v2117 = vunpack.c.l.b16 %v659
    %v2118 = vunpack.c.h.b16 %v659
    %v2119 = vunpack.c.l.b16 %v660
    %v2120 = vunpack.c.h.b16 %v660
    %v2121 = vunpack.c.l.b16 %v661
    %v2122 = vunpack.c.h.b16 %v661
    %v2123 = vunpack.c.l.b16 %v662
    %v2124 = vunpack.c.h.b16 %v662
    %v2125 = vunpack.c.l.b16 %v663
    %v2126 = vunpack.c.h.b16 %v663
    %v2127 = vunpack.c.l.b16 %v664
    %v2128 = vunpack.c.h.b16 %v664
    %v2129 = vunpack.c.l.b16 %v665
    %v2130 = vunpack.c.h.b16 %v665
    %v2131 = vunpack.c.l.b16 %v666
    %v2132 = vunpack.c.h.b16 %v666
    %v2133 = vunpack.c.l.b16 %v667
    %v2134 = vunpack.c.h.b16 %v667
    %v2135 = vunpack.c.l.b16 %v668
    %v2136 = vunpack.c.h.b16 %v668
    %v2137 = vunpack.c.l.b16 %v669
    %v2138 = vunpack.c.h.b16 %v669
    %v2139 = vunpack.c.l.b16 %v670
    %v2140 = vunpack.c.h.b16 %v670
    %v2141 = vunpack.c.l.b16 %v671
    %v2142 = vunpack.c.h.b16 %v671
    %v2143 = vunpack.c.l.b16 %v672
    %v2144 = vunpack.c.h.b16 %v672
    %v2145 = vunpack.c.l.b16 %v673
    %v2146 = vunpack.c.h.b16 %v673
    %v2147 = vunpack.c.l.b16 %v674
    %v2148 = vunpack.c.h.b16 %v674
    %v2149 = vunpack.c.l.b16 %v675
    %v2150 = vunpack.c.h.b16 %v675
    %v2151 = vunpack.c.l.b16 %v676
    %v2152 = vunpack.c.h.b16 %v676
    %v2153 = vunpack.c.l.b16 %v677
    %v2154 = vunpack.c.h.b16 %v677
    %v2155 = vunpack.c.l.b16 %v678
    %v2156 = vunpack.c.h.b16 %v678
    %v2157 = vunpack.c.l.b16 %v679
    %v2158 = vunpack.c.h.b16 %v679
    %v2159 = vunpack.c.l.b16 %v680
    %v2160 = vunpack.c.h.b16 %v680
    %v2161 = vunpack.c.l.b16 %v681
    %v2162 = vunpack.c.h.b16 %v681
    %v2163 = vunpack.c.l.b16 %v682
    %v2164 = vunpack.c.h.b16 %v682
    %v2165 = vunpack.c.l.b16 %v683
    %v2166 = vunpack.c.h.b16 %v683
    %v2167 = vunpack.c.l.b16 %v684
    %v2168 = vunpack.c.h.b16 %v684
    %v2169 = vunpack.c.l.b16 %v685
    %v2170 = vunpack.c.h.b16 %v685
    %v2171 = vunpack.c.l.b16 %v686
    %v2172 = vunpack.c.h.b16 %v686
    %v2173 = vunpack.c.l.b16 %v687
    %v2174 = vunpack.c.h.b16 %v687
    %v2175 = vunpack.c.l.b16 %v688
    %v2176 = vunpack.c.h.b16 %v688
    %v2177 = vunpack.c.l.b16 %v689
    %v2178 = vunpack.c.h.b16 %v689
    %v2179 = vunpack.c.l.b16 %v690
    %v2180 = vunpack.c.h.b16 %v690
    %v2181 = vunpack.c.l.b16 %v691
    %v2182 = vunpack.c.h.b16 %v691
    %v2183 = vunpack.c.l.b16 %v692
    %v2184 = vunpack.c.h.b16 %v692
    %v2185 = vunpack.c.l.b16 %v693
    %v2186 = vunpack.c.h.b16 %v693
    %v2187 = vunpack.c.l.b16 %v694
    %v2188 = vunpack.c.h.b16 %v694
    %v2189 = vunpack.c.l.b16 %v695
    %v2190 = vunpack.c.h.b16 %v695
    %v2191 = vunpack.c.l.b16 %v696
    %v2192 = vunpack.c.h.b16 %v696
    %v2193 = vunpack.c.l.b16 %v697
    %v2194 = vunpack.c.h.b16 %v697
    %v2195 = vunpack.c.l.b16 %v698
    %v2196 = vunpack.c.h.b16 %v698
    %v2197 = vunpack.c.l.b16 %v699
    %v2198 = vunpack.c.h.b16 %v699
    %v2199 = vunpack.c.l.b16 %v700
    %v2200 = vunpack.c.h.b16 %v700
    %v2201 = vunpack.c.l.b16 %v701
    %v2202 = vunpack.c.h.b16 %v701
    %v2203 = vunpack.c.l.b16 %v702
    %v2204 = vunpack.c.h.b16 %v702
    %v2205 = vunpack.c.l.b16 %v703
    %v2206 = vunpack.c.h.b16 %v703
    %v2207 = vunpack.c.l.b16 %v704
    %v2208 = vunpack.c.h.b16 %v704
    %v2209 = vunpack.c.l.b16 %v705
    %v2210 = vunpack.c.h.b16 %v705
    %v2211 = vunpack.c.l.b16 %v706
    %v2212 = vunpack.c.h.b16 %v706
    %v2213 = vunpack.c.l.b16 %v707
    %v2214 = vunpack.c.h.b16 %v707
    %v2215 = vunpack.c.l.b16 %v708
    %v2216 = vunpack.c.h.b16 %v708
    %v2217 = vunpack.c.l.b16 %v709
    %v2218 = vunpack.c.h.b16 %v709
    %v2219 = vunpack.c.l.b16 %v710
    %v2220 = vunpack.c.h.b16 %v710
    %v2221 = vunpack.c.l.b16 %v711
    %v2222 = vunpack.c.h.b16 %v711
    %v2223 = vunpack.c.l.b16 %v712
    %v2224 = vunpack.c.h.b16 %v712
    %v2225 = vunpack.c.l.b16 %v713
    %v2226 = vunpack.c.h.b16 %v713
    %v2227 = vunpack.c.l.b16 %v714
    %v2228 = vunpack.c.h.b16 %v714
    %v2229 = vunpack.c.l.b16 %v715
    %v2230 = vunpack.c.h.b16 %v715
    %v2231 = vunpack.c.l.b16 %v716
    %v2232 = vunpack.c.h.b16 %v716
    %v2233 = vunpack.c.l.b16 %v717
    %v2234 = vunpack.c.h.b16 %v717
    %v2235 = vunpack.c.l.b16 %v718
    %v2236 = vunpack.c.h.b16 %v718
    %v2237 = vunpack.c.l.b16 %v719
    %v2238 = vunpack.c.h.b16 %v719
    %v2239 = vunpack.c.l.b16 %v720
    %v2240 = vunpack.c.h.b16 %v720
    %v2241 = vunpack.c.l.b16 %v721
    %v2242 = vunpack.c.h.b16 %v721
    %v2243 = vunpack.c.l.b16 %v722
    %v2244 = vunpack.c.h.b16 %v722
    %v2245 = vunpack.c.l.b16 %v723
    %v2246 = vunpack.c.h.b16 %v723
    %v2247 = vunpack.c.l.b16 %v724
    %v2248 = vunpack.c.h.b16 %v724
    %v2249 = vunpack.c.l.b16 %v725
    %v2250 = vunpack.c.h.b16 %v725
    %v2251 = vunpack.c.l.b16 %v726
    %v2252 = vunpack.c.h.b16 %v726
    %v2253 = vunpack.c.l.b16 %v727
    %v2254 = vunpack.c.h.b16 %v727
    %v2255 = vunpack.c.l.b16 %v728
    %v2256 = vunpack.c.h.b16 %v728
    %v2257 = vunpack.c.l.b16 %v729
    %v2258 = vunpack.c.h.b16 %v729
    %v2259 = vunpack.c.l.b16 %v730
    %v2260 = vunpack.c.h.b16 %v730
    %v2261 = vunpack.c.l.b16 %v731
    %v2262 = vunpack.c.h.b16 %v731
    %v2263 = vunpack.c.l.b16 %v732
    %v2264 = vunpack.c.h.b16 %v732
    %v2265 = vunpack.c.l.b16 %v733
    %v2266 = vunpack.c.h.b16 %v733
    %v2267 = vunpack.c.l.b16 %v734
    %v2268 = vunpack.c.h.b16 %v734
    %v2269 = vunpack.c.l.b16 %v735
    %v2270 = vunpack.c.h.b16 %v735
    %v2271 = vunpack.c.l.b16 %v736
    %v2272 = vunpack.c.h.b16 %v736
    %v2273 = vunpack.c.l.b16 %v737
    %v2274 = vunpack.c.h.b16 %v737
    %v2275 = vunpack.c.l.b16 %v738
    %v2276 = vunpack.c.h.b16 %v738
    %v2277 = vunpack.c.l.b16 %v739
    %v2278 = vunpack.c.h.b16 %v739
    %v2279 = vunpack.c.l.b16 %v740
    %v2280 = vunpack.c.h.b16 %v740
    %v2281 = vunpack.c.l.b16 %v741
    %v2282 = vunpack.c.h.b16 %v741
    %v2283 = vunpack.c.l.b16 %v742
    %v2284 = vunpack.c.h.b16 %v742
    %v2285 = vunpack.c.l.b16 %v743
    %v2286 = vunpack.c.h.b16 %v743
    %v2287 = vunpack.c.l.b16 %v744
    %v2288 = vunpack.c.h.b16 %v744
    %v2289 = vunpack.c.l.b16 %v745
    %v2290 = vunpack.c.h.b16 %v745
    %v2291 = vunpack.c.l.b16 %v746
    %v2292 = vunpack.c.h.b16 %v746
    %v2293 = vunpack.c.l.b16 %v747
    %v2294 = vunpack.c.h.b16 %v747
    %v2295 = vunpack.c.l.b16 %v748
    %v2296 = vunpack.c.h.b16 %v748
    %v2297 = vpack.c.b16 %v1275, %v1273
    %v2298 = vpack.c.b16 %v1276, %v1274
    %v2299 = vpack.c.b16 %v1279, %v1277
    %v2300 = vpack.c.b16 %v1280, %v1278
    %v2301 = vpack.c.b16 %v1283, %v1281
    %v2302 = vpack.c.b16 %v1284, %v1282
    %v2303 = vpack.c.b16 %v1287, %v1285
    %v2304 = vpack.c.b16 %v1288, %v1286
    %v2305 = vpack.c.b16 %v1291, %v1289
    %v2306 = vpack.c.b16 %v1292, %v1290
    %v2307 = vpack.c.b16 %v1295, %v1293
    %v2308 = vpack.c.b16 %v1296, %v1294
    %v2309 = vpack.c.b16 %v1299, %v1297
    %v2310 = vpack.c.b16 %v1300, %v1298
    %v2311 = vpack.c.b16 %v1303, %v1301
    %v2312 = vpack.c.b16 %v1304, %v1302
    %v2313 = vpack.c.b16 %v1307, %v1305
    %v2314 = vpack.c.b16 %v1308, %v1306
    %v2315 = vpack.c.b16 %v1311, %v1309
    %v2316 = vpack.c.b16 %v1312, %v1310
    %v2317 = vpack.c.b16 %v1315, %v1313
    %v2318 = vpack.c.b16 %v1316, %v1314
    %v2319 = vpack.c.b16 %v1319, %v1317
    %v2320 = vpack.c.b16 %v1320, %v1318
    %v2321 = vpack.c.b16 %v1323, %v1321
    %v2322 = vpack.c.b16 %v1324, %v1322
    %v2323 = vpack.c.b16 %v1327, %v1325
    %v2324 = vpack.c.b16 %v1328, %v1326
    %v2325 = vpack.c.b16 %v1331, %v1329
    %v2326 = vpack.c.b16 %v1332, %v1330
    %v2327 = vpack.c.b16 %v1335, %v1333
    %v2328 = vpack.c.b16 %v1336, %v1334
    %v2329 = vpack.c.b16 %v1339, %v1337
    %v2330 = vpack.c.b16 %v1340, %v1338
    %v2331 = vpack.c.b16 %v1343, %v1341
    %v2332 = vpack.c.b16 %v1344, %v1342
    %v2333 = vpack.c.b16 %v1347, %v1345
    %v2334 = vpack.c.b16 %v1348, %v1346
    %v2335 = vpack.c.b16 %v1351, %v1349
    %v2336 = vpack.c.b16 %v1352, %v1350
    %v2337 = vpack.c.b16 %v1355, %v1353
    %v2338 = vpack.c.b16 %v1356, %v1354
    %v2339 = vpack.c.b16 %v1359, %v1357
    %v2340 = vpack.c.b16 %v1360, %v1358
    %v2341 = vpack.c.b16 %v1363, %v1361
    %v2342 = vpack.c.b16 %v1364, %v1362
    %v2343 = vpack.c.b16 %v1367, %v1365
    %v2344 = vpack.c.b16 %v1368, %v1366
    %v2345 = vpack.c.b16 %v1371, %v1369
    %v2346 = vpack.c.b16 %v1372, %v1370
    %v2347 = vpack.c.b16 %v1375, %v1373
    %v2348 = vpack.c.b16 %v1376, %v1374
    %v2349 = vpack.c.b16 %v1379, %v1377
    %v2350 = vpack.c.b16 %v1380, %v1378
    %v2351 = vpack.c.b16 %v1383, %v1381
    %v2352 = vpack.c.b16 %v1384, %v1382
    %v2353 = vpack.c.b16 %v1387, %v1385
    %v2354 = vpack.c.b16 %v1388, %v1386
    %v2355 = vpack.c.b16 %v1391, %v1389
    %v2356 = vpack.c.b16 %v1392, %v1390
    %v2357 = vpack.c.b16 %v1395, %v1393
    %v2358 = vpack.c.b16 %v1396, %v1394
    %v2359 = vpack.c.b16 %v1399, %v1397
    %v2360 = vpack.c.b16 %v1400, %v1398
    %v2361 = vpack.c.b16 %v1403, %v1401
    %v2362 = vpack.c.b16 %v1404, %v1402
    %v2363 = vpack.c.b16 %v1407, %v1405
    %v2364 = vpack.c.b16 %v1408, %v1406
    %v2365 = vpack.c.b16 %v1411, %v1409
    %v2366 = vpack.c.b16 %v1412, %v1410
    %v2367 = vpack.c.b16 %v1415, %v1413
    %v2368 = vpack.c.b16 %v1416, %v1414
    %v2369 = vpack.c.b16 %v1419, %v1417
    %v2370 = vpack.c.b16 %v1420, %v1418
    %v2371 = vpack.c.b16 %v1423, %v1421
    %v2372 = vpack.c.b16 %v1424, %v1422
    %v2373 = vpack.c.b16 %v1427, %v1425
    %v2374 = vpack.c.b16 %v1428, %v1426
    %v2375 = vpack.c.b16 %v1431, %v1429
    %v2376 = vpack.c.b16 %v1432, %v1430
    %v2377 = vpack.c.b16 %v1435, %v1433
    %v2378 = vpack.c.b16 %v1436, %v1434
    %v2379 = vpack.c.b16 %v1439, %v1437
    %v2380 = vpack.c.b16 %v1440, %v1438
    %v2381 = vpack.c.b16 %v1443, %v1441
    %v2382 = vpack.c.b16 %v1444, %v1442
    %v2383 = vpack.c.b16 %v1447, %v1445
    %v2384 = vpack.c.b16 %v1448, %v1446
    %v2385 = vpack.c.b16 %v1451, %v1449
    %v2386 = vpack.c.b16 %v1452, %v1450
    %v2387 = vpack.c.b16 %v1455, %v1453
    %v2388 = vpack.c.b16 %v1456, %v1454
    %v2389 = vpack.c.b16 %v1459, %v1457
    %v2390 = vpack.c.b16 %v1460, %v1458
    %v2391 = vpack.c.b16 %v1463, %v1461
    %v2392 = vpack.c.b16 %v1464, %v1462
    %v2393 = vpack.c.b16 %v1467, %v1465
    %v2394 = vpack.c.b16 %v1468, %v1466
    %v2395 = vpack.c.b16 %v1471, %v1469
    %v2396 = vpack.c.b16 %v1472, %v1470
    %v2397 = vpack.c.b16 %v1475, %v1473
    %v2398 = vpack.c.b16 %v1476, %v1474
    %v2399 = vpack.c.b16 %v1479, %v1477
    %v2400 = vpack.c.b16 %v1480, %v1478
    %v2401 = vpack.c.b16 %v1483, %v1481
    %v2402 = vpack.c.b16 %v1484, %v1482
    %v2403 = vpack.c.b16 %v1487, %v1485
    %v2404 = vpack.c.b16 %v1488, %v1486
    %v2405 = vpack.c.b16 %v1491, %v1489
    %v2406 = vpack.c.b16 %v1492, %v1490
    %v2407 = vpack.c.b16 %v1495, %v1493
    %v2408 = vpack.c.b16 %v1496, %v1494
    %v2409 = vpack.c.b16 %v1499, %v1497
    %v2410 = vpack.c.b16 %v1500, %v1498
    %v2411 = vpack.c.b16 %v1503, %v1501
    %v2412 = vpack.c.b16 %v1504, %v1502
    %v2413 = vpack.c.b16 %v1507, %v1505
    %v2414 = vpack.c.b16 %v1508, %v1506
    %v2415 = vpack.c.b16 %v1511, %v1509
    %v2416 = vpack.c.b16 %v1512, %v1510
    %v2417 = vpack.c.b16 %v1515, %v1513
    %v2418 = vpack.c.b16 %v1516, %v1514
    %v2419 = vpack.c.b16 %v1519, %v1517
    %v2420 = vpack.c.b16 %v1520, %v1518
    %v2421 = vpack.c.b16 %v1523, %v1521
    %v2422 = vpack.c.b16 %v1524, %v1522
    %v2423 = vpack.c.b16 %v1527, %v1525
    %v2424 = vpack.c.b16 %v1528, %v1526
    %v2425 = vpack.c.b16 %v1531, %v1529
    %v2426 = vpack.c.b16 %v1532, %v1530
    %v2427 = vpack.c.b16 %v1535, %v1533
    %v2428 = vpack.c.b16 %v1536, %v1534
    %v2429 = vpack.c.b16 %v1539, %v1537
    %v2430 = vpack.c.b16 %v1540, %v1538
    %v2431 = vpack.c.b16 %v1543, %v1541
    %v2432 = vpack.c.b16 %v1544, %v1542
    %v2433 = vpack.c.b16 %v1547, %v1545
    %v2434 = vpack.c.b16 %v1548, %v1546
    %v2435 = vpack.c.b16 %v1551, %v1549
    %v2436 = vpack.c.b16 %v1552, %v1550
    %v2437 = vpack.c.b16 %v1555, %v1553
    %v2438 = vpack.c.b16 %v1556, %v1554
    %v2439 = vpack.c.b16 %v1559, %v1557
    %v2440 = vpack.c.b16 %v1560, %v1558
    %v2441 = vpack.c.b16 %v1563, %v1561
    %v2442 = vpack.c.b16 %v1564, %v1562
    %v2443 = vpack.c.b16 %v1567, %v1565
    %v2444 = vpack.c.b16 %v1568, %v1566
    %v2445 = vpack.c.b16 %v1571, %v1569
    %v2446 = vpack.c.b16 %v1572, %v1570
    %v2447 = vpack.c.b16 %v1575, %v1573
    %v2448 = vpack.c.b16 %v1576, %v1574
    %v2449 = vpack.c.b16 %v1579, %v1577
    %v2450 = vpack.c.b16 %v1580, %v1578
    %v2451 = vpack.c.b16 %v1583, %v1581
    %v2452 = vpack.c.b16 %v1584, %v1582
    %v2453 = vpack.c.b16 %v1587, %v1585
    %v2454 = vpack.c.b16 %v1588, %v1586
    %v2455 = vpack.c.b16 %v1591, %v1589
    %v2456 = vpack.c.b16 %v1592, %v1590
    %v2457 = vpack.c.b16 %v1595, %v1593
    %v2458 = vpack.c.b16 %v1596, %v1594
    %v2459 = vpack.c.b16 %v1599, %v1597
    %v2460 = vpack.c.b16 %v1600, %v1598
    %v2461 = vpack.c.b16 %v1603, %v1601
    %v2462 = vpack.c.b16 %v1604, %v1602
    %v2463 = vpack.c.b16 %v1607, %v1605
    %v2464 = vpack.c.b16 %v1608, %v1606
    %v2465 = vpack.c.b16 %v1611, %v1609
    %v2466 = vpack.c.b16 %v1612, %v1610
    %v2467 = vpack.c.b16 %v1615, %v1613
    %v2468 = vpack.c.b16 %v1616, %v1614
    %v2469 = vpack.c.b16 %v1619, %v1617
    %v2470 = vpack.c.b16 %v1620, %v1618
    %v2471 = vpack.c.b16 %v1623, %v1621
    %v2472 = vpack.c.b16 %v1624, %v1622
    %v2473 = vpack.c.b16 %v1627, %v1625
    %v2474 = vpack.c.b16 %v1628, %v1626
    %v2475 = vpack.c.b16 %v1631, %v1629
    %v2476 = vpack.c.b16 %v1632, %v1630
    %v2477 = vpack.c.b16 %v1635, %v1633
    %v2478 = vpack.c.b16 %v1636, %v1634
    %v2479 = vpack.c.b16 %v1639, %v1637
    %v2480 = vpack.c.b16 %v1640, %v1638
    %v2481 = vpack.c.b16 %v1643, %v1641
    %v2482 = vpack.c.b16 %v1644, %v1642
    %v2483 = vpack.c.b16 %v1647, %v1645
    %v2484 = vpack.c.b16 %v1648, %v1646
    %v2485 = vpack.c.b16 %v1651, %v1649
    %v2486 = vpack.c.b16 %v1652, %v1650
    %v2487 = vpack.c.b16 %v1655, %v1653
    %v2488 = vpack.c.b16 %v1656, %v1654
    %v2489 = vpack.c.b16 %v1659, %v1657
    %v2490 = vpack.c.b16 %v1660, %v1658
    %v2491 = vpack.c.b16 %v1663, %v1661
    %v2492 = vpack.c.b16 %v1664, %v1662
    %v2493 = vpack.c.b16 %v1667, %v1665
    %v2494 = vpack.c.b16 %v1668, %v1666
    %v2495 = vpack.c.b16 %v1671, %v1669
    %v2496 = vpack.c.b16 %v1672, %v1670
    %v2497 = vpack.c.b16 %v1675, %v1673
    %v2498 = vpack.c.b16 %v1676, %v1674
    %v2499 = vpack.c.b16 %v1679, %v1677
    %v2500 = vpack.c.b16 %v1680, %v1678
    %v2501 = vpack.c.b16 %v1683, %v1681
    %v2502 = vpack.c.b16 %v1684, %v1682
    %v2503 = vpack.c.b16 %v1687, %v1685
    %v2504 = vpack.c.b16 %v1688, %v1686
    %v2505 = vpack.c.b16 %v1691, %v1689
    %v2506 = vpack.c.b16 %v1692, %v1690
    %v2507 = vpack.c.b16 %v1695, %v1693
    %v2508 = vpack.c.b16 %v1696, %v1694
    %v2509 = vpack.c.b16 %v1699, %v1697
    %v2510 = vpack.c.b16 %v1700, %v1698
    %v2511 = vpack.c.b16 %v1703, %v1701
    %v2512 = vpack.c.b16 %v1704, %v1702
    %v2513 = vpack.c.b16 %v1707, %v1705
    %v2514 = vpack.c.b16 %v1708, %v1706
    %v2515 = vpack.c.b16 %v1711, %v1709
    %v2516 = vpack.c.b16 %v1712, %v1710
    %v2517 = vpack.c.b16 %v1715, %v1713
    %v2518 = vpack.c.b16 %v1716, %v1714
    %v2519 = vpack.c.b16 %v1719, %v1717
    %v2520 = vpack.c.b16 %v1720, %v1718
    %v2521 = vpack.c.b16 %v1723, %v1721
    %v2522 = vpack.c.b16 %v1724, %v1722
    %v2523 = vpack.c.b16 %v1727, %v1725
    %v2524 = vpack.c.b16 %v1728, %v1726
    %v2525 = vpack.c.b16 %v1731, %v1729
    %v2526 = vpack.c.b16 %v1732, %v1730
    %v2527 = vpack.c.b16 %v1735, %v1733
    %v2528 = vpack.c.b16 %v1736, %v1734
    %v2529 = vpack.c.b16 %v1739, %v1737
    %v2530 = vpack.c.b16 %v1740, %v1738
    %v2531 = vpack.c.b16 %v1743, %v1741
    %v2532 = vpack.c.b16 %v1744, %v1742
    %v2533 = vpack.c.b16 %v1747, %v1745
    %v2534 = vpack.c.b16 %v1748, %v1746
    %v2535 = vpack.c.b16 %v1751, %v1749
    %v2536 = vpack.c.b16 %v1752, %v1750
    %v2537 = vpack.c.b16 %v1755, %v1753
    %v2538 = vpack.c.b16 %v1756, %v1754
    %v2539 = vpack.c.b16 %v1759, %v1757
    %v2540 = vpack.c.b16 %v1760, %v1758
    %v2541 = vpack.c.b16 %v1763, %v1761
    %v2542 = vpack.c.b16 %v1764, %v1762
    %v2543 = vpack.c.b16 %v1767, %v1765
    %v2544 = vpack.c.b16 %v1768, %v1766
    %v2545 = vpack.c.b16 %v1771, %v1769
    %v2546 = vpack.c.b16 %v1772, %v1770
    %v2547 = vpack.c.b16 %v1775, %v1773
    %v2548 = vpack.c.b16 %v1776, %v1774
    %v2549 = vpack.c.b16 %v1779, %v1777
    %v2550 = vpack.c.b16 %v1780, %v1778
    %v2551 = vpack.c.b16 %v1783, %v1781
    %v2552 = vpack.c.b16 %v1784, %v1782
    %v2553 = vpack.c.b16 %v1787, %v1785
    %v2554 = vpack.c.b16 %v1788, %v1786
    %v2555 = vpack.c.b16 %v1791, %v1789
    %v2556 = vpack.c.b16 %v1792, %v1790
    %v2557 = vpack.c.b16 %v1795, %v1793
    %v2558 = vpack.c.b16 %v1796, %v1794
    %v2559 = vpack.c.b16 %v1799, %v1797
    %v2560 = vpack.c.b16 %v1800, %v1798
    %v2561 = vpack.c.b16 %v1803, %v1801
    %v2562 = vpack.c.b16 %v1804, %v1802
    %v2563 = vpack.c.b16 %v1807, %v1805
    %v2564 = vpack.c.b16 %v1808, %v1806
    %v2565 = vpack.c.b16 %v1811, %v1809
    %v2566 = vpack.c.b16 %v1812, %v1810
    %v2567 = vpack.c.b16 %v1815, %v1813
    %v2568 = vpack.c.b16 %v1816, %v1814
    %v2569 = vpack.c.b16 %v1819, %v1817
    %v2570 = vpack.c.b16 %v1820, %v1818
    %v2571 = vpack.c.b16 %v1823, %v1821
    %v2572 = vpack.c.b16 %v1824, %v1822
    %v2573 = vpack.c.b16 %v1827, %v1825
    %v2574 = vpack.c.b16 %v1828, %v1826
    %v2575 = vpack.c.b16 %v1831, %v1829
    %v2576 = vpack.c.b16 %v1832, %v1830
    %v2577 = vpack.c.b16 %v1835, %v1833
    %v2578 = vpack.c.b16 %v1836, %v1834
    %v2579 = vpack.c.b16 %v1839, %v1837
    %v2580 = vpack.c.b16 %v1840, %v1838
    %v2581 = vpack.c.b16 %v1843, %v1841
    %v2582 = vpack.c.b16 %v1844, %v1842
    %v2583 = vpack.c.b16 %v1847, %v1845
    %v2584 = vpack.c.b16 %v1848, %v1846
    %v2585 = vpack.c.b16 %v1851, %v1849
    %v2586 = vpack.c.b16 %v1852, %v1850
    %v2587 = vpack.c.b16 %v1855, %v1853
    %v2588 = vpack.c.b16 %v1856, %v1854
    %v2589 = vpack.c.b16 %v1859, %v1857
    %v2590 = vpack.c.b16 %v1860, %v1858
    %v2591 = vpack.c.b16 %v1863, %v1861
    %v2592 = vpack.c.b16 %v1864, %v1862
    %v2593 = vpack.c.b16 %v1867, %v1865
    %v2594 = vpack.c.b16 %v1868, %v1866
    %v2595 = vpack.c.b16 %v1871, %v1869
    %v2596 = vpack.c.b16 %v1872, %v1870
    %v2597 = vpack.c.b16 %v1875, %v1873
    %v2598 = vpack.c.b16 %v1876, %v1874
    %v2599 = vpack.c.b16 %v1879, %v1877
    %v2600 = vpack.c.b16 %v1880, %v1878
    %v2601 = vpack.c.b16 %v1883, %v1881
    %v2602 = vpack.c.b16 %v1884, %v1882
    %v2603 = vpack.c.b16 %v1887, %v1885
    %v2604 = vpack.c.b16 %v1888, %v1886
    %v2605 = vpack.c.b16 %v1891, %v1889
    %v2606 = vpack.c.b16 %v1892, %v1890
    %v2607 = vpack.c.b16 %v1895, %v1893
    %v2608 = vpack.c.b16 %v1896, %v1894
    %v2609 = vpack.c.b16 %v1899, %v1897
    %v2610 = vpack.c.b16 %v1900, %v1898
    %v2611 = vpack.c.b16 %v1903, %v1901
    %v2612 = vpack.c.b16 %v1904, %v1902
    %v2613 = vpack.c.b16 %v1907, %v1905
    %v2614 = vpack.c.b16 %v1908, %v1906
    %v2615 = vpack.c.b16 %v1911, %v1909
    %v2616 = vpack.c.b16 %v1912, %v1910
    %v2617 = vpack.c.b16 %v1915, %v1913
    %v2618 = vpack.c.b16 %v1916, %v1914
    %v2619 = vpack.c.b16 %v1919, %v1917
    %v2620 = vpack.c.b16 %v1920, %v1918
    %v2621 = vpack.c.b16 %v1923, %v1921
    %v2622 = vpack.c.b16 %v1924, %v1922
    %v2623 = vpack.c.b16 %v1927, %v1925
    %v2624 = vpack.c.b16 %v1928, %v1926
    %v2625 = vpack.c.b16 %v1931, %v1929
    %v2626 = vpack.c.b16 %v1932, %v1930
    %v2627 = vpack.c.b16 %v1935, %v1933
    %v2628 = vpack.c.b16 %v1936, %v1934
    %v2629 = vpack.c.b16 %v1939, %v1937
    %v2630 = vpack.c.b16 %v1940, %v1938
    %v2631 = vpack.c.b16 %v1943, %v1941
    %v2632 = vpack.c.b16 %v1944, %v1942
    %v2633 = vpack.c.b16 %v1947, %v1945
    %v2634 = vpack.c.b16 %v1948, %v1946
    %v2635 = vpack.c.b16 %v1951, %v1949
    %v2636 = vpack.c.b16 %v1952, %v1950
    %v2637 = vpack.c.b16 %v1955, %v1953
    %v2638 = vpack.c.b16 %v1956, %v1954
    %v2639 = vpack.c.b16 %v1959, %v1957
    %v2640 = vpack.c.b16 %v1960, %v1958
    %v2641 = vpack.c.b16 %v1963, %v1961
    %v2642 = vpack.c.b16 %v1964, %v1962
    %v2643 = vpack.c.b16 %v1967, %v1965
    %v2644 = vpack.c.b16 %v1968, %v1966
    %v2645 = vpack.c.b16 %v1971, %v1969
    %v2646 = vpack.c.b16 %v1972, %v1970
    %v2647 = vpack.c.b16 %v1975, %v1973
    %v2648 = vpack.c.b16 %v1976, %v1974
    %v2649 = vpack.c.b16 %v1979, %v1977
    %v2650 = vpack.c.b16 %v1980, %v1978
    %v2651 = vpack.c.b16 %v1983, %v1981
    %v2652 = vpack.c.b16 %v1984, %v1982
    %v2653 = vpack.c.b16 %v1987, %v1985
    %v2654 = vpack.c.b16 %v1988, %v1986
    %v2655 = vpack.c.b16 %v1991, %v1989
    %v2656 = vpack.c.b16 %v1992, %v1990
    %v2657 = vpack.c.b16 %v1995, %v1993
    %v2658 = vpack.c.b16 %v1996, %v1994
    %v2659 = vpack.c.b16 %v1999, %v1997
    %v2660 = vpack.c.b16 %v2000, %v1998
    %v2661 = vpack.c.b16 %v2003, %v2001
    %v2662 = vpack.c.b16 %v2004, %v2002
    %v2663 = vpack.c.b16 %v2007, %v2005
    %v2664 = vpack.c.b16 %v2008, %v2006
    %v2665 = vpack.c.b16 %v2011, %v2009
    %v2666 = vpack.c.b16 %v2012, %v2010
    %v2667 = vpack.c.b16 %v2015, %v2013
    %v2668 = vpack.c.b16 %v2016, %v2014
    %v2669 = vpack.c.b16 %v2019, %v2017
    %v2670 = vpack.c.b16 %v2020, %v2018
    %v2671 = vpack.c.b16 %v2023, %v2021
    %v2672 = vpack.c.b16 %v2024, %v2022
    %v2673 = vpack.c.b16 %v2027, %v2025
    %v2674 = vpack.c.b16 %v2028, %v2026
    %v2675 = vpack.c.b16 %v2031, %v2029
    %v2676 = vpack.c.b16 %v2032, %v2030
    %v2677 = vpack.c.b16 %v2035, %v2033
    %v2678 = vpack.c.b16 %v2036, %v2034
    %v2679 = vpack.c.b16 %v2039, %v2037
    %v2680 = vpack.c.b16 %v2040, %v2038
    %v2681 = vpack.c.b16 %v2043, %v2041
    %v2682 = vpack.c.b16 %v2044, %v2042
    %v2683 = vpack.c.b16 %v2047, %v2045
    %v2684 = vpack.c.b16 %v2048, %v2046
    %v2685 = vpack.c.b16 %v2051, %v2049
    %v2686 = vpack.c.b16 %v2052, %v2050
    %v2687 = vpack.c.b16 %v2055, %v2053
    %v2688 = vpack.c.b16 %v2056, %v2054
    %v2689 = vpack.c.b16 %v2059, %v2057
    %v2690 = vpack.c.b16 %v2060, %v2058
    %v2691 = vpack.c.b16 %v2063, %v2061
    %v2692 = vpack.c.b16 %v2064, %v2062
    %v2693 = vpack.c.b16 %v2067, %v2065
    %v2694 = vpack.c.b16 %v2068, %v2066
    %v2695 = vpack.c.b16 %v2071, %v2069
    %v2696 = vpack.c.b16 %v2072, %v2070
    %v2697 = vpack.c.b16 %v2075, %v2073
    %v2698 = vpack.c.b16 %v2076, %v2074
    %v2699 = vpack.c.b16 %v2079, %v2077
    %v2700 = vpack.c.b16 %v2080, %v2078
    %v2701 = vpack.c.b16 %v2083, %v2081
    %v2702 = vpack.c.b16 %v2084, %v2082
    %v2703 = vpack.c.b16 %v2087, %v2085
    %v2704 = vpack.c.b16 %v2088, %v2086
    %v2705 = vpack.c.b16 %v2091, %v2089
    %v2706 = vpack.c.b16 %v2092, %v2090
    %v2707 = vpack.c.b16 %v2095, %v2093
    %v2708 = vpack.c.b16 %v2096, %v2094
    %v2709 = vpack.c.b16 %v2099, %v2097
    %v2710 = vpack.c.b16 %v2100, %v2098
    %v2711 = vpack.c.b16 %v2103, %v2101
    %v2712 = vpack.c.b16 %v2104, %v2102
    %v2713 = vpack.c.b16 %v2107, %v2105
    %v2714 = vpack.c.b16 %v2108, %v2106
    %v2715 = vpack.c.b16 %v2111, %v2109
    %v2716 = vpack.c.b16 %v2112, %v2110
    %v2717 = vpack.c.b16 %v2115, %v2113
    %v2718 = vpack.c.b16 %v2116, %v2114
    %v2719 = vpack.c.b16 %v2119, %v2117
    %v2720 = vpack.c.b16 %v2120, %v2118
    %v2721 = vpack.c.b16 %v2123, %v2121
    %v2722 = vpack.c.b16 %v2124, %v2122
    %v2723 = vpack.c.b16 %v2127, %v2125
    %v2724 = vpack.c.b16 %v2128, %v2126
    %v2725 = vpack.c.b16 %v2131, %v2129
    %v2726 = vpack.c.b16 %v2132, %v2130
    %v2727 = vpack.c.b16 %v2135, %v2133
    %v2728 = vpack.c.b16 %v2136, %v2134
    %v2729 = vpack.c.b16 %v2139, %v2137
    %v2730 = vpack.c.b16 %v2140, %v2138
    %v2731 = vpack.c.b16 %v2143, %v2141
    %v2732 = vpack.c.b16 %v2144, %v2142
    %v2733 = vpack.c.b16 %v2147, %v2145
    %v2734 = vpack.c.b16 %v2148, %v2146
    %v2735 = vpack.c.b16 %v2151, %v2149
    %v2736 = vpack.c.b16 %v2152, %v2150
    %v2737 = vpack.c.b16 %v2155, %v2153
    %v2738 = vpack.c.b16 %v2156, %v2154
    %v2739 = vpack.c.b16 %v2159, %v2157
    %v2740 = vpack.c.b16 %v2160, %v2158
    %v2741 = vpack.c.b16 %v2163, %v2161
    %v2742 = vpack.c.b16 %v2164, %v2162
    %v2743 = vpack.c.b16 %v2167, %v2165
    %v2744 = vpack.c.b16 %v2168, %v2166
    %v2745 = vpack.c.b16 %v2171, %v2169
    %v2746 = vpack.c.b16 %v2172, %v2170
    %v2747 = vpack.c.b16 %v2175, %v2173
    %v2748 = vpack.c.b16 %v2176, %v2174
    %v2749 = vpack.c.b16 %v2179, %v2177
    %v2750 = vpack.c.b16 %v2180, %v2178
    %v2751 = vpack.c.b16 %v2183, %v2181
    %v2752 = vpack.c.b16 %v2184, %v2182
    %v2753 = vpack.c.b16 %v2187, %v2185
    %v2754 = vpack.c.b16 %v2188, %v2186
    %v2755 = vpack.c.b16 %v2191, %v2189
    %v2756 = vpack.c.b16 %v2192, %v2190
    %v2757 = vpack.c.b16 %v2195, %v2193
    %v2758 = vpack.c.b16 %v2196, %v2194
    %v2759 = vpack.c.b16 %v2199, %v2197
    %v2760 = vpack.c.b16 %v2200, %v2198
    %v2761 = vpack.c.b16 %v2203, %v2201
    %v2762 = vpack.c.b16 %v2204, %v2202
    %v2763 = vpack.c.b16 %v2207, %v2205
    %v2764 = vpack.c.b16 %v2208, %v2206
    %v2765 = vpack.c.b16 %v2211, %v2209
    %v2766 = vpack.c.b16 %v2212, %v2210
    %v2767 = vpack.c.b16 %v2215, %v2213
    %v2768 = vpack.c.b16 %v2216, %v2214
    %v2769 = vpack.c.b16 %v2219, %v2217
    %v2770 = vpack.c.b16 %v2220, %v2218
    %v2771 = vpack.c.b16 %v2223, %v2221
    %v2772 = vpack.c.b16 %v2224, %v2222
    %v2773 = vpack.c.b16 %v2227, %v2225
    %v2774 = vpack.c.b16 %v2228, %v2226
    %v2775 = vpack.c.b16 %v2231, %v2229
    %v2776 = vpack.c.b16 %v2232, %v2230
    %v2777 = vpack.c.b16 %v2235, %v2233
    %v2778 = vpack.c.b16 %v2236, %v2234
    %v2779 = vpack.c.b16 %v2239, %v2237
    %v2780 = vpack.c.b16 %v2240, %v2238
    %v2781 = vpack.c.b16 %v2243, %v2241
    %v2782 = vpack.c.b16 %v2244, %v2242
    %v2783 = vpack.c.b16 %v2247, %v2245
    %v2784 = vpack.c.b16 %v2248, %v2246
    %v2785 = vpack.c.b16 %v2251, %v2249
    %v2786 = vpack.c.b16 %v2252, %v2250
    %v2787 = vpack.c.b16 %v2255, %v2253
    %v2788 = vpack.c.b16 %v2256, %v2254
    %v2789 = vpack.c.b16 %v2259, %v2257
    %v2790 = vpack.c.b16 %v2260, %v2258
    %v2791 = vpack.c.b16 %v2263, %v2261
    %v2792 = vpack.c.b16 %v2264, %v2262
    %v2793 = vpack.c.b16 %v2267, %v2265
    %v2794 = vpack.c.b16 %v2268, %v2266
    %v2795 = vpack.c.b16 %v2271, %v2269
    %v2796 = vpack.c.b16 %v2272, %v2270
    %v2797 = vpack.c.b16 %v2275, %v2273
    %v2798 = vpack.c.b16 %v2276, %v2274
    %v2799 = vpack.c.b16 %v2279, %v2277
    %v2800 = vpack.c.b16 %v2280, %v2278
    %v2801 = vpack.c.b16 %v2283, %v2281
    %v2802 = vpack.c.b16 %v2284, %v2282
    %v2803 = vpack.c.b16 %v2287, %v2285
    %v2804 = vpack.c.b16 %v2288, %v2286
    %v2805 = vpack.c.b16 %v2291, %v2289
    %v2806 = vpack.c.b16 %v2292, %v2290
    %v2807 = vpack.c.b16 %v2295, %v2293
    %v2808 = vpack.c.b16 %v2296, %v2294
    %3321 = vmatprep.subr.bf16.mxu0 %v2312
    %3322 = vmatpush1.bf16.msra.mxu0 %v2311
    %3323 = vmatprep.subr.bf16.mxu0 %v2310
    %3324 = vmatpush1.bf16.msra.mxu0 %v2309
    %3325 = vmatprep.subr.bf16.mxu0 %v2308
    %3326 = vmatpush1.bf16.msra.mxu0 %v2307
    %3327 = vmatprep.subr.bf16.mxu0 %v2306
    %3328 = vmatpush1.bf16.msra.mxu0 %v2305
    %3329 = vmatprep.subr.bf16.mxu0 %v2304
    %3330 = vmatpush1.bf16.msra.mxu0 %v2303
    %3331 = vmatprep.subr.bf16.mxu0 %v2302
    %3332 = vmatpush1.bf16.msra.mxu0 %v2301
    %3333 = vmatprep.subr.bf16.mxu0 %v2300
    %3334 = vmatpush1.bf16.msra.mxu0 %v2299
    %3335 = vmatprep.subr.bf16.mxu0 %v2298
    %3336 = vmatpush1.bf16.msra.mxu0 %v2297
    %3337 = vmatprep.subr.bf16.mxu0 %v2328
    %3338 = vmatpush2.bf16.msra.mxu0 %v2327
    %3339 = vmatprep.subr.bf16.mxu0 %v2326
    %3340 = vmatpush2.bf16.msra.mxu0 %v2325
    %3341 = vmatprep.subr.bf16.mxu0 %v2324
    %3342 = vmatpush2.bf16.msra.mxu0 %v2323
    %3343 = vmatprep.subr.bf16.mxu0 %v2322
    %3344 = vmatpush2.bf16.msra.mxu0 %v2321
    %3345 = vmatprep.subr.bf16.mxu0 %v2320
    %3346 = vmatpush2.bf16.msra.mxu0 %v2319
    %3347 = vmatprep.subr.bf16.mxu0 %v2318
    %3348 = vmatpush2.bf16.msra.mxu0 %v2317
    %3349 = vmatprep.subr.bf16.mxu0 %v2316
    %3350 = vmatpush2.bf16.msra.mxu0 %v2315
    %3351 = vmatprep.subr.bf16.mxu0 %v2314
    %3352 = vmatpush2.bf16.msra.mxu0 %v2313
    %3353 = vmatprep.mubr.bf16.mxu0 %v206
    %3354 = vmatmul.mubr.bf16.gmra.mxu0 %v205
    %v3355 = vpop.f32.mrf.mxu0
    %v3356 = vadd.f32 %v754, %v3355
    %v3357 = vpop.f32.mrf.mxu0
    %v3358 = vadd.f32 %v758, %v3357
    %v3359 = vpop.f32.mrf.mxu0
    %v3360 = vpop.f32.mrf.mxu0
    %3361 = vdwg.mxu0
    %3362 = vmatprep.subr.bf16.mxu0 %v2344
    %3363 = vmatpush1.bf16.msra.mxu0 %v2343
    %3364 = vmatprep.subr.bf16.mxu0 %v2342
    %3365 = vmatpush1.bf16.msra.mxu0 %v2341
    %3366 = vmatprep.subr.bf16.mxu0 %v2340
    %3367 = vmatpush1.bf16.msra.mxu0 %v2339
    %3368 = vmatprep.subr.bf16.mxu0 %v2338
    %3369 = vmatpush1.bf16.msra.mxu0 %v2337
    %3370 = vmatprep.subr.bf16.mxu0 %v2336
    %3371 = vmatpush1.bf16.msra.mxu0 %v2335
    %3372 = vmatprep.subr.bf16.mxu0 %v2334
    %3373 = vmatpush1.bf16.msra.mxu0 %v2333
    %3374 = vmatprep.subr.bf16.mxu0 %v2332
    %3375 = vmatpush1.bf16.msra.mxu0 %v2331
    %3376 = vmatprep.subr.bf16.mxu0 %v2330
    %3377 = vmatpush1.bf16.msra.mxu0 %v2329
    %3378 = vmatprep.subr.bf16.mxu0 %v2360
    %3379 = vmatpush2.bf16.msra.mxu0 %v2359
    %3380 = vmatprep.subr.bf16.mxu0 %v2358
    %3381 = vmatpush2.bf16.msra.mxu0 %v2357
    %3382 = vmatprep.subr.bf16.mxu0 %v2356
    %3383 = vmatpush2.bf16.msra.mxu0 %v2355
    %3384 = vmatprep.subr.bf16.mxu0 %v2354
    %3385 = vmatpush2.bf16.msra.mxu0 %v2353
    %3386 = vmatprep.subr.bf16.mxu0 %v2352
    %3387 = vmatpush2.bf16.msra.mxu0 %v2351
    %3388 = vmatprep.subr.bf16.mxu0 %v2350
    %3389 = vmatpush2.bf16.msra.mxu0 %v2349
    %3390 = vmatprep.subr.bf16.mxu0 %v2348
    %3391 = vmatpush2.bf16.msra.mxu0 %v2347
    %3392 = vmatprep.subr.bf16.mxu0 %v2346
    %3393 = vmatpush2.bf16.msra.mxu0 %v2345
    %3394 = vmatprep.mubr.bf16.mxu0 %v208
    %3395 = vmatmul.mubr.bf16.gmra.mxu0 %v207
    %v3396 = vpop.f32.mrf.mxu0
    %v3397 = vadd.f32 %v3356, %v3396
    %v3398 = vpop.f32.mrf.mxu0
    %v3399 = vadd.f32 %v3358, %v3398
    %v3400 = vpop.f32.mrf.mxu0
    %v3401 = vpop.f32.mrf.mxu0
    %3402 = vdwg.mxu0
    %3403 = vmatprep.subr.bf16.mxu0 %v2376
    %3404 = vmatpush1.bf16.msra.mxu0 %v2375
    %3405 = vmatprep.subr.bf16.mxu0 %v2374
    %3406 = vmatpush1.bf16.msra.mxu0 %v2373
    %3407 = vmatprep.subr.bf16.mxu0 %v2372
    %3408 = vmatpush1.bf16.msra.mxu0 %v2371
    %3409 = vmatprep.subr.bf16.mxu0 %v2370
    %3410 = vmatpush1.bf16.msra.mxu0 %v2369
    %3411 = vmatprep.subr.bf16.mxu0 %v2368
    %3412 = vmatpush1.bf16.msra.mxu0 %v2367
    %3413 = vmatprep.subr.bf16.mxu0 %v2366
    %3414 = vmatpush1.bf16.msra.mxu0 %v2365
    %3415 = vmatprep.subr.bf16.mxu0 %v2364
    %3416 = vmatpush1.bf16.msra.mxu0 %v2363
    %3417 = vmatprep.subr.bf16.mxu0 %v2362
    %3418 = vmatpush1.bf16.msra.mxu0 %v2361
    %3419 = vmatprep.subr.bf16.mxu0 %v2392
    %3420 = vmatpush2.bf16.msra.mxu0 %v2391
    %3421 = vmatprep.subr.bf16.mxu0 %v2390
    %3422 = vmatpush2.bf16.msra.mxu0 %v2389
    %3423 = vmatprep.subr.bf16.mxu0 %v2388
    %3424 = vmatpush2.bf16.msra.mxu0 %v2387
    %3425 = vmatprep.subr.bf16.mxu0 %v2386
    %3426 = vmatpush2.bf16.msra.mxu0 %v2385
    %3427 = vmatprep.subr.bf16.mxu0 %v2384
    %3428 = vmatpush2.bf16.msra.mxu0 %v2383
    %3429 = vmatprep.subr.bf16.mxu0 %v2382
    %3430 = vmatpush2.bf16.msra.mxu0 %v2381
    %3431 = vmatprep.subr.bf16.mxu0 %v2380
    %3432 = vmatpush2.bf16.msra.mxu0 %v2379
    %3433 = vmatprep.subr.bf16.mxu0 %v2378
    %3434 = vmatpush2.bf16.msra.mxu0 %v2377
    %3435 = vmatprep.mubr.bf16.mxu0 %v210
    %3436 = vmatmul.mubr.bf16.gmra.mxu0 %v209
    %v3437 = vpop.f32.mrf.mxu0
    %v3438 = vadd.f32 %v3397, %v3437
    %v3439 = vpop.f32.mrf.mxu0
    %v3440 = vadd.f32 %v3399, %v3439
    %v3441 = vpop.f32.mrf.mxu0
    %v3442 = vpop.f32.mrf.mxu0
    %3443 = vdwg.mxu0
    %3444 = vmatprep.subr.bf16.mxu0 %v2408
    %3445 = vmatpush1.bf16.msra.mxu0 %v2407
    %3446 = vmatprep.subr.bf16.mxu0 %v2406
    %3447 = vmatpush1.bf16.msra.mxu0 %v2405
    %3448 = vmatprep.subr.bf16.mxu0 %v2404
    %3449 = vmatpush1.bf16.msra.mxu0 %v2403
    %3450 = vmatprep.subr.bf16.mxu0 %v2402
    %3451 = vmatpush1.bf16.msra.mxu0 %v2401
    %3452 = vmatprep.subr.bf16.mxu0 %v2400
    %3453 = vmatpush1.bf16.msra.mxu0 %v2399
    %3454 = vmatprep.subr.bf16.mxu0 %v2398
    %3455 = vmatpush1.bf16.msra.mxu0 %v2397
    %3456 = vmatprep.subr.bf16.mxu0 %v2396
    %3457 = vmatpush1.bf16.msra.mxu0 %v2395
    %3458 = vmatprep.subr.bf16.mxu0 %v2394
    %3459 = vmatpush1.bf16.msra.mxu0 %v2393
    %3460 = vmatprep.subr.bf16.mxu0 %v2424
    %3461 = vmatpush2.bf16.msra.mxu0 %v2423
    %3462 = vmatprep.subr.bf16.mxu0 %v2422
    %3463 = vmatpush2.bf16.msra.mxu0 %v2421
    %3464 = vmatprep.subr.bf16.mxu0 %v2420
    %3465 = vmatpush2.bf16.msra.mxu0 %v2419
    %3466 = vmatprep.subr.bf16.mxu0 %v2418
    %3467 = vmatpush2.bf16.msra.mxu0 %v2417
    %3468 = vmatprep.subr.bf16.mxu0 %v2416
    %3469 = vmatpush2.bf16.msra.mxu0 %v2415
    %3470 = vmatprep.subr.bf16.mxu0 %v2414
    %3471 = vmatpush2.bf16.msra.mxu0 %v2413
    %3472 = vmatprep.subr.bf16.mxu0 %v2412
    %3473 = vmatpush2.bf16.msra.mxu0 %v2411
    %3474 = vmatprep.subr.bf16.mxu0 %v2410
    %3475 = vmatpush2.bf16.msra.mxu0 %v2409
    %3476 = vmatprep.mubr.bf16.mxu0 %v212
    %3477 = vmatmul.mubr.bf16.gmra.mxu0 %v211
    %v3478 = vpop.f32.mrf.mxu0
    %v3479 = vadd.f32 %v3438, %v3478
    %v3480 = vpop.f32.mrf.mxu0
    %v3481 = vadd.f32 %v3440, %v3480
    %v3482 = vpop.f32.mrf.mxu0
    %v3483 = vpop.f32.mrf.mxu0
    %3484 = vdwg.mxu0
    %3485 = vmatprep.subr.bf16.mxu0 %v2440
    %3486 = vmatpush1.bf16.msra.mxu0 %v2439
    %3487 = vmatprep.subr.bf16.mxu0 %v2438
    %3488 = vmatpush1.bf16.msra.mxu0 %v2437
    %3489 = vmatprep.subr.bf16.mxu0 %v2436
    %3490 = vmatpush1.bf16.msra.mxu0 %v2435
    %3491 = vmatprep.subr.bf16.mxu0 %v2434
    %3492 = vmatpush1.bf16.msra.mxu0 %v2433
    %3493 = vmatprep.subr.bf16.mxu0 %v2432
    %3494 = vmatpush1.bf16.msra.mxu0 %v2431
    %3495 = vmatprep.subr.bf16.mxu0 %v2430
    %3496 = vmatpush1.bf16.msra.mxu0 %v2429
    %3497 = vmatprep.subr.bf16.mxu0 %v2428
    %3498 = vmatpush1.bf16.msra.mxu0 %v2427
    %3499 = vmatprep.subr.bf16.mxu0 %v2426
    %3500 = vmatpush1.bf16.msra.mxu0 %v2425
    %3501 = vmatprep.subr.bf16.mxu0 %v2456
    %3502 = vmatpush2.bf16.msra.mxu0 %v2455
    %3503 = vmatprep.subr.bf16.mxu0 %v2454
    %3504 = vmatpush2.bf16.msra.mxu0 %v2453
    %3505 = vmatprep.subr.bf16.mxu0 %v2452
    %3506 = vmatpush2.bf16.msra.mxu0 %v2451
    %3507 = vmatprep.subr.bf16.mxu0 %v2450
    %3508 = vmatpush2.bf16.msra.mxu0 %v2449
    %3509 = vmatprep.subr.bf16.mxu0 %v2448
    %3510 = vmatpush2.bf16.msra.mxu0 %v2447
    %3511 = vmatprep.subr.bf16.mxu0 %v2446
    %3512 = vmatpush2.bf16.msra.mxu0 %v2445
    %3513 = vmatprep.subr.bf16.mxu0 %v2444
    %3514 = vmatpush2.bf16.msra.mxu0 %v2443
    %3515 = vmatprep.subr.bf16.mxu0 %v2442
    %3516 = vmatpush2.bf16.msra.mxu0 %v2441
    %3517 = vmatprep.mubr.bf16.mxu0 %v214
    %3518 = vmatmul.mubr.bf16.gmra.mxu0 %v213
    %v3519 = vpop.f32.mrf.mxu0
    %v3520 = vadd.f32 %v3479, %v3519
    %v3521 = vpop.f32.mrf.mxu0
    %v3522 = vadd.f32 %v3481, %v3521
    %v3523 = vpop.f32.mrf.mxu0
    %v3524 = vpop.f32.mrf.mxu0
    %3525 = vdwg.mxu0
    %3526 = vmatprep.subr.bf16.mxu0 %v2472
    %3527 = vmatpush1.bf16.msra.mxu0 %v2471
    %3528 = vmatprep.subr.bf16.mxu0 %v2470
    %3529 = vmatpush1.bf16.msra.mxu0 %v2469
    %3530 = vmatprep.subr.bf16.mxu0 %v2468
    %3531 = vmatpush1.bf16.msra.mxu0 %v2467
    %3532 = vmatprep.subr.bf16.mxu0 %v2466
    %3533 = vmatpush1.bf16.msra.mxu0 %v2465
    %3534 = vmatprep.subr.bf16.mxu0 %v2464
    %3535 = vmatpush1.bf16.msra.mxu0 %v2463
    %3536 = vmatprep.subr.bf16.mxu0 %v2462
    %3537 = vmatpush1.bf16.msra.mxu0 %v2461
    %3538 = vmatprep.subr.bf16.mxu0 %v2460
    %3539 = vmatpush1.bf16.msra.mxu0 %v2459
    %3540 = vmatprep.subr.bf16.mxu0 %v2458
    %3541 = vmatpush1.bf16.msra.mxu0 %v2457
    %3542 = vmatprep.subr.bf16.mxu0 %v2488
    %3543 = vmatpush2.bf16.msra.mxu0 %v2487
    %3544 = vmatprep.subr.bf16.mxu0 %v2486
    %3545 = vmatpush2.bf16.msra.mxu0 %v2485
    %3546 = vmatprep.subr.bf16.mxu0 %v2484
    %3547 = vmatpush2.bf16.msra.mxu0 %v2483
    %3548 = vmatprep.subr.bf16.mxu0 %v2482
    %3549 = vmatpush2.bf16.msra.mxu0 %v2481
    %3550 = vmatprep.subr.bf16.mxu0 %v2480
    %3551 = vmatpush2.bf16.msra.mxu0 %v2479
    %3552 = vmatprep.subr.bf16.mxu0 %v2478
    %3553 = vmatpush2.bf16.msra.mxu0 %v2477
    %3554 = vmatprep.subr.bf16.mxu0 %v2476
    %3555 = vmatpush2.bf16.msra.mxu0 %v2475
    %3556 = vmatprep.subr.bf16.mxu0 %v2474
    %3557 = vmatpush2.bf16.msra.mxu0 %v2473
    %3558 = vmatprep.mubr.bf16.mxu0 %v216
    %3559 = vmatmul.mubr.bf16.gmra.mxu0 %v215
    %v3560 = vpop.f32.mrf.mxu0
    %v3561 = vadd.f32 %v3520, %v3560
    %v3562 = vpop.f32.mrf.mxu0
    %v3563 = vadd.f32 %v3522, %v3562
    %v3564 = vpop.f32.mrf.mxu0
    %v3565 = vpop.f32.mrf.mxu0
    %3566 = vdwg.mxu0
    %3567 = vmatprep.subr.bf16.mxu0 %v2504
    %3568 = vmatpush1.bf16.msra.mxu0 %v2503
    %3569 = vmatprep.subr.bf16.mxu0 %v2502
    %3570 = vmatpush1.bf16.msra.mxu0 %v2501
    %3571 = vmatprep.subr.bf16.mxu0 %v2500
    %3572 = vmatpush1.bf16.msra.mxu0 %v2499
    %3573 = vmatprep.subr.bf16.mxu0 %v2498
    %3574 = vmatpush1.bf16.msra.mxu0 %v2497
    %3575 = vmatprep.subr.bf16.mxu0 %v2496
    %3576 = vmatpush1.bf16.msra.mxu0 %v2495
    %3577 = vmatprep.subr.bf16.mxu0 %v2494
    %3578 = vmatpush1.bf16.msra.mxu0 %v2493
    %3579 = vmatprep.subr.bf16.mxu0 %v2492
    %3580 = vmatpush1.bf16.msra.mxu0 %v2491
    %3581 = vmatprep.subr.bf16.mxu0 %v2490
    %3582 = vmatpush1.bf16.msra.mxu0 %v2489
    %3583 = vmatprep.subr.bf16.mxu0 %v2520
    %3584 = vmatpush2.bf16.msra.mxu0 %v2519
    %3585 = vmatprep.subr.bf16.mxu0 %v2518
    %3586 = vmatpush2.bf16.msra.mxu0 %v2517
    %3587 = vmatprep.subr.bf16.mxu0 %v2516
    %3588 = vmatpush2.bf16.msra.mxu0 %v2515
    %3589 = vmatprep.subr.bf16.mxu0 %v2514
    %3590 = vmatpush2.bf16.msra.mxu0 %v2513
    %3591 = vmatprep.subr.bf16.mxu0 %v2512
    %3592 = vmatpush2.bf16.msra.mxu0 %v2511
    %3593 = vmatprep.subr.bf16.mxu0 %v2510
    %3594 = vmatpush2.bf16.msra.mxu0 %v2509
    %3595 = vmatprep.subr.bf16.mxu0 %v2508
    %3596 = vmatpush2.bf16.msra.mxu0 %v2507
    %3597 = vmatprep.subr.bf16.mxu0 %v2506
    %3598 = vmatpush2.bf16.msra.mxu0 %v2505
    %3599 = vmatprep.mubr.bf16.mxu0 %v218
    %3600 = vmatmul.mubr.bf16.gmra.mxu0 %v217
    %v3601 = vpop.f32.mrf.mxu0
    %v3602 = vadd.f32 %v3561, %v3601
    %v3603 = vpop.f32.mrf.mxu0
    %v3604 = vadd.f32 %v3563, %v3603
    %v3605 = vpop.f32.mrf.mxu0
    %v3606 = vpop.f32.mrf.mxu0
    %3607 = vdwg.mxu0
    %3608 = vmatprep.subr.bf16.mxu0 %v2536
    %3609 = vmatpush1.bf16.msra.mxu0 %v2535
    %3610 = vmatprep.subr.bf16.mxu0 %v2534
    %3611 = vmatpush1.bf16.msra.mxu0 %v2533
    %3612 = vmatprep.subr.bf16.mxu0 %v2532
    %3613 = vmatpush1.bf16.msra.mxu0 %v2531
    %3614 = vmatprep.subr.bf16.mxu0 %v2530
    %3615 = vmatpush1.bf16.msra.mxu0 %v2529
    %3616 = vmatprep.subr.bf16.mxu0 %v2528
    %3617 = vmatpush1.bf16.msra.mxu0 %v2527
    %3618 = vmatprep.subr.bf16.mxu0 %v2526
    %3619 = vmatpush1.bf16.msra.mxu0 %v2525
    %3620 = vmatprep.subr.bf16.mxu0 %v2524
    %3621 = vmatpush1.bf16.msra.mxu0 %v2523
    %3622 = vmatprep.subr.bf16.mxu0 %v2522
    %3623 = vmatpush1.bf16.msra.mxu0 %v2521
    %3624 = vmatprep.subr.bf16.mxu0 %v2552
    %3625 = vmatpush2.bf16.msra.mxu0 %v2551
    %3626 = vmatprep.subr.bf16.mxu0 %v2550
    %3627 = vmatpush2.bf16.msra.mxu0 %v2549
    %3628 = vmatprep.subr.bf16.mxu0 %v2548
    %3629 = vmatpush2.bf16.msra.mxu0 %v2547
    %3630 = vmatprep.subr.bf16.mxu0 %v2546
    %3631 = vmatpush2.bf16.msra.mxu0 %v2545
    %3632 = vmatprep.subr.bf16.mxu0 %v2544
    %3633 = vmatpush2.bf16.msra.mxu0 %v2543
    %3634 = vmatprep.subr.bf16.mxu0 %v2542
    %3635 = vmatpush2.bf16.msra.mxu0 %v2541
    %3636 = vmatprep.subr.bf16.mxu0 %v2540
    %3637 = vmatpush2.bf16.msra.mxu0 %v2539
    %3638 = vmatprep.subr.bf16.mxu0 %v2538
    %3639 = vmatpush2.bf16.msra.mxu0 %v2537
    %3640 = vmatprep.mubr.bf16.mxu0 %v220
    %3641 = vmatmul.mubr.bf16.gmra.mxu0 %v219
    %v3642 = vpop.f32.mrf.mxu0
    %v3643 = vadd.f32 %v3602, %v3642
    %v3644 = vpop.f32.mrf.mxu0
    %v3645 = vadd.f32 %v3604, %v3644
    %v3646 = vpop.f32.mrf.mxu0
    %v3647 = vpop.f32.mrf.mxu0
    %3648 = vdwg.mxu0
    %3649 = vmatprep.subr.bf16.mxu0 %v2568
    %3650 = vmatpush1.bf16.msra.mxu0 %v2567
    %3651 = vmatprep.subr.bf16.mxu0 %v2566
    %3652 = vmatpush1.bf16.msra.mxu0 %v2565
    %3653 = vmatprep.subr.bf16.mxu0 %v2564
    %3654 = vmatpush1.bf16.msra.mxu0 %v2563
    %3655 = vmatprep.subr.bf16.mxu0 %v2562
    %3656 = vmatpush1.bf16.msra.mxu0 %v2561
    %3657 = vmatprep.subr.bf16.mxu0 %v2560
    %3658 = vmatpush1.bf16.msra.mxu0 %v2559
    %3659 = vmatprep.subr.bf16.mxu0 %v2558
    %3660 = vmatpush1.bf16.msra.mxu0 %v2557
    %3661 = vmatprep.subr.bf16.mxu0 %v2556
    %3662 = vmatpush1.bf16.msra.mxu0 %v2555
    %3663 = vmatprep.subr.bf16.mxu0 %v2554
    %3664 = vmatpush1.bf16.msra.mxu0 %v2553
    %3665 = vmatprep.subr.bf16.mxu0 %v2584
    %3666 = vmatpush2.bf16.msra.mxu0 %v2583
    %3667 = vmatprep.subr.bf16.mxu0 %v2582
    %3668 = vmatpush2.bf16.msra.mxu0 %v2581
    %3669 = vmatprep.subr.bf16.mxu0 %v2580
    %3670 = vmatpush2.bf16.msra.mxu0 %v2579
    %3671 = vmatprep.subr.bf16.mxu0 %v2578
    %3672 = vmatpush2.bf16.msra.mxu0 %v2577
    %3673 = vmatprep.subr.bf16.mxu0 %v2576
    %3674 = vmatpush2.bf16.msra.mxu0 %v2575
    %3675 = vmatprep.subr.bf16.mxu0 %v2574
    %3676 = vmatpush2.bf16.msra.mxu0 %v2573
    %3677 = vmatprep.subr.bf16.mxu0 %v2572
    %3678 = vmatpush2.bf16.msra.mxu0 %v2571
    %3679 = vmatprep.subr.bf16.mxu0 %v2570
    %3680 = vmatpush2.bf16.msra.mxu0 %v2569
    %3681 = vmatprep.mubr.bf16.mxu0 %v222
    %3682 = vmatmul.mubr.bf16.gmra.mxu0 %v221
    %v3683 = vpop.f32.mrf.mxu0
    %v3684 = vadd.f32 %v3643, %v3683
    %v3685 = vpop.f32.mrf.mxu0
    %v3686 = vadd.f32 %v3645, %v3685
    %v3687 = vpop.f32.mrf.mxu0
    %v3688 = vpop.f32.mrf.mxu0
    %3689 = vdwg.mxu0
    %3690 = vmatprep.subr.bf16.mxu0 %v2600
    %3691 = vmatpush1.bf16.msra.mxu0 %v2599
    %3692 = vmatprep.subr.bf16.mxu0 %v2598
    %3693 = vmatpush1.bf16.msra.mxu0 %v2597
    %3694 = vmatprep.subr.bf16.mxu0 %v2596
    %3695 = vmatpush1.bf16.msra.mxu0 %v2595
    %3696 = vmatprep.subr.bf16.mxu0 %v2594
    %3697 = vmatpush1.bf16.msra.mxu0 %v2593
    %3698 = vmatprep.subr.bf16.mxu0 %v2592
    %3699 = vmatpush1.bf16.msra.mxu0 %v2591
    %3700 = vmatprep.subr.bf16.mxu0 %v2590
    %3701 = vmatpush1.bf16.msra.mxu0 %v2589
    %3702 = vmatprep.subr.bf16.mxu0 %v2588
    %3703 = vmatpush1.bf16.msra.mxu0 %v2587
    %3704 = vmatprep.subr.bf16.mxu0 %v2586
    %3705 = vmatpush1.bf16.msra.mxu0 %v2585
    %3706 = vmatprep.subr.bf16.mxu0 %v2616
    %3707 = vmatpush2.bf16.msra.mxu0 %v2615
    %3708 = vmatprep.subr.bf16.mxu0 %v2614
    %3709 = vmatpush2.bf16.msra.mxu0 %v2613
    %3710 = vmatprep.subr.bf16.mxu0 %v2612
    %3711 = vmatpush2.bf16.msra.mxu0 %v2611
    %3712 = vmatprep.subr.bf16.mxu0 %v2610
    %3713 = vmatpush2.bf16.msra.mxu0 %v2609
    %3714 = vmatprep.subr.bf16.mxu0 %v2608
    %3715 = vmatpush2.bf16.msra.mxu0 %v2607
    %3716 = vmatprep.subr.bf16.mxu0 %v2606
    %3717 = vmatpush2.bf16.msra.mxu0 %v2605
    %3718 = vmatprep.subr.bf16.mxu0 %v2604
    %3719 = vmatpush2.bf16.msra.mxu0 %v2603
    %3720 = vmatprep.subr.bf16.mxu0 %v2602
    %3721 = vmatpush2.bf16.msra.mxu0 %v2601
    %3722 = vmatprep.mubr.bf16.mxu0 %v224
    %3723 = vmatmul.mubr.bf16.gmra.mxu0 %v223
    %v3724 = vpop.f32.mrf.mxu0
    %v3725 = vadd.f32 %v3684, %v3724
    %v3726 = vpop.f32.mrf.mxu0
    %v3727 = vadd.f32 %v3686, %v3726
    %v3728 = vpop.f32.mrf.mxu0
    %v3729 = vpop.f32.mrf.mxu0
    %3730 = vdwg.mxu0
    %3731 = vmatprep.subr.bf16.mxu0 %v2632
    %3732 = vmatpush1.bf16.msra.mxu0 %v2631
    %3733 = vmatprep.subr.bf16.mxu0 %v2630
    %3734 = vmatpush1.bf16.msra.mxu0 %v2629
    %3735 = vmatprep.subr.bf16.mxu0 %v2628
    %3736 = vmatpush1.bf16.msra.mxu0 %v2627
    %3737 = vmatprep.subr.bf16.mxu0 %v2626
    %3738 = vmatpush1.bf16.msra.mxu0 %v2625
    %3739 = vmatprep.subr.bf16.mxu0 %v2624
    %3740 = vmatpush1.bf16.msra.mxu0 %v2623
    %3741 = vmatprep.subr.bf16.mxu0 %v2622
    %3742 = vmatpush1.bf16.msra.mxu0 %v2621
    %3743 = vmatprep.subr.bf16.mxu0 %v2620
    %3744 = vmatpush1.bf16.msra.mxu0 %v2619
    %3745 = vmatprep.subr.bf16.mxu0 %v2618
    %3746 = vmatpush1.bf16.msra.mxu0 %v2617
    %3747 = vmatprep.subr.bf16.mxu0 %v2648
    %3748 = vmatpush2.bf16.msra.mxu0 %v2647
    %3749 = vmatprep.subr.bf16.mxu0 %v2646
    %3750 = vmatpush2.bf16.msra.mxu0 %v2645
    %3751 = vmatprep.subr.bf16.mxu0 %v2644
    %3752 = vmatpush2.bf16.msra.mxu0 %v2643
    %3753 = vmatprep.subr.bf16.mxu0 %v2642
    %3754 = vmatpush2.bf16.msra.mxu0 %v2641
    %3755 = vmatprep.subr.bf16.mxu0 %v2640
    %3756 = vmatpush2.bf16.msra.mxu0 %v2639
    %3757 = vmatprep.subr.bf16.mxu0 %v2638
    %3758 = vmatpush2.bf16.msra.mxu0 %v2637
    %3759 = vmatprep.subr.bf16.mxu0 %v2636
    %3760 = vmatpush2.bf16.msra.mxu0 %v2635
    %3761 = vmatprep.subr.bf16.mxu0 %v2634
    %3762 = vmatpush2.bf16.msra.mxu0 %v2633
    %3763 = vmatprep.mubr.bf16.mxu0 %v226
    %3764 = vmatmul.mubr.bf16.gmra.mxu0 %v225
    %v3765 = vpop.f32.mrf.mxu0
    %v3766 = vadd.f32 %v3725, %v3765
    %v3767 = vpop.f32.mrf.mxu0
    %v3768 = vadd.f32 %v3727, %v3767
    %v3769 = vpop.f32.mrf.mxu0
    %v3770 = vpop.f32.mrf.mxu0
    %3771 = vdwg.mxu0
    %3772 = vmatprep.subr.bf16.mxu0 %v2664
    %3773 = vmatpush1.bf16.msra.mxu0 %v2663
    %3774 = vmatprep.subr.bf16.mxu0 %v2662
    %3775 = vmatpush1.bf16.msra.mxu0 %v2661
    %3776 = vmatprep.subr.bf16.mxu0 %v2660
    %3777 = vmatpush1.bf16.msra.mxu0 %v2659
    %3778 = vmatprep.subr.bf16.mxu0 %v2658
    %3779 = vmatpush1.bf16.msra.mxu0 %v2657
    %3780 = vmatprep.subr.bf16.mxu0 %v2656
    %3781 = vmatpush1.bf16.msra.mxu0 %v2655
    %3782 = vmatprep.subr.bf16.mxu0 %v2654
    %3783 = vmatpush1.bf16.msra.mxu0 %v2653
    %3784 = vmatprep.subr.bf16.mxu0 %v2652
    %3785 = vmatpush1.bf16.msra.mxu0 %v2651
    %3786 = vmatprep.subr.bf16.mxu0 %v2650
    %3787 = vmatpush1.bf16.msra.mxu0 %v2649
    %3788 = vmatprep.subr.bf16.mxu0 %v2680
    %3789 = vmatpush2.bf16.msra.mxu0 %v2679
    %3790 = vmatprep.subr.bf16.mxu0 %v2678
    %3791 = vmatpush2.bf16.msra.mxu0 %v2677
    %3792 = vmatprep.subr.bf16.mxu0 %v2676
    %3793 = vmatpush2.bf16.msra.mxu0 %v2675
    %3794 = vmatprep.subr.bf16.mxu0 %v2674
    %3795 = vmatpush2.bf16.msra.mxu0 %v2673
    %3796 = vmatprep.subr.bf16.mxu0 %v2672
    %3797 = vmatpush2.bf16.msra.mxu0 %v2671
    %3798 = vmatprep.subr.bf16.mxu0 %v2670
    %3799 = vmatpush2.bf16.msra.mxu0 %v2669
    %3800 = vmatprep.subr.bf16.mxu0 %v2668
    %3801 = vmatpush2.bf16.msra.mxu0 %v2667
    %3802 = vmatprep.subr.bf16.mxu0 %v2666
    %3803 = vmatpush2.bf16.msra.mxu0 %v2665
    %3804 = vmatprep.mubr.bf16.mxu0 %v228
    %3805 = vmatmul.mubr.bf16.gmra.mxu0 %v227
    %v3806 = vpop.f32.mrf.mxu0
    %v3807 = vadd.f32 %v3766, %v3806
    %v3808 = vpop.f32.mrf.mxu0
    %v3809 = vadd.f32 %v3768, %v3808
    %v3810 = vpop.f32.mrf.mxu0
    %v3811 = vpop.f32.mrf.mxu0
    %3812 = vdwg.mxu0
    %3813 = vmatprep.subr.bf16.mxu0 %v2696
    %3814 = vmatpush1.bf16.msra.mxu0 %v2695
    %3815 = vmatprep.subr.bf16.mxu0 %v2694
    %3816 = vmatpush1.bf16.msra.mxu0 %v2693
    %3817 = vmatprep.subr.bf16.mxu0 %v2692
    %3818 = vmatpush1.bf16.msra.mxu0 %v2691
    %3819 = vmatprep.subr.bf16.mxu0 %v2690
    %3820 = vmatpush1.bf16.msra.mxu0 %v2689
    %3821 = vmatprep.subr.bf16.mxu0 %v2688
    %3822 = vmatpush1.bf16.msra.mxu0 %v2687
    %3823 = vmatprep.subr.bf16.mxu0 %v2686
    %3824 = vmatpush1.bf16.msra.mxu0 %v2685
    %3825 = vmatprep.subr.bf16.mxu0 %v2684
    %3826 = vmatpush1.bf16.msra.mxu0 %v2683
    %3827 = vmatprep.subr.bf16.mxu0 %v2682
    %3828 = vmatpush1.bf16.msra.mxu0 %v2681
    %3829 = vmatprep.subr.bf16.mxu0 %v2712
    %3830 = vmatpush2.bf16.msra.mxu0 %v2711
    %3831 = vmatprep.subr.bf16.mxu0 %v2710
    %3832 = vmatpush2.bf16.msra.mxu0 %v2709
    %3833 = vmatprep.subr.bf16.mxu0 %v2708
    %3834 = vmatpush2.bf16.msra.mxu0 %v2707
    %3835 = vmatprep.subr.bf16.mxu0 %v2706
    %3836 = vmatpush2.bf16.msra.mxu0 %v2705
    %3837 = vmatprep.subr.bf16.mxu0 %v2704
    %3838 = vmatpush2.bf16.msra.mxu0 %v2703
    %3839 = vmatprep.subr.bf16.mxu0 %v2702
    %3840 = vmatpush2.bf16.msra.mxu0 %v2701
    %3841 = vmatprep.subr.bf16.mxu0 %v2700
    %3842 = vmatpush2.bf16.msra.mxu0 %v2699
    %3843 = vmatprep.subr.bf16.mxu0 %v2698
    %3844 = vmatpush2.bf16.msra.mxu0 %v2697
    %3845 = vmatprep.mubr.bf16.mxu0 %v230
    %3846 = vmatmul.mubr.bf16.gmra.mxu0 %v229
    %v3847 = vpop.f32.mrf.mxu0
    %v3848 = vadd.f32 %v3807, %v3847
    %v3849 = vpop.f32.mrf.mxu0
    %v3850 = vadd.f32 %v3809, %v3849
    %v3851 = vpop.f32.mrf.mxu0
    %v3852 = vpop.f32.mrf.mxu0
    %3853 = vdwg.mxu0
    %3854 = vmatprep.subr.bf16.mxu0 %v2728
    %3855 = vmatpush1.bf16.msra.mxu0 %v2727
    %3856 = vmatprep.subr.bf16.mxu0 %v2726
    %3857 = vmatpush1.bf16.msra.mxu0 %v2725
    %3858 = vmatprep.subr.bf16.mxu0 %v2724
    %3859 = vmatpush1.bf16.msra.mxu0 %v2723
    %3860 = vmatprep.subr.bf16.mxu0 %v2722
    %3861 = vmatpush1.bf16.msra.mxu0 %v2721
    %3862 = vmatprep.subr.bf16.mxu0 %v2720
    %3863 = vmatpush1.bf16.msra.mxu0 %v2719
    %3864 = vmatprep.subr.bf16.mxu0 %v2718
    %3865 = vmatpush1.bf16.msra.mxu0 %v2717
    %3866 = vmatprep.subr.bf16.mxu0 %v2716
    %3867 = vmatpush1.bf16.msra.mxu0 %v2715
    %3868 = vmatprep.subr.bf16.mxu0 %v2714
    %3869 = vmatpush1.bf16.msra.mxu0 %v2713
    %3870 = vmatprep.subr.bf16.mxu0 %v2744
    %3871 = vmatpush2.bf16.msra.mxu0 %v2743
    %3872 = vmatprep.subr.bf16.mxu0 %v2742
    %3873 = vmatpush2.bf16.msra.mxu0 %v2741
    %3874 = vmatprep.subr.bf16.mxu0 %v2740
    %3875 = vmatpush2.bf16.msra.mxu0 %v2739
    %3876 = vmatprep.subr.bf16.mxu0 %v2738
    %3877 = vmatpush2.bf16.msra.mxu0 %v2737
    %3878 = vmatprep.subr.bf16.mxu0 %v2736
    %3879 = vmatpush2.bf16.msra.mxu0 %v2735
    %3880 = vmatprep.subr.bf16.mxu0 %v2734
    %3881 = vmatpush2.bf16.msra.mxu0 %v2733
    %3882 = vmatprep.subr.bf16.mxu0 %v2732
    %3883 = vmatpush2.bf16.msra.mxu0 %v2731
    %3884 = vmatprep.subr.bf16.mxu0 %v2730
    %3885 = vmatpush2.bf16.msra.mxu0 %v2729
    %3886 = vmatprep.mubr.bf16.mxu0 %v232
    %3887 = vmatmul.mubr.bf16.gmra.mxu0 %v231
    %v3888 = vpop.f32.mrf.mxu0
    %v3889 = vadd.f32 %v3848, %v3888
    %v3890 = vpop.f32.mrf.mxu0
    %v3891 = vadd.f32 %v3850, %v3890
    %v3892 = vpop.f32.mrf.mxu0
    %v3893 = vpop.f32.mrf.mxu0
    %3894 = vdwg.mxu0
    %3895 = vmatprep.subr.bf16.mxu0 %v2760
    %3896 = vmatpush1.bf16.msra.mxu0 %v2759
    %3897 = vmatprep.subr.bf16.mxu0 %v2758
    %3898 = vmatpush1.bf16.msra.mxu0 %v2757
    %3899 = vmatprep.subr.bf16.mxu0 %v2756
    %3900 = vmatpush1.bf16.msra.mxu0 %v2755
    %3901 = vmatprep.subr.bf16.mxu0 %v2754
    %3902 = vmatpush1.bf16.msra.mxu0 %v2753
    %3903 = vmatprep.subr.bf16.mxu0 %v2752
    %3904 = vmatpush1.bf16.msra.mxu0 %v2751
    %3905 = vmatprep.subr.bf16.mxu0 %v2750
    %3906 = vmatpush1.bf16.msra.mxu0 %v2749
    %3907 = vmatprep.subr.bf16.mxu0 %v2748
    %3908 = vmatpush1.bf16.msra.mxu0 %v2747
    %3909 = vmatprep.subr.bf16.mxu0 %v2746
    %3910 = vmatpush1.bf16.msra.mxu0 %v2745
    %3911 = vmatprep.subr.bf16.mxu0 %v2776
    %3912 = vmatpush2.bf16.msra.mxu0 %v2775
    %3913 = vmatprep.subr.bf16.mxu0 %v2774
    %3914 = vmatpush2.bf16.msra.mxu0 %v2773
    %3915 = vmatprep.subr.bf16.mxu0 %v2772
    %3916 = vmatpush2.bf16.msra.mxu0 %v2771
    %3917 = vmatprep.subr.bf16.mxu0 %v2770
    %3918 = vmatpush2.bf16.msra.mxu0 %v2769
    %3919 = vmatprep.subr.bf16.mxu0 %v2768
    %3920 = vmatpush2.bf16.msra.mxu0 %v2767
    %3921 = vmatprep.subr.bf16.mxu0 %v2766
    %3922 = vmatpush2.bf16.msra.mxu0 %v2765
    %3923 = vmatprep.subr.bf16.mxu0 %v2764
    %3924 = vmatpush2.bf16.msra.mxu0 %v2763
    %3925 = vmatprep.subr.bf16.mxu0 %v2762
    %3926 = vmatpush2.bf16.msra.mxu0 %v2761
    %3927 = vmatprep.mubr.bf16.mxu0 %v234
    %3928 = vmatmul.mubr.bf16.gmra.mxu0 %v233
    %v3929 = vpop.f32.mrf.mxu0
    %v3930 = vadd.f32 %v3889, %v3929
    %v3931 = vpop.f32.mrf.mxu0
    %v3932 = vadd.f32 %v3891, %v3931
    %v3933 = vpop.f32.mrf.mxu0
    %v3934 = vpop.f32.mrf.mxu0
    %3935 = vdwg.mxu0
    %3936 = vmatprep.subr.bf16.mxu0 %v2792
    %3937 = vmatpush1.bf16.msra.mxu0 %v2791
    %3938 = vmatprep.subr.bf16.mxu0 %v2790
    %3939 = vmatpush1.bf16.msra.mxu0 %v2789
    %3940 = vmatprep.subr.bf16.mxu0 %v2788
    %3941 = vmatpush1.bf16.msra.mxu0 %v2787
    %3942 = vmatprep.subr.bf16.mxu0 %v2786
    %3943 = vmatpush1.bf16.msra.mxu0 %v2785
    %3944 = vmatprep.subr.bf16.mxu0 %v2784
    %3945 = vmatpush1.bf16.msra.mxu0 %v2783
    %3946 = vmatprep.subr.bf16.mxu0 %v2782
    %3947 = vmatpush1.bf16.msra.mxu0 %v2781
    %3948 = vmatprep.subr.bf16.mxu0 %v2780
    %3949 = vmatpush1.bf16.msra.mxu0 %v2779
    %3950 = vmatprep.subr.bf16.mxu0 %v2778
    %3951 = vmatpush1.bf16.msra.mxu0 %v2777
    %3952 = vmatprep.subr.bf16.mxu0 %v2808
    %3953 = vmatpush2.bf16.msra.mxu0 %v2807
    %3954 = vmatprep.subr.bf16.mxu0 %v2806
    %3955 = vmatpush2.bf16.msra.mxu0 %v2805
    %3956 = vmatprep.subr.bf16.mxu0 %v2804
    %3957 = vmatpush2.bf16.msra.mxu0 %v2803
    %3958 = vmatprep.subr.bf16.mxu0 %v2802
    %3959 = vmatpush2.bf16.msra.mxu0 %v2801
    %3960 = vmatprep.subr.bf16.mxu0 %v2800
    %3961 = vmatpush2.bf16.msra.mxu0 %v2799
    %3962 = vmatprep.subr.bf16.mxu0 %v2798
    %3963 = vmatpush2.bf16.msra.mxu0 %v2797
    %3964 = vmatprep.subr.bf16.mxu0 %v2796
    %3965 = vmatpush2.bf16.msra.mxu0 %v2795
    %3966 = vmatprep.subr.bf16.mxu0 %v2794
    %3967 = vmatpush2.bf16.msra.mxu0 %v2793
    %3968 = vmatprep.mubr.bf16.mxu0 %v236
    %3969 = vmatmul.mubr.bf16.gmra.mxu0 %v235
    %v3970 = vpop.f32.mrf.mxu0
    %v3971 = vadd.f32 %v3930, %v3970
    %v3972 = vpop.f32.mrf.mxu0
    %v3973 = vadd.f32 %v3932, %v3972
    %v3974 = vpop.f32.mrf.mxu0
    %v3975 = vpop.f32.mrf.mxu0
    %3976 = vdwg.mxu0
    %v3977 = vmax.f32 %v3971, 0.0
    %v3978 = vmax.f32 %v3973, 0.0
    %v3979 = vld [vmem:[%s3] sm:$0xff]
    %v3980 = vld [vmem:[%s3 + $0x8] sm:$0xff]
    %v3981 = vld [vmem:[%s3 + $0x10] sm:$0xff]
    %v3982 = vld [vmem:[%s3 + $0x18] sm:$0xff]
    %v3983 = vld [vmem:[%s3 + $0x20] sm:$0xff]
    %v3984 = vld [vmem:[%s3 + $0x28] sm:$0xff]
    %v3985 = vld [vmem:[%s3 + $0x30] sm:$0xff]
    %v3986 = vld [vmem:[%s3 + $0x38] sm:$0xff]
    %v3987 = vld [vmem:[%s3 + $0x40] sm:$0xff]
    %v3988 = vld [vmem:[%s3 + $0x48] sm:$0xff]
    %v3989 = vld [vmem:[%s3 + $0x50] sm:$0xff]
    %v3990 = vld [vmem:[%s3 + $0x58] sm:$0xff]
    %v3991 = vld [vmem:[%s3 + $0x60] sm:$0xff]
    %v3992 = vld [vmem:[%s3 + $0x68] sm:$0xff]
    %v3993 = vld [vmem:[%s3 + $0x70] sm:$0xff]
    %v3994 = vld [vmem:[%s3 + $0x78] sm:$0xff]
    %v3995 = vld [vmem:[%s3 + $0x80] sm:$0xff]
    %v3996 = vld [vmem:[%s3 + $0x88] sm:$0xff]
    %v3997 = vld [vmem:[%s3 + $0x90] sm:$0xff]
    %v3998 = vld [vmem:[%s3 + $0x98] sm:$0xff]
    %v3999 = vld [vmem:[%s3 + $0xa0] sm:$0xff]
    %v4000 = vld [vmem:[%s3 + $0xa8] sm:$0xff]
    %v4001 = vld [vmem:[%s3 + $0xb0] sm:$0xff]
    %v4002 = vld [vmem:[%s3 + $0xb8] sm:$0xff]
    %v4003 = vld [vmem:[%s3 + $0xc0] sm:$0xff]
    %v4004 = vld [vmem:[%s4] sm:$0x1]
    %v4006 = vlaneseq
    %v4007 = vshrl.u32 %v4006, 7
    %v4008 = vsub.s32 0, %v4007
    %v4009 = vrot.slane %v4004, %v4008
    %vm4011 = vcmask 588800
    %v4013 = vsel %vm4011, %v3978, 0
    %4015 = vmatprep.subr.mxu0 0.0
    %4016 = vmatpush1.msra.mxu0 %v3994
    %4017 = vmatprep.subr.mxu0 0.0
    %4018 = vmatpush1.msra.mxu0 %v3993
    %4019 = vmatprep.subr.mxu0 0.0
    %4020 = vmatpush1.msra.mxu0 %v3992
    %4021 = vmatprep.subr.mxu0 0.0
    %4022 = vmatpush1.msra.mxu0 %v3991
    %4023 = vmatprep.subr.mxu0 0.0
    %4024 = vmatpush1.msra.mxu0 %v3990
    %4025 = vmatprep.subr.mxu0 0.0
    %4026 = vmatpush1.msra.mxu0 %v3989
    %4027 = vmatprep.subr.mxu0 0.0
    %4028 = vmatpush1.msra.mxu0 %v3988
    %4029 = vmatprep.subr.mxu0 0.0
    %4030 = vmatpush1.msra.mxu0 %v3987
    %4031 = vmatprep.subr.mxu0 0.0
    %4032 = vmatpush1.msra.mxu0 %v3986
    %4033 = vmatprep.subr.mxu0 0.0
    %4034 = vmatpush1.msra.mxu0 %v3985
    %4035 = vmatprep.subr.mxu0 0.0
    %4036 = vmatpush1.msra.mxu0 %v3984
    %4037 = vmatprep.subr.mxu0 0.0
    %4038 = vmatpush1.msra.mxu0 %v3983
    %4039 = vmatprep.subr.mxu0 0.0
    %4040 = vmatpush1.msra.mxu0 %v3982
    %4041 = vmatprep.subr.mxu0 0.0
    %4042 = vmatpush1.msra.mxu0 %v3981
    %4043 = vmatprep.subr.mxu0 0.0
    %4044 = vmatpush1.msra.mxu0 %v3980
    %4045 = vmatprep.subr.mxu0 0.0
    %4046 = vmatpush1.msra.mxu0 %v3979
    %4047 = vmatprep.subr.mxu0 0.0
    %4048 = vmatpush2.msra.mxu0 0.0
    %4049 = vmatprep.subr.mxu0 0.0
    %4050 = vmatpush2.msra.mxu0 0.0
    %4051 = vmatprep.subr.mxu0 0.0
    %4052 = vmatpush2.msra.mxu0 0.0
    %4053 = vmatprep.subr.mxu0 0.0
    %4054 = vmatpush2.msra.mxu0 0.0
    %4055 = vmatprep.subr.mxu0 0.0
    %4056 = vmatpush2.msra.mxu0 0.0
    %4057 = vmatprep.subr.mxu0 0.0
    %4058 = vmatpush2.msra.mxu0 0.0
    %4059 = vmatprep.subr.mxu0 0.0
    %4060 = vmatpush2.msra.mxu0 0.0
    %4061 = vmatprep.subr.mxu0 0.0
    %4062 = vmatpush2.msra.mxu0 %v4003
    %4063 = vmatprep.subr.mxu0 0.0
    %4064 = vmatpush2.msra.mxu0 %v4002
    %4065 = vmatprep.subr.mxu0 0.0
    %4066 = vmatpush2.msra.mxu0 %v4001
    %4067 = vmatprep.subr.mxu0 0.0
    %4068 = vmatpush2.msra.mxu0 %v4000
    %4069 = vmatprep.subr.mxu0 0.0
    %4070 = vmatpush2.msra.mxu0 %v3999
    %4071 = vmatprep.subr.mxu0 0.0
    %4072 = vmatpush2.msra.mxu0 %v3998
    %4073 = vmatprep.subr.mxu0 0.0
    %4074 = vmatpush2.msra.mxu0 %v3997
    %4075 = vmatprep.subr.mxu0 0.0
    %4076 = vmatpush2.msra.mxu0 %v3996
    %4077 = vmatprep.subr.mxu0 0.0
    %4078 = vmatpush2.msra.mxu0 %v3995
    %4079 = vmatprep.mubr.f32.mxu0 %v4013
    %4080 = vmatmul.mubr.f32.gmra.mxu0 %v3977
    %v4081 = vpop.f32.mrf.mxu0
    %v4082 = vadd.f32 %v4009, %v4081
    %v4083 = vpop.f32.mrf.mxu0
    %4084 = vdwg.mxu0
    %v4085 = vxor.u32 %v4082, 2147483648
    %v4086 = vmul.f32 %v4085, 1.442695
    %v4087 = vpow.pop %v4086
    %v4088 = vadd.f32 %v4087, 1.0
    %v4089 = vrcp.pop %v4088
    %v4090 = vmul.f32 1.0, %v4089
    %vm4091 = vcmask 74752
    %4092 = vst.msk [vmem:[#allocation2] sm:$0x3] %vm4091, %v4090
    // Predicated region
    $region22: #{cnn_forward.3} parent=1 // pred_check
      _
    $region23: #{cnn_forward.3} parent=1 // pred_check_branch
      %4094 = sbr.rel (0) target = $region25
    $region24: #{cnn_forward.3} parent=1 // pred_region
      %s4096 = ssub.s32 32, 32
      %4097 = vsyncadd [#allocation3], %s4096
      %s4099 = sshll.u32 [#allocation2], 4
      %s4100 = int_to_ptr.vmem [resolvable:$true] %s4099
      %4102 = dma.vmem_to_hbm [thread:$0]  %s4100, 32, %s5, [#allocation3]
    $region25: #{cnn_forward.3} parent=1 // pred_fallthru
      _
    // Predicated region
    $region26: #{cnn_forward.3} parent=1 // pred_check
      _
    $region27: #{cnn_forward.3} parent=1 // pred_check_branch
      %4104 = sbr.rel (0) target = $region29
    $region28: #{cnn_forward.3} parent=1 // pred_region
      %4105 = dma.done [#allocation3], 32
    $region29: #{cnn_forward.3} parent=1 // pred_fallthru
      _
    %4106 = vsyncpa [#allocation3], 1

</llo_original>
